<compile_context>
chip_gen: v7x
topology: tpu7x:2x2x1
jax: 0.10.0
libtpu: 0.0.40
codegen_flags: <defaults>
</compile_context>

<pallas_src>
import numpy as np
import jax
import jax.numpy as jnp
from jax.experimental import pallas as pl
from jax.experimental.pallas import tpu as pltpu

# ----------------------------- configuration -------------------------------
BATCH = 2
NUM_NODES = 16
TOP_K = 4            # args.top_k_neighbors
SEQ_X = 8            # args.seq_length_x
SEQ_Y = 8            # args.seq_length_y
POOL_N = [2, 2]      # args.pooling_neighbors_list  (prod == TOP_K)
POOL_S = [2, 4]      # args.pooling_seq_list        (prod == SEQ_X)
INC_HID = 32         # increase_dimension_hidden_size
INCEPTION_OUT = 64   # inception_out_feature_size
HEAD_HID = 64
HEAD_OUT = 12
BN_EPS = 1e-5
OUT_PAD = 128        # lane-dense output width (real outputs in lanes [0, 12))

# TODO(synk): the reference selects (k1,k2,d1,d2) conv bags via a CPLEX integer
# program (Caculate_parameters_conv) plus np.random.shuffle; here we hardcode a
# deterministic bag set that satisfies the same constraints
# sum(d1*(k1-1)) == TOP_K-1 and sum(d2*(k2-1)) == SEQ_X-1.
CONV_BAGS = [(3, 3, 1, 2), (1, 3, 1, 1), (2, 2, 1, 1)]

CIN0 = INC_HID + 1              # 33-channel features after the concat
CH_PAD = INCEPTION_OUT - CIN0   # zero-pad 33 -> 64 channels (pad at the front)


# ------------------------- packed weight/bias layout -------------------------
def _weight_layout():
    idx = 0
    nn = []
    for (k1, k2, _, _) in CONV_BAGS:
        nn.append(idx)
        idx += k1 * k2
    pool = []
    for _ in POOL_N:
        pool.append(idx)
        idx += 2                        # (max-weight, min-weight) copies
    onen = [idx, idx + TOP_K]
    idx += TOP_K + SEQ_Y
    head = idx
    idx += 3
    return nn, pool, onen, head, idx


_W_NN, _W_POOL, _W_1N, _W_HEAD, _NW = _weight_layout()

_nb = 0
_B_NN = list(range(_nb, _nb + len(CONV_BAGS))); _nb += len(CONV_BAGS)
_B_POOL = list(range(_nb, _nb + len(POOL_N))); _nb += len(POOL_N)
_B_1N = [_nb, _nb + 1]; _nb += 2
_B_HEAD0 = _nb; _nb += 1
_B_HEAD1 = _nb; _nb += 1
_B_WINC = _nb; _nb += 1
_B_BINC = _nb; _nb += 1
_B_MMID = _nb; _nb += 1
_B_MLAST = _nb; _nb += 1
_NB = ((_nb + 7) // 8) * 8


# --------------------------- shared kernel math -------------------------------
def _elu(v):
    return jnp.where(v > 0, v, jnp.exp(jnp.minimum(v, 0.0)) - 1.0)


def _forward_core(x64, wm, wh, bv):
    """Shared math for the Pallas kernel body and the pure-JAX reference.

    x64: (TOP_K*SEQ_X*R, 64) f32 -- raw scalar, lane-broadcast, rows ordered
         position-major (neighbor, time, row);
    wm:  (NW, 64, 64) bf16 packed matmul weights (Pallas ref OR array);
    wh:  (64, 128) bf16 final head weight (lane-padded);
    bv:  (NB, 128) f32 packed biases / scales / masks.
    Returns (R, 128) f32 whose first HEAD_OUT lanes are the module output."""
    C = INCEPTION_OUT
    R = x64.shape[0] // (TOP_K * SEQ_X)

    def brow(r):
        return bv[r:r + 1, :C]

    # ---- increase_dimension_net (Cin=1 1x1x1 conv + ELU) + channel concat ----
    # channels [0,31): zero pad, [31,63): ELU(x*w+b), 63: raw input.
    feat = (_elu(x64 * brow(_B_WINC) + brow(_B_BINC)) * brow(_B_MMID)
            + x64 * brow(_B_MLAST))                      # (P*R, 64) f32
    feat_bf = feat.astype(jnp.bfloat16)

    def conv_stage(slab, slab_bf, hin, win, kh, kw, dh, dw, widx0, bidx):
        """(BN folded) valid Conv3d((1,kh,kw), dil (1,dh,dw)) + bias + ELU,
        fused with the inception residual merge, on a position-major slab."""
        hout, wout = hin - dh * (kh - 1), win - dw * (kw - 1)
        mh0, mw0 = hin - hout, win - wout
        b = brow(bidx)
        blocks = []
        for h in range(hout):
            acc = None
            for i in range(kh):
                for j in range(kw):
                    s = ((h + i * dh) * win + j * dw) * R
                    y = jnp.dot(slab_bf[s:s + wout * R],
                                wm[widx0 + i * kw + j],
                                preferred_element_type=jnp.float32)
                    acc = y if acc is None else acc + y
            p = ((mh0 + h) * win + mw0) * R
            blocks.append(slab[p:p + wout * R] + _elu(acc + b))
        new = blocks[0] if len(blocks) == 1 else jnp.concatenate(blocks, axis=0)
        return new, hout, wout

    def pool_stage(slab, hin, win, pn, ps, widx0, bidx):
        """BN -> MaxPool3d((1,pn,ps)) -> Conv1x1x1 -> ELU + residual merge.
        The BN scale is folded into two conv-weight copies applied to the
        max / min pooled slabs; the BN shift is folded into the bias."""
        hout, wout = hin // pn, win // ps
        mh0, mw0 = hin - hout, win - wout
        b = brow(bidx)
        blocks = []
        for ho in range(hout):
            vmax = vmin = None
            for i in range(pn):
                row = slab[(ho * pn + i) * win * R:(ho * pn + i + 1) * win * R]
                vmax = row if vmax is None else jnp.maximum(vmax, row)
                vmin = row if vmin is None else jnp.minimum(vmin, row)
            mx, mn = [], []
            for wo in range(wout):
                m = vmax[wo * ps * R:(wo * ps + 1) * R]
                n = vmin[wo * ps * R:(wo * ps + 1) * R]
                for j in range(1, ps):
                    m = jnp.maximum(m, vmax[(wo * ps + j) * R:(wo * ps + j + 1) * R])
                    n = jnp.minimum(n, vmin[(wo * ps + j) * R:(wo * ps + j + 1) * R])
                mx.append(m)
                mn.append(n)
            pmax = mx[0] if wout == 1 else jnp.concatenate(mx, axis=0)
            pmin = mn[0] if wout == 1 else jnp.concatenate(mn, axis=0)
            y = (jnp.dot(pmax.astype(jnp.bfloat16), wm[widx0],
                         preferred_element_type=jnp.float32)
                 + jnp.dot(pmin.astype(jnp.bfloat16), wm[widx0 + 1],
                           preferred_element_type=jnp.float32))
            p = ((mh0 + ho) * win + mw0) * R
            blocks.append(slab[p:p + wout * R] + _elu(y + b))
        new = blocks[0] if len(blocks) == 1 else jnp.concatenate(blocks, axis=0)
        return new, hout, wout

    # ----------------------- spatial_temporal_net_nn -------------------------
    nn_slab, nn_bf, hh, ww = feat, feat_bf, TOP_K, SEQ_X
    for bag_i, (k1, k2, d1, d2) in enumerate(CONV_BAGS):
        nn_slab, hh, ww = conv_stage(nn_slab, nn_bf, hh, ww, k1, k2, d1, d2,
                                     _W_NN[bag_i], _B_NN[bag_i])
        if bag_i + 1 < len(CONV_BAGS):
            nn_bf = nn_slab.astype(jnp.bfloat16)

    # --------------------- spatial_temporal_net_pooling ----------------------
    pool_slab, hh, ww = feat, TOP_K, SEQ_X
    for st_i, (pn, ps) in enumerate(zip(POOL_N, POOL_S)):
        pool_slab, hh, ww = pool_stage(pool_slab, hh, ww, pn, ps,
                                       _W_POOL[st_i], _B_POOL[st_i])

    # ----------------------- spatial_temporal_net_1n -------------------------
    on_slab, on_bf, hh, ww = feat, feat_bf, TOP_K, SEQ_X
    on_slab, hh, ww = conv_stage(on_slab, on_bf, hh, ww, TOP_K, 1, 1, 1,
                                 _W_1N[0], _B_1N[0])
    on_bf = on_slab.astype(jnp.bfloat16)
    on_slab, hh, ww = conv_stage(on_slab, on_bf, hh, ww, 1, SEQ_Y, 1, 1,
                                 _W_1N[1], _B_1N[1])

    # ----------------------------- final_conv head ---------------------------
    # concat([pooling, nn, 1n]) @ W0 as three accumulated matmuls against the
    # per-branch row-blocks of the BN-folded head weight.
    z = (jnp.dot(pool_slab.astype(jnp.bfloat16), wm[_W_HEAD + 0],
                 preferred_element_type=jnp.float32)
         + jnp.dot(nn_slab.astype(jnp.bfloat16), wm[_W_HEAD + 1],
                   preferred_element_type=jnp.float32)
         + jnp.dot(on_slab.astype(jnp.bfloat16), wm[_W_HEAD + 2],
                   preferred_element_type=jnp.float32))
    hid = _elu(z + brow(_B_HEAD0))
    out = (jnp.dot(hid.astype(jnp.bfloat16), wh,
                   preferred_element_type=jnp.float32)
           + bv[_B_HEAD1:_B_HEAD1 + 1, :])
    return out                                              # (R, 128) f32


# ------------------------------- parameters ----------------------------------
def _bn_eval_params(c):
    # PyTorch BatchNorm3d defaults (gamma=1, beta=0, running stats 0/1), eval.
    # TODO(synk): training-mode batch statistics are not reproduced.
    gamma = np.ones((c,), np.float32)
    beta = np.zeros((c,), np.float32)
    mean = np.zeros((c,), np.float32)
    var = np.ones((c,), np.float32)
    scale = gamma / np.sqrt(var + BN_EPS)
    shift = beta - mean * scale
    return scale, shift


def _init_conv(key, ntaps, cin, cout):
    kw_, kb_ = jax.random.split(key)
    bound = 1.0 / np.sqrt(ntaps * cin)
    w = jax.random.uniform(kw_, (ntaps, cin, cout), jnp.float32, -bound, bound)
    b = jax.random.uniform(kb_, (cout,), jnp.float32, -bound, bound)
    return np.asarray(w), np.asarray(b)


def init_params(key):
    keys = iter(jax.random.split(key, 16))
    p = {}
    p['inc'] = _init_conv(next(keys), 1, 1, INC_HID)
    p['nn'] = []
    for idx, (k1, k2, _, _) in enumerate(CONV_BAGS):
        cin = CIN0 if idx == 0 else INCEPTION_OUT
        s, t = _bn_eval_params(cin)
        w, b = _init_conv(next(keys), k1 * k2, cin, INCEPTION_OUT)
        p['nn'].append((s, t, w, b))
    p['pool'] = []
    for idx in range(len(POOL_N)):
        cin = CIN0 if idx == 0 else INCEPTION_OUT
        s, t = _bn_eval_params(cin)
        w, b = _init_conv(next(keys), 1, cin, INCEPTION_OUT)
        p['pool'].append((s, t, w, b))
    s, t = _bn_eval_params(CIN0)
    w0, b0 = _init_conv(next(keys), TOP_K, CIN0, INCEPTION_OUT)
    w1, b1 = _init_conv(next(keys), SEQ_Y, INCEPTION_OUT, INCEPTION_OUT)
    p['one_n'] = ((s, t, w0, b0), (w1, b1))
    wh0, bh0 = _init_conv(next(keys), 1, INCEPTION_OUT * 3, HEAD_HID)
    sh, th = _bn_eval_params(HEAD_HID)
    wh1, bh1 = _init_conv(next(keys), 1, HEAD_HID, HEAD_OUT)
    p['head'] = (wh0, bh0, sh, th, wh1, bh1)
    return p


def pack_params(p):
    """Fold every BatchNorm3d(eval) affine into the adjacent linear op and pack
    all matmul weights / biases into three contiguous tile-friendly buffers."""
    C = INCEPTION_OUT
    mats = np.zeros((_NW, C, C), np.float32)
    bias = np.zeros((_NB, OUT_PAD), np.float32)

    def pad_cin(w):                           # (taps, 33, C) -> (taps, C, C)
        out = np.zeros((w.shape[0], C, C), np.float32)
        out[:, CH_PAD:, :] = w
        return out

    # nn branch: BN -> conv -> ELU  (BN folds exactly into the conv).
    for bag_i, (wstart, (s, t, w, b)) in enumerate(zip(_W_NN, p['nn'])):
        wf = w * s[None, :, None]
        bf = b + np.einsum('kco,c->o', w, t)
        if bag_i == 0:
            wf = pad_cin(wf)
        mats[wstart:wstart + wf.shape[0]] = wf
        bias[_B_NN[bag_i], :C] = bf

    # pooling branch: BN -> maxpool -> conv1x1 -> ELU.  Split the BN scale into
    # (s+, s-) conv-weight copies (max / min pooled inputs); shift -> bias.
    for st_i, (wstart, (s, t, w, b)) in enumerate(zip(_W_POOL, p['pool'])):
        w2 = w[0]
        wp = np.maximum(s, 0.0)[:, None] * w2
        wn = np.minimum(s, 0.0)[:, None] * w2
        bf = b + t @ w2
        if st_i == 0:
            wp = pad_cin(wp[None])[0]
            wn = pad_cin(wn[None])[0]
        mats[wstart] = wp
        mats[wstart + 1] = wn
        bias[_B_POOL[st_i], :C] = bf

    # 1n branch: (BN -> conv(top_k,1) -> ELU), (conv(1,seq_y) -> ELU).
    (s, t, wa, ba), (wb, bb) = p['one_n']
    mats[_W_1N[0]:_W_1N[0] + TOP_K] = pad_cin(wa * s[None, :, None])
    bias[_B_1N[0], :C] = ba + np.einsum('kco,c->o', wa, t)
    mats[_W_1N[1]:_W_1N[1] + SEQ_Y] = wb
    bias[_B_1N[1], :C] = bb

    # head: conv1x1(192->64) -> BN -> ELU -> conv1x1(64->12); BN folds into the
    # first conv's output columns.  Concat order is [pooling, nn, 1n].
    wh0, bh0, sh, th, wh1, bh1 = p['head']
    wf = wh0[0] * sh[None, :]
    for blk in range(3):
        mats[_W_HEAD + blk] = wf[blk * C:(blk + 1) * C]
    bias[_B_HEAD0, :C] = sh * bh0 + th
    wh_pad = np.zeros((C, OUT_PAD), np.float32)
    wh_pad[:, :HEAD_OUT] = wh1[0]
    bias[_B_HEAD1, :HEAD_OUT] = bh1

    # increase_dimension conv (Cin=1, 1x1x1) + channel-padding masks:
    # lanes [0,31): zero pad, [31,63): ELU(x*w+b), 63: raw input.
    bias[_B_WINC, CH_PAD:CH_PAD + INC_HID] = p['inc'][0].reshape(-1)
    bias[_B_BINC, CH_PAD:CH_PAD + INC_HID] = p['inc'][1].reshape(-1)
    bias[_B_MMID, CH_PAD:CH_PAD + INC_HID] = 1.0
    bias[_B_MLAST, C - 1] = 1.0

    return (jnp.asarray(mats, jnp.bfloat16),
            jnp.asarray(wh_pad, jnp.bfloat16),
            jnp.asarray(bias, jnp.float32))


# ---------------------------- pallas entry point ------------------------------
def _kernel(x_ref, wm_ref, wh_ref, bv_ref, o_ref):
    o_ref[0] = _forward_core(x_ref[0], wm_ref, wh_ref[...], bv_ref[...])


def _num_row_blocks(batch):
    """Grid blocks over the batch: 2 'parallel' blocks on 2-TensorCore chips
    (v4 / v5p / v7x), 1 on single-core chips (v5e / v6e)."""
    try:
        kind = jax.devices()[0].device_kind.lower()
    except Exception:
        return 1
    if batch % 2 == 0 and any(tag in kind for tag in ("v7", "v5p", "v4")):
        return 2
    return 1


def forward(x5, packed):
    """x5: (B, num_nodes, top_k, 1, seq_x) -- the tensor fed to the torch module
    before its internal permute(0, 3, 1, 2, 4).  Returns (B, 12, num_nodes, 1)."""
    wm, wh, bv = packed
    B, N, K, Cf, T = x5.shape
    assert (K, Cf, T) == (TOP_K, 1, SEQ_X)
    R = B * N
    G = _num_row_blocks(B)
    rsub = R // G
    rows = K * T * rsub

    # Position-major row layout (neighbor, time, row) per grid block; the raw
    # scalar is pre-broadcast to 64 lanes so the kernel input DMA is dense.
    if G == 1:
        xp = jnp.transpose(x5, (2, 4, 0, 1, 3)).reshape(1, rows, 1)
    else:
        xp = jnp.transpose(x5, (0, 2, 4, 1, 3)).reshape(G, rows, 1)
    xb = jnp.broadcast_to(xp, (G, rows, INCEPTION_OUT)).astype(jnp.float32)

    out = pl.pallas_call(
        _kernel,
        out_shape=jax.ShapeDtypeStruct((G, rsub, OUT_PAD), jnp.float32),
        grid=(G,),
        in_specs=[
            pl.BlockSpec((1, rows, INCEPTION_OUT), lambda g: (g, 0, 0)),
            pl.BlockSpec(wm.shape, lambda g: (0, 0, 0)),
            pl.BlockSpec(wh.shape, lambda g: (0, 0)),
            pl.BlockSpec(bv.shape, lambda g: (0, 0)),
        ],
        out_specs=pl.BlockSpec((1, rsub, OUT_PAD), lambda g: (g, 0, 0)),
        compiler_params=pltpu.CompilerParams(
            dimension_semantics=("parallel",)),
    )(xb, wm, wh, bv)

    y = out.reshape(R, OUT_PAD)[:, :HEAD_OUT].reshape(B, N, HEAD_OUT)
    # torch output after squeeze(-1): (B, 12, num_nodes, 1)
    return jnp.transpose(y, (0, 2, 1))[..., None]


def forward_reference(x5, packed):
    """Pure-JAX (XLA) version of the exact same folded math, for a sanity check
    of the Pallas lowering."""
    wm, wh, bv = packed
    B, N, K, Cf, T = x5.shape
    R = B * N
    xp = jnp.transpose(x5, (2, 4, 0, 1, 3)).reshape(K * T * R, 1)
    xb = jnp.broadcast_to(xp, (K * T * R, INCEPTION_OUT)).astype(jnp.float32)
    y = _forward_core(xb, wm, wh, bv)[:, :HEAD_OUT].reshape(B, N, HEAD_OUT)
    return jnp.transpose(y, (0, 2, 1))[..., None]


# ----------------------------------- main -------------------------------------
if __name__ == "__main__":
    key = jax.random.PRNGKey(0)
    k_in, k_par = jax.random.split(key)
    x = jax.random.normal(
        k_in, (BATCH, NUM_NODES, TOP_K, 1, SEQ_X), jnp.float32)
    packed = pack_params(init_params(k_par))

    out = jax.block_until_ready(jax.jit(forward)(x, packed))
    assert out.shape == (BATCH, HEAD_OUT, NUM_NODES, 1), out.shape
    assert bool(jnp.all(jnp.isfinite(out)))

    # Sanity check against the XLA version of the identical (folded, bf16-
    # matmul) math; differences are only MXU vs XLA summation order.
    ref = jax.block_until_ready(jax.jit(forward_reference)(x, packed))
    err = float(jnp.max(jnp.abs(out - ref)))
    assert err < 5e-2, f"max |pallas - reference| = {err}"

    print("KERNEL_OK")
</pallas_src>

<mosaic_0001>
module attributes {stable_mosaic.version = 11 : i64} {
  func.func @_kernel(%arg0: i32, %arg1: memref<1x1024x64xf32, #tpu.memory_space<vmem>>, %arg2: memref<35x64x64xbf16, #tpu.memory_space<vmem>>, %arg3: memref<64x128xbf16, #tpu.memory_space<vmem>>, %arg4: memref<16x128xf32, #tpu.memory_space<vmem>>, %arg5: memref<1x32x128xf32, #tpu.memory_space<vmem>>) attributes {dimension_semantics = [#tpu.dimension_semantics<parallel>], iteration_bounds = array<i64: 1>, scalar_prefetch = 0 : i64, scratch_operands = 0 : i64, tpu.core_type = #tpu.core_type<tc>, window_params = [{transform_indices = @transform_0, window_bounds = array<i64: 1, 1024, 64>}, {pipeline_mode = #tpu.pipeline_mode<synchronous>, transform_indices = @transform_1, window_bounds = array<i64: 35, 64, 64>}, {pipeline_mode = #tpu.pipeline_mode<synchronous>, transform_indices = @transform_2, window_bounds = array<i64: 64, 128>}, {pipeline_mode = #tpu.pipeline_mode<synchronous>, transform_indices = @transform_3, window_bounds = array<i64: 16, 128>}, {transform_indices = @transform_4, window_bounds = array<i64: 1, 32, 128>}]} {
    %c0 = arith.constant 0 : index
    %c0_0 = arith.constant 0 : index
    %c0_1 = arith.constant 0 : index
    %0 = vector.load %arg1[%c0, %c0_0, %c0_1] : memref<1x1024x64xf32, #tpu.memory_space<vmem>>, vector<1x1024x64xf32>
    %1 = vector.shape_cast %0 : vector<1x1024x64xf32> to vector<1024x64xf32>
    %c0_2 = arith.constant 0 : index
    %c0_3 = arith.constant 0 : index
    %2 = vector.load %arg3[%c0_2, %c0_3] : memref<64x128xbf16, #tpu.memory_space<vmem>>, vector<64x128xbf16>
    %c0_4 = arith.constant 0 : index
    %c0_5 = arith.constant 0 : index
    %3 = vector.load %arg4[%c0_4, %c0_5] : memref<16x128xf32, #tpu.memory_space<vmem>>, vector<16x128xf32>
    %4 = vector.extract_strided_slice %3 {offsets = [9, 0], sizes = [1, 64], strides = [1, 1]} : vector<16x128xf32> to vector<1x64xf32>
    %5 = vector.broadcast %4 : vector<1x64xf32> to vector<1024x64xf32>
    %6 = arith.mulf %1, %5 : vector<1024x64xf32>
    %7 = vector.extract_strided_slice %3 {offsets = [10, 0], sizes = [1, 64], strides = [1, 1]} : vector<16x128xf32> to vector<1x64xf32>
    %8 = vector.broadcast %7 : vector<1x64xf32> to vector<1024x64xf32>
    %9 = arith.addf %6, %8 : vector<1024x64xf32>
    %cst = arith.constant 0.000000e+00 : f32
    %10 = vector.broadcast %cst : f32 to vector<1024x64xf32>
    %11 = arith.cmpf ogt, %9, %10 : vector<1024x64xf32>
    %cst_6 = arith.constant 0.000000e+00 : f32
    %12 = vector.broadcast %cst_6 : f32 to vector<1024x64xf32>
    %13 = arith.minimumf %9, %12 : vector<1024x64xf32>
    %14 = math.exp %13 : vector<1024x64xf32>
    %cst_7 = arith.constant 1.000000e+00 : f32
    %15 = vector.broadcast %cst_7 : f32 to vector<1024x64xf32>
    %16 = arith.subf %14, %15 : vector<1024x64xf32>
    %17 = arith.select %11, %9, %16 : vector<1024x64xi1>, vector<1024x64xf32>
    %18 = vector.extract_strided_slice %3 {offsets = [11, 0], sizes = [1, 64], strides = [1, 1]} : vector<16x128xf32> to vector<1x64xf32>
    %19 = vector.broadcast %18 : vector<1x64xf32> to vector<1024x64xf32>
    %20 = arith.mulf %17, %19 : vector<1024x64xf32>
    %21 = vector.extract_strided_slice %3 {offsets = [12, 0], sizes = [1, 64], strides = [1, 1]} : vector<16x128xf32> to vector<1x64xf32>
    %22 = vector.broadcast %21 : vector<1x64xf32> to vector<1024x64xf32>
    %23 = arith.mulf %1, %22 : vector<1024x64xf32>
    %24 = arith.addf %20, %23 : vector<1024x64xf32>
    %25 = arith.truncf %24 : vector<1024x64xf32> to vector<1024x64xbf16>
    %26 = vector.extract_strided_slice %3 {offsets = [0, 0], sizes = [1, 64], strides = [1, 1]} : vector<16x128xf32> to vector<1x64xf32>
    %27 = vector.extract_strided_slice %25 {offsets = [0, 0], sizes = [128, 64], strides = [1, 1]} : vector<1024x64xbf16> to vector<128x64xbf16>
    %c0_8 = arith.constant 0 : index
    %c0_9 = arith.constant 0 : index
    %c0_10 = arith.constant 0 : index
    %28 = vector.load %arg2[%c0_8, %c0_9, %c0_10] : memref<35x64x64xbf16, #tpu.memory_space<vmem>>, vector<1x64x64xbf16>
    %29 = vector.shape_cast %28 : vector<1x64x64xbf16> to vector<64x64xbf16>
    %cst_11 = arith.constant dense<0.000000e+00> : vector<128x64xf32>
    %30 = tpu.matmul %27, %29, %cst_11 {dimension_numbers = #tpu.dot_dimension_numbers<[1], [0], [0], [1], [0, 0, 1, 1], [], []>} : vector<128x64xbf16>, vector<64x64xbf16>, vector<128x64xf32> -> vector<128x64xf32>
    %31 = vector.extract_strided_slice %25 {offsets = [64, 0], sizes = [128, 64], strides = [1, 1]} : vector<1024x64xbf16> to vector<128x64xbf16>
    %c1 = arith.constant 1 : index
    %c0_12 = arith.constant 0 : index
    %c0_13 = arith.constant 0 : index
    %32 = vector.load %arg2[%c1, %c0_12, %c0_13] : memref<35x64x64xbf16, #tpu.memory_space<vmem>>, vector<1x64x64xbf16>
    %33 = vector.shape_cast %32 : vector<1x64x64xbf16> to vector<64x64xbf16>
    %cst_14 = arith.constant dense<0.000000e+00> : vector<128x64xf32>
    %34 = tpu.matmul %31, %33, %cst_14 {dimension_numbers = #tpu.dot_dimension_numbers<[1], [0], [0], [1], [0, 0, 1, 1], [], []>} : vector<128x64xbf16>, vector<64x64xbf16>, vector<128x64xf32> -> vector<128x64xf32>
    %35 = arith.addf %30, %34 : vector<128x64xf32>
    %36 = vector.extract_strided_slice %25 {offsets = [128, 0], sizes = [128, 64], strides = [1, 1]} : vector<1024x64xbf16> to vector<128x64xbf16>
    %c2 = arith.constant 2 : index
    %c0_15 = arith.constant 0 : index
    %c0_16 = arith.constant 0 : index
    %37 = vector.load %arg2[%c2, %c0_15, %c0_16] : memref<35x64x64xbf16, #tpu.memory_space<vmem>>, vector<1x64x64xbf16>
    %38 = vector.shape_cast %37 : vector<1x64x64xbf16> to vector<64x64xbf16>
    %cst_17 = arith.constant dense<0.000000e+00> : vector<128x64xf32>
    %39 = tpu.matmul %36, %38, %cst_17 {dimension_numbers = #tpu.dot_dimension_numbers<[1], [0], [0], [1], [0, 0, 1, 1], [], []>} : vector<128x64xbf16>, vector<64x64xbf16>, vector<128x64xf32> -> vector<128x64xf32>
    %40 = arith.addf %35, %39 : vector<128x64xf32>
    %41 = vector.extract_strided_slice %25 {offsets = [256, 0], sizes = [128, 64], strides = [1, 1]} : vector<1024x64xbf16> to vector<128x64xbf16>
    %c3 = arith.constant 3 : index
    %c0_18 = arith.constant 0 : index
    %c0_19 = arith.constant 0 : index
    %42 = vector.load %arg2[%c3, %c0_18, %c0_19] : memref<35x64x64xbf16, #tpu.memory_space<vmem>>, vector<1x64x64xbf16>
    %43 = vector.shape_cast %42 : vector<1x64x64xbf16> to vector<64x64xbf16>
    %cst_20 = arith.constant dense<0.000000e+00> : vector<128x64xf32>
    %44 = tpu.matmul %41, %43, %cst_20 {dimension_numbers = #tpu.dot_dimension_numbers<[1], [0], [0], [1], [0, 0, 1, 1], [], []>} : vector<128x64xbf16>, vector<64x64xbf16>, vector<128x64xf32> -> vector<128x64xf32>
    %45 = arith.addf %40, %44 : vector<128x64xf32>
    %46 = vector.extract_strided_slice %25 {offsets = [320, 0], sizes = [128, 64], strides = [1, 1]} : vector<1024x64xbf16> to vector<128x64xbf16>
    %c4 = arith.constant 4 : index
    %c0_21 = arith.constant 0 : index
    %c0_22 = arith.constant 0 : index
    %47 = vector.load %arg2[%c4, %c0_21, %c0_22] : memref<35x64x64xbf16, #tpu.memory_space<vmem>>, vector<1x64x64xbf16>
    %48 = vector.shape_cast %47 : vector<1x64x64xbf16> to vector<64x64xbf16>
    %cst_23 = arith.constant dense<0.000000e+00> : vector<128x64xf32>
    %49 = tpu.matmul %46, %48, %cst_23 {dimension_numbers = #tpu.dot_dimension_numbers<[1], [0], [0], [1], [0, 0, 1, 1], [], []>} : vector<128x64xbf16>, vector<64x64xbf16>, vector<128x64xf32> -> vector<128x64xf32>
    %50 = arith.addf %45, %49 : vector<128x64xf32>
    %51 = vector.extract_strided_slice %25 {offsets = [384, 0], sizes = [128, 64], strides = [1, 1]} : vector<1024x64xbf16> to vector<128x64xbf16>
    %c5 = arith.constant 5 : index
    %c0_24 = arith.constant 0 : index
    %c0_25 = arith.constant 0 : index
    %52 = vector.load %arg2[%c5, %c0_24, %c0_25] : memref<35x64x64xbf16, #tpu.memory_space<vmem>>, vector<1x64x64xbf16>
    %53 = vector.shape_cast %52 : vector<1x64x64xbf16> to vector<64x64xbf16>
    %cst_26 = arith.constant dense<0.000000e+00> : vector<128x64xf32>
    %54 = tpu.matmul %51, %53, %cst_26 {dimension_numbers = #tpu.dot_dimension_numbers<[1], [0], [0], [1], [0, 0, 1, 1], [], []>} : vector<128x64xbf16>, vector<64x64xbf16>, vector<128x64xf32> -> vector<128x64xf32>
    %55 = arith.addf %50, %54 : vector<128x64xf32>
    %56 = vector.extract_strided_slice %25 {offsets = [512, 0], sizes = [128, 64], strides = [1, 1]} : vector<1024x64xbf16> to vector<128x64xbf16>
    %c6 = arith.constant 6 : index
    %c0_27 = arith.constant 0 : index
    %c0_28 = arith.constant 0 : index
    %57 = vector.load %arg2[%c6, %c0_27, %c0_28] : memref<35x64x64xbf16, #tpu.memory_space<vmem>>, vector<1x64x64xbf16>
    %58 = vector.shape_cast %57 : vector<1x64x64xbf16> to vector<64x64xbf16>
    %cst_29 = arith.constant dense<0.000000e+00> : vector<128x64xf32>
    %59 = tpu.matmul %56, %58, %cst_29 {dimension_numbers = #tpu.dot_dimension_numbers<[1], [0], [0], [1], [0, 0, 1, 1], [], []>} : vector<128x64xbf16>, vector<64x64xbf16>, vector<128x64xf32> -> vector<128x64xf32>
    %60 = arith.addf %55, %59 : vector<128x64xf32>
    %61 = vector.extract_strided_slice %25 {offsets = [576, 0], sizes = [128, 64], strides = [1, 1]} : vector<1024x64xbf16> to vector<128x64xbf16>
    %c7 = arith.constant 7 : index
    %c0_30 = arith.constant 0 : index
    %c0_31 = arith.constant 0 : index
    %62 = vector.load %arg2[%c7, %c0_30, %c0_31] : memref<35x64x64xbf16, #tpu.memory_space<vmem>>, vector<1x64x64xbf16>
    %63 = vector.shape_cast %62 : vector<1x64x64xbf16> to vector<64x64xbf16>
    %cst_32 = arith.constant dense<0.000000e+00> : vector<128x64xf32>
    %64 = tpu.matmul %61, %63, %cst_32 {dimension_numbers = #tpu.dot_dimension_numbers<[1], [0], [0], [1], [0, 0, 1, 1], [], []>} : vector<128x64xbf16>, vector<64x64xbf16>, vector<128x64xf32> -> vector<128x64xf32>
    %65 = arith.addf %60, %64 : vector<128x64xf32>
    %66 = vector.extract_strided_slice %25 {offsets = [640, 0], sizes = [128, 64], strides = [1, 1]} : vector<1024x64xbf16> to vector<128x64xbf16>
    %c8 = arith.constant 8 : index
    %c0_33 = arith.constant 0 : index
    %c0_34 = arith.constant 0 : index
    %67 = vector.load %arg2[%c8, %c0_33, %c0_34] : memref<35x64x64xbf16, #tpu.memory_space<vmem>>, vector<1x64x64xbf16>
    %68 = vector.shape_cast %67 : vector<1x64x64xbf16> to vector<64x64xbf16>
    %cst_35 = arith.constant dense<0.000000e+00> : vector<128x64xf32>
    %69 = tpu.matmul %66, %68, %cst_35 {dimension_numbers = #tpu.dot_dimension_numbers<[1], [0], [0], [1], [0, 0, 1, 1], [], []>} : vector<128x64xbf16>, vector<64x64xbf16>, vector<128x64xf32> -> vector<128x64xf32>
    %70 = arith.addf %65, %69 : vector<128x64xf32>
    %71 = vector.extract_strided_slice %24 {offsets = [640, 0], sizes = [128, 64], strides = [1, 1]} : vector<1024x64xf32> to vector<128x64xf32>
    %72 = vector.broadcast %26 : vector<1x64xf32> to vector<128x64xf32>
    %73 = arith.addf %70, %72 : vector<128x64xf32>
    %cst_36 = arith.constant 0.000000e+00 : f32
    %74 = vector.broadcast %cst_36 : f32 to vector<128x64xf32>
    %75 = arith.cmpf ogt, %73, %74 : vector<128x64xf32>
    %cst_37 = arith.constant 0.000000e+00 : f32
    %76 = vector.broadcast %cst_37 : f32 to vector<128x64xf32>
    %77 = arith.minimumf %73, %76 : vector<128x64xf32>
    %78 = math.exp %77 : vector<128x64xf32>
    %cst_38 = arith.constant 1.000000e+00 : f32
    %79 = vector.broadcast %cst_38 : f32 to vector<128x64xf32>
    %80 = arith.subf %78, %79 : vector<128x64xf32>
    %81 = arith.select %75, %73, %80 : vector<128x64xi1>, vector<128x64xf32>
    %82 = arith.addf %71, %81 : vector<128x64xf32>
    %83 = vector.extract_strided_slice %25 {offsets = [256, 0], sizes = [128, 64], strides = [1, 1]} : vector<1024x64xbf16> to vector<128x64xbf16>
    %c0_39 = arith.constant 0 : index
    %c0_40 = arith.constant 0 : index
    %c0_41 = arith.constant 0 : index
    %84 = vector.load %arg2[%c0_39, %c0_40, %c0_41] : memref<35x64x64xbf16, #tpu.memory_space<vmem>>, vector<1x64x64xbf16>
    %85 = vector.shape_cast %84 : vector<1x64x64xbf16> to vector<64x64xbf16>
    %cst_42 = arith.constant dense<0.000000e+00> : vector<128x64xf32>
    %86 = tpu.matmul %83, %85, %cst_42 {dimension_numbers = #tpu.dot_dimension_numbers<[1], [0], [0], [1], [0, 0, 1, 1], [], []>} : vector<128x64xbf16>, vector<64x64xbf16>, vector<128x64xf32> -> vector<128x64xf32>
    %87 = vector.extract_strided_slice %25 {offsets = [320, 0], sizes = [128, 64], strides = [1, 1]} : vector<1024x64xbf16> to vector<128x64xbf16>
    %c1_43 = arith.constant 1 : index
    %c0_44 = arith.constant 0 : index
    %c0_45 = arith.constant 0 : index
    %88 = vector.load %arg2[%c1_43, %c0_44, %c0_45] : memref<35x64x64xbf16, #tpu.memory_space<vmem>>, vector<1x64x64xbf16>
    %89 = vector.shape_cast %88 : vector<1x64x64xbf16> to vector<64x64xbf16>
    %cst_46 = arith.constant dense<0.000000e+00> : vector<128x64xf32>
    %90 = tpu.matmul %87, %89, %cst_46 {dimension_numbers = #tpu.dot_dimension_numbers<[1], [0], [0], [1], [0, 0, 1, 1], [], []>} : vector<128x64xbf16>, vector<64x64xbf16>, vector<128x64xf32> -> vector<128x64xf32>
    %91 = arith.addf %86, %90 : vector<128x64xf32>
    %92 = vector.extract_strided_slice %25 {offsets = [384, 0], sizes = [128, 64], strides = [1, 1]} : vector<1024x64xbf16> to vector<128x64xbf16>
    %c2_47 = arith.constant 2 : index
    %c0_48 = arith.constant 0 : index
    %c0_49 = arith.constant 0 : index
    %93 = vector.load %arg2[%c2_47, %c0_48, %c0_49] : memref<35x64x64xbf16, #tpu.memory_space<vmem>>, vector<1x64x64xbf16>
    %94 = vector.shape_cast %93 : vector<1x64x64xbf16> to vector<64x64xbf16>
    %cst_50 = arith.constant dense<0.000000e+00> : vector<128x64xf32>
    %95 = tpu.matmul %92, %94, %cst_50 {dimension_numbers = #tpu.dot_dimension_numbers<[1], [0], [0], [1], [0, 0, 1, 1], [], []>} : vector<128x64xbf16>, vector<64x64xbf16>, vector<128x64xf32> -> vector<128x64xf32>
    %96 = arith.addf %91, %95 : vector<128x64xf32>
    %97 = vector.extract_strided_slice %25 {offsets = [512, 0], sizes = [128, 64], strides = [1, 1]} : vector<1024x64xbf16> to vector<128x64xbf16>
    %c3_51 = arith.constant 3 : index
    %c0_52 = arith.constant 0 : index
    %c0_53 = arith.constant 0 : index
    %98 = vector.load %arg2[%c3_51, %c0_52, %c0_53] : memref<35x64x64xbf16, #tpu.memory_space<vmem>>, vector<1x64x64xbf16>
    %99 = vector.shape_cast %98 : vector<1x64x64xbf16> to vector<64x64xbf16>
    %cst_54 = arith.constant dense<0.000000e+00> : vector<128x64xf32>
    %100 = tpu.matmul %97, %99, %cst_54 {dimension_numbers = #tpu.dot_dimension_numbers<[1], [0], [0], [1], [0, 0, 1, 1], [], []>} : vector<128x64xbf16>, vector<64x64xbf16>, vector<128x64xf32> -> vector<128x64xf32>
    %101 = arith.addf %96, %100 : vector<128x64xf32>
    %102 = vector.extract_strided_slice %25 {offsets = [576, 0], sizes = [128, 64], strides = [1, 1]} : vector<1024x64xbf16> to vector<128x64xbf16>
    %c4_55 = arith.constant 4 : index
    %c0_56 = arith.constant 0 : index
    %c0_57 = arith.constant 0 : index
    %103 = vector.load %arg2[%c4_55, %c0_56, %c0_57] : memref<35x64x64xbf16, #tpu.memory_space<vmem>>, vector<1x64x64xbf16>
    %104 = vector.shape_cast %103 : vector<1x64x64xbf16> to vector<64x64xbf16>
    %cst_58 = arith.constant dense<0.000000e+00> : vector<128x64xf32>
    %105 = tpu.matmul %102, %104, %cst_58 {dimension_numbers = #tpu.dot_dimension_numbers<[1], [0], [0], [1], [0, 0, 1, 1], [], []>} : vector<128x64xbf16>, vector<64x64xbf16>, vector<128x64xf32> -> vector<128x64xf32>
    %106 = arith.addf %101, %105 : vector<128x64xf32>
    %107 = vector.extract_strided_slice %25 {offsets = [640, 0], sizes = [128, 64], strides = [1, 1]} : vector<1024x64xbf16> to vector<128x64xbf16>
    %c5_59 = arith.constant 5 : index
    %c0_60 = arith.constant 0 : index
    %c0_61 = arith.constant 0 : index
    %108 = vector.load %arg2[%c5_59, %c0_60, %c0_61] : memref<35x64x64xbf16, #tpu.memory_space<vmem>>, vector<1x64x64xbf16>
    %109 = vector.shape_cast %108 : vector<1x64x64xbf16> to vector<64x64xbf16>
    %cst_62 = arith.constant dense<0.000000e+00> : vector<128x64xf32>
    %110 = tpu.matmul %107, %109, %cst_62 {dimension_numbers = #tpu.dot_dimension_numbers<[1], [0], [0], [1], [0, 0, 1, 1], [], []>} : vector<128x64xbf16>, vector<64x64xbf16>, vector<128x64xf32> -> vector<128x64xf32>
    %111 = arith.addf %106, %110 : vector<128x64xf32>
    %112 = vector.extract_strided_slice %25 {offsets = [768, 0], sizes = [128, 64], strides = [1, 1]} : vector<1024x64xbf16> to vector<128x64xbf16>
    %c6_63 = arith.constant 6 : index
    %c0_64 = arith.constant 0 : index
    %c0_65 = arith.constant 0 : index
    %113 = vector.load %arg2[%c6_63, %c0_64, %c0_65] : memref<35x64x64xbf16, #tpu.memory_space<vmem>>, vector<1x64x64xbf16>
    %114 = vector.shape_cast %113 : vector<1x64x64xbf16> to vector<64x64xbf16>
    %cst_66 = arith.constant dense<0.000000e+00> : vector<128x64xf32>
    %115 = tpu.matmul %112, %114, %cst_66 {dimension_numbers = #tpu.dot_dimension_numbers<[1], [0], [0], [1], [0, 0, 1, 1], [], []>} : vector<128x64xbf16>, vector<64x64xbf16>, vector<128x64xf32> -> vector<128x64xf32>
    %116 = arith.addf %111, %115 : vector<128x64xf32>
    %117 = vector.extract_strided_slice %25 {offsets = [832, 0], sizes = [128, 64], strides = [1, 1]} : vector<1024x64xbf16> to vector<128x64xbf16>
    %c7_67 = arith.constant 7 : index
    %c0_68 = arith.constant 0 : index
    %c0_69 = arith.constant 0 : index
    %118 = vector.load %arg2[%c7_67, %c0_68, %c0_69] : memref<35x64x64xbf16, #tpu.memory_space<vmem>>, vector<1x64x64xbf16>
    %119 = vector.shape_cast %118 : vector<1x64x64xbf16> to vector<64x64xbf16>
    %cst_70 = arith.constant dense<0.000000e+00> : vector<128x64xf32>
    %120 = tpu.matmul %117, %119, %cst_70 {dimension_numbers = #tpu.dot_dimension_numbers<[1], [0], [0], [1], [0, 0, 1, 1], [], []>} : vector<128x64xbf16>, vector<64x64xbf16>, vector<128x64xf32> -> vector<128x64xf32>
    %121 = arith.addf %116, %120 : vector<128x64xf32>
    %122 = vector.extract_strided_slice %25 {offsets = [896, 0], sizes = [128, 64], strides = [1, 1]} : vector<1024x64xbf16> to vector<128x64xbf16>
    %c8_71 = arith.constant 8 : index
    %c0_72 = arith.constant 0 : index
    %c0_73 = arith.constant 0 : index
    %123 = vector.load %arg2[%c8_71, %c0_72, %c0_73] : memref<35x64x64xbf16, #tpu.memory_space<vmem>>, vector<1x64x64xbf16>
    %124 = vector.shape_cast %123 : vector<1x64x64xbf16> to vector<64x64xbf16>
    %cst_74 = arith.constant dense<0.000000e+00> : vector<128x64xf32>
    %125 = tpu.matmul %122, %124, %cst_74 {dimension_numbers = #tpu.dot_dimension_numbers<[1], [0], [0], [1], [0, 0, 1, 1], [], []>} : vector<128x64xbf16>, vector<64x64xbf16>, vector<128x64xf32> -> vector<128x64xf32>
    %126 = arith.addf %121, %125 : vector<128x64xf32>
    %127 = vector.extract_strided_slice %24 {offsets = [896, 0], sizes = [128, 64], strides = [1, 1]} : vector<1024x64xf32> to vector<128x64xf32>
    %128 = vector.broadcast %26 : vector<1x64xf32> to vector<128x64xf32>
    %129 = arith.addf %126, %128 : vector<128x64xf32>
    %cst_75 = arith.constant 0.000000e+00 : f32
    %130 = vector.broadcast %cst_75 : f32 to vector<128x64xf32>
    %131 = arith.cmpf ogt, %129, %130 : vector<128x64xf32>
    %cst_76 = arith.constant 0.000000e+00 : f32
    %132 = vector.broadcast %cst_76 : f32 to vector<128x64xf32>
    %133 = arith.minimumf %129, %132 : vector<128x64xf32>
    %134 = math.exp %133 : vector<128x64xf32>
    %cst_77 = arith.constant 1.000000e+00 : f32
    %135 = vector.broadcast %cst_77 : f32 to vector<128x64xf32>
    %136 = arith.subf %134, %135 : vector<128x64xf32>
    %137 = arith.select %131, %129, %136 : vector<128x64xi1>, vector<128x64xf32>
    %138 = arith.addf %127, %137 : vector<128x64xf32>
    %139 = tpu.concatenate %82, %138 in 0 : vector<128x64xf32>, vector<128x64xf32> -> vector<256x64xf32>
    %140 = arith.truncf %139 : vector<256x64xf32> to vector<256x64xbf16>
    %141 = vector.extract_strided_slice %3 {offsets = [1, 0], sizes = [1, 64], strides = [1, 1]} : vector<16x128xf32> to vector<1x64xf32>
    %142 = vector.extract_strided_slice %140 {offsets = [0, 0], sizes = [64, 64], strides = [1, 1]} : vector<256x64xbf16> to vector<64x64xbf16>
    %c9 = arith.constant 9 : index
    %c0_78 = arith.constant 0 : index
    %c0_79 = arith.constant 0 : index
    %143 = vector.load %arg2[%c9, %c0_78, %c0_79] : memref<35x64x64xbf16, #tpu.memory_space<vmem>>, vector<1x64x64xbf16>
    %144 = vector.shape_cast %143 : vector<1x64x64xbf16> to vector<64x64xbf16>
    %cst_80 = arith.constant dense<0.000000e+00> : vector<64x64xf32>
    %145 = tpu.matmul %142, %144, %cst_80 {dimension_numbers = #tpu.dot_dimension_numbers<[1], [0], [0], [1], [0, 0, 1, 1], [], []>} : vector<64x64xbf16>, vector<64x64xbf16>, vector<64x64xf32> -> vector<64x64xf32>
    %146 = vector.extract_strided_slice %140 {offsets = [32, 0], sizes = [64, 64], strides = [1, 1]} : vector<256x64xbf16> to vector<64x64xbf16>
    %c10 = arith.constant 10 : index
    %c0_81 = arith.constant 0 : index
    %c0_82 = arith.constant 0 : index
    %147 = vector.load %arg2[%c10, %c0_81, %c0_82] : memref<35x64x64xbf16, #tpu.memory_space<vmem>>, vector<1x64x64xbf16>
    %148 = vector.shape_cast %147 : vector<1x64x64xbf16> to vector<64x64xbf16>
    %cst_83 = arith.constant dense<0.000000e+00> : vector<64x64xf32>
    %149 = tpu.matmul %146, %148, %cst_83 {dimension_numbers = #tpu.dot_dimension_numbers<[1], [0], [0], [1], [0, 0, 1, 1], [], []>} : vector<64x64xbf16>, vector<64x64xbf16>, vector<64x64xf32> -> vector<64x64xf32>
    %150 = arith.addf %145, %149 : vector<64x64xf32>
    %151 = vector.extract_strided_slice %140 {offsets = [64, 0], sizes = [64, 64], strides = [1, 1]} : vector<256x64xbf16> to vector<64x64xbf16>
    %c11 = arith.constant 11 : index
    %c0_84 = arith.constant 0 : index
    %c0_85 = arith.constant 0 : index
    %152 = vector.load %arg2[%c11, %c0_84, %c0_85] : memref<35x64x64xbf16, #tpu.memory_space<vmem>>, vector<1x64x64xbf16>
    %153 = vector.shape_cast %152 : vector<1x64x64xbf16> to vector<64x64xbf16>
    %cst_86 = arith.constant dense<0.000000e+00> : vector<64x64xf32>
    %154 = tpu.matmul %151, %153, %cst_86 {dimension_numbers = #tpu.dot_dimension_numbers<[1], [0], [0], [1], [0, 0, 1, 1], [], []>} : vector<64x64xbf16>, vector<64x64xbf16>, vector<64x64xf32> -> vector<64x64xf32>
    %155 = arith.addf %150, %154 : vector<64x64xf32>
    %156 = vector.extract_strided_slice %139 {offsets = [64, 0], sizes = [64, 64], strides = [1, 1]} : vector<256x64xf32> to vector<64x64xf32>
    %157 = vector.broadcast %141 : vector<1x64xf32> to vector<64x64xf32>
    %158 = arith.addf %155, %157 : vector<64x64xf32>
    %cst_87 = arith.constant 0.000000e+00 : f32
    %159 = vector.broadcast %cst_87 : f32 to vector<64x64xf32>
    %160 = arith.cmpf ogt, %158, %159 : vector<64x64xf32>
    %cst_88 = arith.constant 0.000000e+00 : f32
    %161 = vector.broadcast %cst_88 : f32 to vector<64x64xf32>
    %162 = arith.minimumf %158, %161 : vector<64x64xf32>
    %163 = math.exp %162 : vector<64x64xf32>
    %cst_89 = arith.constant 1.000000e+00 : f32
    %164 = vector.broadcast %cst_89 : f32 to vector<64x64xf32>
    %165 = arith.subf %163, %164 : vector<64x64xf32>
    %166 = arith.select %160, %158, %165 : vector<64x64xi1>, vector<64x64xf32>
    %167 = arith.addf %156, %166 : vector<64x64xf32>
    %168 = vector.extract_strided_slice %140 {offsets = [128, 0], sizes = [64, 64], strides = [1, 1]} : vector<256x64xbf16> to vector<64x64xbf16>
    %c9_90 = arith.constant 9 : index
    %c0_91 = arith.constant 0 : index
    %c0_92 = arith.constant 0 : index
    %169 = vector.load %arg2[%c9_90, %c0_91, %c0_92] : memref<35x64x64xbf16, #tpu.memory_space<vmem>>, vector<1x64x64xbf16>
    %170 = vector.shape_cast %169 : vector<1x64x64xbf16> to vector<64x64xbf16>
    %cst_93 = arith.constant dense<0.000000e+00> : vector<64x64xf32>
    %171 = tpu.matmul %168, %170, %cst_93 {dimension_numbers = #tpu.dot_dimension_numbers<[1], [0], [0], [1], [0, 0, 1, 1], [], []>} : vector<64x64xbf16>, vector<64x64xbf16>, vector<64x64xf32> -> vector<64x64xf32>
    %172 = vector.extract_strided_slice %140 {offsets = [160, 0], sizes = [64, 64], strides = [1, 1]} : vector<256x64xbf16> to vector<64x64xbf16>
    %c10_94 = arith.constant 10 : index
    %c0_95 = arith.constant 0 : index
    %c0_96 = arith.constant 0 : index
    %173 = vector.load %arg2[%c10_94, %c0_95, %c0_96] : memref<35x64x64xbf16, #tpu.memory_space<vmem>>, vector<1x64x64xbf16>
    %174 = vector.shape_cast %173 : vector<1x64x64xbf16> to vector<64x64xbf16>
    %cst_97 = arith.constant dense<0.000000e+00> : vector<64x64xf32>
    %175 = tpu.matmul %172, %174, %cst_97 {dimension_numbers = #tpu.dot_dimension_numbers<[1], [0], [0], [1], [0, 0, 1, 1], [], []>} : vector<64x64xbf16>, vector<64x64xbf16>, vector<64x64xf32> -> vector<64x64xf32>
    %176 = arith.addf %171, %175 : vector<64x64xf32>
    %177 = vector.extract_strided_slice %140 {offsets = [192, 0], sizes = [64, 64], strides = [1, 1]} : vector<256x64xbf16> to vector<64x64xbf16>
    %c11_98 = arith.constant 11 : index
    %c0_99 = arith.constant 0 : index
    %c0_100 = arith.constant 0 : index
    %178 = vector.load %arg2[%c11_98, %c0_99, %c0_100] : memref<35x64x64xbf16, #tpu.memory_space<vmem>>, vector<1x64x64xbf16>
    %179 = vector.shape_cast %178 : vector<1x64x64xbf16> to vector<64x64xbf16>
    %cst_101 = arith.constant dense<0.000000e+00> : vector<64x64xf32>
    %180 = tpu.matmul %177, %179, %cst_101 {dimension_numbers = #tpu.dot_dimension_numbers<[1], [0], [0], [1], [0, 0, 1, 1], [], []>} : vector<64x64xbf16>, vector<64x64xbf16>, vector<64x64xf32> -> vector<64x64xf32>
    %181 = arith.addf %176, %180 : vector<64x64xf32>
    %182 = vector.extract_strided_slice %139 {offsets = [192, 0], sizes = [64, 64], strides = [1, 1]} : vector<256x64xf32> to vector<64x64xf32>
    %183 = vector.broadcast %141 : vector<1x64xf32> to vector<64x64xf32>
    %184 = arith.addf %181, %183 : vector<64x64xf32>
    %cst_102 = arith.constant 0.000000e+00 : f32
    %185 = vector.broadcast %cst_102 : f32 to vector<64x64xf32>
    %186 = arith.cmpf ogt, %184, %185 : vector<64x64xf32>
    %cst_103 = arith.constant 0.000000e+00 : f32
    %187 = vector.broadcast %cst_103 : f32 to vector<64x64xf32>
    %188 = arith.minimumf %184, %187 : vector<64x64xf32>
    %189 = math.exp %188 : vector<64x64xf32>
    %cst_104 = arith.constant 1.000000e+00 : f32
    %190 = vector.broadcast %cst_104 : f32 to vector<64x64xf32>
    %191 = arith.subf %189, %190 : vector<64x64xf32>
    %192 = arith.select %186, %184, %191 : vector<64x64xi1>, vector<64x64xf32>
    %193 = arith.addf %182, %192 : vector<64x64xf32>
    %194 = tpu.concatenate %167, %193 in 0 : vector<64x64xf32>, vector<64x64xf32> -> vector<128x64xf32>
    %195 = arith.truncf %194 : vector<128x64xf32> to vector<128x64xbf16>
    %196 = vector.extract_strided_slice %3 {offsets = [2, 0], sizes = [1, 64], strides = [1, 1]} : vector<16x128xf32> to vector<1x64xf32>
    %197 = vector.extract_strided_slice %195 {offsets = [0, 0], sizes = [32, 64], strides = [1, 1]} : vector<128x64xbf16> to vector<32x64xbf16>
    %c12 = arith.constant 12 : index
    %c0_105 = arith.constant 0 : index
    %c0_106 = arith.constant 0 : index
    %198 = vector.load %arg2[%c12, %c0_105, %c0_106] : memref<35x64x64xbf16, #tpu.memory_space<vmem>>, vector<1x64x64xbf16>
    %199 = vector.shape_cast %198 : vector<1x64x64xbf16> to vector<64x64xbf16>
    %cst_107 = arith.constant dense<0.000000e+00> : vector<32x64xf32>
    %200 = tpu.matmul %197, %199, %cst_107 {dimension_numbers = #tpu.dot_dimension_numbers<[1], [0], [0], [1], [0, 0, 1, 1], [], []>} : vector<32x64xbf16>, vector<64x64xbf16>, vector<32x64xf32> -> vector<32x64xf32>
    %201 = vector.extract_strided_slice %195 {offsets = [32, 0], sizes = [32, 64], strides = [1, 1]} : vector<128x64xbf16> to vector<32x64xbf16>
    %c13 = arith.constant 13 : index
    %c0_108 = arith.constant 0 : index
    %c0_109 = arith.constant 0 : index
    %202 = vector.load %arg2[%c13, %c0_108, %c0_109] : memref<35x64x64xbf16, #tpu.memory_space<vmem>>, vector<1x64x64xbf16>
    %203 = vector.shape_cast %202 : vector<1x64x64xbf16> to vector<64x64xbf16>
    %cst_110 = arith.constant dense<0.000000e+00> : vector<32x64xf32>
    %204 = tpu.matmul %201, %203, %cst_110 {dimension_numbers = #tpu.dot_dimension_numbers<[1], [0], [0], [1], [0, 0, 1, 1], [], []>} : vector<32x64xbf16>, vector<64x64xbf16>, vector<32x64xf32> -> vector<32x64xf32>
    %205 = arith.addf %200, %204 : vector<32x64xf32>
    %206 = vector.extract_strided_slice %195 {offsets = [64, 0], sizes = [32, 64], strides = [1, 1]} : vector<128x64xbf16> to vector<32x64xbf16>
    %c14 = arith.constant 14 : index
    %c0_111 = arith.constant 0 : index
    %c0_112 = arith.constant 0 : index
    %207 = vector.load %arg2[%c14, %c0_111, %c0_112] : memref<35x64x64xbf16, #tpu.memory_space<vmem>>, vector<1x64x64xbf16>
    %208 = vector.shape_cast %207 : vector<1x64x64xbf16> to vector<64x64xbf16>
    %cst_113 = arith.constant dense<0.000000e+00> : vector<32x64xf32>
    %209 = tpu.matmul %206, %208, %cst_113 {dimension_numbers = #tpu.dot_dimension_numbers<[1], [0], [0], [1], [0, 0, 1, 1], [], []>} : vector<32x64xbf16>, vector<64x64xbf16>, vector<32x64xf32> -> vector<32x64xf32>
    %210 = arith.addf %205, %209 : vector<32x64xf32>
    %211 = vector.extract_strided_slice %195 {offsets = [96, 0], sizes = [32, 64], strides = [1, 1]} : vector<128x64xbf16> to vector<32x64xbf16>
    %c15 = arith.constant 15 : index
    %c0_114 = arith.constant 0 : index
    %c0_115 = arith.constant 0 : index
    %212 = vector.load %arg2[%c15, %c0_114, %c0_115] : memref<35x64x64xbf16, #tpu.memory_space<vmem>>, vector<1x64x64xbf16>
    %213 = vector.shape_cast %212 : vector<1x64x64xbf16> to vector<64x64xbf16>
    %cst_116 = arith.constant dense<0.000000e+00> : vector<32x64xf32>
    %214 = tpu.matmul %211, %213, %cst_116 {dimension_numbers = #tpu.dot_dimension_numbers<[1], [0], [0], [1], [0, 0, 1, 1], [], []>} : vector<32x64xbf16>, vector<64x64xbf16>, vector<32x64xf32> -> vector<32x64xf32>
    %215 = arith.addf %210, %214 : vector<32x64xf32>
    %216 = vector.extract_strided_slice %194 {offsets = [96, 0], sizes = [32, 64], strides = [1, 1]} : vector<128x64xf32> to vector<32x64xf32>
    %217 = vector.broadcast %196 : vector<1x64xf32> to vector<32x64xf32>
    %218 = arith.addf %215, %217 : vector<32x64xf32>
    %cst_117 = arith.constant 0.000000e+00 : f32
    %219 = vector.broadcast %cst_117 : f32 to vector<32x64xf32>
    %220 = arith.cmpf ogt, %218, %219 : vector<32x64xf32>
    %cst_118 = arith.constant 0.000000e+00 : f32
    %221 = vector.broadcast %cst_118 : f32 to vector<32x64xf32>
    %222 = arith.minimumf %218, %221 : vector<32x64xf32>
    %223 = math.exp %222 : vector<32x64xf32>
    %cst_119 = arith.constant 1.000000e+00 : f32
    %224 = vector.broadcast %cst_119 : f32 to vector<32x64xf32>
    %225 = arith.subf %223, %224 : vector<32x64xf32>
    %226 = arith.select %220, %218, %225 : vector<32x64xi1>, vector<32x64xf32>
    %227 = arith.addf %216, %226 : vector<32x64xf32>
    %228 = vector.extract_strided_slice %3 {offsets = [3, 0], sizes = [1, 64], strides = [1, 1]} : vector<16x128xf32> to vector<1x64xf32>
    %229 = vector.extract_strided_slice %24 {offsets = [0, 0], sizes = [256, 64], strides = [1, 1]} : vector<1024x64xf32> to vector<256x64xf32>
    %230 = vector.extract_strided_slice %24 {offsets = [256, 0], sizes = [256, 64], strides = [1, 1]} : vector<1024x64xf32> to vector<256x64xf32>
    %231 = arith.maximumf %229, %230 : vector<256x64xf32>
    %232 = arith.minimumf %229, %230 : vector<256x64xf32>
    %233 = vector.extract_strided_slice %231 {offsets = [0, 0], sizes = [32, 64], strides = [1, 1]} : vector<256x64xf32> to vector<32x64xf32>
    %234 = vector.extract_strided_slice %232 {offsets = [0, 0], sizes = [32, 64], strides = [1, 1]} : vector<256x64xf32> to vector<32x64xf32>
    %235 = vector.extract_strided_slice %231 {offsets = [32, 0], sizes = [32, 64], strides = [1, 1]} : vector<256x64xf32> to vector<32x64xf32>
    %236 = arith.maximumf %233, %235 : vector<32x64xf32>
    %237 = vector.extract_strided_slice %232 {offsets = [32, 0], sizes = [32, 64], strides = [1, 1]} : vector<256x64xf32> to vector<32x64xf32>
    %238 = arith.minimumf %234, %237 : vector<32x64xf32>
    %239 = vector.extract_strided_slice %231 {offsets = [64, 0], sizes = [32, 64], strides = [1, 1]} : vector<256x64xf32> to vector<32x64xf32>
    %240 = vector.extract_strided_slice %232 {offsets = [64, 0], sizes = [32, 64], strides = [1, 1]} : vector<256x64xf32> to vector<32x64xf32>
    %241 = vector.extract_strided_slice %231 {offsets = [96, 0], sizes = [32, 64], strides = [1, 1]} : vector<256x64xf32> to vector<32x64xf32>
    %242 = arith.maximumf %239, %241 : vector<32x64xf32>
    %243 = vector.extract_strided_slice %232 {offsets = [96, 0], sizes = [32, 64], strides = [1, 1]} : vector<256x64xf32> to vector<32x64xf32>
    %244 = arith.minimumf %240, %243 : vector<32x64xf32>
    %245 = vector.extract_strided_slice %231 {offsets = [128, 0], sizes = [32, 64], strides = [1, 1]} : vector<256x64xf32> to vector<32x64xf32>
    %246 = vector.extract_strided_slice %232 {offsets = [128, 0], sizes = [32, 64], strides = [1, 1]} : vector<256x64xf32> to vector<32x64xf32>
    %247 = vector.extract_strided_slice %231 {offsets = [160, 0], sizes = [32, 64], strides = [1, 1]} : vector<256x64xf32> to vector<32x64xf32>
    %248 = arith.maximumf %245, %247 : vector<32x64xf32>
    %249 = vector.extract_strided_slice %232 {offsets = [160, 0], sizes = [32, 64], strides = [1, 1]} : vector<256x64xf32> to vector<32x64xf32>
    %250 = arith.minimumf %246, %249 : vector<32x64xf32>
    %251 = vector.extract_strided_slice %231 {offsets = [192, 0], sizes = [32, 64], strides = [1, 1]} : vector<256x64xf32> to vector<32x64xf32>
    %252 = vector.extract_strided_slice %232 {offsets = [192, 0], sizes = [32, 64], strides = [1, 1]} : vector<256x64xf32> to vector<32x64xf32>
    %253 = vector.extract_strided_slice %231 {offsets = [224, 0], sizes = [32, 64], strides = [1, 1]} : vector<256x64xf32> to vector<32x64xf32>
    %254 = arith.maximumf %251, %253 : vector<32x64xf32>
    %255 = vector.extract_strided_slice %232 {offsets = [224, 0], sizes = [32, 64], strides = [1, 1]} : vector<256x64xf32> to vector<32x64xf32>
    %256 = arith.minimumf %252, %255 : vector<32x64xf32>
    %257 = tpu.concatenate %236, %242, %248, %254 in 0 : vector<32x64xf32>, vector<32x64xf32>, vector<32x64xf32>, vector<32x64xf32> -> vector<128x64xf32>
    %258 = tpu.concatenate %238, %244, %250, %256 in 0 : vector<32x64xf32>, vector<32x64xf32>, vector<32x64xf32>, vector<32x64xf32> -> vector<128x64xf32>
    %259 = arith.truncf %257 : vector<128x64xf32> to vector<128x64xbf16>
    %c16 = arith.constant 16 : index
    %c0_120 = arith.constant 0 : index
    %c0_121 = arith.constant 0 : index
    %260 = vector.load %arg2[%c16, %c0_120, %c0_121] : memref<35x64x64xbf16, #tpu.memory_space<vmem>>, vector<1x64x64xbf16>
    %261 = vector.shape_cast %260 : vector<1x64x64xbf16> to vector<64x64xbf16>
    %cst_122 = arith.constant dense<0.000000e+00> : vector<128x64xf32>
    %262 = tpu.matmul %259, %261, %cst_122 {dimension_numbers = #tpu.dot_dimension_numbers<[1], [0], [0], [1], [0, 0, 1, 1], [], []>} : vector<128x64xbf16>, vector<64x64xbf16>, vector<128x64xf32> -> vector<128x64xf32>
    %263 = arith.truncf %258 : vector<128x64xf32> to vector<128x64xbf16>
    %c17 = arith.constant 17 : index
    %c0_123 = arith.constant 0 : index
    %c0_124 = arith.constant 0 : index
    %264 = vector.load %arg2[%c17, %c0_123, %c0_124] : memref<35x64x64xbf16, #tpu.memory_space<vmem>>, vector<1x64x64xbf16>
    %265 = vector.shape_cast %264 : vector<1x64x64xbf16> to vector<64x64xbf16>
    %cst_125 = arith.constant dense<0.000000e+00> : vector<128x64xf32>
    %266 = tpu.matmul %263, %265, %cst_125 {dimension_numbers = #tpu.dot_dimension_numbers<[1], [0], [0], [1], [0, 0, 1, 1], [], []>} : vector<128x64xbf16>, vector<64x64xbf16>, vector<128x64xf32> -> vector<128x64xf32>
    %267 = arith.addf %262, %266 : vector<128x64xf32>
    %268 = vector.extract_strided_slice %24 {offsets = [640, 0], sizes = [128, 64], strides = [1, 1]} : vector<1024x64xf32> to vector<128x64xf32>
    %269 = vector.broadcast %228 : vector<1x64xf32> to vector<128x64xf32>
    %270 = arith.addf %267, %269 : vector<128x64xf32>
    %cst_126 = arith.constant 0.000000e+00 : f32
    %271 = vector.broadcast %cst_126 : f32 to vector<128x64xf32>
    %272 = arith.cmpf ogt, %270, %271 : vector<128x64xf32>
    %cst_127 = arith.constant 0.000000e+00 : f32
    %273 = vector.broadcast %cst_127 : f32 to vector<128x64xf32>
    %274 = arith.minimumf %270, %273 : vector<128x64xf32>
    %275 = math.exp %274 : vector<128x64xf32>
    %cst_128 = arith.constant 1.000000e+00 : f32
    %276 = vector.broadcast %cst_128 : f32 to vector<128x64xf32>
    %277 = arith.subf %275, %276 : vector<128x64xf32>
    %278 = arith.select %272, %270, %277 : vector<128x64xi1>, vector<128x64xf32>
    %279 = arith.addf %268, %278 : vector<128x64xf32>
    %280 = vector.extract_strided_slice %24 {offsets = [512, 0], sizes = [256, 64], strides = [1, 1]} : vector<1024x64xf32> to vector<256x64xf32>
    %281 = vector.extract_strided_slice %24 {offsets = [768, 0], sizes = [256, 64], strides = [1, 1]} : vector<1024x64xf32> to vector<256x64xf32>
    %282 = arith.maximumf %280, %281 : vector<256x64xf32>
    %283 = arith.minimumf %280, %281 : vector<256x64xf32>
    %284 = vector.extract_strided_slice %282 {offsets = [0, 0], sizes = [32, 64], strides = [1, 1]} : vector<256x64xf32> to vector<32x64xf32>
    %285 = vector.extract_strided_slice %283 {offsets = [0, 0], sizes = [32, 64], strides = [1, 1]} : vector<256x64xf32> to vector<32x64xf32>
    %286 = vector.extract_strided_slice %282 {offsets = [32, 0], sizes = [32, 64], strides = [1, 1]} : vector<256x64xf32> to vector<32x64xf32>
    %287 = arith.maximumf %284, %286 : vector<32x64xf32>
    %288 = vector.extract_strided_slice %283 {offsets = [32, 0], sizes = [32, 64], strides = [1, 1]} : vector<256x64xf32> to vector<32x64xf32>
    %289 = arith.minimumf %285, %288 : vector<32x64xf32>
    %290 = vector.extract_strided_slice %282 {offsets = [64, 0], sizes = [32, 64], strides = [1, 1]} : vector<256x64xf32> to vector<32x64xf32>
    %291 = vector.extract_strided_slice %283 {offsets = [64, 0], sizes = [32, 64], strides = [1, 1]} : vector<256x64xf32> to vector<32x64xf32>
    %292 = vector.extract_strided_slice %282 {offsets = [96, 0], sizes = [32, 64], strides = [1, 1]} : vector<256x64xf32> to vector<32x64xf32>
    %293 = arith.maximumf %290, %292 : vector<32x64xf32>
    %294 = vector.extract_strided_slice %283 {offsets = [96, 0], sizes = [32, 64], strides = [1, 1]} : vector<256x64xf32> to vector<32x64xf32>
    %295 = arith.minimumf %291, %294 : vector<32x64xf32>
    %296 = vector.extract_strided_slice %282 {offsets = [128, 0], sizes = [32, 64], strides = [1, 1]} : vector<256x64xf32> to vector<32x64xf32>
    %297 = vector.extract_strided_slice %283 {offsets = [128, 0], sizes = [32, 64], strides = [1, 1]} : vector<256x64xf32> to vector<32x64xf32>
    %298 = vector.extract_strided_slice %282 {offsets = [160, 0], sizes = [32, 64], strides = [1, 1]} : vector<256x64xf32> to vector<32x64xf32>
    %299 = arith.maximumf %296, %298 : vector<32x64xf32>
    %300 = vector.extract_strided_slice %283 {offsets = [160, 0], sizes = [32, 64], strides = [1, 1]} : vector<256x64xf32> to vector<32x64xf32>
    %301 = arith.minimumf %297, %300 : vector<32x64xf32>
    %302 = vector.extract_strided_slice %282 {offsets = [192, 0], sizes = [32, 64], strides = [1, 1]} : vector<256x64xf32> to vector<32x64xf32>
    %303 = vector.extract_strided_slice %283 {offsets = [192, 0], sizes = [32, 64], strides = [1, 1]} : vector<256x64xf32> to vector<32x64xf32>
    %304 = vector.extract_strided_slice %282 {offsets = [224, 0], sizes = [32, 64], strides = [1, 1]} : vector<256x64xf32> to vector<32x64xf32>
    %305 = arith.maximumf %302, %304 : vector<32x64xf32>
    %306 = vector.extract_strided_slice %283 {offsets = [224, 0], sizes = [32, 64], strides = [1, 1]} : vector<256x64xf32> to vector<32x64xf32>
    %307 = arith.minimumf %303, %306 : vector<32x64xf32>
    %308 = tpu.concatenate %287, %293, %299, %305 in 0 : vector<32x64xf32>, vector<32x64xf32>, vector<32x64xf32>, vector<32x64xf32> -> vector<128x64xf32>
    %309 = tpu.concatenate %289, %295, %301, %307 in 0 : vector<32x64xf32>, vector<32x64xf32>, vector<32x64xf32>, vector<32x64xf32> -> vector<128x64xf32>
    %310 = arith.truncf %308 : vector<128x64xf32> to vector<128x64xbf16>
    %c16_129 = arith.constant 16 : index
    %c0_130 = arith.constant 0 : index
    %c0_131 = arith.constant 0 : index
    %311 = vector.load %arg2[%c16_129, %c0_130, %c0_131] : memref<35x64x64xbf16, #tpu.memory_space<vmem>>, vector<1x64x64xbf16>
    %312 = vector.shape_cast %311 : vector<1x64x64xbf16> to vector<64x64xbf16>
    %cst_132 = arith.constant dense<0.000000e+00> : vector<128x64xf32>
    %313 = tpu.matmul %310, %312, %cst_132 {dimension_numbers = #tpu.dot_dimension_numbers<[1], [0], [0], [1], [0, 0, 1, 1], [], []>} : vector<128x64xbf16>, vector<64x64xbf16>, vector<128x64xf32> -> vector<128x64xf32>
    %314 = arith.truncf %309 : vector<128x64xf32> to vector<128x64xbf16>
    %c17_133 = arith.constant 17 : index
    %c0_134 = arith.constant 0 : index
    %c0_135 = arith.constant 0 : index
    %315 = vector.load %arg2[%c17_133, %c0_134, %c0_135] : memref<35x64x64xbf16, #tpu.memory_space<vmem>>, vector<1x64x64xbf16>
    %316 = vector.shape_cast %315 : vector<1x64x64xbf16> to vector<64x64xbf16>
    %cst_136 = arith.constant dense<0.000000e+00> : vector<128x64xf32>
    %317 = tpu.matmul %314, %316, %cst_136 {dimension_numbers = #tpu.dot_dimension_numbers<[1], [0], [0], [1], [0, 0, 1, 1], [], []>} : vector<128x64xbf16>, vector<64x64xbf16>, vector<128x64xf32> -> vector<128x64xf32>
    %318 = arith.addf %313, %317 : vector<128x64xf32>
    %319 = vector.extract_strided_slice %24 {offsets = [896, 0], sizes = [128, 64], strides = [1, 1]} : vector<1024x64xf32> to vector<128x64xf32>
    %320 = vector.broadcast %228 : vector<1x64xf32> to vector<128x64xf32>
    %321 = arith.addf %318, %320 : vector<128x64xf32>
    %cst_137 = arith.constant 0.000000e+00 : f32
    %322 = vector.broadcast %cst_137 : f32 to vector<128x64xf32>
    %323 = arith.cmpf ogt, %321, %322 : vector<128x64xf32>
    %cst_138 = arith.constant 0.000000e+00 : f32
    %324 = vector.broadcast %cst_138 : f32 to vector<128x64xf32>
    %325 = arith.minimumf %321, %324 : vector<128x64xf32>
    %326 = math.exp %325 : vector<128x64xf32>
    %cst_139 = arith.constant 1.000000e+00 : f32
    %327 = vector.broadcast %cst_139 : f32 to vector<128x64xf32>
    %328 = arith.subf %326, %327 : vector<128x64xf32>
    %329 = arith.select %323, %321, %328 : vector<128x64xi1>, vector<128x64xf32>
    %330 = arith.addf %319, %329 : vector<128x64xf32>
    %331 = tpu.concatenate %279, %330 in 0 : vector<128x64xf32>, vector<128x64xf32> -> vector<256x64xf32>
    %332 = vector.extract_strided_slice %3 {offsets = [4, 0], sizes = [1, 64], strides = [1, 1]} : vector<16x128xf32> to vector<1x64xf32>
    %333 = vector.extract_strided_slice %331 {offsets = [0, 0], sizes = [128, 64], strides = [1, 1]} : vector<256x64xf32> to vector<128x64xf32>
    %334 = vector.extract_strided_slice %331 {offsets = [128, 0], sizes = [128, 64], strides = [1, 1]} : vector<256x64xf32> to vector<128x64xf32>
    %335 = arith.maximumf %333, %334 : vector<128x64xf32>
    %336 = arith.minimumf %333, %334 : vector<128x64xf32>
    %337 = vector.extract_strided_slice %335 {offsets = [0, 0], sizes = [32, 64], strides = [1, 1]} : vector<128x64xf32> to vector<32x64xf32>
    %338 = vector.extract_strided_slice %336 {offsets = [0, 0], sizes = [32, 64], strides = [1, 1]} : vector<128x64xf32> to vector<32x64xf32>
    %339 = vector.extract_strided_slice %335 {offsets = [32, 0], sizes = [32, 64], strides = [1, 1]} : vector<128x64xf32> to vector<32x64xf32>
    %340 = arith.maximumf %337, %339 : vector<32x64xf32>
    %341 = vector.extract_strided_slice %336 {offsets = [32, 0], sizes = [32, 64], strides = [1, 1]} : vector<128x64xf32> to vector<32x64xf32>
    %342 = arith.minimumf %338, %341 : vector<32x64xf32>
    %343 = vector.extract_strided_slice %335 {offsets = [64, 0], sizes = [32, 64], strides = [1, 1]} : vector<128x64xf32> to vector<32x64xf32>
    %344 = arith.maximumf %340, %343 : vector<32x64xf32>
    %345 = vector.extract_strided_slice %336 {offsets = [64, 0], sizes = [32, 64], strides = [1, 1]} : vector<128x64xf32> to vector<32x64xf32>
    %346 = arith.minimumf %342, %345 : vector<32x64xf32>
    %347 = vector.extract_strided_slice %335 {offsets = [96, 0], sizes = [32, 64], strides = [1, 1]} : vector<128x64xf32> to vector<32x64xf32>
    %348 = arith.maximumf %344, %347 : vector<32x64xf32>
    %349 = vector.extract_strided_slice %336 {offsets = [96, 0], sizes = [32, 64], strides = [1, 1]} : vector<128x64xf32> to vector<32x64xf32>
    %350 = arith.minimumf %346, %349 : vector<32x64xf32>
    %351 = arith.truncf %348 : vector<32x64xf32> to vector<32x64xbf16>
    %c18 = arith.constant 18 : index
    %c0_140 = arith.constant 0 : index
    %c0_141 = arith.constant 0 : index
    %352 = vector.load %arg2[%c18, %c0_140, %c0_141] : memref<35x64x64xbf16, #tpu.memory_space<vmem>>, vector<1x64x64xbf16>
    %353 = vector.shape_cast %352 : vector<1x64x64xbf16> to vector<64x64xbf16>
    %cst_142 = arith.constant dense<0.000000e+00> : vector<32x64xf32>
    %354 = tpu.matmul %351, %353, %cst_142 {dimension_numbers = #tpu.dot_dimension_numbers<[1], [0], [0], [1], [0, 0, 1, 1], [], []>} : vector<32x64xbf16>, vector<64x64xbf16>, vector<32x64xf32> -> vector<32x64xf32>
    %355 = arith.truncf %350 : vector<32x64xf32> to vector<32x64xbf16>
    %c19 = arith.constant 19 : index
    %c0_143 = arith.constant 0 : index
    %c0_144 = arith.constant 0 : index
    %356 = vector.load %arg2[%c19, %c0_143, %c0_144] : memref<35x64x64xbf16, #tpu.memory_space<vmem>>, vector<1x64x64xbf16>
    %357 = vector.shape_cast %356 : vector<1x64x64xbf16> to vector<64x64xbf16>
    %cst_145 = arith.constant dense<0.000000e+00> : vector<32x64xf32>
    %358 = tpu.matmul %355, %357, %cst_145 {dimension_numbers = #tpu.dot_dimension_numbers<[1], [0], [0], [1], [0, 0, 1, 1], [], []>} : vector<32x64xbf16>, vector<64x64xbf16>, vector<32x64xf32> -> vector<32x64xf32>
    %359 = arith.addf %354, %358 : vector<32x64xf32>
    %360 = vector.extract_strided_slice %331 {offsets = [224, 0], sizes = [32, 64], strides = [1, 1]} : vector<256x64xf32> to vector<32x64xf32>
    %361 = vector.broadcast %332 : vector<1x64xf32> to vector<32x64xf32>
    %362 = arith.addf %359, %361 : vector<32x64xf32>
    %cst_146 = arith.constant 0.000000e+00 : f32
    %363 = vector.broadcast %cst_146 : f32 to vector<32x64xf32>
    %364 = arith.cmpf ogt, %362, %363 : vector<32x64xf32>
    %cst_147 = arith.constant 0.000000e+00 : f32
    %365 = vector.broadcast %cst_147 : f32 to vector<32x64xf32>
    %366 = arith.minimumf %362, %365 : vector<32x64xf32>
    %367 = math.exp %366 : vector<32x64xf32>
    %cst_148 = arith.constant 1.000000e+00 : f32
    %368 = vector.broadcast %cst_148 : f32 to vector<32x64xf32>
    %369 = arith.subf %367, %368 : vector<32x64xf32>
    %370 = arith.select %364, %362, %369 : vector<32x64xi1>, vector<32x64xf32>
    %371 = arith.addf %360, %370 : vector<32x64xf32>
    %372 = vector.extract_strided_slice %3 {offsets = [5, 0], sizes = [1, 64], strides = [1, 1]} : vector<16x128xf32> to vector<1x64xf32>
    %373 = vector.extract_strided_slice %25 {offsets = [0, 0], sizes = [256, 64], strides = [1, 1]} : vector<1024x64xbf16> to vector<256x64xbf16>
    %c20 = arith.constant 20 : index
    %c0_149 = arith.constant 0 : index
    %c0_150 = arith.constant 0 : index
    %374 = vector.load %arg2[%c20, %c0_149, %c0_150] : memref<35x64x64xbf16, #tpu.memory_space<vmem>>, vector<1x64x64xbf16>
    %375 = vector.shape_cast %374 : vector<1x64x64xbf16> to vector<64x64xbf16>
    %cst_151 = arith.constant dense<0.000000e+00> : vector<256x64xf32>
    %376 = tpu.matmul %373, %375, %cst_151 {dimension_numbers = #tpu.dot_dimension_numbers<[1], [0], [0], [1], [0, 0, 1, 1], [], []>} : vector<256x64xbf16>, vector<64x64xbf16>, vector<256x64xf32> -> vector<256x64xf32>
    %377 = vector.extract_strided_slice %25 {offsets = [256, 0], sizes = [256, 64], strides = [1, 1]} : vector<1024x64xbf16> to vector<256x64xbf16>
    %c21 = arith.constant 21 : index
    %c0_152 = arith.constant 0 : index
    %c0_153 = arith.constant 0 : index
    %378 = vector.load %arg2[%c21, %c0_152, %c0_153] : memref<35x64x64xbf16, #tpu.memory_space<vmem>>, vector<1x64x64xbf16>
    %379 = vector.shape_cast %378 : vector<1x64x64xbf16> to vector<64x64xbf16>
    %cst_154 = arith.constant dense<0.000000e+00> : vector<256x64xf32>
    %380 = tpu.matmul %377, %379, %cst_154 {dimension_numbers = #tpu.dot_dimension_numbers<[1], [0], [0], [1], [0, 0, 1, 1], [], []>} : vector<256x64xbf16>, vector<64x64xbf16>, vector<256x64xf32> -> vector<256x64xf32>
    %381 = arith.addf %376, %380 : vector<256x64xf32>
    %382 = vector.extract_strided_slice %25 {offsets = [512, 0], sizes = [256, 64], strides = [1, 1]} : vector<1024x64xbf16> to vector<256x64xbf16>
    %c22 = arith.constant 22 : index
    %c0_155 = arith.constant 0 : index
    %c0_156 = arith.constant 0 : index
    %383 = vector.load %arg2[%c22, %c0_155, %c0_156] : memref<35x64x64xbf16, #tpu.memory_space<vmem>>, vector<1x64x64xbf16>
    %384 = vector.shape_cast %383 : vector<1x64x64xbf16> to vector<64x64xbf16>
    %cst_157 = arith.constant dense<0.000000e+00> : vector<256x64xf32>
    %385 = tpu.matmul %382, %384, %cst_157 {dimension_numbers = #tpu.dot_dimension_numbers<[1], [0], [0], [1], [0, 0, 1, 1], [], []>} : vector<256x64xbf16>, vector<64x64xbf16>, vector<256x64xf32> -> vector<256x64xf32>
    %386 = arith.addf %381, %385 : vector<256x64xf32>
    %387 = vector.extract_strided_slice %25 {offsets = [768, 0], sizes = [256, 64], strides = [1, 1]} : vector<1024x64xbf16> to vector<256x64xbf16>
    %c23 = arith.constant 23 : index
    %c0_158 = arith.constant 0 : index
    %c0_159 = arith.constant 0 : index
    %388 = vector.load %arg2[%c23, %c0_158, %c0_159] : memref<35x64x64xbf16, #tpu.memory_space<vmem>>, vector<1x64x64xbf16>
    %389 = vector.shape_cast %388 : vector<1x64x64xbf16> to vector<64x64xbf16>
    %cst_160 = arith.constant dense<0.000000e+00> : vector<256x64xf32>
    %390 = tpu.matmul %387, %389, %cst_160 {dimension_numbers = #tpu.dot_dimension_numbers<[1], [0], [0], [1], [0, 0, 1, 1], [], []>} : vector<256x64xbf16>, vector<64x64xbf16>, vector<256x64xf32> -> vector<256x64xf32>
    %391 = arith.addf %386, %390 : vector<256x64xf32>
    %392 = vector.extract_strided_slice %24 {offsets = [768, 0], sizes = [256, 64], strides = [1, 1]} : vector<1024x64xf32> to vector<256x64xf32>
    %393 = vector.broadcast %372 : vector<1x64xf32> to vector<256x64xf32>
    %394 = arith.addf %391, %393 : vector<256x64xf32>
    %cst_161 = arith.constant 0.000000e+00 : f32
    %395 = vector.broadcast %cst_161 : f32 to vector<256x64xf32>
    %396 = arith.cmpf ogt, %394, %395 : vector<256x64xf32>
    %cst_162 = arith.constant 0.000000e+00 : f32
    %397 = vector.broadcast %cst_162 : f32 to vector<256x64xf32>
    %398 = arith.minimumf %394, %397 : vector<256x64xf32>
    %399 = math.exp %398 : vector<256x64xf32>
    %cst_163 = arith.constant 1.000000e+00 : f32
    %400 = vector.broadcast %cst_163 : f32 to vector<256x64xf32>
    %401 = arith.subf %399, %400 : vector<256x64xf32>
    %402 = arith.select %396, %394, %401 : vector<256x64xi1>, vector<256x64xf32>
    %403 = arith.addf %392, %402 : vector<256x64xf32>
    %404 = arith.truncf %403 : vector<256x64xf32> to vector<256x64xbf16>
    %405 = vector.extract_strided_slice %3 {offsets = [6, 0], sizes = [1, 64], strides = [1, 1]} : vector<16x128xf32> to vector<1x64xf32>
    %406 = vector.extract_strided_slice %404 {offsets = [0, 0], sizes = [32, 64], strides = [1, 1]} : vector<256x64xbf16> to vector<32x64xbf16>
    %c24 = arith.constant 24 : index
    %c0_164 = arith.constant 0 : index
    %c0_165 = arith.constant 0 : index
    %407 = vector.load %arg2[%c24, %c0_164, %c0_165] : memref<35x64x64xbf16, #tpu.memory_space<vmem>>, vector<1x64x64xbf16>
    %408 = vector.shape_cast %407 : vector<1x64x64xbf16> to vector<64x64xbf16>
    %cst_166 = arith.constant dense<0.000000e+00> : vector<32x64xf32>
    %409 = tpu.matmul %406, %408, %cst_166 {dimension_numbers = #tpu.dot_dimension_numbers<[1], [0], [0], [1], [0, 0, 1, 1], [], []>} : vector<32x64xbf16>, vector<64x64xbf16>, vector<32x64xf32> -> vector<32x64xf32>
    %410 = vector.extract_strided_slice %404 {offsets = [32, 0], sizes = [32, 64], strides = [1, 1]} : vector<256x64xbf16> to vector<32x64xbf16>
    %c25 = arith.constant 25 : index
    %c0_167 = arith.constant 0 : index
    %c0_168 = arith.constant 0 : index
    %411 = vector.load %arg2[%c25, %c0_167, %c0_168] : memref<35x64x64xbf16, #tpu.memory_space<vmem>>, vector<1x64x64xbf16>
    %412 = vector.shape_cast %411 : vector<1x64x64xbf16> to vector<64x64xbf16>
    %cst_169 = arith.constant dense<0.000000e+00> : vector<32x64xf32>
    %413 = tpu.matmul %410, %412, %cst_169 {dimension_numbers = #tpu.dot_dimension_numbers<[1], [0], [0], [1], [0, 0, 1, 1], [], []>} : vector<32x64xbf16>, vector<64x64xbf16>, vector<32x64xf32> -> vector<32x64xf32>
    %414 = arith.addf %409, %413 : vector<32x64xf32>
    %415 = vector.extract_strided_slice %404 {offsets = [64, 0], sizes = [32, 64], strides = [1, 1]} : vector<256x64xbf16> to vector<32x64xbf16>
    %c26 = arith.constant 26 : index
    %c0_170 = arith.constant 0 : index
    %c0_171 = arith.constant 0 : index
    %416 = vector.load %arg2[%c26, %c0_170, %c0_171] : memref<35x64x64xbf16, #tpu.memory_space<vmem>>, vector<1x64x64xbf16>
    %417 = vector.shape_cast %416 : vector<1x64x64xbf16> to vector<64x64xbf16>
    %cst_172 = arith.constant dense<0.000000e+00> : vector<32x64xf32>
    %418 = tpu.matmul %415, %417, %cst_172 {dimension_numbers = #tpu.dot_dimension_numbers<[1], [0], [0], [1], [0, 0, 1, 1], [], []>} : vector<32x64xbf16>, vector<64x64xbf16>, vector<32x64xf32> -> vector<32x64xf32>
    %419 = arith.addf %414, %418 : vector<32x64xf32>
    %420 = vector.extract_strided_slice %404 {offsets = [96, 0], sizes = [32, 64], strides = [1, 1]} : vector<256x64xbf16> to vector<32x64xbf16>
    %c27 = arith.constant 27 : index
    %c0_173 = arith.constant 0 : index
    %c0_174 = arith.constant 0 : index
    %421 = vector.load %arg2[%c27, %c0_173, %c0_174] : memref<35x64x64xbf16, #tpu.memory_space<vmem>>, vector<1x64x64xbf16>
    %422 = vector.shape_cast %421 : vector<1x64x64xbf16> to vector<64x64xbf16>
    %cst_175 = arith.constant dense<0.000000e+00> : vector<32x64xf32>
    %423 = tpu.matmul %420, %422, %cst_175 {dimension_numbers = #tpu.dot_dimension_numbers<[1], [0], [0], [1], [0, 0, 1, 1], [], []>} : vector<32x64xbf16>, vector<64x64xbf16>, vector<32x64xf32> -> vector<32x64xf32>
    %424 = arith.addf %419, %423 : vector<32x64xf32>
    %425 = vector.extract_strided_slice %404 {offsets = [128, 0], sizes = [32, 64], strides = [1, 1]} : vector<256x64xbf16> to vector<32x64xbf16>
    %c28 = arith.constant 28 : index
    %c0_176 = arith.constant 0 : index
    %c0_177 = arith.constant 0 : index
    %426 = vector.load %arg2[%c28, %c0_176, %c0_177] : memref<35x64x64xbf16, #tpu.memory_space<vmem>>, vector<1x64x64xbf16>
    %427 = vector.shape_cast %426 : vector<1x64x64xbf16> to vector<64x64xbf16>
    %cst_178 = arith.constant dense<0.000000e+00> : vector<32x64xf32>
    %428 = tpu.matmul %425, %427, %cst_178 {dimension_numbers = #tpu.dot_dimension_numbers<[1], [0], [0], [1], [0, 0, 1, 1], [], []>} : vector<32x64xbf16>, vector<64x64xbf16>, vector<32x64xf32> -> vector<32x64xf32>
    %429 = arith.addf %424, %428 : vector<32x64xf32>
    %430 = vector.extract_strided_slice %404 {offsets = [160, 0], sizes = [32, 64], strides = [1, 1]} : vector<256x64xbf16> to vector<32x64xbf16>
    %c29 = arith.constant 29 : index
    %c0_179 = arith.constant 0 : index
    %c0_180 = arith.constant 0 : index
    %431 = vector.load %arg2[%c29, %c0_179, %c0_180] : memref<35x64x64xbf16, #tpu.memory_space<vmem>>, vector<1x64x64xbf16>
    %432 = vector.shape_cast %431 : vector<1x64x64xbf16> to vector<64x64xbf16>
    %cst_181 = arith.constant dense<0.000000e+00> : vector<32x64xf32>
    %433 = tpu.matmul %430, %432, %cst_181 {dimension_numbers = #tpu.dot_dimension_numbers<[1], [0], [0], [1], [0, 0, 1, 1], [], []>} : vector<32x64xbf16>, vector<64x64xbf16>, vector<32x64xf32> -> vector<32x64xf32>
    %434 = arith.addf %429, %433 : vector<32x64xf32>
    %435 = vector.extract_strided_slice %404 {offsets = [192, 0], sizes = [32, 64], strides = [1, 1]} : vector<256x64xbf16> to vector<32x64xbf16>
    %c30 = arith.constant 30 : index
    %c0_182 = arith.constant 0 : index
    %c0_183 = arith.constant 0 : index
    %436 = vector.load %arg2[%c30, %c0_182, %c0_183] : memref<35x64x64xbf16, #tpu.memory_space<vmem>>, vector<1x64x64xbf16>
    %437 = vector.shape_cast %436 : vector<1x64x64xbf16> to vector<64x64xbf16>
    %cst_184 = arith.constant dense<0.000000e+00> : vector<32x64xf32>
    %438 = tpu.matmul %435, %437, %cst_184 {dimension_numbers = #tpu.dot_dimension_numbers<[1], [0], [0], [1], [0, 0, 1, 1], [], []>} : vector<32x64xbf16>, vector<64x64xbf16>, vector<32x64xf32> -> vector<32x64xf32>
    %439 = arith.addf %434, %438 : vector<32x64xf32>
    %440 = vector.extract_strided_slice %404 {offsets = [224, 0], sizes = [32, 64], strides = [1, 1]} : vector<256x64xbf16> to vector<32x64xbf16>
    %c31 = arith.constant 31 : index
    %c0_185 = arith.constant 0 : index
    %c0_186 = arith.constant 0 : index
    %441 = vector.load %arg2[%c31, %c0_185, %c0_186] : memref<35x64x64xbf16, #tpu.memory_space<vmem>>, vector<1x64x64xbf16>
    %442 = vector.shape_cast %441 : vector<1x64x64xbf16> to vector<64x64xbf16>
    %cst_187 = arith.constant dense<0.000000e+00> : vector<32x64xf32>
    %443 = tpu.matmul %440, %442, %cst_187 {dimension_numbers = #tpu.dot_dimension_numbers<[1], [0], [0], [1], [0, 0, 1, 1], [], []>} : vector<32x64xbf16>, vector<64x64xbf16>, vector<32x64xf32> -> vector<32x64xf32>
    %444 = arith.addf %439, %443 : vector<32x64xf32>
    %445 = vector.extract_strided_slice %403 {offsets = [224, 0], sizes = [32, 64], strides = [1, 1]} : vector<256x64xf32> to vector<32x64xf32>
    %446 = vector.broadcast %405 : vector<1x64xf32> to vector<32x64xf32>
    %447 = arith.addf %444, %446 : vector<32x64xf32>
    %cst_188 = arith.constant 0.000000e+00 : f32
    %448 = vector.broadcast %cst_188 : f32 to vector<32x64xf32>
    %449 = arith.cmpf ogt, %447, %448 : vector<32x64xf32>
    %cst_189 = arith.constant 0.000000e+00 : f32
    %450 = vector.broadcast %cst_189 : f32 to vector<32x64xf32>
    %451 = arith.minimumf %447, %450 : vector<32x64xf32>
    %452 = math.exp %451 : vector<32x64xf32>
    %cst_190 = arith.constant 1.000000e+00 : f32
    %453 = vector.broadcast %cst_190 : f32 to vector<32x64xf32>
    %454 = arith.subf %452, %453 : vector<32x64xf32>
    %455 = arith.select %449, %447, %454 : vector<32x64xi1>, vector<32x64xf32>
    %456 = arith.addf %445, %455 : vector<32x64xf32>
    %457 = arith.truncf %371 : vector<32x64xf32> to vector<32x64xbf16>
    %c32 = arith.constant 32 : index
    %c0_191 = arith.constant 0 : index
    %c0_192 = arith.constant 0 : index
    %458 = vector.load %arg2[%c32, %c0_191, %c0_192] : memref<35x64x64xbf16, #tpu.memory_space<vmem>>, vector<1x64x64xbf16>
    %459 = vector.shape_cast %458 : vector<1x64x64xbf16> to vector<64x64xbf16>
    %cst_193 = arith.constant dense<0.000000e+00> : vector<32x64xf32>
    %460 = tpu.matmul %457, %459, %cst_193 {dimension_numbers = #tpu.dot_dimension_numbers<[1], [0], [0], [1], [0, 0, 1, 1], [], []>} : vector<32x64xbf16>, vector<64x64xbf16>, vector<32x64xf32> -> vector<32x64xf32>
    %461 = arith.truncf %227 : vector<32x64xf32> to vector<32x64xbf16>
    %c33 = arith.constant 33 : index
    %c0_194 = arith.constant 0 : index
    %c0_195 = arith.constant 0 : index
    %462 = vector.load %arg2[%c33, %c0_194, %c0_195] : memref<35x64x64xbf16, #tpu.memory_space<vmem>>, vector<1x64x64xbf16>
    %463 = vector.shape_cast %462 : vector<1x64x64xbf16> to vector<64x64xbf16>
    %cst_196 = arith.constant dense<0.000000e+00> : vector<32x64xf32>
    %464 = tpu.matmul %461, %463, %cst_196 {dimension_numbers = #tpu.dot_dimension_numbers<[1], [0], [0], [1], [0, 0, 1, 1], [], []>} : vector<32x64xbf16>, vector<64x64xbf16>, vector<32x64xf32> -> vector<32x64xf32>
    %465 = arith.addf %460, %464 : vector<32x64xf32>
    %466 = arith.truncf %456 : vector<32x64xf32> to vector<32x64xbf16>
    %c34 = arith.constant 34 : index
    %c0_197 = arith.constant 0 : index
    %c0_198 = arith.constant 0 : index
    %467 = vector.load %arg2[%c34, %c0_197, %c0_198] : memref<35x64x64xbf16, #tpu.memory_space<vmem>>, vector<1x64x64xbf16>
    %468 = vector.shape_cast %467 : vector<1x64x64xbf16> to vector<64x64xbf16>
    %cst_199 = arith.constant dense<0.000000e+00> : vector<32x64xf32>
    %469 = tpu.matmul %466, %468, %cst_199 {dimension_numbers = #tpu.dot_dimension_numbers<[1], [0], [0], [1], [0, 0, 1, 1], [], []>} : vector<32x64xbf16>, vector<64x64xbf16>, vector<32x64xf32> -> vector<32x64xf32>
    %470 = arith.addf %465, %469 : vector<32x64xf32>
    %471 = vector.extract_strided_slice %3 {offsets = [7, 0], sizes = [1, 64], strides = [1, 1]} : vector<16x128xf32> to vector<1x64xf32>
    %472 = vector.broadcast %471 : vector<1x64xf32> to vector<32x64xf32>
    %473 = arith.addf %470, %472 : vector<32x64xf32>
    %cst_200 = arith.constant 0.000000e+00 : f32
    %474 = vector.broadcast %cst_200 : f32 to vector<32x64xf32>
    %475 = arith.cmpf ogt, %473, %474 : vector<32x64xf32>
    %cst_201 = arith.constant 0.000000e+00 : f32
    %476 = vector.broadcast %cst_201 : f32 to vector<32x64xf32>
    %477 = arith.minimumf %473, %476 : vector<32x64xf32>
    %478 = math.exp %477 : vector<32x64xf32>
    %cst_202 = arith.constant 1.000000e+00 : f32
    %479 = vector.broadcast %cst_202 : f32 to vector<32x64xf32>
    %480 = arith.subf %478, %479 : vector<32x64xf32>
    %481 = arith.select %475, %473, %480 : vector<32x64xi1>, vector<32x64xf32>
    %482 = arith.truncf %481 : vector<32x64xf32> to vector<32x64xbf16>
    %cst_203 = arith.constant dense<0.000000e+00> : vector<32x128xf32>
    %483 = tpu.matmul %482, %2, %cst_203 {dimension_numbers = #tpu.dot_dimension_numbers<[1], [0], [0], [1], [0, 0, 1, 1], [], []>} : vector<32x64xbf16>, vector<64x128xbf16>, vector<32x128xf32> -> vector<32x128xf32>
    %484 = vector.extract_strided_slice %3 {offsets = [8, 0], sizes = [1, 128], strides = [1, 1]} : vector<16x128xf32> to vector<1x128xf32>
    %485 = vector.broadcast %484 : vector<1x128xf32> to vector<32x128xf32>
    %486 = arith.addf %483, %485 : vector<32x128xf32>
    %c0_204 = arith.constant 0 : index
    %c0_205 = arith.constant 0 : index
    %c0_206 = arith.constant 0 : index
    %487 = vector.load %arg5[%c0_204, %c0_205, %c0_206] : memref<1x32x128xf32, #tpu.memory_space<vmem>>, vector<1x32x128xf32>
    %488 = vector.shape_cast %487 : vector<1x32x128xf32> to vector<32x128xf32>
    %489 = vector.shape_cast %486 : vector<32x128xf32> to vector<1x32x128xf32>
    tpu.vector_store %arg5[%c0_204, %c0_205, %c0_206], %489 {strides = array<i32>} : memref<1x32x128xf32, #tpu.memory_space<vmem>>, vector<1x32x128xf32>,
    return
  }
  func.func @transform_0(%arg0: i32) -> (i32, i32, i32) {
    %c0_i32 = arith.constant 0 : i32
    %c0_i32_0 = arith.constant 0 : i32
    %c0_i32_1 = arith.constant 0 : i32
    return %arg0, %c0_i32, %c0_i32_0 : i32, i32, i32
  }
  func.func @transform_1(%arg0: i32) -> (i32, i32, i32) {
    %c0_i32 = arith.constant 0 : i32
    %c0_i32_0 = arith.constant 0 : i32
    %c0_i32_1 = arith.constant 0 : i32
    %c0_i32_2 = arith.constant 0 : i32
    return %c0_i32, %c0_i32_0, %c0_i32_1 : i32, i32, i32
  }
  func.func @transform_2(%arg0: i32) -> (i32, i32) {
    %c0_i32 = arith.constant 0 : i32
    %c0_i32_0 = arith.constant 0 : i32
    %c0_i32_1 = arith.constant 0 : i32
    return %c0_i32, %c0_i32_0 : i32, i32
  }
  func.func @transform_3(%arg0: i32) -> (i32, i32) {
    %c0_i32 = arith.constant 0 : i32
    %c0_i32_0 = arith.constant 0 : i32
    %c0_i32_1 = arith.constant 0 : i32
    return %c0_i32, %c0_i32_0 : i32, i32
  }
  func.func @transform_4(%arg0: i32) -> (i32, i32, i32) {
    %c0_i32 = arith.constant 0 : i32
    %c0_i32_0 = arith.constant 0 : i32
    %c0_i32_1 = arith.constant 0 : i32
    return %arg0, %c0_i32, %c0_i32_0 : i32, i32, i32
  }
}

</mosaic_0001>

<llo_original>
// kernel: forward.1
$region0: #{forward.1}
  #allocation0 [shape = 'u32[]', space=smem, size = 0x4, offset = 0x4, fixed_abs, tag = 'smem constant byte address 0x4 - core index']
  #allocation1 [shape = 'u32[144,128]{1,0:T(1,128)}', space=vmem, size = 0x12000, scoped, tag = 'internal scratch']
  %s0 = inlined_call_operand.vmem [shape: f32[1,1024,64], index: 0, kind: input, shape index: {}]
  %s1 = inlined_call_operand.vmem [shape: bf16[35,64,64], index: 1, kind: input, shape index: {}]
  %s2 = inlined_call_operand.vmem [shape: bf16[64,128], index: 2, kind: input, shape index: {}]
  %s3 = inlined_call_operand.vmem [shape: f32[16,128], index: 3, kind: input, shape index: {}]
  %s4 = inlined_call_operand.vmem [shape: f32[1,32,128], index: 4, kind: output, shape index: {}]
  %s5 = sld [smem:[#allocation0]]
  $region26: #{forward.1} parent=0
    _
  %s7 = ssub.s32 1, %s5
  %s8 = scalar_select 0, %s7, %s5
  // Predicated region
  $region2: #{forward.1} parent=0 // pred_check
    _
  $region3: #{forward.1} parent=0 // pred_check_branch
    %10 = sbr.rel (0) target = $region5
  $region4: #{forward.1} parent=0 // pred_region
    _
  $region5: #{forward.1} parent=0 // pred_fallthru
    _
  // Predicated region
  $region6: #{forward.1} parent=0 // pred_check
    _
  $region7: #{forward.1} parent=0 // pred_check_branch
    %12 = sbr.rel (0) target = $region9
  $region8: #{forward.1} parent=0 // pred_region
    _
  $region9: #{forward.1} parent=0 // pred_fallthru
    _
  // Predicated region
  $region10: #{forward.1} parent=0 // pred_check
    _
  $region11: #{forward.1} parent=0 // pred_check_branch
    %14 = sbr.rel (0) target = $region13
  $region12: #{forward.1} parent=0 // pred_region
    _
  $region13: #{forward.1} parent=0 // pred_fallthru
    _
  // Predicated region
  $region14: #{forward.1} parent=0 // pred_check
    _
  $region15: #{forward.1} parent=0 // pred_check_branch
    %16 = sbr.rel (0) target = $region17
  $region16: #{forward.1} parent=0 // pred_region
    _
  $region17: #{forward.1} parent=0 // pred_fallthru
    _
  %v18 = vld [vmem:[%s0] sm:$0xff]
  %v19 = vld [vmem:[%s0 + $0x8] sm:$0xff]
  %v20 = vld [vmem:[%s0 + $0x10] sm:$0xff]
  %v21 = vld [vmem:[%s0 + $0x18] sm:$0xff]
  %v22 = vld [vmem:[%s0 + $0x20] sm:$0xff]
  %v23 = vld [vmem:[%s0 + $0x28] sm:$0xff]
  %v24 = vld [vmem:[%s0 + $0x30] sm:$0xff]
  %v25 = vld [vmem:[%s0 + $0x38] sm:$0xff]
  %v26 = vld [vmem:[%s0 + $0x40] sm:$0xff]
  %v27 = vld [vmem:[%s0 + $0x48] sm:$0xff]
  %v28 = vld [vmem:[%s0 + $0x50] sm:$0xff]
  %v29 = vld [vmem:[%s0 + $0x58] sm:$0xff]
  %v30 = vld [vmem:[%s0 + $0x60] sm:$0xff]
  %v31 = vld [vmem:[%s0 + $0x68] sm:$0xff]
  %v32 = vld [vmem:[%s0 + $0x70] sm:$0xff]
  %v33 = vld [vmem:[%s0 + $0x78] sm:$0xff]
  %v34 = vld [vmem:[%s0 + $0x80] sm:$0xff]
  %v35 = vld [vmem:[%s0 + $0x88] sm:$0xff]
  %v36 = vld [vmem:[%s0 + $0x90] sm:$0xff]
  %v37 = vld [vmem:[%s0 + $0x98] sm:$0xff]
  %v38 = vld [vmem:[%s0 + $0xa0] sm:$0xff]
  %v39 = vld [vmem:[%s0 + $0xa8] sm:$0xff]
  %v40 = vld [vmem:[%s0 + $0xb0] sm:$0xff]
  %v41 = vld [vmem:[%s0 + $0xb8] sm:$0xff]
  %v42 = vld [vmem:[%s0 + $0xc0] sm:$0xff]
  %v43 = vld [vmem:[%s0 + $0xc8] sm:$0xff]
  %v44 = vld [vmem:[%s0 + $0xd0] sm:$0xff]
  %v45 = vld [vmem:[%s0 + $0xd8] sm:$0xff]
  %v46 = vld [vmem:[%s0 + $0xe0] sm:$0xff]
  %v47 = vld [vmem:[%s0 + $0xe8] sm:$0xff]
  %v48 = vld [vmem:[%s0 + $0xf0] sm:$0xff]
  %v49 = vld [vmem:[%s0 + $0xf8] sm:$0xff]
  %v50 = vld [vmem:[%s0 + $0x100] sm:$0xff]
  %v51 = vld [vmem:[%s0 + $0x108] sm:$0xff]
  %v52 = vld [vmem:[%s0 + $0x110] sm:$0xff]
  %v53 = vld [vmem:[%s0 + $0x118] sm:$0xff]
  %v54 = vld [vmem:[%s0 + $0x120] sm:$0xff]
  %v55 = vld [vmem:[%s0 + $0x128] sm:$0xff]
  %v56 = vld [vmem:[%s0 + $0x130] sm:$0xff]
  %v57 = vld [vmem:[%s0 + $0x138] sm:$0xff]
  %v58 = vld [vmem:[%s0 + $0x140] sm:$0xff]
  %v59 = vld [vmem:[%s0 + $0x148] sm:$0xff]
  %v60 = vld [vmem:[%s0 + $0x150] sm:$0xff]
  %v61 = vld [vmem:[%s0 + $0x158] sm:$0xff]
  %v62 = vld [vmem:[%s0 + $0x160] sm:$0xff]
  %v63 = vld [vmem:[%s0 + $0x168] sm:$0xff]
  %v64 = vld [vmem:[%s0 + $0x170] sm:$0xff]
  %v65 = vld [vmem:[%s0 + $0x178] sm:$0xff]
  %v66 = vld [vmem:[%s0 + $0x180] sm:$0xff]
  %v67 = vld [vmem:[%s0 + $0x188] sm:$0xff]
  %v68 = vld [vmem:[%s0 + $0x190] sm:$0xff]
  %v69 = vld [vmem:[%s0 + $0x198] sm:$0xff]
  %v70 = vld [vmem:[%s0 + $0x1a0] sm:$0xff]
  %v71 = vld [vmem:[%s0 + $0x1a8] sm:$0xff]
  %v72 = vld [vmem:[%s0 + $0x1b0] sm:$0xff]
  %v73 = vld [vmem:[%s0 + $0x1b8] sm:$0xff]
  %v74 = vld [vmem:[%s0 + $0x1c0] sm:$0xff]
  %v75 = vld [vmem:[%s0 + $0x1c8] sm:$0xff]
  %v76 = vld [vmem:[%s0 + $0x1d0] sm:$0xff]
  %v77 = vld [vmem:[%s0 + $0x1d8] sm:$0xff]
  %v78 = vld [vmem:[%s0 + $0x1e0] sm:$0xff]
  %v79 = vld [vmem:[%s0 + $0x1e8] sm:$0xff]
  %v80 = vld [vmem:[%s0 + $0x1f0] sm:$0xff]
  %v81 = vld [vmem:[%s0 + $0x1f8] sm:$0xff]
  %v82 = vld [vmem:[%s0 + $0x200] sm:$0xff]
  %v83 = vld [vmem:[%s0 + $0x208] sm:$0xff]
  %v84 = vld [vmem:[%s0 + $0x210] sm:$0xff]
  %v85 = vld [vmem:[%s0 + $0x218] sm:$0xff]
  %v86 = vld [vmem:[%s0 + $0x220] sm:$0xff]
  %v87 = vld [vmem:[%s0 + $0x228] sm:$0xff]
  %v88 = vld [vmem:[%s0 + $0x230] sm:$0xff]
  %v89 = vld [vmem:[%s0 + $0x238] sm:$0xff]
  %v90 = vld [vmem:[%s0 + $0x240] sm:$0xff]
  %v91 = vld [vmem:[%s0 + $0x248] sm:$0xff]
  %v92 = vld [vmem:[%s0 + $0x250] sm:$0xff]
  %v93 = vld [vmem:[%s0 + $0x258] sm:$0xff]
  %v94 = vld [vmem:[%s0 + $0x260] sm:$0xff]
  %v95 = vld [vmem:[%s0 + $0x268] sm:$0xff]
  %v96 = vld [vmem:[%s0 + $0x270] sm:$0xff]
  %v97 = vld [vmem:[%s0 + $0x278] sm:$0xff]
  %v98 = vld [vmem:[%s0 + $0x280] sm:$0xff]
  %v99 = vld [vmem:[%s0 + $0x288] sm:$0xff]
  %v100 = vld [vmem:[%s0 + $0x290] sm:$0xff]
  %v101 = vld [vmem:[%s0 + $0x298] sm:$0xff]
  %v102 = vld [vmem:[%s0 + $0x2a0] sm:$0xff]
  %v103 = vld [vmem:[%s0 + $0x2a8] sm:$0xff]
  %v104 = vld [vmem:[%s0 + $0x2b0] sm:$0xff]
  %v105 = vld [vmem:[%s0 + $0x2b8] sm:$0xff]
  %v106 = vld [vmem:[%s0 + $0x2c0] sm:$0xff]
  %v107 = vld [vmem:[%s0 + $0x2c8] sm:$0xff]
  %v108 = vld [vmem:[%s0 + $0x2d0] sm:$0xff]
  %v109 = vld [vmem:[%s0 + $0x2d8] sm:$0xff]
  %v110 = vld [vmem:[%s0 + $0x2e0] sm:$0xff]
  %v111 = vld [vmem:[%s0 + $0x2e8] sm:$0xff]
  %v112 = vld [vmem:[%s0 + $0x2f0] sm:$0xff]
  %v113 = vld [vmem:[%s0 + $0x2f8] sm:$0xff]
  %v114 = vld [vmem:[%s0 + $0x300] sm:$0xff]
  %v115 = vld [vmem:[%s0 + $0x308] sm:$0xff]
  %v116 = vld [vmem:[%s0 + $0x310] sm:$0xff]
  %v117 = vld [vmem:[%s0 + $0x318] sm:$0xff]
  %v118 = vld [vmem:[%s0 + $0x320] sm:$0xff]
  %v119 = vld [vmem:[%s0 + $0x328] sm:$0xff]
  %v120 = vld [vmem:[%s0 + $0x330] sm:$0xff]
  %v121 = vld [vmem:[%s0 + $0x338] sm:$0xff]
  %v122 = vld [vmem:[%s0 + $0x340] sm:$0xff]
  %v123 = vld [vmem:[%s0 + $0x348] sm:$0xff]
  %v124 = vld [vmem:[%s0 + $0x350] sm:$0xff]
  %v125 = vld [vmem:[%s0 + $0x358] sm:$0xff]
  %v126 = vld [vmem:[%s0 + $0x360] sm:$0xff]
  %v127 = vld [vmem:[%s0 + $0x368] sm:$0xff]
  %v128 = vld [vmem:[%s0 + $0x370] sm:$0xff]
  %v129 = vld [vmem:[%s0 + $0x378] sm:$0xff]
  %v130 = vld [vmem:[%s0 + $0x380] sm:$0xff]
  %v131 = vld [vmem:[%s0 + $0x388] sm:$0xff]
  %v132 = vld [vmem:[%s0 + $0x390] sm:$0xff]
  %v133 = vld [vmem:[%s0 + $0x398] sm:$0xff]
  %v134 = vld [vmem:[%s0 + $0x3a0] sm:$0xff]
  %v135 = vld [vmem:[%s0 + $0x3a8] sm:$0xff]
  %v136 = vld [vmem:[%s0 + $0x3b0] sm:$0xff]
  %v137 = vld [vmem:[%s0 + $0x3b8] sm:$0xff]
  %v138 = vld [vmem:[%s0 + $0x3c0] sm:$0xff]
  %v139 = vld [vmem:[%s0 + $0x3c8] sm:$0xff]
  %v140 = vld [vmem:[%s0 + $0x3d0] sm:$0xff]
  %v141 = vld [vmem:[%s0 + $0x3d8] sm:$0xff]
  %v142 = vld [vmem:[%s0 + $0x3e0] sm:$0xff]
  %v143 = vld [vmem:[%s0 + $0x3e8] sm:$0xff]
  %v144 = vld [vmem:[%s0 + $0x3f0] sm:$0xff]
  %v145 = vld [vmem:[%s0 + $0x3f8] sm:$0xff]
  %v146 = vld [vmem:[%s2] sm:$0xf]
  %v147 = vld [vmem:[%s2 + $0x4] sm:$0xf]
  %v148 = vld [vmem:[%s2 + $0x8] sm:$0xf]
  %v149 = vld [vmem:[%s2 + $0xc] sm:$0xf]
  %v150 = vld [vmem:[%s2 + $0x10] sm:$0xf]
  %v151 = vld [vmem:[%s2 + $0x14] sm:$0xf]
  %v152 = vld [vmem:[%s2 + $0x18] sm:$0xf]
  %v153 = vld [vmem:[%s2 + $0x1c] sm:$0xf]
  %v154 = vld [vmem:[%s3] sm:$0xff]
  %v155 = vld [vmem:[%s3 + $0x8] sm:$0xff]
  %v156 = vlaneseq
  %v157 = vshrl.u32 %v156, 7
  %v158 = vsub.s32 1, %v157
  %v159 = vrot.slane %v155, %v158
  %v160 = vmul.f32 %v18, %v159
  %v161 = vmul.f32 %v19, %v159
  %v162 = vmul.f32 %v20, %v159
  %v163 = vmul.f32 %v21, %v159
  %v164 = vmul.f32 %v22, %v159
  %v165 = vmul.f32 %v23, %v159
  %v166 = vmul.f32 %v24, %v159
  %v167 = vmul.f32 %v25, %v159
  %v168 = vmul.f32 %v26, %v159
  %v169 = vmul.f32 %v27, %v159
  %v170 = vmul.f32 %v28, %v159
  %v171 = vmul.f32 %v29, %v159
  %v172 = vmul.f32 %v30, %v159
  %v173 = vmul.f32 %v31, %v159
  %v174 = vmul.f32 %v32, %v159
  %v175 = vmul.f32 %v33, %v159
  %v176 = vmul.f32 %v34, %v159
  %v177 = vmul.f32 %v35, %v159
  %v178 = vmul.f32 %v36, %v159
  %v179 = vmul.f32 %v37, %v159
  %v180 = vmul.f32 %v38, %v159
  %v181 = vmul.f32 %v39, %v159
  %v182 = vmul.f32 %v40, %v159
  %v183 = vmul.f32 %v41, %v159
  %v184 = vmul.f32 %v42, %v159
  %v185 = vmul.f32 %v43, %v159
  %v186 = vmul.f32 %v44, %v159
  %v187 = vmul.f32 %v45, %v159
  %v188 = vmul.f32 %v46, %v159
  %v189 = vmul.f32 %v47, %v159
  %v190 = vmul.f32 %v48, %v159
  %v191 = vmul.f32 %v49, %v159
  %v192 = vmul.f32 %v50, %v159
  %v193 = vmul.f32 %v51, %v159
  %v194 = vmul.f32 %v52, %v159
  %v195 = vmul.f32 %v53, %v159
  %v196 = vmul.f32 %v54, %v159
  %v197 = vmul.f32 %v55, %v159
  %v198 = vmul.f32 %v56, %v159
  %v199 = vmul.f32 %v57, %v159
  %v200 = vmul.f32 %v58, %v159
  %v201 = vmul.f32 %v59, %v159
  %v202 = vmul.f32 %v60, %v159
  %v203 = vmul.f32 %v61, %v159
  %v204 = vmul.f32 %v62, %v159
  %v205 = vmul.f32 %v63, %v159
  %v206 = vmul.f32 %v64, %v159
  %v207 = vmul.f32 %v65, %v159
  %v208 = vmul.f32 %v66, %v159
  %v209 = vmul.f32 %v67, %v159
  %v210 = vmul.f32 %v68, %v159
  %v211 = vmul.f32 %v69, %v159
  %v212 = vmul.f32 %v70, %v159
  %v213 = vmul.f32 %v71, %v159
  %v214 = vmul.f32 %v72, %v159
  %v215 = vmul.f32 %v73, %v159
  %v216 = vmul.f32 %v74, %v159
  %v217 = vmul.f32 %v75, %v159
  %v218 = vmul.f32 %v76, %v159
  %v219 = vmul.f32 %v77, %v159
  %v220 = vmul.f32 %v78, %v159
  %v221 = vmul.f32 %v79, %v159
  %v222 = vmul.f32 %v80, %v159
  %v223 = vmul.f32 %v81, %v159
  %v224 = vmul.f32 %v82, %v159
  %v225 = vmul.f32 %v83, %v159
  %v226 = vmul.f32 %v84, %v159
  %v227 = vmul.f32 %v85, %v159
  %v228 = vmul.f32 %v86, %v159
  %v229 = vmul.f32 %v87, %v159
  %v230 = vmul.f32 %v88, %v159
  %v231 = vmul.f32 %v89, %v159
  %v232 = vmul.f32 %v90, %v159
  %v233 = vmul.f32 %v91, %v159
  %v234 = vmul.f32 %v92, %v159
  %v235 = vmul.f32 %v93, %v159
  %v236 = vmul.f32 %v94, %v159
  %v237 = vmul.f32 %v95, %v159
  %v238 = vmul.f32 %v96, %v159
  %v239 = vmul.f32 %v97, %v159
  %v240 = vmul.f32 %v98, %v159
  %v241 = vmul.f32 %v99, %v159
  %v242 = vmul.f32 %v100, %v159
  %v243 = vmul.f32 %v101, %v159
  %v244 = vmul.f32 %v102, %v159
  %v245 = vmul.f32 %v103, %v159
  %v246 = vmul.f32 %v104, %v159
  %v247 = vmul.f32 %v105, %v159
  %v248 = vmul.f32 %v106, %v159
  %v249 = vmul.f32 %v107, %v159
  %v250 = vmul.f32 %v108, %v159
  %v251 = vmul.f32 %v109, %v159
  %v252 = vmul.f32 %v110, %v159
  %v253 = vmul.f32 %v111, %v159
  %v254 = vmul.f32 %v112, %v159
  %v255 = vmul.f32 %v113, %v159
  %v256 = vmul.f32 %v114, %v159
  %v257 = vmul.f32 %v115, %v159
  %v258 = vmul.f32 %v116, %v159
  %v259 = vmul.f32 %v117, %v159
  %v260 = vmul.f32 %v118, %v159
  %v261 = vmul.f32 %v119, %v159
  %v262 = vmul.f32 %v120, %v159
  %v263 = vmul.f32 %v121, %v159
  %v264 = vmul.f32 %v122, %v159
  %v265 = vmul.f32 %v123, %v159
  %v266 = vmul.f32 %v124, %v159
  %v267 = vmul.f32 %v125, %v159
  %v268 = vmul.f32 %v126, %v159
  %v269 = vmul.f32 %v127, %v159
  %v270 = vmul.f32 %v128, %v159
  %v271 = vmul.f32 %v129, %v159
  %v272 = vmul.f32 %v130, %v159
  %v273 = vmul.f32 %v131, %v159
  %v274 = vmul.f32 %v132, %v159
  %v275 = vmul.f32 %v133, %v159
  %v276 = vmul.f32 %v134, %v159
  %v277 = vmul.f32 %v135, %v159
  %v278 = vmul.f32 %v136, %v159
  %v279 = vmul.f32 %v137, %v159
  %v280 = vmul.f32 %v138, %v159
  %v281 = vmul.f32 %v139, %v159
  %v282 = vmul.f32 %v140, %v159
  %v283 = vmul.f32 %v141, %v159
  %v284 = vmul.f32 %v142, %v159
  %v285 = vmul.f32 %v143, %v159
  %v286 = vmul.f32 %v144, %v159
  %v287 = vmul.f32 %v145, %v159
  %v288 = vlaneseq
  %v289 = vshrl.u32 %v288, 7
  %v290 = vsub.s32 2, %v289
  %v291 = vrot.slane %v155, %v290
  %v292 = vadd.f32 %v160, %v291
  %v293 = vadd.f32 %v161, %v291
  %v294 = vadd.f32 %v162, %v291
  %v295 = vadd.f32 %v163, %v291
  %v296 = vadd.f32 %v164, %v291
  %v297 = vadd.f32 %v165, %v291
  %v298 = vadd.f32 %v166, %v291
  %v299 = vadd.f32 %v167, %v291
  %v300 = vadd.f32 %v168, %v291
  %v301 = vadd.f32 %v169, %v291
  %v302 = vadd.f32 %v170, %v291
  %v303 = vadd.f32 %v171, %v291
  %v304 = vadd.f32 %v172, %v291
  %v305 = vadd.f32 %v173, %v291
  %v306 = vadd.f32 %v174, %v291
  %v307 = vadd.f32 %v175, %v291
  %v308 = vadd.f32 %v176, %v291
  %v309 = vadd.f32 %v177, %v291
  %v310 = vadd.f32 %v178, %v291
  %v311 = vadd.f32 %v179, %v291
  %v312 = vadd.f32 %v180, %v291
  %v313 = vadd.f32 %v181, %v291
  %v314 = vadd.f32 %v182, %v291
  %v315 = vadd.f32 %v183, %v291
  %v316 = vadd.f32 %v184, %v291
  %v317 = vadd.f32 %v185, %v291
  %v318 = vadd.f32 %v186, %v291
  %v319 = vadd.f32 %v187, %v291
  %v320 = vadd.f32 %v188, %v291
  %v321 = vadd.f32 %v189, %v291
  %v322 = vadd.f32 %v190, %v291
  %v323 = vadd.f32 %v191, %v291
  %v324 = vadd.f32 %v192, %v291
  %v325 = vadd.f32 %v193, %v291
  %v326 = vadd.f32 %v194, %v291
  %v327 = vadd.f32 %v195, %v291
  %v328 = vadd.f32 %v196, %v291
  %v329 = vadd.f32 %v197, %v291
  %v330 = vadd.f32 %v198, %v291
  %v331 = vadd.f32 %v199, %v291
  %v332 = vadd.f32 %v200, %v291
  %v333 = vadd.f32 %v201, %v291
  %v334 = vadd.f32 %v202, %v291
  %v335 = vadd.f32 %v203, %v291
  %v336 = vadd.f32 %v204, %v291
  %v337 = vadd.f32 %v205, %v291
  %v338 = vadd.f32 %v206, %v291
  %v339 = vadd.f32 %v207, %v291
  %v340 = vadd.f32 %v208, %v291
  %v341 = vadd.f32 %v209, %v291
  %v342 = vadd.f32 %v210, %v291
  %v343 = vadd.f32 %v211, %v291
  %v344 = vadd.f32 %v212, %v291
  %v345 = vadd.f32 %v213, %v291
  %v346 = vadd.f32 %v214, %v291
  %v347 = vadd.f32 %v215, %v291
  %v348 = vadd.f32 %v216, %v291
  %v349 = vadd.f32 %v217, %v291
  %v350 = vadd.f32 %v218, %v291
  %v351 = vadd.f32 %v219, %v291
  %v352 = vadd.f32 %v220, %v291
  %v353 = vadd.f32 %v221, %v291
  %v354 = vadd.f32 %v222, %v291
  %v355 = vadd.f32 %v223, %v291
  %v356 = vadd.f32 %v224, %v291
  %v357 = vadd.f32 %v225, %v291
  %v358 = vadd.f32 %v226, %v291
  %v359 = vadd.f32 %v227, %v291
  %v360 = vadd.f32 %v228, %v291
  %v361 = vadd.f32 %v229, %v291
  %v362 = vadd.f32 %v230, %v291
  %v363 = vadd.f32 %v231, %v291
  %v364 = vadd.f32 %v232, %v291
  %v365 = vadd.f32 %v233, %v291
  %v366 = vadd.f32 %v234, %v291
  %v367 = vadd.f32 %v235, %v291
  %v368 = vadd.f32 %v236, %v291
  %v369 = vadd.f32 %v237, %v291
  %v370 = vadd.f32 %v238, %v291
  %v371 = vadd.f32 %v239, %v291
  %v372 = vadd.f32 %v240, %v291
  %v373 = vadd.f32 %v241, %v291
  %v374 = vadd.f32 %v242, %v291
  %v375 = vadd.f32 %v243, %v291
  %v376 = vadd.f32 %v244, %v291
  %v377 = vadd.f32 %v245, %v291
  %v378 = vadd.f32 %v246, %v291
  %v379 = vadd.f32 %v247, %v291
  %v380 = vadd.f32 %v248, %v291
  %v381 = vadd.f32 %v249, %v291
  %v382 = vadd.f32 %v250, %v291
  %v383 = vadd.f32 %v251, %v291
  %v384 = vadd.f32 %v252, %v291
  %v385 = vadd.f32 %v253, %v291
  %v386 = vadd.f32 %v254, %v291
  %v387 = vadd.f32 %v255, %v291
  %v388 = vadd.f32 %v256, %v291
  %v389 = vadd.f32 %v257, %v291
  %v390 = vadd.f32 %v258, %v291
  %v391 = vadd.f32 %v259, %v291
  %v392 = vadd.f32 %v260, %v291
  %v393 = vadd.f32 %v261, %v291
  %v394 = vadd.f32 %v262, %v291
  %v395 = vadd.f32 %v263, %v291
  %v396 = vadd.f32 %v264, %v291
  %v397 = vadd.f32 %v265, %v291
  %v398 = vadd.f32 %v266, %v291
  %v399 = vadd.f32 %v267, %v291
  %v400 = vadd.f32 %v268, %v291
  %v401 = vadd.f32 %v269, %v291
  %v402 = vadd.f32 %v270, %v291
  %v403 = vadd.f32 %v271, %v291
  %v404 = vadd.f32 %v272, %v291
  %v405 = vadd.f32 %v273, %v291
  %v406 = vadd.f32 %v274, %v291
  %v407 = vadd.f32 %v275, %v291
  %v408 = vadd.f32 %v276, %v291
  %v409 = vadd.f32 %v277, %v291
  %v410 = vadd.f32 %v278, %v291
  %v411 = vadd.f32 %v279, %v291
  %v412 = vadd.f32 %v280, %v291
  %v413 = vadd.f32 %v281, %v291
  %v414 = vadd.f32 %v282, %v291
  %v415 = vadd.f32 %v283, %v291
  %v416 = vadd.f32 %v284, %v291
  %v417 = vadd.f32 %v285, %v291
  %v418 = vadd.f32 %v286, %v291
  %v419 = vadd.f32 %v287, %v291
  %vm420 = vcmp.gt.f32.partialorder %v292, 0.0
  %vm421 = vcmp.gt.f32.partialorder %v293, 0.0
  %vm422 = vcmp.gt.f32.partialorder %v294, 0.0
  %vm423 = vcmp.gt.f32.partialorder %v295, 0.0
  %vm424 = vcmp.gt.f32.partialorder %v296, 0.0
  %vm425 = vcmp.gt.f32.partialorder %v297, 0.0
  %vm426 = vcmp.gt.f32.partialorder %v298, 0.0
  %vm427 = vcmp.gt.f32.partialorder %v299, 0.0
  %vm428 = vcmp.gt.f32.partialorder %v300, 0.0
  %vm429 = vcmp.gt.f32.partialorder %v301, 0.0
  %vm430 = vcmp.gt.f32.partialorder %v302, 0.0
  %vm431 = vcmp.gt.f32.partialorder %v303, 0.0
  %vm432 = vcmp.gt.f32.partialorder %v304, 0.0
  %vm433 = vcmp.gt.f32.partialorder %v305, 0.0
  %vm434 = vcmp.gt.f32.partialorder %v306, 0.0
  %vm435 = vcmp.gt.f32.partialorder %v307, 0.0
  %vm436 = vcmp.gt.f32.partialorder %v308, 0.0
  %vm437 = vcmp.gt.f32.partialorder %v309, 0.0
  %vm438 = vcmp.gt.f32.partialorder %v310, 0.0
  %vm439 = vcmp.gt.f32.partialorder %v311, 0.0
  %vm440 = vcmp.gt.f32.partialorder %v312, 0.0
  %vm441 = vcmp.gt.f32.partialorder %v313, 0.0
  %vm442 = vcmp.gt.f32.partialorder %v314, 0.0
  %vm443 = vcmp.gt.f32.partialorder %v315, 0.0
  %vm444 = vcmp.gt.f32.partialorder %v316, 0.0
  %vm445 = vcmp.gt.f32.partialorder %v317, 0.0
  %vm446 = vcmp.gt.f32.partialorder %v318, 0.0
  %vm447 = vcmp.gt.f32.partialorder %v319, 0.0
  %vm448 = vcmp.gt.f32.partialorder %v320, 0.0
  %vm449 = vcmp.gt.f32.partialorder %v321, 0.0
  %vm450 = vcmp.gt.f32.partialorder %v322, 0.0
  %vm451 = vcmp.gt.f32.partialorder %v323, 0.0
  %vm452 = vcmp.gt.f32.partialorder %v324, 0.0
  %vm453 = vcmp.gt.f32.partialorder %v325, 0.0
  %vm454 = vcmp.gt.f32.partialorder %v326, 0.0
  %vm455 = vcmp.gt.f32.partialorder %v327, 0.0
  %vm456 = vcmp.gt.f32.partialorder %v328, 0.0
  %vm457 = vcmp.gt.f32.partialorder %v329, 0.0
  %vm458 = vcmp.gt.f32.partialorder %v330, 0.0
  %vm459 = vcmp.gt.f32.partialorder %v331, 0.0
  %vm460 = vcmp.gt.f32.partialorder %v332, 0.0
  %vm461 = vcmp.gt.f32.partialorder %v333, 0.0
  %vm462 = vcmp.gt.f32.partialorder %v334, 0.0
  %vm463 = vcmp.gt.f32.partialorder %v335, 0.0
  %vm464 = vcmp.gt.f32.partialorder %v336, 0.0
  %vm465 = vcmp.gt.f32.partialorder %v337, 0.0
  %vm466 = vcmp.gt.f32.partialorder %v338, 0.0
  %vm467 = vcmp.gt.f32.partialorder %v339, 0.0
  %vm468 = vcmp.gt.f32.partialorder %v340, 0.0
  %vm469 = vcmp.gt.f32.partialorder %v341, 0.0
  %vm470 = vcmp.gt.f32.partialorder %v342, 0.0
  %vm471 = vcmp.gt.f32.partialorder %v343, 0.0
  %vm472 = vcmp.gt.f32.partialorder %v344, 0.0
  %vm473 = vcmp.gt.f32.partialorder %v345, 0.0
  %vm474 = vcmp.gt.f32.partialorder %v346, 0.0
  %vm475 = vcmp.gt.f32.partialorder %v347, 0.0
  %vm476 = vcmp.gt.f32.partialorder %v348, 0.0
  %vm477 = vcmp.gt.f32.partialorder %v349, 0.0
  %vm478 = vcmp.gt.f32.partialorder %v350, 0.0
  %vm479 = vcmp.gt.f32.partialorder %v351, 0.0
  %vm480 = vcmp.gt.f32.partialorder %v352, 0.0
  %vm481 = vcmp.gt.f32.partialorder %v353, 0.0
  %vm482 = vcmp.gt.f32.partialorder %v354, 0.0
  %vm483 = vcmp.gt.f32.partialorder %v355, 0.0
  %vm484 = vcmp.gt.f32.partialorder %v356, 0.0
  %vm485 = vcmp.gt.f32.partialorder %v357, 0.0
  %vm486 = vcmp.gt.f32.partialorder %v358, 0.0
  %vm487 = vcmp.gt.f32.partialorder %v359, 0.0
  %vm488 = vcmp.gt.f32.partialorder %v360, 0.0
  %vm489 = vcmp.gt.f32.partialorder %v361, 0.0
  %vm490 = vcmp.gt.f32.partialorder %v362, 0.0
  %vm491 = vcmp.gt.f32.partialorder %v363, 0.0
  %vm492 = vcmp.gt.f32.partialorder %v364, 0.0
  %vm493 = vcmp.gt.f32.partialorder %v365, 0.0
  %vm494 = vcmp.gt.f32.partialorder %v366, 0.0
  %vm495 = vcmp.gt.f32.partialorder %v367, 0.0
  %vm496 = vcmp.gt.f32.partialorder %v368, 0.0
  %vm497 = vcmp.gt.f32.partialorder %v369, 0.0
  %vm498 = vcmp.gt.f32.partialorder %v370, 0.0
  %vm499 = vcmp.gt.f32.partialorder %v371, 0.0
  %vm500 = vcmp.gt.f32.partialorder %v372, 0.0
  %vm501 = vcmp.gt.f32.partialorder %v373, 0.0
  %vm502 = vcmp.gt.f32.partialorder %v374, 0.0
  %vm503 = vcmp.gt.f32.partialorder %v375, 0.0
  %vm504 = vcmp.gt.f32.partialorder %v376, 0.0
  %vm505 = vcmp.gt.f32.partialorder %v377, 0.0
  %vm506 = vcmp.gt.f32.partialorder %v378, 0.0
  %vm507 = vcmp.gt.f32.partialorder %v379, 0.0
  %vm508 = vcmp.gt.f32.partialorder %v380, 0.0
  %vm509 = vcmp.gt.f32.partialorder %v381, 0.0
  %vm510 = vcmp.gt.f32.partialorder %v382, 0.0
  %vm511 = vcmp.gt.f32.partialorder %v383, 0.0
  %vm512 = vcmp.gt.f32.partialorder %v384, 0.0
  %vm513 = vcmp.gt.f32.partialorder %v385, 0.0
  %vm514 = vcmp.gt.f32.partialorder %v386, 0.0
  %vm515 = vcmp.gt.f32.partialorder %v387, 0.0
  %vm516 = vcmp.gt.f32.partialorder %v388, 0.0
  %vm517 = vcmp.gt.f32.partialorder %v389, 0.0
  %vm518 = vcmp.gt.f32.partialorder %v390, 0.0
  %vm519 = vcmp.gt.f32.partialorder %v391, 0.0
  %vm520 = vcmp.gt.f32.partialorder %v392, 0.0
  %vm521 = vcmp.gt.f32.partialorder %v393, 0.0
  %vm522 = vcmp.gt.f32.partialorder %v394, 0.0
  %vm523 = vcmp.gt.f32.partialorder %v395, 0.0
  %vm524 = vcmp.gt.f32.partialorder %v396, 0.0
  %vm525 = vcmp.gt.f32.partialorder %v397, 0.0
  %vm526 = vcmp.gt.f32.partialorder %v398, 0.0
  %vm527 = vcmp.gt.f32.partialorder %v399, 0.0
  %vm528 = vcmp.gt.f32.partialorder %v400, 0.0
  %vm529 = vcmp.gt.f32.partialorder %v401, 0.0
  %vm530 = vcmp.gt.f32.partialorder %v402, 0.0
  %vm531 = vcmp.gt.f32.partialorder %v403, 0.0
  %vm532 = vcmp.gt.f32.partialorder %v404, 0.0
  %vm533 = vcmp.gt.f32.partialorder %v405, 0.0
  %vm534 = vcmp.gt.f32.partialorder %v406, 0.0
  %vm535 = vcmp.gt.f32.partialorder %v407, 0.0
  %vm536 = vcmp.gt.f32.partialorder %v408, 0.0
  %vm537 = vcmp.gt.f32.partialorder %v409, 0.0
  %vm538 = vcmp.gt.f32.partialorder %v410, 0.0
  %vm539 = vcmp.gt.f32.partialorder %v411, 0.0
  %vm540 = vcmp.gt.f32.partialorder %v412, 0.0
  %vm541 = vcmp.gt.f32.partialorder %v413, 0.0
  %vm542 = vcmp.gt.f32.partialorder %v414, 0.0
  %vm543 = vcmp.gt.f32.partialorder %v415, 0.0
  %vm544 = vcmp.gt.f32.partialorder %v416, 0.0
  %vm545 = vcmp.gt.f32.partialorder %v417, 0.0
  %vm546 = vcmp.gt.f32.partialorder %v418, 0.0
  %vm547 = vcmp.gt.f32.partialorder %v419, 0.0
  %v548 = vmin.f32 %v292, 0.0
  %v549 = vmin.f32 %v293, 0.0
  %v550 = vmin.f32 %v294, 0.0
  %v551 = vmin.f32 %v295, 0.0
  %v552 = vmin.f32 %v296, 0.0
  %v553 = vmin.f32 %v297, 0.0
  %v554 = vmin.f32 %v298, 0.0
  %v555 = vmin.f32 %v299, 0.0
  %v556 = vmin.f32 %v300, 0.0
  %v557 = vmin.f32 %v301, 0.0
  %v558 = vmin.f32 %v302, 0.0
  %v559 = vmin.f32 %v303, 0.0
  %v560 = vmin.f32 %v304, 0.0
  %v561 = vmin.f32 %v305, 0.0
  %v562 = vmin.f32 %v306, 0.0
  %v563 = vmin.f32 %v307, 0.0
  %v564 = vmin.f32 %v308, 0.0
  %v565 = vmin.f32 %v309, 0.0
  %v566 = vmin.f32 %v310, 0.0
  %v567 = vmin.f32 %v311, 0.0
  %v568 = vmin.f32 %v312, 0.0
  %v569 = vmin.f32 %v313, 0.0
  %v570 = vmin.f32 %v314, 0.0
  %v571 = vmin.f32 %v315, 0.0
  %v572 = vmin.f32 %v316, 0.0
  %v573 = vmin.f32 %v317, 0.0
  %v574 = vmin.f32 %v318, 0.0
  %v575 = vmin.f32 %v319, 0.0
  %v576 = vmin.f32 %v320, 0.0
  %v577 = vmin.f32 %v321, 0.0
  %v578 = vmin.f32 %v322, 0.0
  %v579 = vmin.f32 %v323, 0.0
  %v580 = vmin.f32 %v324, 0.0
  %v581 = vmin.f32 %v325, 0.0
  %v582 = vmin.f32 %v326, 0.0
  %v583 = vmin.f32 %v327, 0.0
  %v584 = vmin.f32 %v328, 0.0
  %v585 = vmin.f32 %v329, 0.0
  %v586 = vmin.f32 %v330, 0.0
  %v587 = vmin.f32 %v331, 0.0
  %v588 = vmin.f32 %v332, 0.0
  %v589 = vmin.f32 %v333, 0.0
  %v590 = vmin.f32 %v334, 0.0
  %v591 = vmin.f32 %v335, 0.0
  %v592 = vmin.f32 %v336, 0.0
  %v593 = vmin.f32 %v337, 0.0
  %v594 = vmin.f32 %v338, 0.0
  %v595 = vmin.f32 %v339, 0.0
  %v596 = vmin.f32 %v340, 0.0
  %v597 = vmin.f32 %v341, 0.0
  %v598 = vmin.f32 %v342, 0.0
  %v599 = vmin.f32 %v343, 0.0
  %v600 = vmin.f32 %v344, 0.0
  %v601 = vmin.f32 %v345, 0.0
  %v602 = vmin.f32 %v346, 0.0
  %v603 = vmin.f32 %v347, 0.0
  %v604 = vmin.f32 %v348, 0.0
  %v605 = vmin.f32 %v349, 0.0
  %v606 = vmin.f32 %v350, 0.0
  %v607 = vmin.f32 %v351, 0.0
  %v608 = vmin.f32 %v352, 0.0
  %v609 = vmin.f32 %v353, 0.0
  %v610 = vmin.f32 %v354, 0.0
  %v611 = vmin.f32 %v355, 0.0
  %v612 = vmin.f32 %v356, 0.0
  %v613 = vmin.f32 %v357, 0.0
  %v614 = vmin.f32 %v358, 0.0
  %v615 = vmin.f32 %v359, 0.0
  %v616 = vmin.f32 %v360, 0.0
  %v617 = vmin.f32 %v361, 0.0
  %v618 = vmin.f32 %v362, 0.0
  %v619 = vmin.f32 %v363, 0.0
  %v620 = vmin.f32 %v364, 0.0
  %v621 = vmin.f32 %v365, 0.0
  %v622 = vmin.f32 %v366, 0.0
  %v623 = vmin.f32 %v367, 0.0
  %v624 = vmin.f32 %v368, 0.0
  %v625 = vmin.f32 %v369, 0.0
  %v626 = vmin.f32 %v370, 0.0
  %v627 = vmin.f32 %v371, 0.0
  %v628 = vmin.f32 %v372, 0.0
  %v629 = vmin.f32 %v373, 0.0
  %v630 = vmin.f32 %v374, 0.0
  %v631 = vmin.f32 %v375, 0.0
  %v632 = vmin.f32 %v376, 0.0
  %v633 = vmin.f32 %v377, 0.0
  %v634 = vmin.f32 %v378, 0.0
  %v635 = vmin.f32 %v379, 0.0
  %v636 = vmin.f32 %v380, 0.0
  %v637 = vmin.f32 %v381, 0.0
  %v638 = vmin.f32 %v382, 0.0
  %v639 = vmin.f32 %v383, 0.0
  %v640 = vmin.f32 %v384, 0.0
  %v641 = vmin.f32 %v385, 0.0
  %v642 = vmin.f32 %v386, 0.0
  %v643 = vmin.f32 %v387, 0.0
  %v644 = vmin.f32 %v388, 0.0
  %v645 = vmin.f32 %v389, 0.0
  %v646 = vmin.f32 %v390, 0.0
  %v647 = vmin.f32 %v391, 0.0
  %v648 = vmin.f32 %v392, 0.0
  %v649 = vmin.f32 %v393, 0.0
  %v650 = vmin.f32 %v394, 0.0
  %v651 = vmin.f32 %v395, 0.0
  %v652 = vmin.f32 %v396, 0.0
  %v653 = vmin.f32 %v397, 0.0
  %v654 = vmin.f32 %v398, 0.0
  %v655 = vmin.f32 %v399, 0.0
  %v656 = vmin.f32 %v400, 0.0
  %v657 = vmin.f32 %v401, 0.0
  %v658 = vmin.f32 %v402, 0.0
  %v659 = vmin.f32 %v403, 0.0
  %v660 = vmin.f32 %v404, 0.0
  %v661 = vmin.f32 %v405, 0.0
  %v662 = vmin.f32 %v406, 0.0
  %v663 = vmin.f32 %v407, 0.0
  %v664 = vmin.f32 %v408, 0.0
  %v665 = vmin.f32 %v409, 0.0
  %v666 = vmin.f32 %v410, 0.0
  %v667 = vmin.f32 %v411, 0.0
  %v668 = vmin.f32 %v412, 0.0
  %v669 = vmin.f32 %v413, 0.0
  %v670 = vmin.f32 %v414, 0.0
  %v671 = vmin.f32 %v415, 0.0
  %v672 = vmin.f32 %v416, 0.0
  %v673 = vmin.f32 %v417, 0.0
  %v674 = vmin.f32 %v418, 0.0
  %v675 = vmin.f32 %v419, 0.0
  %v676 = vmul.f32 %v548, 1.442695
  %v677 = vpow.pop %v676
  %v678 = vmul.f32 %v549, 1.442695
  %v679 = vpow.pop %v678
  %v680 = vmul.f32 %v550, 1.442695
  %v681 = vpow.pop %v680
  %v682 = vmul.f32 %v551, 1.442695
  %v683 = vpow.pop %v682
  %v684 = vmul.f32 %v552, 1.442695
  %v685 = vpow.pop %v684
  %v686 = vmul.f32 %v553, 1.442695
  %v687 = vpow.pop %v686
  %v688 = vmul.f32 %v554, 1.442695
  %v689 = vpow.pop %v688
  %v690 = vmul.f32 %v555, 1.442695
  %v691 = vpow.pop %v690
  %v692 = vmul.f32 %v556, 1.442695
  %v693 = vpow.pop %v692
  %v694 = vmul.f32 %v557, 1.442695
  %v695 = vpow.pop %v694
  %v696 = vmul.f32 %v558, 1.442695
  %v697 = vpow.pop %v696
  %v698 = vmul.f32 %v559, 1.442695
  %v699 = vpow.pop %v698
  %v700 = vmul.f32 %v560, 1.442695
  %v701 = vpow.pop %v700
  %v702 = vmul.f32 %v561, 1.442695
  %v703 = vpow.pop %v702
  %v704 = vmul.f32 %v562, 1.442695
  %v705 = vpow.pop %v704
  %v706 = vmul.f32 %v563, 1.442695
  %v707 = vpow.pop %v706
  %v708 = vmul.f32 %v564, 1.442695
  %v709 = vpow.pop %v708
  %v710 = vmul.f32 %v565, 1.442695
  %v711 = vpow.pop %v710
  %v712 = vmul.f32 %v566, 1.442695
  %v713 = vpow.pop %v712
  %v714 = vmul.f32 %v567, 1.442695
  %v715 = vpow.pop %v714
  %v716 = vmul.f32 %v568, 1.442695
  %v717 = vpow.pop %v716
  %v718 = vmul.f32 %v569, 1.442695
  %v719 = vpow.pop %v718
  %v720 = vmul.f32 %v570, 1.442695
  %v721 = vpow.pop %v720
  %v722 = vmul.f32 %v571, 1.442695
  %v723 = vpow.pop %v722
  %v724 = vmul.f32 %v572, 1.442695
  %v725 = vpow.pop %v724
  %v726 = vmul.f32 %v573, 1.442695
  %v727 = vpow.pop %v726
  %v728 = vmul.f32 %v574, 1.442695
  %v729 = vpow.pop %v728
  %v730 = vmul.f32 %v575, 1.442695
  %v731 = vpow.pop %v730
  %v732 = vmul.f32 %v576, 1.442695
  %v733 = vpow.pop %v732
  %v734 = vmul.f32 %v577, 1.442695
  %v735 = vpow.pop %v734
  %v736 = vmul.f32 %v578, 1.442695
  %v737 = vpow.pop %v736
  %v738 = vmul.f32 %v579, 1.442695
  %v739 = vpow.pop %v738
  %v740 = vmul.f32 %v580, 1.442695
  %v741 = vpow.pop %v740
  %v742 = vmul.f32 %v581, 1.442695
  %v743 = vpow.pop %v742
  %v744 = vmul.f32 %v582, 1.442695
  %v745 = vpow.pop %v744
  %v746 = vmul.f32 %v583, 1.442695
  %v747 = vpow.pop %v746
  %v748 = vmul.f32 %v584, 1.442695
  %v749 = vpow.pop %v748
  %v750 = vmul.f32 %v585, 1.442695
  %v751 = vpow.pop %v750
  %v752 = vmul.f32 %v586, 1.442695
  %v753 = vpow.pop %v752
  %v754 = vmul.f32 %v587, 1.442695
  %v755 = vpow.pop %v754
  %v756 = vmul.f32 %v588, 1.442695
  %v757 = vpow.pop %v756
  %v758 = vmul.f32 %v589, 1.442695
  %v759 = vpow.pop %v758
  %v760 = vmul.f32 %v590, 1.442695
  %v761 = vpow.pop %v760
  %v762 = vmul.f32 %v591, 1.442695
  %v763 = vpow.pop %v762
  %v764 = vmul.f32 %v592, 1.442695
  %v765 = vpow.pop %v764
  %v766 = vmul.f32 %v593, 1.442695
  %v767 = vpow.pop %v766
  %v768 = vmul.f32 %v594, 1.442695
  %v769 = vpow.pop %v768
  %v770 = vmul.f32 %v595, 1.442695
  %v771 = vpow.pop %v770
  %v772 = vmul.f32 %v596, 1.442695
  %v773 = vpow.pop %v772
  %v774 = vmul.f32 %v597, 1.442695
  %v775 = vpow.pop %v774
  %v776 = vmul.f32 %v598, 1.442695
  %v777 = vpow.pop %v776
  %v778 = vmul.f32 %v599, 1.442695
  %v779 = vpow.pop %v778
  %v780 = vmul.f32 %v600, 1.442695
  %v781 = vpow.pop %v780
  %v782 = vmul.f32 %v601, 1.442695
  %v783 = vpow.pop %v782
  %v784 = vmul.f32 %v602, 1.442695
  %v785 = vpow.pop %v784
  %v786 = vmul.f32 %v603, 1.442695
  %v787 = vpow.pop %v786
  %v788 = vmul.f32 %v604, 1.442695
  %v789 = vpow.pop %v788
  %v790 = vmul.f32 %v605, 1.442695
  %v791 = vpow.pop %v790
  %v792 = vmul.f32 %v606, 1.442695
  %v793 = vpow.pop %v792
  %v794 = vmul.f32 %v607, 1.442695
  %v795 = vpow.pop %v794
  %v796 = vmul.f32 %v608, 1.442695
  %v797 = vpow.pop %v796
  %v798 = vmul.f32 %v609, 1.442695
  %v799 = vpow.pop %v798
  %v800 = vmul.f32 %v610, 1.442695
  %v801 = vpow.pop %v800
  %v802 = vmul.f32 %v611, 1.442695
  %v803 = vpow.pop %v802
  %v804 = vmul.f32 %v612, 1.442695
  %v805 = vpow.pop %v804
  %v806 = vmul.f32 %v613, 1.442695
  %v807 = vpow.pop %v806
  %v808 = vmul.f32 %v614, 1.442695
  %v809 = vpow.pop %v808
  %v810 = vmul.f32 %v615, 1.442695
  %v811 = vpow.pop %v810
  %v812 = vmul.f32 %v616, 1.442695
  %v813 = vpow.pop %v812
  %v814 = vmul.f32 %v617, 1.442695
  %v815 = vpow.pop %v814
  %v816 = vmul.f32 %v618, 1.442695
  %v817 = vpow.pop %v816
  %v818 = vmul.f32 %v619, 1.442695
  %v819 = vpow.pop %v818
  %v820 = vmul.f32 %v620, 1.442695
  %v821 = vpow.pop %v820
  %v822 = vmul.f32 %v621, 1.442695
  %v823 = vpow.pop %v822
  %v824 = vmul.f32 %v622, 1.442695
  %v825 = vpow.pop %v824
  %v826 = vmul.f32 %v623, 1.442695
  %v827 = vpow.pop %v826
  %v828 = vmul.f32 %v624, 1.442695
  %v829 = vpow.pop %v828
  %v830 = vmul.f32 %v625, 1.442695
  %v831 = vpow.pop %v830
  %v832 = vmul.f32 %v626, 1.442695
  %v833 = vpow.pop %v832
  %v834 = vmul.f32 %v627, 1.442695
  %v835 = vpow.pop %v834
  %v836 = vmul.f32 %v628, 1.442695
  %v837 = vpow.pop %v836
  %v838 = vmul.f32 %v629, 1.442695
  %v839 = vpow.pop %v838
  %v840 = vmul.f32 %v630, 1.442695
  %v841 = vpow.pop %v840
  %v842 = vmul.f32 %v631, 1.442695
  %v843 = vpow.pop %v842
  %v844 = vmul.f32 %v632, 1.442695
  %v845 = vpow.pop %v844
  %v846 = vmul.f32 %v633, 1.442695
  %v847 = vpow.pop %v846
  %v848 = vmul.f32 %v634, 1.442695
  %v849 = vpow.pop %v848
  %v850 = vmul.f32 %v635, 1.442695
  %v851 = vpow.pop %v850
  %v852 = vmul.f32 %v636, 1.442695
  %v853 = vpow.pop %v852
  %v854 = vmul.f32 %v637, 1.442695
  %v855 = vpow.pop %v854
  %v856 = vmul.f32 %v638, 1.442695
  %v857 = vpow.pop %v856
  %v858 = vmul.f32 %v639, 1.442695
  %v859 = vpow.pop %v858
  %v860 = vmul.f32 %v640, 1.442695
  %v861 = vpow.pop %v860
  %v862 = vmul.f32 %v641, 1.442695
  %v863 = vpow.pop %v862
  %v864 = vmul.f32 %v642, 1.442695
  %v865 = vpow.pop %v864
  %v866 = vmul.f32 %v643, 1.442695
  %v867 = vpow.pop %v866
  %v868 = vmul.f32 %v644, 1.442695
  %v869 = vpow.pop %v868
  %v870 = vmul.f32 %v645, 1.442695
  %v871 = vpow.pop %v870
  %v872 = vmul.f32 %v646, 1.442695
  %v873 = vpow.pop %v872
  %v874 = vmul.f32 %v647, 1.442695
  %v875 = vpow.pop %v874
  %v876 = vmul.f32 %v648, 1.442695
  %v877 = vpow.pop %v876
  %v878 = vmul.f32 %v649, 1.442695
  %v879 = vpow.pop %v878
  %v880 = vmul.f32 %v650, 1.442695
  %v881 = vpow.pop %v880
  %v882 = vmul.f32 %v651, 1.442695
  %v883 = vpow.pop %v882
  %v884 = vmul.f32 %v652, 1.442695
  %v885 = vpow.pop %v884
  %v886 = vmul.f32 %v653, 1.442695
  %v887 = vpow.pop %v886
  %v888 = vmul.f32 %v654, 1.442695
  %v889 = vpow.pop %v888
  %v890 = vmul.f32 %v655, 1.442695
  %v891 = vpow.pop %v890
  %v892 = vmul.f32 %v656, 1.442695
  %v893 = vpow.pop %v892
  %v894 = vmul.f32 %v657, 1.442695
  %v895 = vpow.pop %v894
  %v896 = vmul.f32 %v658, 1.442695
  %v897 = vpow.pop %v896
  %v898 = vmul.f32 %v659, 1.442695
  %v899 = vpow.pop %v898
  %v900 = vmul.f32 %v660, 1.442695
  %v901 = vpow.pop %v900
  %v902 = vmul.f32 %v661, 1.442695
  %v903 = vpow.pop %v902
  %v904 = vmul.f32 %v662, 1.442695
  %v905 = vpow.pop %v904
  %v906 = vmul.f32 %v663, 1.442695
  %v907 = vpow.pop %v906
  %v908 = vmul.f32 %v664, 1.442695
  %v909 = vpow.pop %v908
  %v910 = vmul.f32 %v665, 1.442695
  %v911 = vpow.pop %v910
  %v912 = vmul.f32 %v666, 1.442695
  %v913 = vpow.pop %v912
  %v914 = vmul.f32 %v667, 1.442695
  %v915 = vpow.pop %v914
  %v916 = vmul.f32 %v668, 1.442695
  %v917 = vpow.pop %v916
  %v918 = vmul.f32 %v669, 1.442695
  %v919 = vpow.pop %v918
  %v920 = vmul.f32 %v670, 1.442695
  %v921 = vpow.pop %v920
  %v922 = vmul.f32 %v671, 1.442695
  %v923 = vpow.pop %v922
  %v924 = vmul.f32 %v672, 1.442695
  %v925 = vpow.pop %v924
  %v926 = vmul.f32 %v673, 1.442695
  %v927 = vpow.pop %v926
  %v928 = vmul.f32 %v674, 1.442695
  %v929 = vpow.pop %v928
  %v930 = vmul.f32 %v675, 1.442695
  %v931 = vpow.pop %v930
  %v932 = vsub.f32 %v677, 1.0
  %v933 = vsub.f32 %v679, 1.0
  %v934 = vsub.f32 %v681, 1.0
  %v935 = vsub.f32 %v683, 1.0
  %v936 = vsub.f32 %v685, 1.0
  %v937 = vsub.f32 %v687, 1.0
  %v938 = vsub.f32 %v689, 1.0
  %v939 = vsub.f32 %v691, 1.0
  %v940 = vsub.f32 %v693, 1.0
  %v941 = vsub.f32 %v695, 1.0
  %v942 = vsub.f32 %v697, 1.0
  %v943 = vsub.f32 %v699, 1.0
  %v944 = vsub.f32 %v701, 1.0
  %v945 = vsub.f32 %v703, 1.0
  %v946 = vsub.f32 %v705, 1.0
  %v947 = vsub.f32 %v707, 1.0
  %v948 = vsub.f32 %v709, 1.0
  %v949 = vsub.f32 %v711, 1.0
  %v950 = vsub.f32 %v713, 1.0
  %v951 = vsub.f32 %v715, 1.0
  %v952 = vsub.f32 %v717, 1.0
  %v953 = vsub.f32 %v719, 1.0
  %v954 = vsub.f32 %v721, 1.0
  %v955 = vsub.f32 %v723, 1.0
  %v956 = vsub.f32 %v725, 1.0
  %v957 = vsub.f32 %v727, 1.0
  %v958 = vsub.f32 %v729, 1.0
  %v959 = vsub.f32 %v731, 1.0
  %v960 = vsub.f32 %v733, 1.0
  %v961 = vsub.f32 %v735, 1.0
  %v962 = vsub.f32 %v737, 1.0
  %v963 = vsub.f32 %v739, 1.0
  %v964 = vsub.f32 %v741, 1.0
  %v965 = vsub.f32 %v743, 1.0
  %v966 = vsub.f32 %v745, 1.0
  %v967 = vsub.f32 %v747, 1.0
  %v968 = vsub.f32 %v749, 1.0
  %v969 = vsub.f32 %v751, 1.0
  %v970 = vsub.f32 %v753, 1.0
  %v971 = vsub.f32 %v755, 1.0
  %v972 = vsub.f32 %v757, 1.0
  %v973 = vsub.f32 %v759, 1.0
  %v974 = vsub.f32 %v761, 1.0
  %v975 = vsub.f32 %v763, 1.0
  %v976 = vsub.f32 %v765, 1.0
  %v977 = vsub.f32 %v767, 1.0
  %v978 = vsub.f32 %v769, 1.0
  %v979 = vsub.f32 %v771, 1.0
  %v980 = vsub.f32 %v773, 1.0
  %v981 = vsub.f32 %v775, 1.0
  %v982 = vsub.f32 %v777, 1.0
  %v983 = vsub.f32 %v779, 1.0
  %v984 = vsub.f32 %v781, 1.0
  %v985 = vsub.f32 %v783, 1.0
  %v986 = vsub.f32 %v785, 1.0
  %v987 = vsub.f32 %v787, 1.0
  %v988 = vsub.f32 %v789, 1.0
  %v989 = vsub.f32 %v791, 1.0
  %v990 = vsub.f32 %v793, 1.0
  %v991 = vsub.f32 %v795, 1.0
  %v992 = vsub.f32 %v797, 1.0
  %v993 = vsub.f32 %v799, 1.0
  %v994 = vsub.f32 %v801, 1.0
  %v995 = vsub.f32 %v803, 1.0
  %v996 = vsub.f32 %v805, 1.0
  %v997 = vsub.f32 %v807, 1.0
  %v998 = vsub.f32 %v809, 1.0
  %v999 = vsub.f32 %v811, 1.0
  %v1000 = vsub.f32 %v813, 1.0
  %v1001 = vsub.f32 %v815, 1.0
  %v1002 = vsub.f32 %v817, 1.0
  %v1003 = vsub.f32 %v819, 1.0
  %v1004 = vsub.f32 %v821, 1.0
  %v1005 = vsub.f32 %v823, 1.0
  %v1006 = vsub.f32 %v825, 1.0
  %v1007 = vsub.f32 %v827, 1.0
  %v1008 = vsub.f32 %v829, 1.0
  %v1009 = vsub.f32 %v831, 1.0
  %v1010 = vsub.f32 %v833, 1.0
  %v1011 = vsub.f32 %v835, 1.0
  %v1012 = vsub.f32 %v837, 1.0
  %v1013 = vsub.f32 %v839, 1.0
  %v1014 = vsub.f32 %v841, 1.0
  %v1015 = vsub.f32 %v843, 1.0
  %v1016 = vsub.f32 %v845, 1.0
  %v1017 = vsub.f32 %v847, 1.0
  %v1018 = vsub.f32 %v849, 1.0
  %v1019 = vsub.f32 %v851, 1.0
  %v1020 = vsub.f32 %v853, 1.0
  %v1021 = vsub.f32 %v855, 1.0
  %v1022 = vsub.f32 %v857, 1.0
  %v1023 = vsub.f32 %v859, 1.0
  %v1024 = vsub.f32 %v861, 1.0
  %v1025 = vsub.f32 %v863, 1.0
  %v1026 = vsub.f32 %v865, 1.0
  %v1027 = vsub.f32 %v867, 1.0
  %v1028 = vsub.f32 %v869, 1.0
  %v1029 = vsub.f32 %v871, 1.0
  %v1030 = vsub.f32 %v873, 1.0
  %v1031 = vsub.f32 %v875, 1.0
  %v1032 = vsub.f32 %v877, 1.0
  %v1033 = vsub.f32 %v879, 1.0
  %v1034 = vsub.f32 %v881, 1.0
  %v1035 = vsub.f32 %v883, 1.0
  %v1036 = vsub.f32 %v885, 1.0
  %v1037 = vsub.f32 %v887, 1.0
  %v1038 = vsub.f32 %v889, 1.0
  %v1039 = vsub.f32 %v891, 1.0
  %v1040 = vsub.f32 %v893, 1.0
  %v1041 = vsub.f32 %v895, 1.0
  %v1042 = vsub.f32 %v897, 1.0
  %v1043 = vsub.f32 %v899, 1.0
  %v1044 = vsub.f32 %v901, 1.0
  %v1045 = vsub.f32 %v903, 1.0
  %v1046 = vsub.f32 %v905, 1.0
  %v1047 = vsub.f32 %v907, 1.0
  %v1048 = vsub.f32 %v909, 1.0
  %v1049 = vsub.f32 %v911, 1.0
  %v1050 = vsub.f32 %v913, 1.0
  %v1051 = vsub.f32 %v915, 1.0
  %v1052 = vsub.f32 %v917, 1.0
  %v1053 = vsub.f32 %v919, 1.0
  %v1054 = vsub.f32 %v921, 1.0
  %v1055 = vsub.f32 %v923, 1.0
  %v1056 = vsub.f32 %v925, 1.0
  %v1057 = vsub.f32 %v927, 1.0
  %v1058 = vsub.f32 %v929, 1.0
  %v1059 = vsub.f32 %v931, 1.0
  %v1060 = vsel %vm420, %v292, %v932
  %v1061 = vsel %vm421, %v293, %v933
  %v1062 = vsel %vm422, %v294, %v934
  %v1063 = vsel %vm423, %v295, %v935
  %v1064 = vsel %vm424, %v296, %v936
  %v1065 = vsel %vm425, %v297, %v937
  %v1066 = vsel %vm426, %v298, %v938
  %v1067 = vsel %vm427, %v299, %v939
  %v1068 = vsel %vm428, %v300, %v940
  %v1069 = vsel %vm429, %v301, %v941
  %v1070 = vsel %vm430, %v302, %v942
  %v1071 = vsel %vm431, %v303, %v943
  %v1072 = vsel %vm432, %v304, %v944
  %v1073 = vsel %vm433, %v305, %v945
  %v1074 = vsel %vm434, %v306, %v946
  %v1075 = vsel %vm435, %v307, %v947
  %v1076 = vsel %vm436, %v308, %v948
  %v1077 = vsel %vm437, %v309, %v949
  %v1078 = vsel %vm438, %v310, %v950
  %v1079 = vsel %vm439, %v311, %v951
  %v1080 = vsel %vm440, %v312, %v952
  %v1081 = vsel %vm441, %v313, %v953
  %v1082 = vsel %vm442, %v314, %v954
  %v1083 = vsel %vm443, %v315, %v955
  %v1084 = vsel %vm444, %v316, %v956
  %v1085 = vsel %vm445, %v317, %v957
  %v1086 = vsel %vm446, %v318, %v958
  %v1087 = vsel %vm447, %v319, %v959
  %v1088 = vsel %vm448, %v320, %v960
  %v1089 = vsel %vm449, %v321, %v961
  %v1090 = vsel %vm450, %v322, %v962
  %v1091 = vsel %vm451, %v323, %v963
  %v1092 = vsel %vm452, %v324, %v964
  %v1093 = vsel %vm453, %v325, %v965
  %v1094 = vsel %vm454, %v326, %v966
  %v1095 = vsel %vm455, %v327, %v967
  %v1096 = vsel %vm456, %v328, %v968
  %v1097 = vsel %vm457, %v329, %v969
  %v1098 = vsel %vm458, %v330, %v970
  %v1099 = vsel %vm459, %v331, %v971
  %v1100 = vsel %vm460, %v332, %v972
  %v1101 = vsel %vm461, %v333, %v973
  %v1102 = vsel %vm462, %v334, %v974
  %v1103 = vsel %vm463, %v335, %v975
  %v1104 = vsel %vm464, %v336, %v976
  %v1105 = vsel %vm465, %v337, %v977
  %v1106 = vsel %vm466, %v338, %v978
  %v1107 = vsel %vm467, %v339, %v979
  %v1108 = vsel %vm468, %v340, %v980
  %v1109 = vsel %vm469, %v341, %v981
  %v1110 = vsel %vm470, %v342, %v982
  %v1111 = vsel %vm471, %v343, %v983
  %v1112 = vsel %vm472, %v344, %v984
  %v1113 = vsel %vm473, %v345, %v985
  %v1114 = vsel %vm474, %v346, %v986
  %v1115 = vsel %vm475, %v347, %v987
  %v1116 = vsel %vm476, %v348, %v988
  %v1117 = vsel %vm477, %v349, %v989
  %v1118 = vsel %vm478, %v350, %v990
  %v1119 = vsel %vm479, %v351, %v991
  %v1120 = vsel %vm480, %v352, %v992
  %v1121 = vsel %vm481, %v353, %v993
  %v1122 = vsel %vm482, %v354, %v994
  %v1123 = vsel %vm483, %v355, %v995
  %v1124 = vsel %vm484, %v356, %v996
  %v1125 = vsel %vm485, %v357, %v997
  %v1126 = vsel %vm486, %v358, %v998
  %v1127 = vsel %vm487, %v359, %v999
  %v1128 = vsel %vm488, %v360, %v1000
  %v1129 = vsel %vm489, %v361, %v1001
  %v1130 = vsel %vm490, %v362, %v1002
  %v1131 = vsel %vm491, %v363, %v1003
  %v1132 = vsel %vm492, %v364, %v1004
  %v1133 = vsel %vm493, %v365, %v1005
  %v1134 = vsel %vm494, %v366, %v1006
  %v1135 = vsel %vm495, %v367, %v1007
  %v1136 = vsel %vm496, %v368, %v1008
  %v1137 = vsel %vm497, %v369, %v1009
  %v1138 = vsel %vm498, %v370, %v1010
  %v1139 = vsel %vm499, %v371, %v1011
  %v1140 = vsel %vm500, %v372, %v1012
  %v1141 = vsel %vm501, %v373, %v1013
  %v1142 = vsel %vm502, %v374, %v1014
  %v1143 = vsel %vm503, %v375, %v1015
  %v1144 = vsel %vm504, %v376, %v1016
  %v1145 = vsel %vm505, %v377, %v1017
  %v1146 = vsel %vm506, %v378, %v1018
  %v1147 = vsel %vm507, %v379, %v1019
  %v1148 = vsel %vm508, %v380, %v1020
  %v1149 = vsel %vm509, %v381, %v1021
  %v1150 = vsel %vm510, %v382, %v1022
  %v1151 = vsel %vm511, %v383, %v1023
  %v1152 = vsel %vm512, %v384, %v1024
  %v1153 = vsel %vm513, %v385, %v1025
  %v1154 = vsel %vm514, %v386, %v1026
  %v1155 = vsel %vm515, %v387, %v1027
  %v1156 = vsel %vm516, %v388, %v1028
  %v1157 = vsel %vm517, %v389, %v1029
  %v1158 = vsel %vm518, %v390, %v1030
  %v1159 = vsel %vm519, %v391, %v1031
  %v1160 = vsel %vm520, %v392, %v1032
  %v1161 = vsel %vm521, %v393, %v1033
  %v1162 = vsel %vm522, %v394, %v1034
  %v1163 = vsel %vm523, %v395, %v1035
  %v1164 = vsel %vm524, %v396, %v1036
  %v1165 = vsel %vm525, %v397, %v1037
  %v1166 = vsel %vm526, %v398, %v1038
  %v1167 = vsel %vm527, %v399, %v1039
  %v1168 = vsel %vm528, %v400, %v1040
  %v1169 = vsel %vm529, %v401, %v1041
  %v1170 = vsel %vm530, %v402, %v1042
  %v1171 = vsel %vm531, %v403, %v1043
  %v1172 = vsel %vm532, %v404, %v1044
  %v1173 = vsel %vm533, %v405, %v1045
  %v1174 = vsel %vm534, %v406, %v1046
  %v1175 = vsel %vm535, %v407, %v1047
  %v1176 = vsel %vm536, %v408, %v1048
  %v1177 = vsel %vm537, %v409, %v1049
  %v1178 = vsel %vm538, %v410, %v1050
  %v1179 = vsel %vm539, %v411, %v1051
  %v1180 = vsel %vm540, %v412, %v1052
  %v1181 = vsel %vm541, %v413, %v1053
  %v1182 = vsel %vm542, %v414, %v1054
  %v1183 = vsel %vm543, %v415, %v1055
  %v1184 = vsel %vm544, %v416, %v1056
  %v1185 = vsel %vm545, %v417, %v1057
  %v1186 = vsel %vm546, %v418, %v1058
  %v1187 = vsel %vm547, %v419, %v1059
  %v1188 = vlaneseq
  %v1189 = vshrl.u32 %v1188, 7
  %v1190 = vsub.s32 3, %v1189
  %v1191 = vrot.slane %v155, %v1190
  %v1192 = vmul.f32 %v1060, %v1191
  %v1193 = vmul.f32 %v1061, %v1191
  %v1194 = vmul.f32 %v1062, %v1191
  %v1195 = vmul.f32 %v1063, %v1191
  %v1196 = vmul.f32 %v1064, %v1191
  %v1197 = vmul.f32 %v1065, %v1191
  %v1198 = vmul.f32 %v1066, %v1191
  %v1199 = vmul.f32 %v1067, %v1191
  %v1200 = vmul.f32 %v1068, %v1191
  %v1201 = vmul.f32 %v1069, %v1191
  %v1202 = vmul.f32 %v1070, %v1191
  %v1203 = vmul.f32 %v1071, %v1191
  %v1204 = vmul.f32 %v1072, %v1191
  %v1205 = vmul.f32 %v1073, %v1191
  %v1206 = vmul.f32 %v1074, %v1191
  %v1207 = vmul.f32 %v1075, %v1191
  %v1208 = vmul.f32 %v1076, %v1191
  %v1209 = vmul.f32 %v1077, %v1191
  %v1210 = vmul.f32 %v1078, %v1191
  %v1211 = vmul.f32 %v1079, %v1191
  %v1212 = vmul.f32 %v1080, %v1191
  %v1213 = vmul.f32 %v1081, %v1191
  %v1214 = vmul.f32 %v1082, %v1191
  %v1215 = vmul.f32 %v1083, %v1191
  %v1216 = vmul.f32 %v1084, %v1191
  %v1217 = vmul.f32 %v1085, %v1191
  %v1218 = vmul.f32 %v1086, %v1191
  %v1219 = vmul.f32 %v1087, %v1191
  %v1220 = vmul.f32 %v1088, %v1191
  %v1221 = vmul.f32 %v1089, %v1191
  %v1222 = vmul.f32 %v1090, %v1191
  %v1223 = vmul.f32 %v1091, %v1191
  %v1224 = vmul.f32 %v1092, %v1191
  %v1225 = vmul.f32 %v1093, %v1191
  %v1226 = vmul.f32 %v1094, %v1191
  %v1227 = vmul.f32 %v1095, %v1191
  %v1228 = vmul.f32 %v1096, %v1191
  %v1229 = vmul.f32 %v1097, %v1191
  %v1230 = vmul.f32 %v1098, %v1191
  %v1231 = vmul.f32 %v1099, %v1191
  %v1232 = vmul.f32 %v1100, %v1191
  %v1233 = vmul.f32 %v1101, %v1191
  %v1234 = vmul.f32 %v1102, %v1191
  %v1235 = vmul.f32 %v1103, %v1191
  %v1236 = vmul.f32 %v1104, %v1191
  %v1237 = vmul.f32 %v1105, %v1191
  %v1238 = vmul.f32 %v1106, %v1191
  %v1239 = vmul.f32 %v1107, %v1191
  %v1240 = vmul.f32 %v1108, %v1191
  %v1241 = vmul.f32 %v1109, %v1191
  %v1242 = vmul.f32 %v1110, %v1191
  %v1243 = vmul.f32 %v1111, %v1191
  %v1244 = vmul.f32 %v1112, %v1191
  %v1245 = vmul.f32 %v1113, %v1191
  %v1246 = vmul.f32 %v1114, %v1191
  %v1247 = vmul.f32 %v1115, %v1191
  %v1248 = vmul.f32 %v1116, %v1191
  %v1249 = vmul.f32 %v1117, %v1191
  %v1250 = vmul.f32 %v1118, %v1191
  %v1251 = vmul.f32 %v1119, %v1191
  %v1252 = vmul.f32 %v1120, %v1191
  %v1253 = vmul.f32 %v1121, %v1191
  %v1254 = vmul.f32 %v1122, %v1191
  %v1255 = vmul.f32 %v1123, %v1191
  %v1256 = vmul.f32 %v1124, %v1191
  %v1257 = vmul.f32 %v1125, %v1191
  %v1258 = vmul.f32 %v1126, %v1191
  %v1259 = vmul.f32 %v1127, %v1191
  %v1260 = vmul.f32 %v1128, %v1191
  %v1261 = vmul.f32 %v1129, %v1191
  %v1262 = vmul.f32 %v1130, %v1191
  %v1263 = vmul.f32 %v1131, %v1191
  %v1264 = vmul.f32 %v1132, %v1191
  %v1265 = vmul.f32 %v1133, %v1191
  %v1266 = vmul.f32 %v1134, %v1191
  %v1267 = vmul.f32 %v1135, %v1191
  %v1268 = vmul.f32 %v1136, %v1191
  %v1269 = vmul.f32 %v1137, %v1191
  %v1270 = vmul.f32 %v1138, %v1191
  %v1271 = vmul.f32 %v1139, %v1191
  %v1272 = vmul.f32 %v1140, %v1191
  %v1273 = vmul.f32 %v1141, %v1191
  %v1274 = vmul.f32 %v1142, %v1191
  %v1275 = vmul.f32 %v1143, %v1191
  %v1276 = vmul.f32 %v1144, %v1191
  %v1277 = vmul.f32 %v1145, %v1191
  %v1278 = vmul.f32 %v1146, %v1191
  %v1279 = vmul.f32 %v1147, %v1191
  %v1280 = vmul.f32 %v1148, %v1191
  %v1281 = vmul.f32 %v1149, %v1191
  %v1282 = vmul.f32 %v1150, %v1191
  %v1283 = vmul.f32 %v1151, %v1191
  %v1284 = vmul.f32 %v1152, %v1191
  %v1285 = vmul.f32 %v1153, %v1191
  %v1286 = vmul.f32 %v1154, %v1191
  %v1287 = vmul.f32 %v1155, %v1191
  %v1288 = vmul.f32 %v1156, %v1191
  %v1289 = vmul.f32 %v1157, %v1191
  %v1290 = vmul.f32 %v1158, %v1191
  %v1291 = vmul.f32 %v1159, %v1191
  %v1292 = vmul.f32 %v1160, %v1191
  %v1293 = vmul.f32 %v1161, %v1191
  %v1294 = vmul.f32 %v1162, %v1191
  %v1295 = vmul.f32 %v1163, %v1191
  %v1296 = vmul.f32 %v1164, %v1191
  %v1297 = vmul.f32 %v1165, %v1191
  %v1298 = vmul.f32 %v1166, %v1191
  %v1299 = vmul.f32 %v1167, %v1191
  %v1300 = vmul.f32 %v1168, %v1191
  %v1301 = vmul.f32 %v1169, %v1191
  %v1302 = vmul.f32 %v1170, %v1191
  %v1303 = vmul.f32 %v1171, %v1191
  %v1304 = vmul.f32 %v1172, %v1191
  %v1305 = vmul.f32 %v1173, %v1191
  %v1306 = vmul.f32 %v1174, %v1191
  %v1307 = vmul.f32 %v1175, %v1191
  %v1308 = vmul.f32 %v1176, %v1191
  %v1309 = vmul.f32 %v1177, %v1191
  %v1310 = vmul.f32 %v1178, %v1191
  %v1311 = vmul.f32 %v1179, %v1191
  %v1312 = vmul.f32 %v1180, %v1191
  %v1313 = vmul.f32 %v1181, %v1191
  %v1314 = vmul.f32 %v1182, %v1191
  %v1315 = vmul.f32 %v1183, %v1191
  %v1316 = vmul.f32 %v1184, %v1191
  %v1317 = vmul.f32 %v1185, %v1191
  %v1318 = vmul.f32 %v1186, %v1191
  %v1319 = vmul.f32 %v1187, %v1191
  %v1320 = vlaneseq
  %v1321 = vshrl.u32 %v1320, 7
  %v1322 = vsub.s32 4, %v1321
  %v1323 = vrot.slane %v155, %v1322
  %v1324 = vmul.f32 %v18, %v1323
  %v1325 = vmul.f32 %v19, %v1323
  %v1326 = vmul.f32 %v20, %v1323
  %v1327 = vmul.f32 %v21, %v1323
  %v1328 = vmul.f32 %v22, %v1323
  %v1329 = vmul.f32 %v23, %v1323
  %v1330 = vmul.f32 %v24, %v1323
  %v1331 = vmul.f32 %v25, %v1323
  %v1332 = vmul.f32 %v26, %v1323
  %v1333 = vmul.f32 %v27, %v1323
  %v1334 = vmul.f32 %v28, %v1323
  %v1335 = vmul.f32 %v29, %v1323
  %v1336 = vmul.f32 %v30, %v1323
  %v1337 = vmul.f32 %v31, %v1323
  %v1338 = vmul.f32 %v32, %v1323
  %v1339 = vmul.f32 %v33, %v1323
  %v1340 = vmul.f32 %v34, %v1323
  %v1341 = vmul.f32 %v35, %v1323
  %v1342 = vmul.f32 %v36, %v1323
  %v1343 = vmul.f32 %v37, %v1323
  %v1344 = vmul.f32 %v38, %v1323
  %v1345 = vmul.f32 %v39, %v1323
  %v1346 = vmul.f32 %v40, %v1323
  %v1347 = vmul.f32 %v41, %v1323
  %v1348 = vmul.f32 %v42, %v1323
  %v1349 = vmul.f32 %v43, %v1323
  %v1350 = vmul.f32 %v44, %v1323
  %v1351 = vmul.f32 %v45, %v1323
  %v1352 = vmul.f32 %v46, %v1323
  %v1353 = vmul.f32 %v47, %v1323
  %v1354 = vmul.f32 %v48, %v1323
  %v1355 = vmul.f32 %v49, %v1323
  %v1356 = vmul.f32 %v50, %v1323
  %v1357 = vmul.f32 %v51, %v1323
  %v1358 = vmul.f32 %v52, %v1323
  %v1359 = vmul.f32 %v53, %v1323
  %v1360 = vmul.f32 %v54, %v1323
  %v1361 = vmul.f32 %v55, %v1323
  %v1362 = vmul.f32 %v56, %v1323
  %v1363 = vmul.f32 %v57, %v1323
  %v1364 = vmul.f32 %v58, %v1323
  %v1365 = vmul.f32 %v59, %v1323
  %v1366 = vmul.f32 %v60, %v1323
  %v1367 = vmul.f32 %v61, %v1323
  %v1368 = vmul.f32 %v62, %v1323
  %v1369 = vmul.f32 %v63, %v1323
  %v1370 = vmul.f32 %v64, %v1323
  %v1371 = vmul.f32 %v65, %v1323
  %v1372 = vmul.f32 %v66, %v1323
  %v1373 = vmul.f32 %v67, %v1323
  %v1374 = vmul.f32 %v68, %v1323
  %v1375 = vmul.f32 %v69, %v1323
  %v1376 = vmul.f32 %v70, %v1323
  %v1377 = vmul.f32 %v71, %v1323
  %v1378 = vmul.f32 %v72, %v1323
  %v1379 = vmul.f32 %v73, %v1323
  %v1380 = vmul.f32 %v74, %v1323
  %v1381 = vmul.f32 %v75, %v1323
  %v1382 = vmul.f32 %v76, %v1323
  %v1383 = vmul.f32 %v77, %v1323
  %v1384 = vmul.f32 %v78, %v1323
  %v1385 = vmul.f32 %v79, %v1323
  %v1386 = vmul.f32 %v80, %v1323
  %v1387 = vmul.f32 %v81, %v1323
  %v1388 = vmul.f32 %v82, %v1323
  %v1389 = vmul.f32 %v83, %v1323
  %v1390 = vmul.f32 %v84, %v1323
  %v1391 = vmul.f32 %v85, %v1323
  %v1392 = vmul.f32 %v86, %v1323
  %v1393 = vmul.f32 %v87, %v1323
  %v1394 = vmul.f32 %v88, %v1323
  %v1395 = vmul.f32 %v89, %v1323
  %v1396 = vmul.f32 %v90, %v1323
  %v1397 = vmul.f32 %v91, %v1323
  %v1398 = vmul.f32 %v92, %v1323
  %v1399 = vmul.f32 %v93, %v1323
  %v1400 = vmul.f32 %v94, %v1323
  %v1401 = vmul.f32 %v95, %v1323
  %v1402 = vmul.f32 %v96, %v1323
  %v1403 = vmul.f32 %v97, %v1323
  %v1404 = vmul.f32 %v98, %v1323
  %v1405 = vmul.f32 %v99, %v1323
  %v1406 = vmul.f32 %v100, %v1323
  %v1407 = vmul.f32 %v101, %v1323
  %v1408 = vmul.f32 %v102, %v1323
  %v1409 = vmul.f32 %v103, %v1323
  %v1410 = vmul.f32 %v104, %v1323
  %v1411 = vmul.f32 %v105, %v1323
  %v1412 = vmul.f32 %v106, %v1323
  %v1413 = vmul.f32 %v107, %v1323
  %v1414 = vmul.f32 %v108, %v1323
  %v1415 = vmul.f32 %v109, %v1323
  %v1416 = vmul.f32 %v110, %v1323
  %v1417 = vmul.f32 %v111, %v1323
  %v1418 = vmul.f32 %v112, %v1323
  %v1419 = vmul.f32 %v113, %v1323
  %v1420 = vmul.f32 %v114, %v1323
  %v1421 = vmul.f32 %v115, %v1323
  %v1422 = vmul.f32 %v116, %v1323
  %v1423 = vmul.f32 %v117, %v1323
  %v1424 = vmul.f32 %v118, %v1323
  %v1425 = vmul.f32 %v119, %v1323
  %v1426 = vmul.f32 %v120, %v1323
  %v1427 = vmul.f32 %v121, %v1323
  %v1428 = vmul.f32 %v122, %v1323
  %v1429 = vmul.f32 %v123, %v1323
  %v1430 = vmul.f32 %v124, %v1323
  %v1431 = vmul.f32 %v125, %v1323
  %v1432 = vmul.f32 %v126, %v1323
  %v1433 = vmul.f32 %v127, %v1323
  %v1434 = vmul.f32 %v128, %v1323
  %v1435 = vmul.f32 %v129, %v1323
  %v1436 = vmul.f32 %v130, %v1323
  %v1437 = vmul.f32 %v131, %v1323
  %v1438 = vmul.f32 %v132, %v1323
  %v1439 = vmul.f32 %v133, %v1323
  %v1440 = vmul.f32 %v134, %v1323
  %v1441 = vmul.f32 %v135, %v1323
  %v1442 = vmul.f32 %v136, %v1323
  %v1443 = vmul.f32 %v137, %v1323
  %v1444 = vmul.f32 %v138, %v1323
  %v1445 = vmul.f32 %v139, %v1323
  %v1446 = vmul.f32 %v140, %v1323
  %v1447 = vmul.f32 %v141, %v1323
  %v1448 = vmul.f32 %v142, %v1323
  %v1449 = vmul.f32 %v143, %v1323
  %v1450 = vmul.f32 %v144, %v1323
  %v1451 = vmul.f32 %v145, %v1323
  %v1452 = vadd.f32 %v1192, %v1324
  %v1453 = vadd.f32 %v1193, %v1325
  %v1454 = vadd.f32 %v1194, %v1326
  %v1455 = vadd.f32 %v1195, %v1327
  %v1456 = vadd.f32 %v1196, %v1328
  %v1457 = vadd.f32 %v1197, %v1329
  %v1458 = vadd.f32 %v1198, %v1330
  %v1459 = vadd.f32 %v1199, %v1331
  %v1460 = vadd.f32 %v1200, %v1332
  %v1461 = vadd.f32 %v1201, %v1333
  %v1462 = vadd.f32 %v1202, %v1334
  %v1463 = vadd.f32 %v1203, %v1335
  %v1464 = vadd.f32 %v1204, %v1336
  %v1465 = vadd.f32 %v1205, %v1337
  %v1466 = vadd.f32 %v1206, %v1338
  %v1467 = vadd.f32 %v1207, %v1339
  %v1468 = vadd.f32 %v1208, %v1340
  %v1469 = vadd.f32 %v1209, %v1341
  %v1470 = vadd.f32 %v1210, %v1342
  %v1471 = vadd.f32 %v1211, %v1343
  %v1472 = vadd.f32 %v1212, %v1344
  %v1473 = vadd.f32 %v1213, %v1345
  %v1474 = vadd.f32 %v1214, %v1346
  %v1475 = vadd.f32 %v1215, %v1347
  %v1476 = vadd.f32 %v1216, %v1348
  %v1477 = vadd.f32 %v1217, %v1349
  %v1478 = vadd.f32 %v1218, %v1350
  %v1479 = vadd.f32 %v1219, %v1351
  %v1480 = vadd.f32 %v1220, %v1352
  %v1481 = vadd.f32 %v1221, %v1353
  %v1482 = vadd.f32 %v1222, %v1354
  %v1483 = vadd.f32 %v1223, %v1355
  %v1484 = vadd.f32 %v1224, %v1356
  %v1485 = vadd.f32 %v1225, %v1357
  %v1486 = vadd.f32 %v1226, %v1358
  %v1487 = vadd.f32 %v1227, %v1359
  %v1488 = vadd.f32 %v1228, %v1360
  %v1489 = vadd.f32 %v1229, %v1361
  %v1490 = vadd.f32 %v1230, %v1362
  %v1491 = vadd.f32 %v1231, %v1363
  %v1492 = vadd.f32 %v1232, %v1364
  %v1493 = vadd.f32 %v1233, %v1365
  %v1494 = vadd.f32 %v1234, %v1366
  %v1495 = vadd.f32 %v1235, %v1367
  %v1496 = vadd.f32 %v1236, %v1368
  %v1497 = vadd.f32 %v1237, %v1369
  %v1498 = vadd.f32 %v1238, %v1370
  %v1499 = vadd.f32 %v1239, %v1371
  %v1500 = vadd.f32 %v1240, %v1372
  %v1501 = vadd.f32 %v1241, %v1373
  %v1502 = vadd.f32 %v1242, %v1374
  %v1503 = vadd.f32 %v1243, %v1375
  %v1504 = vadd.f32 %v1244, %v1376
  %v1505 = vadd.f32 %v1245, %v1377
  %v1506 = vadd.f32 %v1246, %v1378
  %v1507 = vadd.f32 %v1247, %v1379
  %v1508 = vadd.f32 %v1248, %v1380
  %v1509 = vadd.f32 %v1249, %v1381
  %v1510 = vadd.f32 %v1250, %v1382
  %v1511 = vadd.f32 %v1251, %v1383
  %v1512 = vadd.f32 %v1252, %v1384
  %v1513 = vadd.f32 %v1253, %v1385
  %v1514 = vadd.f32 %v1254, %v1386
  %v1515 = vadd.f32 %v1255, %v1387
  %v1516 = vadd.f32 %v1256, %v1388
  %v1517 = vadd.f32 %v1257, %v1389
  %v1518 = vadd.f32 %v1258, %v1390
  %v1519 = vadd.f32 %v1259, %v1391
  %v1520 = vadd.f32 %v1260, %v1392
  %v1521 = vadd.f32 %v1261, %v1393
  %v1522 = vadd.f32 %v1262, %v1394
  %v1523 = vadd.f32 %v1263, %v1395
  %v1524 = vadd.f32 %v1264, %v1396
  %v1525 = vadd.f32 %v1265, %v1397
  %v1526 = vadd.f32 %v1266, %v1398
  %v1527 = vadd.f32 %v1267, %v1399
  %v1528 = vadd.f32 %v1268, %v1400
  %v1529 = vadd.f32 %v1269, %v1401
  %v1530 = vadd.f32 %v1270, %v1402
  %v1531 = vadd.f32 %v1271, %v1403
  %v1532 = vadd.f32 %v1272, %v1404
  %v1533 = vadd.f32 %v1273, %v1405
  %v1534 = vadd.f32 %v1274, %v1406
  %v1535 = vadd.f32 %v1275, %v1407
  %v1536 = vadd.f32 %v1276, %v1408
  %v1537 = vadd.f32 %v1277, %v1409
  %v1538 = vadd.f32 %v1278, %v1410
  %v1539 = vadd.f32 %v1279, %v1411
  %v1540 = vadd.f32 %v1280, %v1412
  %v1541 = vadd.f32 %v1281, %v1413
  %v1542 = vadd.f32 %v1282, %v1414
  %v1543 = vadd.f32 %v1283, %v1415
  %v1544 = vadd.f32 %v1284, %v1416
  %v1545 = vadd.f32 %v1285, %v1417
  %v1546 = vadd.f32 %v1286, %v1418
  %v1547 = vadd.f32 %v1287, %v1419
  %v1548 = vadd.f32 %v1288, %v1420
  %v1549 = vadd.f32 %v1289, %v1421
  %v1550 = vadd.f32 %v1290, %v1422
  %v1551 = vadd.f32 %v1291, %v1423
  %v1552 = vadd.f32 %v1292, %v1424
  %v1553 = vadd.f32 %v1293, %v1425
  %v1554 = vadd.f32 %v1294, %v1426
  %v1555 = vadd.f32 %v1295, %v1427
  %v1556 = vadd.f32 %v1296, %v1428
  %v1557 = vadd.f32 %v1297, %v1429
  %v1558 = vadd.f32 %v1298, %v1430
  %v1559 = vadd.f32 %v1299, %v1431
  %v1560 = vadd.f32 %v1300, %v1432
  %v1561 = vadd.f32 %v1301, %v1433
  %v1562 = vadd.f32 %v1302, %v1434
  %v1563 = vadd.f32 %v1303, %v1435
  %v1564 = vadd.f32 %v1304, %v1436
  %v1565 = vadd.f32 %v1305, %v1437
  %v1566 = vadd.f32 %v1306, %v1438
  %v1567 = vadd.f32 %v1307, %v1439
  %v1568 = vadd.f32 %v1308, %v1440
  %v1569 = vadd.f32 %v1309, %v1441
  %v1570 = vadd.f32 %v1310, %v1442
  %v1571 = vadd.f32 %v1311, %v1443
  %v1572 = vadd.f32 %v1312, %v1444
  %v1573 = vadd.f32 %v1313, %v1445
  %v1574 = vadd.f32 %v1314, %v1446
  %v1575 = vadd.f32 %v1315, %v1447
  %v1576 = vadd.f32 %v1316, %v1448
  %v1577 = vadd.f32 %v1317, %v1449
  %v1578 = vadd.f32 %v1318, %v1450
  %v1579 = vadd.f32 %v1319, %v1451
  %v1580 = vpack.c.bf16 %v1453, %v1452
  %v1581 = vpack.c.bf16 %v1455, %v1454
  %v1582 = vpack.c.bf16 %v1457, %v1456
  %v1583 = vpack.c.bf16 %v1459, %v1458
  %v1584 = vpack.c.bf16 %v1461, %v1460
  %v1585 = vpack.c.bf16 %v1463, %v1462
  %v1586 = vpack.c.bf16 %v1465, %v1464
  %v1587 = vpack.c.bf16 %v1467, %v1466
  %v1588 = vpack.c.bf16 %v1469, %v1468
  %v1589 = vpack.c.bf16 %v1471, %v1470
  %v1590 = vpack.c.bf16 %v1473, %v1472
  %v1591 = vpack.c.bf16 %v1475, %v1474
  %v1592 = vpack.c.bf16 %v1477, %v1476
  %v1593 = vpack.c.bf16 %v1479, %v1478
  %v1594 = vpack.c.bf16 %v1481, %v1480
  %v1595 = vpack.c.bf16 %v1483, %v1482
  %v1596 = vpack.c.bf16 %v1485, %v1484
  %v1597 = vpack.c.bf16 %v1487, %v1486
  %v1598 = vpack.c.bf16 %v1489, %v1488
  %v1599 = vpack.c.bf16 %v1491, %v1490
  %v1600 = vpack.c.bf16 %v1493, %v1492
  %v1601 = vpack.c.bf16 %v1495, %v1494
  %v1602 = vpack.c.bf16 %v1497, %v1496
  %v1603 = vpack.c.bf16 %v1499, %v1498
  %v1604 = vpack.c.bf16 %v1501, %v1500
  %v1605 = vpack.c.bf16 %v1503, %v1502
  %v1606 = vpack.c.bf16 %v1505, %v1504
  %v1607 = vpack.c.bf16 %v1507, %v1506
  %v1608 = vpack.c.bf16 %v1509, %v1508
  %v1609 = vpack.c.bf16 %v1511, %v1510
  %v1610 = vpack.c.bf16 %v1513, %v1512
  %v1611 = vpack.c.bf16 %v1515, %v1514
  %v1612 = vpack.c.bf16 %v1517, %v1516
  %v1613 = vpack.c.bf16 %v1519, %v1518
  %v1614 = vpack.c.bf16 %v1521, %v1520
  %v1615 = vpack.c.bf16 %v1523, %v1522
  %v1616 = vpack.c.bf16 %v1525, %v1524
  %v1617 = vpack.c.bf16 %v1527, %v1526
  %v1618 = vpack.c.bf16 %v1529, %v1528
  %v1619 = vpack.c.bf16 %v1531, %v1530
  %v1620 = vpack.c.bf16 %v1533, %v1532
  %v1621 = vpack.c.bf16 %v1535, %v1534
  %v1622 = vpack.c.bf16 %v1537, %v1536
  %v1623 = vpack.c.bf16 %v1539, %v1538
  %v1624 = vpack.c.bf16 %v1541, %v1540
  %v1625 = vpack.c.bf16 %v1543, %v1542
  %v1626 = vpack.c.bf16 %v1545, %v1544
  %v1627 = vpack.c.bf16 %v1547, %v1546
  %v1628 = vpack.c.bf16 %v1549, %v1548
  %v1629 = vpack.c.bf16 %v1551, %v1550
  %v1630 = vpack.c.bf16 %v1553, %v1552
  %v1631 = vpack.c.bf16 %v1555, %v1554
  %v1632 = vpack.c.bf16 %v1557, %v1556
  %v1633 = vpack.c.bf16 %v1559, %v1558
  %v1634 = vpack.c.bf16 %v1561, %v1560
  %v1635 = vpack.c.bf16 %v1563, %v1562
  %v1636 = vpack.c.bf16 %v1565, %v1564
  %v1637 = vpack.c.bf16 %v1567, %v1566
  %v1638 = vpack.c.bf16 %v1569, %v1568
  %v1639 = vpack.c.bf16 %v1571, %v1570
  %v1640 = vpack.c.bf16 %v1573, %v1572
  %v1641 = vpack.c.bf16 %v1575, %v1574
  %v1642 = vpack.c.bf16 %v1577, %v1576
  %v1643 = vpack.c.bf16 %v1579, %v1578
  %v1644 = vld [vmem:[%s1] sm:$0xf]
  %v1645 = vld [vmem:[%s1 + $0x4] sm:$0xf]
  %v1646 = vld [vmem:[%s1 + $0x8] sm:$0xf]
  %v1647 = vld [vmem:[%s1 + $0xc] sm:$0xf]
  %v1648 = vld [vmem:[%s1 + $0x10] sm:$0xf]
  %v1649 = vld [vmem:[%s1 + $0x14] sm:$0xf]
  %v1650 = vld [vmem:[%s1 + $0x18] sm:$0xf]
  %v1651 = vld [vmem:[%s1 + $0x1c] sm:$0xf]
  %s1652 = scalar_lea.vmem %s1, 32
  %v1653 = vld [vmem:[%s1652] sm:$0xf]
  %v1654 = vld [vmem:[%s1652 + $0x4] sm:$0xf]
  %v1655 = vld [vmem:[%s1652 + $0x8] sm:$0xf]
  %v1656 = vld [vmem:[%s1652 + $0xc] sm:$0xf]
  %v1657 = vld [vmem:[%s1652 + $0x10] sm:$0xf]
  %v1658 = vld [vmem:[%s1652 + $0x14] sm:$0xf]
  %v1659 = vld [vmem:[%s1652 + $0x18] sm:$0xf]
  %v1660 = vld [vmem:[%s1652 + $0x1c] sm:$0xf]
  %v1669 = vunpack.c.l.b16 %v1653
  %v1670 = vunpack.c.l.b16 %v1654
  %v1671 = vunpack.c.l.b16 %v1655
  %v1672 = vunpack.c.l.b16 %v1656
  %v1673 = vunpack.c.l.b16 %v1657
  %v1674 = vunpack.c.l.b16 %v1658
  %v1675 = vunpack.c.l.b16 %v1659
  %v1676 = vunpack.c.l.b16 %v1660
  %v1677 = vpack.c.b16 %v1670, %v1669
  %v1678 = vpack.c.b16 %v1672, %v1671
  %v1679 = vpack.c.b16 %v1674, %v1673
  %v1680 = vpack.c.b16 %v1676, %v1675
  %vm1685 = vcmask 523264
  %v1687 = vsel %vm1685, %v1584, 0
  %v1690 = vsel %vm1685, %v1585, 0
  %v1693 = vsel %vm1685, %v1586, 0
  %v1696 = vsel %vm1685, %v1587, 0
  %v1699 = vsel %vm1685, %v1588, 0
  %v1702 = vsel %vm1685, %v1589, 0
  %v1705 = vsel %vm1685, %v1590, 0
  %v1708 = vsel %vm1685, %v1591, 0
  %1710 = vmatprep.subr.bf16.mxu0 0
  %1711 = vmatpush1.bf16.msra.mxu0 %v1677
  %1712 = vmatprep.subr.bf16.mxu0 0
  %1713 = vmatpush1.bf16.msra.mxu0 %v1678
  %1714 = vmatprep.subr.bf16.mxu0 0
  %1715 = vmatpush1.bf16.msra.mxu0 %v1679
  %1716 = vmatprep.subr.bf16.mxu0 0
  %1717 = vmatpush1.bf16.msra.mxu0 %v1680
  %1718 = vmatprep.subr.bf16.mxu0 0
  %1719 = vmatpush1.bf16.msra.mxu0 0
  %1720 = vmatprep.subr.bf16.mxu0 0
  %1721 = vmatpush1.bf16.msra.mxu0 0
  %1722 = vmatprep.subr.bf16.mxu0 0
  %1723 = vmatpush1.bf16.msra.mxu0 0
  %1724 = vmatprep.subr.bf16.mxu0 0
  %1725 = vmatpush1.bf16.msra.mxu0 0
  %1726 = vmatprep.subr.bf16.mxu0 0
  %1727 = vmatpush1.bf16.msra.mxu0 0
  %1728 = vmatprep.subr.bf16.mxu0 0
  %1729 = vmatpush1.bf16.msra.mxu0 0
  %1730 = vmatprep.subr.bf16.mxu0 0
  %1731 = vmatpush1.bf16.msra.mxu0 0
  %1732 = vmatprep.subr.bf16.mxu0 0
  %1733 = vmatpush1.bf16.msra.mxu0 0
  %1734 = vmatprep.subr.bf16.mxu0 0
  %1735 = vmatpush1.bf16.msra.mxu0 0
  %1736 = vmatprep.subr.bf16.mxu0 0
  %1737 = vmatpush1.bf16.msra.mxu0 0
  %1738 = vmatprep.subr.bf16.mxu0 0
  %1739 = vmatpush1.bf16.msra.mxu0 0
  %1740 = vmatprep.subr.bf16.mxu0 0
  %1741 = vmatpush1.bf16.msra.mxu0 0
  %1742 = vmatprep.mubr.bf16.mxu0 0
  %1743 = vmatmul.mubr.bf16.gmra.mrb[0].mxu0 %v1687
  %v1744 = vpop.f32.mrb[0].mxu0
  %v1745 = vadd.f32 0.0, %v1744
  %v1746 = vpop.f32.mrb[0].mxu0
  %v1747 = vpop.f32.mrb[0].mxu0
  %v1748 = vadd.f32 0.0, %v1747
  %v1749 = vpop.f32.mrb[0].mxu0
  %1750 = vmatprep.mubr.bf16.mxu0 0
  %1751 = vmatmul.mubr.bf16.gmra.mrb[0].mxu0 %v1690
  %v1752 = vpop.f32.mrb[0].mxu0
  %v1753 = vadd.f32 0.0, %v1752
  %v1754 = vpop.f32.mrb[0].mxu0
  %v1755 = vpop.f32.mrb[0].mxu0
  %v1756 = vadd.f32 0.0, %v1755
  %v1757 = vpop.f32.mrb[0].mxu0
  %1758 = vmatprep.mubr.bf16.mxu0 0
  %1759 = vmatmul.mubr.bf16.gmra.mrb[0].mxu0 %v1693
  %v1760 = vpop.f32.mrb[0].mxu0
  %v1761 = vadd.f32 0.0, %v1760
  %v1762 = vpop.f32.mrb[0].mxu0
  %v1763 = vpop.f32.mrb[0].mxu0
  %v1764 = vadd.f32 0.0, %v1763
  %v1765 = vpop.f32.mrb[0].mxu0
  %1766 = vmatprep.mubr.bf16.mxu0 0
  %1767 = vmatmul.mubr.bf16.gmra.mrb[0].mxu0 %v1696
  %v1768 = vpop.f32.mrb[0].mxu0
  %v1769 = vadd.f32 0.0, %v1768
  %v1770 = vpop.f32.mrb[0].mxu0
  %v1771 = vpop.f32.mrb[0].mxu0
  %v1772 = vadd.f32 0.0, %v1771
  %v1773 = vpop.f32.mrb[0].mxu0
  %1774 = vmatprep.mubr.bf16.mxu0 0
  %1775 = vmatmul.mubr.bf16.gmra.mrb[0].mxu0 %v1699
  %v1776 = vpop.f32.mrb[0].mxu0
  %v1777 = vadd.f32 0.0, %v1776
  %v1778 = vpop.f32.mrb[0].mxu0
  %v1779 = vpop.f32.mrb[0].mxu0
  %v1780 = vadd.f32 0.0, %v1779
  %v1781 = vpop.f32.mrb[0].mxu0
  %1782 = vmatprep.mubr.bf16.mxu0 0
  %1783 = vmatmul.mubr.bf16.gmra.mrb[0].mxu0 %v1702
  %v1784 = vpop.f32.mrb[0].mxu0
  %v1785 = vadd.f32 0.0, %v1784
  %v1786 = vpop.f32.mrb[0].mxu0
  %v1787 = vpop.f32.mrb[0].mxu0
  %v1788 = vadd.f32 0.0, %v1787
  %v1789 = vpop.f32.mrb[0].mxu0
  %1790 = vmatprep.mubr.bf16.mxu0 0
  %1791 = vmatmul.mubr.bf16.gmra.mrb[0].mxu0 %v1705
  %v1792 = vpop.f32.mrb[0].mxu0
  %v1793 = vadd.f32 0.0, %v1792
  %v1794 = vpop.f32.mrb[0].mxu0
  %v1795 = vpop.f32.mrb[0].mxu0
  %v1796 = vadd.f32 0.0, %v1795
  %v1797 = vpop.f32.mrb[0].mxu0
  %1798 = vmatprep.mubr.bf16.mxu0 0
  %1799 = vmatmul.mubr.bf16.gmra.mrb[0].mxu0 %v1708
  %v1800 = vpop.f32.mrb[0].mxu0
  %v1801 = vadd.f32 0.0, %v1800
  %v1802 = vpop.f32.mrb[0].mxu0
  %v1803 = vpop.f32.mrb[0].mxu0
  %v1804 = vadd.f32 0.0, %v1803
  %v1805 = vpop.f32.mrb[0].mxu0
  %1806 = vdwg.mxu0
  %v1815 = vunpack.c.l.b16 %v1644
  %v1816 = vunpack.c.l.b16 %v1645
  %v1817 = vunpack.c.l.b16 %v1646
  %v1818 = vunpack.c.l.b16 %v1647
  %v1819 = vunpack.c.l.b16 %v1648
  %v1820 = vunpack.c.l.b16 %v1649
  %v1821 = vunpack.c.l.b16 %v1650
  %v1822 = vunpack.c.l.b16 %v1651
  %v1823 = vpack.c.b16 %v1816, %v1815
  %v1824 = vpack.c.b16 %v1818, %v1817
  %v1825 = vpack.c.b16 %v1820, %v1819
  %v1826 = vpack.c.b16 %v1822, %v1821
  %v1832 = vsel %vm1685, %v1580, 0
  %v1835 = vsel %vm1685, %v1581, 0
  %v1838 = vsel %vm1685, %v1582, 0
  %v1841 = vsel %vm1685, %v1583, 0
  %1843 = vmatprep.subr.bf16.mxu0 0
  %1844 = vmatpush1.bf16.msra.mxu0 %v1823
  %1845 = vmatprep.subr.bf16.mxu0 0
  %1846 = vmatpush1.bf16.msra.mxu0 %v1824
  %1847 = vmatprep.subr.bf16.mxu0 0
  %1848 = vmatpush1.bf16.msra.mxu0 %v1825
  %1849 = vmatprep.subr.bf16.mxu0 0
  %1850 = vmatpush1.bf16.msra.mxu0 %v1826
  %1851 = vmatprep.subr.bf16.mxu0 0
  %1852 = vmatpush1.bf16.msra.mxu0 0
  %1853 = vmatprep.subr.bf16.mxu0 0
  %1854 = vmatpush1.bf16.msra.mxu0 0
  %1855 = vmatprep.subr.bf16.mxu0 0
  %1856 = vmatpush1.bf16.msra.mxu0 0
  %1857 = vmatprep.subr.bf16.mxu0 0
  %1858 = vmatpush1.bf16.msra.mxu0 0
  %1859 = vmatprep.subr.bf16.mxu0 0
  %1860 = vmatpush1.bf16.msra.mxu0 0
  %1861 = vmatprep.subr.bf16.mxu0 0
  %1862 = vmatpush1.bf16.msra.mxu0 0
  %1863 = vmatprep.subr.bf16.mxu0 0
  %1864 = vmatpush1.bf16.msra.mxu0 0
  %1865 = vmatprep.subr.bf16.mxu0 0
  %1866 = vmatpush1.bf16.msra.mxu0 0
  %1867 = vmatprep.subr.bf16.mxu0 0
  %1868 = vmatpush1.bf16.msra.mxu0 0
  %1869 = vmatprep.subr.bf16.mxu0 0
  %1870 = vmatpush1.bf16.msra.mxu0 0
  %1871 = vmatprep.subr.bf16.mxu0 0
  %1872 = vmatpush1.bf16.msra.mxu0 0
  %1873 = vmatprep.subr.bf16.mxu0 0
  %1874 = vmatpush1.bf16.msra.mxu0 0
  %1875 = vmatprep.mubr.bf16.mxu0 0
  %1876 = vmatmul.mubr.bf16.gmra.mrb[0].mxu0 %v1832
  %v1877 = vpop.f32.mrb[0].mxu0
  %v1878 = vadd.f32 %v1745, %v1877
  %v1879 = vpop.f32.mrb[0].mxu0
  %v1880 = vpop.f32.mrb[0].mxu0
  %v1881 = vadd.f32 %v1748, %v1880
  %v1882 = vpop.f32.mrb[0].mxu0
  %1883 = vmatprep.mubr.bf16.mxu0 0
  %1884 = vmatmul.mubr.bf16.gmra.mrb[0].mxu0 %v1835
  %v1885 = vpop.f32.mrb[0].mxu0
  %v1886 = vadd.f32 %v1753, %v1885
  %v1887 = vpop.f32.mrb[0].mxu0
  %v1888 = vpop.f32.mrb[0].mxu0
  %v1889 = vadd.f32 %v1756, %v1888
  %v1890 = vpop.f32.mrb[0].mxu0
  %1891 = vmatprep.mubr.bf16.mxu0 0
  %1892 = vmatmul.mubr.bf16.gmra.mrb[0].mxu0 %v1838
  %v1893 = vpop.f32.mrb[0].mxu0
  %v1894 = vadd.f32 %v1761, %v1893
  %v1895 = vpop.f32.mrb[0].mxu0
  %v1896 = vpop.f32.mrb[0].mxu0
  %v1897 = vadd.f32 %v1764, %v1896
  %v1898 = vpop.f32.mrb[0].mxu0
  %1899 = vmatprep.mubr.bf16.mxu0 0
  %1900 = vmatmul.mubr.bf16.gmra.mrb[0].mxu0 %v1841
  %v1901 = vpop.f32.mrb[0].mxu0
  %v1902 = vadd.f32 %v1769, %v1901
  %v1903 = vpop.f32.mrb[0].mxu0
  %v1904 = vpop.f32.mrb[0].mxu0
  %v1905 = vadd.f32 %v1772, %v1904
  %v1906 = vpop.f32.mrb[0].mxu0
  %1907 = vmatprep.mubr.bf16.mxu0 0
  %1908 = vmatmul.mubr.bf16.gmra.mrb[0].mxu0 %v1687
  %v1909 = vpop.f32.mrb[0].mxu0
  %v1910 = vadd.f32 %v1777, %v1909
  %v1911 = vpop.f32.mrb[0].mxu0
  %v1912 = vpop.f32.mrb[0].mxu0
  %v1913 = vadd.f32 %v1780, %v1912
  %v1914 = vpop.f32.mrb[0].mxu0
  %1915 = vmatprep.mubr.bf16.mxu0 0
  %1916 = vmatmul.mubr.bf16.gmra.mrb[0].mxu0 %v1690
  %v1917 = vpop.f32.mrb[0].mxu0
  %v1918 = vadd.f32 %v1785, %v1917
  %v1919 = vpop.f32.mrb[0].mxu0
  %v1920 = vpop.f32.mrb[0].mxu0
  %v1921 = vadd.f32 %v1788, %v1920
  %v1922 = vpop.f32.mrb[0].mxu0
  %1923 = vmatprep.mubr.bf16.mxu0 0
  %1924 = vmatmul.mubr.bf16.gmra.mrb[0].mxu0 %v1693
  %v1925 = vpop.f32.mrb[0].mxu0
  %v1926 = vadd.f32 %v1793, %v1925
  %v1927 = vpop.f32.mrb[0].mxu0
  %v1928 = vpop.f32.mrb[0].mxu0
  %v1929 = vadd.f32 %v1796, %v1928
  %v1930 = vpop.f32.mrb[0].mxu0
  %1931 = vmatprep.mubr.bf16.mxu0 0
  %1932 = vmatmul.mubr.bf16.gmra.mrb[0].mxu0 %v1696
  %v1933 = vpop.f32.mrb[0].mxu0
  %v1934 = vadd.f32 %v1801, %v1933
  %v1935 = vpop.f32.mrb[0].mxu0
  %v1936 = vpop.f32.mrb[0].mxu0
  %v1937 = vadd.f32 %v1804, %v1936
  %v1938 = vpop.f32.mrb[0].mxu0
  %1939 = vdwg.mxu0
  %s1940 = scalar_lea.vmem %s1, 64
  %v1941 = vld [vmem:[%s1940] sm:$0xf]
  %v1942 = vld [vmem:[%s1940 + $0x4] sm:$0xf]
  %v1943 = vld [vmem:[%s1940 + $0x8] sm:$0xf]
  %v1944 = vld [vmem:[%s1940 + $0xc] sm:$0xf]
  %v1945 = vld [vmem:[%s1940 + $0x10] sm:$0xf]
  %v1946 = vld [vmem:[%s1940 + $0x14] sm:$0xf]
  %v1947 = vld [vmem:[%s1940 + $0x18] sm:$0xf]
  %v1948 = vld [vmem:[%s1940 + $0x1c] sm:$0xf]
  %v1957 = vunpack.c.l.b16 %v1941
  %v1958 = vunpack.c.l.b16 %v1942
  %v1959 = vunpack.c.l.b16 %v1943
  %v1960 = vunpack.c.l.b16 %v1944
  %v1961 = vunpack.c.l.b16 %v1945
  %v1962 = vunpack.c.l.b16 %v1946
  %v1963 = vunpack.c.l.b16 %v1947
  %v1964 = vunpack.c.l.b16 %v1948
  %v1965 = vpack.c.b16 %v1958, %v1957
  %v1966 = vpack.c.b16 %v1960, %v1959
  %v1967 = vpack.c.b16 %v1962, %v1961
  %v1968 = vpack.c.b16 %v1964, %v1963
  %v1974 = vsel %vm1685, %v1592, 0
  %v1977 = vsel %vm1685, %v1593, 0
  %v1980 = vsel %vm1685, %v1594, 0
  %v1983 = vsel %vm1685, %v1595, 0
  %1985 = vmatprep.subr.bf16.mxu0 0
  %1986 = vmatpush1.bf16.msra.mxu0 %v1965
  %1987 = vmatprep.subr.bf16.mxu0 0
  %1988 = vmatpush1.bf16.msra.mxu0 %v1966
  %1989 = vmatprep.subr.bf16.mxu0 0
  %1990 = vmatpush1.bf16.msra.mxu0 %v1967
  %1991 = vmatprep.subr.bf16.mxu0 0
  %1992 = vmatpush1.bf16.msra.mxu0 %v1968
  %1993 = vmatprep.subr.bf16.mxu0 0
  %1994 = vmatpush1.bf16.msra.mxu0 0
  %1995 = vmatprep.subr.bf16.mxu0 0
  %1996 = vmatpush1.bf16.msra.mxu0 0
  %1997 = vmatprep.subr.bf16.mxu0 0
  %1998 = vmatpush1.bf16.msra.mxu0 0
  %1999 = vmatprep.subr.bf16.mxu0 0
  %2000 = vmatpush1.bf16.msra.mxu0 0
  %2001 = vmatprep.subr.bf16.mxu0 0
  %2002 = vmatpush1.bf16.msra.mxu0 0
  %2003 = vmatprep.subr.bf16.mxu0 0
  %2004 = vmatpush1.bf16.msra.mxu0 0
  %2005 = vmatprep.subr.bf16.mxu0 0
  %2006 = vmatpush1.bf16.msra.mxu0 0
  %2007 = vmatprep.subr.bf16.mxu0 0
  %2008 = vmatpush1.bf16.msra.mxu0 0
  %2009 = vmatprep.subr.bf16.mxu0 0
  %2010 = vmatpush1.bf16.msra.mxu0 0
  %2011 = vmatprep.subr.bf16.mxu0 0
  %2012 = vmatpush1.bf16.msra.mxu0 0
  %2013 = vmatprep.subr.bf16.mxu0 0
  %2014 = vmatpush1.bf16.msra.mxu0 0
  %2015 = vmatprep.subr.bf16.mxu0 0
  %2016 = vmatpush1.bf16.msra.mxu0 0
  %2017 = vmatprep.mubr.bf16.mxu0 0
  %2018 = vmatmul.mubr.bf16.gmra.mrb[0].mxu0 %v1699
  %v2019 = vpop.f32.mrb[0].mxu0
  %v2020 = vadd.f32 0.0, %v2019
  %v2021 = vpop.f32.mrb[0].mxu0
  %v2022 = vpop.f32.mrb[0].mxu0
  %v2023 = vadd.f32 0.0, %v2022
  %v2024 = vpop.f32.mrb[0].mxu0
  %2025 = vmatprep.mubr.bf16.mxu0 0
  %2026 = vmatmul.mubr.bf16.gmra.mrb[0].mxu0 %v1702
  %v2027 = vpop.f32.mrb[0].mxu0
  %v2028 = vadd.f32 0.0, %v2027
  %v2029 = vpop.f32.mrb[0].mxu0
  %v2030 = vpop.f32.mrb[0].mxu0
  %v2031 = vadd.f32 0.0, %v2030
  %v2032 = vpop.f32.mrb[0].mxu0
  %2033 = vmatprep.mubr.bf16.mxu0 0
  %2034 = vmatmul.mubr.bf16.gmra.mrb[0].mxu0 %v1705
  %v2035 = vpop.f32.mrb[0].mxu0
  %v2036 = vadd.f32 0.0, %v2035
  %v2037 = vpop.f32.mrb[0].mxu0
  %v2038 = vpop.f32.mrb[0].mxu0
  %v2039 = vadd.f32 0.0, %v2038
  %v2040 = vpop.f32.mrb[0].mxu0
  %2041 = vmatprep.mubr.bf16.mxu0 0
  %2042 = vmatmul.mubr.bf16.gmra.mrb[0].mxu0 %v1708
  %v2043 = vpop.f32.mrb[0].mxu0
  %v2044 = vadd.f32 0.0, %v2043
  %v2045 = vpop.f32.mrb[0].mxu0
  %v2046 = vpop.f32.mrb[0].mxu0
  %v2047 = vadd.f32 0.0, %v2046
  %v2048 = vpop.f32.mrb[0].mxu0
  %2049 = vmatprep.mubr.bf16.mxu0 0
  %2050 = vmatmul.mubr.bf16.gmra.mrb[0].mxu0 %v1974
  %v2051 = vpop.f32.mrb[0].mxu0
  %v2052 = vadd.f32 0.0, %v2051
  %v2053 = vpop.f32.mrb[0].mxu0
  %v2054 = vpop.f32.mrb[0].mxu0
  %v2055 = vadd.f32 0.0, %v2054
  %v2056 = vpop.f32.mrb[0].mxu0
  %2057 = vmatprep.mubr.bf16.mxu0 0
  %2058 = vmatmul.mubr.bf16.gmra.mrb[0].mxu0 %v1977
  %v2059 = vpop.f32.mrb[0].mxu0
  %v2060 = vadd.f32 0.0, %v2059
  %v2061 = vpop.f32.mrb[0].mxu0
  %v2062 = vpop.f32.mrb[0].mxu0
  %v2063 = vadd.f32 0.0, %v2062
  %v2064 = vpop.f32.mrb[0].mxu0
  %2065 = vmatprep.mubr.bf16.mxu0 0
  %2066 = vmatmul.mubr.bf16.gmra.mrb[0].mxu0 %v1980
  %v2067 = vpop.f32.mrb[0].mxu0
  %v2068 = vadd.f32 0.0, %v2067
  %v2069 = vpop.f32.mrb[0].mxu0
  %v2070 = vpop.f32.mrb[0].mxu0
  %v2071 = vadd.f32 0.0, %v2070
  %v2072 = vpop.f32.mrb[0].mxu0
  %2073 = vmatprep.mubr.bf16.mxu0 0
  %2074 = vmatmul.mubr.bf16.gmra.mrb[0].mxu0 %v1983
  %v2075 = vpop.f32.mrb[0].mxu0
  %v2076 = vadd.f32 0.0, %v2075
  %v2077 = vpop.f32.mrb[0].mxu0
  %v2078 = vpop.f32.mrb[0].mxu0
  %v2079 = vadd.f32 0.0, %v2078
  %v2080 = vpop.f32.mrb[0].mxu0
  %2081 = vdwg.mxu0
  %v2082 = vadd.f32 %v1878, %v2020
  %v2083 = vadd.f32 %v1881, %v2023
  %v2084 = vadd.f32 %v1886, %v2028
  %v2085 = vadd.f32 %v1889, %v2031
  %v2086 = vadd.f32 %v1894, %v2036
  %v2087 = vadd.f32 %v1897, %v2039
  %v2088 = vadd.f32 %v1902, %v2044
  %v2089 = vadd.f32 %v1905, %v2047
  %v2090 = vadd.f32 %v1910, %v2052
  %v2091 = vadd.f32 %v1913, %v2055
  %v2092 = vadd.f32 %v1918, %v2060
  %v2093 = vadd.f32 %v1921, %v2063
  %v2094 = vadd.f32 %v1926, %v2068
  %v2095 = vadd.f32 %v1929, %v2071
  %v2096 = vadd.f32 %v1934, %v2076
  %v2097 = vadd.f32 %v1937, %v2079
  %s2098 = scalar_lea.vmem %s1, 96
  %v2099 = vld [vmem:[%s2098] sm:$0xf]
  %v2100 = vld [vmem:[%s2098 + $0x4] sm:$0xf]
  %v2101 = vld [vmem:[%s2098 + $0x8] sm:$0xf]
  %v2102 = vld [vmem:[%s2098 + $0xc] sm:$0xf]
  %v2103 = vld [vmem:[%s2098 + $0x10] sm:$0xf]
  %v2104 = vld [vmem:[%s2098 + $0x14] sm:$0xf]
  %v2105 = vld [vmem:[%s2098 + $0x18] sm:$0xf]
  %v2106 = vld [vmem:[%s2098 + $0x1c] sm:$0xf]
  %v2115 = vunpack.c.l.b16 %v2099
  %v2116 = vunpack.c.l.b16 %v2100
  %v2117 = vunpack.c.l.b16 %v2101
  %v2118 = vunpack.c.l.b16 %v2102
  %v2119 = vunpack.c.l.b16 %v2103
  %v2120 = vunpack.c.l.b16 %v2104
  %v2121 = vunpack.c.l.b16 %v2105
  %v2122 = vunpack.c.l.b16 %v2106
  %v2123 = vpack.c.b16 %v2116, %v2115
  %v2124 = vpack.c.b16 %v2118, %v2117
  %v2125 = vpack.c.b16 %v2120, %v2119
  %v2126 = vpack.c.b16 %v2122, %v2121
  %v2132 = vsel %vm1685, %v1596, 0
  %v2135 = vsel %vm1685, %v1597, 0
  %v2138 = vsel %vm1685, %v1598, 0
  %v2141 = vsel %vm1685, %v1599, 0
  %v2144 = vsel %vm1685, %v1600, 0
  %v2147 = vsel %vm1685, %v1601, 0
  %v2150 = vsel %vm1685, %v1602, 0
  %v2153 = vsel %vm1685, %v1603, 0
  %2155 = vmatprep.subr.bf16.mxu0 0
  %2156 = vmatpush1.bf16.msra.mxu0 %v2123
  %2157 = vmatprep.subr.bf16.mxu0 0
  %2158 = vmatpush1.bf16.msra.mxu0 %v2124
  %2159 = vmatprep.subr.bf16.mxu0 0
  %2160 = vmatpush1.bf16.msra.mxu0 %v2125
  %2161 = vmatprep.subr.bf16.mxu0 0
  %2162 = vmatpush1.bf16.msra.mxu0 %v2126
  %2163 = vmatprep.subr.bf16.mxu0 0
  %2164 = vmatpush1.bf16.msra.mxu0 0
  %2165 = vmatprep.subr.bf16.mxu0 0
  %2166 = vmatpush1.bf16.msra.mxu0 0
  %2167 = vmatprep.subr.bf16.mxu0 0
  %2168 = vmatpush1.bf16.msra.mxu0 0
  %2169 = vmatprep.subr.bf16.mxu0 0
  %2170 = vmatpush1.bf16.msra.mxu0 0
  %2171 = vmatprep.subr.bf16.mxu0 0
  %2172 = vmatpush1.bf16.msra.mxu0 0
  %2173 = vmatprep.subr.bf16.mxu0 0
  %2174 = vmatpush1.bf16.msra.mxu0 0
  %2175 = vmatprep.subr.bf16.mxu0 0
  %2176 = vmatpush1.bf16.msra.mxu0 0
  %2177 = vmatprep.subr.bf16.mxu0 0
  %2178 = vmatpush1.bf16.msra.mxu0 0
  %2179 = vmatprep.subr.bf16.mxu0 0
  %2180 = vmatpush1.bf16.msra.mxu0 0
  %2181 = vmatprep.subr.bf16.mxu0 0
  %2182 = vmatpush1.bf16.msra.mxu0 0
  %2183 = vmatprep.subr.bf16.mxu0 0
  %2184 = vmatpush1.bf16.msra.mxu0 0
  %2185 = vmatprep.subr.bf16.mxu0 0
  %2186 = vmatpush1.bf16.msra.mxu0 0
  %2187 = vmatprep.mubr.bf16.mxu0 0
  %2188 = vmatmul.mubr.bf16.gmra.mrb[0].mxu0 %v2132
  %v2189 = vpop.f32.mrb[0].mxu0
  %v2190 = vadd.f32 0.0, %v2189
  %v2191 = vpop.f32.mrb[0].mxu0
  %v2192 = vpop.f32.mrb[0].mxu0
  %v2193 = vadd.f32 0.0, %v2192
  %v2194 = vpop.f32.mrb[0].mxu0
  %2195 = vmatprep.mubr.bf16.mxu0 0
  %2196 = vmatmul.mubr.bf16.gmra.mrb[0].mxu0 %v2135
  %v2197 = vpop.f32.mrb[0].mxu0
  %v2198 = vadd.f32 0.0, %v2197
  %v2199 = vpop.f32.mrb[0].mxu0
  %v2200 = vpop.f32.mrb[0].mxu0
  %v2201 = vadd.f32 0.0, %v2200
  %v2202 = vpop.f32.mrb[0].mxu0
  %2203 = vmatprep.mubr.bf16.mxu0 0
  %2204 = vmatmul.mubr.bf16.gmra.mrb[0].mxu0 %v2138
  %v2205 = vpop.f32.mrb[0].mxu0
  %v2206 = vadd.f32 0.0, %v2205
  %v2207 = vpop.f32.mrb[0].mxu0
  %v2208 = vpop.f32.mrb[0].mxu0
  %v2209 = vadd.f32 0.0, %v2208
  %v2210 = vpop.f32.mrb[0].mxu0
  %2211 = vmatprep.mubr.bf16.mxu0 0
  %2212 = vmatmul.mubr.bf16.gmra.mrb[0].mxu0 %v2141
  %v2213 = vpop.f32.mrb[0].mxu0
  %v2214 = vadd.f32 0.0, %v2213
  %v2215 = vpop.f32.mrb[0].mxu0
  %v2216 = vpop.f32.mrb[0].mxu0
  %v2217 = vadd.f32 0.0, %v2216
  %v2218 = vpop.f32.mrb[0].mxu0
  %2219 = vmatprep.mubr.bf16.mxu0 0
  %2220 = vmatmul.mubr.bf16.gmra.mrb[0].mxu0 %v2144
  %v2221 = vpop.f32.mrb[0].mxu0
  %v2222 = vadd.f32 0.0, %v2221
  %v2223 = vpop.f32.mrb[0].mxu0
  %v2224 = vpop.f32.mrb[0].mxu0
  %v2225 = vadd.f32 0.0, %v2224
  %v2226 = vpop.f32.mrb[0].mxu0
  %2227 = vmatprep.mubr.bf16.mxu0 0
  %2228 = vmatmul.mubr.bf16.gmra.mrb[0].mxu0 %v2147
  %v2229 = vpop.f32.mrb[0].mxu0
  %v2230 = vadd.f32 0.0, %v2229
  %v2231 = vpop.f32.mrb[0].mxu0
  %v2232 = vpop.f32.mrb[0].mxu0
  %v2233 = vadd.f32 0.0, %v2232
  %v2234 = vpop.f32.mrb[0].mxu0
  %2235 = vmatprep.mubr.bf16.mxu0 0
  %2236 = vmatmul.mubr.bf16.gmra.mrb[0].mxu0 %v2150
  %v2237 = vpop.f32.mrb[0].mxu0
  %v2238 = vadd.f32 0.0, %v2237
  %v2239 = vpop.f32.mrb[0].mxu0
  %v2240 = vpop.f32.mrb[0].mxu0
  %v2241 = vadd.f32 0.0, %v2240
  %v2242 = vpop.f32.mrb[0].mxu0
  %2243 = vmatprep.mubr.bf16.mxu0 0
  %2244 = vmatmul.mubr.bf16.gmra.mrb[0].mxu0 %v2153
  %v2245 = vpop.f32.mrb[0].mxu0
  %v2246 = vadd.f32 0.0, %v2245
  %v2247 = vpop.f32.mrb[0].mxu0
  %v2248 = vpop.f32.mrb[0].mxu0
  %v2249 = vadd.f32 0.0, %v2248
  %v2250 = vpop.f32.mrb[0].mxu0
  %2251 = vdwg.mxu0
  %v2252 = vadd.f32 %v2082, %v2190
  %v2253 = vadd.f32 %v2083, %v2193
  %v2254 = vadd.f32 %v2084, %v2198
  %v2255 = vadd.f32 %v2085, %v2201
  %v2256 = vadd.f32 %v2086, %v2206
  %v2257 = vadd.f32 %v2087, %v2209
  %v2258 = vadd.f32 %v2088, %v2214
  %v2259 = vadd.f32 %v2089, %v2217
  %v2260 = vadd.f32 %v2090, %v2222
  %v2261 = vadd.f32 %v2091, %v2225
  %v2262 = vadd.f32 %v2092, %v2230
  %v2263 = vadd.f32 %v2093, %v2233
  %v2264 = vadd.f32 %v2094, %v2238
  %v2265 = vadd.f32 %v2095, %v2241
  %v2266 = vadd.f32 %v2096, %v2246
  %v2267 = vadd.f32 %v2097, %v2249
  %s2268 = scalar_lea.vmem %s1, 128
  %v2269 = vld [vmem:[%s2268] sm:$0xf]
  %v2270 = vld [vmem:[%s2268 + $0x4] sm:$0xf]
  %v2271 = vld [vmem:[%s2268 + $0x8] sm:$0xf]
  %v2272 = vld [vmem:[%s2268 + $0xc] sm:$0xf]
  %v2273 = vld [vmem:[%s2268 + $0x10] sm:$0xf]
  %v2274 = vld [vmem:[%s2268 + $0x14] sm:$0xf]
  %v2275 = vld [vmem:[%s2268 + $0x18] sm:$0xf]
  %v2276 = vld [vmem:[%s2268 + $0x1c] sm:$0xf]
  %v2285 = vunpack.c.l.b16 %v2269
  %v2286 = vunpack.c.l.b16 %v2270
  %v2287 = vunpack.c.l.b16 %v2271
  %v2288 = vunpack.c.l.b16 %v2272
  %v2289 = vunpack.c.l.b16 %v2273
  %v2290 = vunpack.c.l.b16 %v2274
  %v2291 = vunpack.c.l.b16 %v2275
  %v2292 = vunpack.c.l.b16 %v2276
  %v2293 = vpack.c.b16 %v2286, %v2285
  %v2294 = vpack.c.b16 %v2288, %v2287
  %v2295 = vpack.c.b16 %v2290, %v2289
  %v2296 = vpack.c.b16 %v2292, %v2291
  %v2302 = vsel %vm1685, %v1604, 0
  %v2305 = vsel %vm1685, %v1605, 0
  %v2308 = vsel %vm1685, %v1606, 0
  %v2311 = vsel %vm1685, %v1607, 0
  %2313 = vmatprep.subr.bf16.mxu0 0
  %2314 = vmatpush1.bf16.msra.mxu0 %v2293
  %2315 = vmatprep.subr.bf16.mxu0 0
  %2316 = vmatpush1.bf16.msra.mxu0 %v2294
  %2317 = vmatprep.subr.bf16.mxu0 0
  %2318 = vmatpush1.bf16.msra.mxu0 %v2295
  %2319 = vmatprep.subr.bf16.mxu0 0
  %2320 = vmatpush1.bf16.msra.mxu0 %v2296
  %2321 = vmatprep.subr.bf16.mxu0 0
  %2322 = vmatpush1.bf16.msra.mxu0 0
  %2323 = vmatprep.subr.bf16.mxu0 0
  %2324 = vmatpush1.bf16.msra.mxu0 0
  %2325 = vmatprep.subr.bf16.mxu0 0
  %2326 = vmatpush1.bf16.msra.mxu0 0
  %2327 = vmatprep.subr.bf16.mxu0 0
  %2328 = vmatpush1.bf16.msra.mxu0 0
  %2329 = vmatprep.subr.bf16.mxu0 0
  %2330 = vmatpush1.bf16.msra.mxu0 0
  %2331 = vmatprep.subr.bf16.mxu0 0
  %2332 = vmatpush1.bf16.msra.mxu0 0
  %2333 = vmatprep.subr.bf16.mxu0 0
  %2334 = vmatpush1.bf16.msra.mxu0 0
  %2335 = vmatprep.subr.bf16.mxu0 0
  %2336 = vmatpush1.bf16.msra.mxu0 0
  %2337 = vmatprep.subr.bf16.mxu0 0
  %2338 = vmatpush1.bf16.msra.mxu0 0
  %2339 = vmatprep.subr.bf16.mxu0 0
  %2340 = vmatpush1.bf16.msra.mxu0 0
  %2341 = vmatprep.subr.bf16.mxu0 0
  %2342 = vmatpush1.bf16.msra.mxu0 0
  %2343 = vmatprep.subr.bf16.mxu0 0
  %2344 = vmatpush1.bf16.msra.mxu0 0
  %2345 = vmatprep.mubr.bf16.mxu0 0
  %2346 = vmatmul.mubr.bf16.gmra.mrb[0].mxu0 %v2144
  %v2347 = vpop.f32.mrb[0].mxu0
  %v2348 = vadd.f32 0.0, %v2347
  %v2349 = vpop.f32.mrb[0].mxu0
  %v2350 = vpop.f32.mrb[0].mxu0
  %v2351 = vadd.f32 0.0, %v2350
  %v2352 = vpop.f32.mrb[0].mxu0
  %2353 = vmatprep.mubr.bf16.mxu0 0
  %2354 = vmatmul.mubr.bf16.gmra.mrb[0].mxu0 %v2147
  %v2355 = vpop.f32.mrb[0].mxu0
  %v2356 = vadd.f32 0.0, %v2355
  %v2357 = vpop.f32.mrb[0].mxu0
  %v2358 = vpop.f32.mrb[0].mxu0
  %v2359 = vadd.f32 0.0, %v2358
  %v2360 = vpop.f32.mrb[0].mxu0
  %2361 = vmatprep.mubr.bf16.mxu0 0
  %2362 = vmatmul.mubr.bf16.gmra.mrb[0].mxu0 %v2150
  %v2363 = vpop.f32.mrb[0].mxu0
  %v2364 = vadd.f32 0.0, %v2363
  %v2365 = vpop.f32.mrb[0].mxu0
  %v2366 = vpop.f32.mrb[0].mxu0
  %v2367 = vadd.f32 0.0, %v2366
  %v2368 = vpop.f32.mrb[0].mxu0
  %2369 = vmatprep.mubr.bf16.mxu0 0
  %2370 = vmatmul.mubr.bf16.gmra.mrb[0].mxu0 %v2153
  %v2371 = vpop.f32.mrb[0].mxu0
  %v2372 = vadd.f32 0.0, %v2371
  %v2373 = vpop.f32.mrb[0].mxu0
  %v2374 = vpop.f32.mrb[0].mxu0
  %v2375 = vadd.f32 0.0, %v2374
  %v2376 = vpop.f32.mrb[0].mxu0
  %2377 = vmatprep.mubr.bf16.mxu0 0
  %2378 = vmatmul.mubr.bf16.gmra.mrb[0].mxu0 %v2302
  %v2379 = vpop.f32.mrb[0].mxu0
  %v2380 = vadd.f32 0.0, %v2379
  %v2381 = vpop.f32.mrb[0].mxu0
  %v2382 = vpop.f32.mrb[0].mxu0
  %v2383 = vadd.f32 0.0, %v2382
  %v2384 = vpop.f32.mrb[0].mxu0
  %2385 = vmatprep.mubr.bf16.mxu0 0
  %2386 = vmatmul.mubr.bf16.gmra.mrb[0].mxu0 %v2305
  %v2387 = vpop.f32.mrb[0].mxu0
  %v2388 = vadd.f32 0.0, %v2387
  %v2389 = vpop.f32.mrb[0].mxu0
  %v2390 = vpop.f32.mrb[0].mxu0
  %v2391 = vadd.f32 0.0, %v2390
  %v2392 = vpop.f32.mrb[0].mxu0
  %2393 = vmatprep.mubr.bf16.mxu0 0
  %2394 = vmatmul.mubr.bf16.gmra.mrb[0].mxu0 %v2308
  %v2395 = vpop.f32.mrb[0].mxu0
  %v2396 = vadd.f32 0.0, %v2395
  %v2397 = vpop.f32.mrb[0].mxu0
  %v2398 = vpop.f32.mrb[0].mxu0
  %v2399 = vadd.f32 0.0, %v2398
  %v2400 = vpop.f32.mrb[0].mxu0
  %2401 = vmatprep.mubr.bf16.mxu0 0
  %2402 = vmatmul.mubr.bf16.gmra.mrb[0].mxu0 %v2311
  %v2403 = vpop.f32.mrb[0].mxu0
  %v2404 = vadd.f32 0.0, %v2403
  %v2405 = vpop.f32.mrb[0].mxu0
  %v2406 = vpop.f32.mrb[0].mxu0
  %v2407 = vadd.f32 0.0, %v2406
  %v2408 = vpop.f32.mrb[0].mxu0
  %2409 = vdwg.mxu0
  %v2410 = vadd.f32 %v2252, %v2348
  %v2411 = vadd.f32 %v2253, %v2351
  %v2412 = vadd.f32 %v2254, %v2356
  %v2413 = vadd.f32 %v2255, %v2359
  %v2414 = vadd.f32 %v2256, %v2364
  %v2415 = vadd.f32 %v2257, %v2367
  %v2416 = vadd.f32 %v2258, %v2372
  %v2417 = vadd.f32 %v2259, %v2375
  %v2418 = vadd.f32 %v2260, %v2380
  %v2419 = vadd.f32 %v2261, %v2383
  %v2420 = vadd.f32 %v2262, %v2388
  %v2421 = vadd.f32 %v2263, %v2391
  %v2422 = vadd.f32 %v2264, %v2396
  %v2423 = vadd.f32 %v2265, %v2399
  %v2424 = vadd.f32 %v2266, %v2404
  %v2425 = vadd.f32 %v2267, %v2407
  %s2426 = scalar_lea.vmem %s1, 160
  %v2427 = vld [vmem:[%s2426] sm:$0xf]
  %v2428 = vld [vmem:[%s2426 + $0x4] sm:$0xf]
  %v2429 = vld [vmem:[%s2426 + $0x8] sm:$0xf]
  %v2430 = vld [vmem:[%s2426 + $0xc] sm:$0xf]
  %v2431 = vld [vmem:[%s2426 + $0x10] sm:$0xf]
  %v2432 = vld [vmem:[%s2426 + $0x14] sm:$0xf]
  %v2433 = vld [vmem:[%s2426 + $0x18] sm:$0xf]
  %v2434 = vld [vmem:[%s2426 + $0x1c] sm:$0xf]
  %v2443 = vunpack.c.l.b16 %v2427
  %v2444 = vunpack.c.l.b16 %v2428
  %v2445 = vunpack.c.l.b16 %v2429
  %v2446 = vunpack.c.l.b16 %v2430
  %v2447 = vunpack.c.l.b16 %v2431
  %v2448 = vunpack.c.l.b16 %v2432
  %v2449 = vunpack.c.l.b16 %v2433
  %v2450 = vunpack.c.l.b16 %v2434
  %v2451 = vpack.c.b16 %v2444, %v2443
  %v2452 = vpack.c.b16 %v2446, %v2445
  %v2453 = vpack.c.b16 %v2448, %v2447
  %v2454 = vpack.c.b16 %v2450, %v2449
  %v2460 = vsel %vm1685, %v1608, 0
  %v2463 = vsel %vm1685, %v1609, 0
  %v2466 = vsel %vm1685, %v1610, 0
  %v2469 = vsel %vm1685, %v1611, 0
  %2471 = vmatprep.subr.bf16.mxu0 0
  %2472 = vmatpush1.bf16.msra.mxu0 %v2451
  %2473 = vmatprep.subr.bf16.mxu0 0
  %2474 = vmatpush1.bf16.msra.mxu0 %v2452
  %2475 = vmatprep.subr.bf16.mxu0 0
  %2476 = vmatpush1.bf16.msra.mxu0 %v2453
  %2477 = vmatprep.subr.bf16.mxu0 0
  %2478 = vmatpush1.bf16.msra.mxu0 %v2454
  %2479 = vmatprep.subr.bf16.mxu0 0
  %2480 = vmatpush1.bf16.msra.mxu0 0
  %2481 = vmatprep.subr.bf16.mxu0 0
  %2482 = vmatpush1.bf16.msra.mxu0 0
  %2483 = vmatprep.subr.bf16.mxu0 0
  %2484 = vmatpush1.bf16.msra.mxu0 0
  %2485 = vmatprep.subr.bf16.mxu0 0
  %2486 = vmatpush1.bf16.msra.mxu0 0
  %2487 = vmatprep.subr.bf16.mxu0 0
  %2488 = vmatpush1.bf16.msra.mxu0 0
  %2489 = vmatprep.subr.bf16.mxu0 0
  %2490 = vmatpush1.bf16.msra.mxu0 0
  %2491 = vmatprep.subr.bf16.mxu0 0
  %2492 = vmatpush1.bf16.msra.mxu0 0
  %2493 = vmatprep.subr.bf16.mxu0 0
  %2494 = vmatpush1.bf16.msra.mxu0 0
  %2495 = vmatprep.subr.bf16.mxu0 0
  %2496 = vmatpush1.bf16.msra.mxu0 0
  %2497 = vmatprep.subr.bf16.mxu0 0
  %2498 = vmatpush1.bf16.msra.mxu0 0
  %2499 = vmatprep.subr.bf16.mxu0 0
  %2500 = vmatpush1.bf16.msra.mxu0 0
  %2501 = vmatprep.subr.bf16.mxu0 0
  %2502 = vmatpush1.bf16.msra.mxu0 0
  %2503 = vmatprep.mubr.bf16.mxu0 0
  %2504 = vmatmul.mubr.bf16.gmra.mrb[0].mxu0 %v2302
  %v2505 = vpop.f32.mrb[0].mxu0
  %v2506 = vadd.f32 0.0, %v2505
  %v2507 = vpop.f32.mrb[0].mxu0
  %v2508 = vpop.f32.mrb[0].mxu0
  %v2509 = vadd.f32 0.0, %v2508
  %v2510 = vpop.f32.mrb[0].mxu0
  %2511 = vmatprep.mubr.bf16.mxu0 0
  %2512 = vmatmul.mubr.bf16.gmra.mrb[0].mxu0 %v2305
  %v2513 = vpop.f32.mrb[0].mxu0
  %v2514 = vadd.f32 0.0, %v2513
  %v2515 = vpop.f32.mrb[0].mxu0
  %v2516 = vpop.f32.mrb[0].mxu0
  %v2517 = vadd.f32 0.0, %v2516
  %v2518 = vpop.f32.mrb[0].mxu0
  %2519 = vmatprep.mubr.bf16.mxu0 0
  %2520 = vmatmul.mubr.bf16.gmra.mrb[0].mxu0 %v2308
  %v2521 = vpop.f32.mrb[0].mxu0
  %v2522 = vadd.f32 0.0, %v2521
  %v2523 = vpop.f32.mrb[0].mxu0
  %v2524 = vpop.f32.mrb[0].mxu0
  %v2525 = vadd.f32 0.0, %v2524
  %v2526 = vpop.f32.mrb[0].mxu0
  %2527 = vmatprep.mubr.bf16.mxu0 0
  %2528 = vmatmul.mubr.bf16.gmra.mrb[0].mxu0 %v2311
  %v2529 = vpop.f32.mrb[0].mxu0
  %v2530 = vadd.f32 0.0, %v2529
  %v2531 = vpop.f32.mrb[0].mxu0
  %v2532 = vpop.f32.mrb[0].mxu0
  %v2533 = vadd.f32 0.0, %v2532
  %v2534 = vpop.f32.mrb[0].mxu0
  %2535 = vmatprep.mubr.bf16.mxu0 0
  %2536 = vmatmul.mubr.bf16.gmra.mrb[0].mxu0 %v2460
  %v2537 = vpop.f32.mrb[0].mxu0
  %v2538 = vadd.f32 0.0, %v2537
  %v2539 = vpop.f32.mrb[0].mxu0
  %v2540 = vpop.f32.mrb[0].mxu0
  %v2541 = vadd.f32 0.0, %v2540
  %v2542 = vpop.f32.mrb[0].mxu0
  %2543 = vmatprep.mubr.bf16.mxu0 0
  %2544 = vmatmul.mubr.bf16.gmra.mrb[0].mxu0 %v2463
  %v2545 = vpop.f32.mrb[0].mxu0
  %v2546 = vadd.f32 0.0, %v2545
  %v2547 = vpop.f32.mrb[0].mxu0
  %v2548 = vpop.f32.mrb[0].mxu0
  %v2549 = vadd.f32 0.0, %v2548
  %v2550 = vpop.f32.mrb[0].mxu0
  %2551 = vmatprep.mubr.bf16.mxu0 0
  %2552 = vmatmul.mubr.bf16.gmra.mrb[0].mxu0 %v2466
  %v2553 = vpop.f32.mrb[0].mxu0
  %v2554 = vadd.f32 0.0, %v2553
  %v2555 = vpop.f32.mrb[0].mxu0
  %v2556 = vpop.f32.mrb[0].mxu0
  %v2557 = vadd.f32 0.0, %v2556
  %v2558 = vpop.f32.mrb[0].mxu0
  %2559 = vmatprep.mubr.bf16.mxu0 0
  %2560 = vmatmul.mubr.bf16.gmra.mrb[0].mxu0 %v2469
  %v2561 = vpop.f32.mrb[0].mxu0
  %v2562 = vadd.f32 0.0, %v2561
  %v2563 = vpop.f32.mrb[0].mxu0
  %v2564 = vpop.f32.mrb[0].mxu0
  %v2565 = vadd.f32 0.0, %v2564
  %v2566 = vpop.f32.mrb[0].mxu0
  %2567 = vdwg.mxu0
  %v2568 = vadd.f32 %v2410, %v2506
  %v2569 = vadd.f32 %v2411, %v2509
  %v2570 = vadd.f32 %v2412, %v2514
  %v2571 = vadd.f32 %v2413, %v2517
  %v2572 = vadd.f32 %v2414, %v2522
  %v2573 = vadd.f32 %v2415, %v2525
  %v2574 = vadd.f32 %v2416, %v2530
  %v2575 = vadd.f32 %v2417, %v2533
  %v2576 = vadd.f32 %v2418, %v2538
  %v2577 = vadd.f32 %v2419, %v2541
  %v2578 = vadd.f32 %v2420, %v2546
  %v2579 = vadd.f32 %v2421, %v2549
  %v2580 = vadd.f32 %v2422, %v2554
  %v2581 = vadd.f32 %v2423, %v2557
  %v2582 = vadd.f32 %v2424, %v2562
  %v2583 = vadd.f32 %v2425, %v2565
  %s2584 = scalar_lea.vmem %s1, 192
  %v2585 = vld [vmem:[%s2584] sm:$0xf]
  %v2586 = vld [vmem:[%s2584 + $0x4] sm:$0xf]
  %v2587 = vld [vmem:[%s2584 + $0x8] sm:$0xf]
  %v2588 = vld [vmem:[%s2584 + $0xc] sm:$0xf]
  %v2589 = vld [vmem:[%s2584 + $0x10] sm:$0xf]
  %v2590 = vld [vmem:[%s2584 + $0x14] sm:$0xf]
  %v2591 = vld [vmem:[%s2584 + $0x18] sm:$0xf]
  %v2592 = vld [vmem:[%s2584 + $0x1c] sm:$0xf]
  %v2601 = vunpack.c.l.b16 %v2585
  %v2602 = vunpack.c.l.b16 %v2586
  %v2603 = vunpack.c.l.b16 %v2587
  %v2604 = vunpack.c.l.b16 %v2588
  %v2605 = vunpack.c.l.b16 %v2589
  %v2606 = vunpack.c.l.b16 %v2590
  %v2607 = vunpack.c.l.b16 %v2591
  %v2608 = vunpack.c.l.b16 %v2592
  %v2609 = vpack.c.b16 %v2602, %v2601
  %v2610 = vpack.c.b16 %v2604, %v2603
  %v2611 = vpack.c.b16 %v2606, %v2605
  %v2612 = vpack.c.b16 %v2608, %v2607
  %v2618 = vsel %vm1685, %v1612, 0
  %v2621 = vsel %vm1685, %v1613, 0
  %v2624 = vsel %vm1685, %v1614, 0
  %v2627 = vsel %vm1685, %v1615, 0
  %v2630 = vsel %vm1685, %v1616, 0
  %v2633 = vsel %vm1685, %v1617, 0
  %v2636 = vsel %vm1685, %v1618, 0
  %v2639 = vsel %vm1685, %v1619, 0
  %2641 = vmatprep.subr.bf16.mxu0 0
  %2642 = vmatpush1.bf16.msra.mxu0 %v2609
  %2643 = vmatprep.subr.bf16.mxu0 0
  %2644 = vmatpush1.bf16.msra.mxu0 %v2610
  %2645 = vmatprep.subr.bf16.mxu0 0
  %2646 = vmatpush1.bf16.msra.mxu0 %v2611
  %2647 = vmatprep.subr.bf16.mxu0 0
  %2648 = vmatpush1.bf16.msra.mxu0 %v2612
  %2649 = vmatprep.subr.bf16.mxu0 0
  %2650 = vmatpush1.bf16.msra.mxu0 0
  %2651 = vmatprep.subr.bf16.mxu0 0
  %2652 = vmatpush1.bf16.msra.mxu0 0
  %2653 = vmatprep.subr.bf16.mxu0 0
  %2654 = vmatpush1.bf16.msra.mxu0 0
  %2655 = vmatprep.subr.bf16.mxu0 0
  %2656 = vmatpush1.bf16.msra.mxu0 0
  %2657 = vmatprep.subr.bf16.mxu0 0
  %2658 = vmatpush1.bf16.msra.mxu0 0
  %2659 = vmatprep.subr.bf16.mxu0 0
  %2660 = vmatpush1.bf16.msra.mxu0 0
  %2661 = vmatprep.subr.bf16.mxu0 0
  %2662 = vmatpush1.bf16.msra.mxu0 0
  %2663 = vmatprep.subr.bf16.mxu0 0
  %2664 = vmatpush1.bf16.msra.mxu0 0
  %2665 = vmatprep.subr.bf16.mxu0 0
  %2666 = vmatpush1.bf16.msra.mxu0 0
  %2667 = vmatprep.subr.bf16.mxu0 0
  %2668 = vmatpush1.bf16.msra.mxu0 0
  %2669 = vmatprep.subr.bf16.mxu0 0
  %2670 = vmatpush1.bf16.msra.mxu0 0
  %2671 = vmatprep.subr.bf16.mxu0 0
  %2672 = vmatpush1.bf16.msra.mxu0 0
  %2673 = vmatprep.mubr.bf16.mxu0 0
  %2674 = vmatmul.mubr.bf16.gmra.mrb[0].mxu0 %v2618
  %v2675 = vpop.f32.mrb[0].mxu0
  %v2676 = vadd.f32 0.0, %v2675
  %v2677 = vpop.f32.mrb[0].mxu0
  %v2678 = vpop.f32.mrb[0].mxu0
  %v2679 = vadd.f32 0.0, %v2678
  %v2680 = vpop.f32.mrb[0].mxu0
  %2681 = vmatprep.mubr.bf16.mxu0 0
  %2682 = vmatmul.mubr.bf16.gmra.mrb[0].mxu0 %v2621
  %v2683 = vpop.f32.mrb[0].mxu0
  %v2684 = vadd.f32 0.0, %v2683
  %v2685 = vpop.f32.mrb[0].mxu0
  %v2686 = vpop.f32.mrb[0].mxu0
  %v2687 = vadd.f32 0.0, %v2686
  %v2688 = vpop.f32.mrb[0].mxu0
  %2689 = vmatprep.mubr.bf16.mxu0 0
  %2690 = vmatmul.mubr.bf16.gmra.mrb[0].mxu0 %v2624
  %v2691 = vpop.f32.mrb[0].mxu0
  %v2692 = vadd.f32 0.0, %v2691
  %v2693 = vpop.f32.mrb[0].mxu0
  %v2694 = vpop.f32.mrb[0].mxu0
  %v2695 = vadd.f32 0.0, %v2694
  %v2696 = vpop.f32.mrb[0].mxu0
  %2697 = vmatprep.mubr.bf16.mxu0 0
  %2698 = vmatmul.mubr.bf16.gmra.mrb[0].mxu0 %v2627
  %v2699 = vpop.f32.mrb[0].mxu0
  %v2700 = vadd.f32 0.0, %v2699
  %v2701 = vpop.f32.mrb[0].mxu0
  %v2702 = vpop.f32.mrb[0].mxu0
  %v2703 = vadd.f32 0.0, %v2702
  %v2704 = vpop.f32.mrb[0].mxu0
  %2705 = vmatprep.mubr.bf16.mxu0 0
  %2706 = vmatmul.mubr.bf16.gmra.mrb[0].mxu0 %v2630
  %v2707 = vpop.f32.mrb[0].mxu0
  %v2708 = vadd.f32 0.0, %v2707
  %v2709 = vpop.f32.mrb[0].mxu0
  %v2710 = vpop.f32.mrb[0].mxu0
  %v2711 = vadd.f32 0.0, %v2710
  %v2712 = vpop.f32.mrb[0].mxu0
  %2713 = vmatprep.mubr.bf16.mxu0 0
  %2714 = vmatmul.mubr.bf16.gmra.mrb[0].mxu0 %v2633
  %v2715 = vpop.f32.mrb[0].mxu0
  %v2716 = vadd.f32 0.0, %v2715
  %v2717 = vpop.f32.mrb[0].mxu0
  %v2718 = vpop.f32.mrb[0].mxu0
  %v2719 = vadd.f32 0.0, %v2718
  %v2720 = vpop.f32.mrb[0].mxu0
  %2721 = vmatprep.mubr.bf16.mxu0 0
  %2722 = vmatmul.mubr.bf16.gmra.mrb[0].mxu0 %v2636
  %v2723 = vpop.f32.mrb[0].mxu0
  %v2724 = vadd.f32 0.0, %v2723
  %v2725 = vpop.f32.mrb[0].mxu0
  %v2726 = vpop.f32.mrb[0].mxu0
  %v2727 = vadd.f32 0.0, %v2726
  %v2728 = vpop.f32.mrb[0].mxu0
  %2729 = vmatprep.mubr.bf16.mxu0 0
  %2730 = vmatmul.mubr.bf16.gmra.mrb[0].mxu0 %v2639
  %v2731 = vpop.f32.mrb[0].mxu0
  %v2732 = vadd.f32 0.0, %v2731
  %v2733 = vpop.f32.mrb[0].mxu0
  %v2734 = vpop.f32.mrb[0].mxu0
  %v2735 = vadd.f32 0.0, %v2734
  %v2736 = vpop.f32.mrb[0].mxu0
  %2737 = vdwg.mxu0
  %v2738 = vadd.f32 %v2568, %v2676
  %v2739 = vadd.f32 %v2569, %v2679
  %v2740 = vadd.f32 %v2570, %v2684
  %v2741 = vadd.f32 %v2571, %v2687
  %v2742 = vadd.f32 %v2572, %v2692
  %v2743 = vadd.f32 %v2573, %v2695
  %v2744 = vadd.f32 %v2574, %v2700
  %v2745 = vadd.f32 %v2575, %v2703
  %v2746 = vadd.f32 %v2576, %v2708
  %v2747 = vadd.f32 %v2577, %v2711
  %v2748 = vadd.f32 %v2578, %v2716
  %v2749 = vadd.f32 %v2579, %v2719
  %v2750 = vadd.f32 %v2580, %v2724
  %v2751 = vadd.f32 %v2581, %v2727
  %v2752 = vadd.f32 %v2582, %v2732
  %v2753 = vadd.f32 %v2583, %v2735
  %s2754 = scalar_lea.vmem %s1, 224
  %v2755 = vld [vmem:[%s2754] sm:$0xf]
  %v2756 = vld [vmem:[%s2754 + $0x4] sm:$0xf]
  %v2757 = vld [vmem:[%s2754 + $0x8] sm:$0xf]
  %v2758 = vld [vmem:[%s2754 + $0xc] sm:$0xf]
  %v2759 = vld [vmem:[%s2754 + $0x10] sm:$0xf]
  %v2760 = vld [vmem:[%s2754 + $0x14] sm:$0xf]
  %v2761 = vld [vmem:[%s2754 + $0x18] sm:$0xf]
  %v2762 = vld [vmem:[%s2754 + $0x1c] sm:$0xf]
  %v2771 = vunpack.c.l.b16 %v2755
  %v2772 = vunpack.c.l.b16 %v2756
  %v2773 = vunpack.c.l.b16 %v2757
  %v2774 = vunpack.c.l.b16 %v2758
  %v2775 = vunpack.c.l.b16 %v2759
  %v2776 = vunpack.c.l.b16 %v2760
  %v2777 = vunpack.c.l.b16 %v2761
  %v2778 = vunpack.c.l.b16 %v2762
  %v2779 = vpack.c.b16 %v2772, %v2771
  %v2780 = vpack.c.b16 %v2774, %v2773
  %v2781 = vpack.c.b16 %v2776, %v2775
  %v2782 = vpack.c.b16 %v2778, %v2777
  %v2788 = vsel %vm1685, %v1620, 0
  %v2791 = vsel %vm1685, %v1621, 0
  %v2794 = vsel %vm1685, %v1622, 0
  %v2797 = vsel %vm1685, %v1623, 0
  %2799 = vmatprep.subr.bf16.mxu0 0
  %2800 = vmatpush1.bf16.msra.mxu0 %v2779
  %2801 = vmatprep.subr.bf16.mxu0 0
  %2802 = vmatpush1.bf16.msra.mxu0 %v2780
  %2803 = vmatprep.subr.bf16.mxu0 0
  %2804 = vmatpush1.bf16.msra.mxu0 %v2781
  %2805 = vmatprep.subr.bf16.mxu0 0
  %2806 = vmatpush1.bf16.msra.mxu0 %v2782
  %2807 = vmatprep.subr.bf16.mxu0 0
  %2808 = vmatpush1.bf16.msra.mxu0 0
  %2809 = vmatprep.subr.bf16.mxu0 0
  %2810 = vmatpush1.bf16.msra.mxu0 0
  %2811 = vmatprep.subr.bf16.mxu0 0
  %2812 = vmatpush1.bf16.msra.mxu0 0
  %2813 = vmatprep.subr.bf16.mxu0 0
  %2814 = vmatpush1.bf16.msra.mxu0 0
  %2815 = vmatprep.subr.bf16.mxu0 0
  %2816 = vmatpush1.bf16.msra.mxu0 0
  %2817 = vmatprep.subr.bf16.mxu0 0
  %2818 = vmatpush1.bf16.msra.mxu0 0
  %2819 = vmatprep.subr.bf16.mxu0 0
  %2820 = vmatpush1.bf16.msra.mxu0 0
  %2821 = vmatprep.subr.bf16.mxu0 0
  %2822 = vmatpush1.bf16.msra.mxu0 0
  %2823 = vmatprep.subr.bf16.mxu0 0
  %2824 = vmatpush1.bf16.msra.mxu0 0
  %2825 = vmatprep.subr.bf16.mxu0 0
  %2826 = vmatpush1.bf16.msra.mxu0 0
  %2827 = vmatprep.subr.bf16.mxu0 0
  %2828 = vmatpush1.bf16.msra.mxu0 0
  %2829 = vmatprep.subr.bf16.mxu0 0
  %2830 = vmatpush1.bf16.msra.mxu0 0
  %2831 = vmatprep.mubr.bf16.mxu0 0
  %2832 = vmatmul.mubr.bf16.gmra.mrb[0].mxu0 %v2630
  %v2833 = vpop.f32.mrb[0].mxu0
  %v2834 = vadd.f32 0.0, %v2833
  %v2835 = vpop.f32.mrb[0].mxu0
  %v2836 = vpop.f32.mrb[0].mxu0
  %v2837 = vadd.f32 0.0, %v2836
  %v2838 = vpop.f32.mrb[0].mxu0
  %2839 = vmatprep.mubr.bf16.mxu0 0
  %2840 = vmatmul.mubr.bf16.gmra.mrb[0].mxu0 %v2633
  %v2841 = vpop.f32.mrb[0].mxu0
  %v2842 = vadd.f32 0.0, %v2841
  %v2843 = vpop.f32.mrb[0].mxu0
  %v2844 = vpop.f32.mrb[0].mxu0
  %v2845 = vadd.f32 0.0, %v2844
  %v2846 = vpop.f32.mrb[0].mxu0
  %2847 = vmatprep.mubr.bf16.mxu0 0
  %2848 = vmatmul.mubr.bf16.gmra.mrb[0].mxu0 %v2636
  %v2849 = vpop.f32.mrb[0].mxu0
  %v2850 = vadd.f32 0.0, %v2849
  %v2851 = vpop.f32.mrb[0].mxu0
  %v2852 = vpop.f32.mrb[0].mxu0
  %v2853 = vadd.f32 0.0, %v2852
  %v2854 = vpop.f32.mrb[0].mxu0
  %2855 = vmatprep.mubr.bf16.mxu0 0
  %2856 = vmatmul.mubr.bf16.gmra.mrb[0].mxu0 %v2639
  %v2857 = vpop.f32.mrb[0].mxu0
  %v2858 = vadd.f32 0.0, %v2857
  %v2859 = vpop.f32.mrb[0].mxu0
  %v2860 = vpop.f32.mrb[0].mxu0
  %v2861 = vadd.f32 0.0, %v2860
  %v2862 = vpop.f32.mrb[0].mxu0
  %2863 = vmatprep.mubr.bf16.mxu0 0
  %2864 = vmatmul.mubr.bf16.gmra.mrb[0].mxu0 %v2788
  %v2865 = vpop.f32.mrb[0].mxu0
  %v2866 = vadd.f32 0.0, %v2865
  %v2867 = vpop.f32.mrb[0].mxu0
  %v2868 = vpop.f32.mrb[0].mxu0
  %v2869 = vadd.f32 0.0, %v2868
  %v2870 = vpop.f32.mrb[0].mxu0
  %2871 = vmatprep.mubr.bf16.mxu0 0
  %2872 = vmatmul.mubr.bf16.gmra.mrb[0].mxu0 %v2791
  %v2873 = vpop.f32.mrb[0].mxu0
  %v2874 = vadd.f32 0.0, %v2873
  %v2875 = vpop.f32.mrb[0].mxu0
  %v2876 = vpop.f32.mrb[0].mxu0
  %v2877 = vadd.f32 0.0, %v2876
  %v2878 = vpop.f32.mrb[0].mxu0
  %2879 = vmatprep.mubr.bf16.mxu0 0
  %2880 = vmatmul.mubr.bf16.gmra.mrb[0].mxu0 %v2794
  %v2881 = vpop.f32.mrb[0].mxu0
  %v2882 = vadd.f32 0.0, %v2881
  %v2883 = vpop.f32.mrb[0].mxu0
  %v2884 = vpop.f32.mrb[0].mxu0
  %v2885 = vadd.f32 0.0, %v2884
  %v2886 = vpop.f32.mrb[0].mxu0
  %2887 = vmatprep.mubr.bf16.mxu0 0
  %2888 = vmatmul.mubr.bf16.gmra.mrb[0].mxu0 %v2797
  %v2889 = vpop.f32.mrb[0].mxu0
  %v2890 = vadd.f32 0.0, %v2889
  %v2891 = vpop.f32.mrb[0].mxu0
  %v2892 = vpop.f32.mrb[0].mxu0
  %v2893 = vadd.f32 0.0, %v2892
  %v2894 = vpop.f32.mrb[0].mxu0
  %2895 = vdwg.mxu0
  %v2896 = vadd.f32 %v2738, %v2834
  %v2897 = vadd.f32 %v2739, %v2837
  %v2898 = vadd.f32 %v2740, %v2842
  %v2899 = vadd.f32 %v2741, %v2845
  %v2900 = vadd.f32 %v2742, %v2850
  %v2901 = vadd.f32 %v2743, %v2853
  %v2902 = vadd.f32 %v2744, %v2858
  %v2903 = vadd.f32 %v2745, %v2861
  %v2904 = vadd.f32 %v2746, %v2866
  %v2905 = vadd.f32 %v2747, %v2869
  %v2906 = vadd.f32 %v2748, %v2874
  %v2907 = vadd.f32 %v2749, %v2877
  %v2908 = vadd.f32 %v2750, %v2882
  %v2909 = vadd.f32 %v2751, %v2885
  %v2910 = vadd.f32 %v2752, %v2890
  %v2911 = vadd.f32 %v2753, %v2893
  %s2912 = scalar_lea.vmem %s1, 256
  %v2913 = vld [vmem:[%s2912] sm:$0xf]
  %v2914 = vld [vmem:[%s2912 + $0x4] sm:$0xf]
  %v2915 = vld [vmem:[%s2912 + $0x8] sm:$0xf]
  %v2916 = vld [vmem:[%s2912 + $0xc] sm:$0xf]
  %v2917 = vld [vmem:[%s2912 + $0x10] sm:$0xf]
  %v2918 = vld [vmem:[%s2912 + $0x14] sm:$0xf]
  %v2919 = vld [vmem:[%s2912 + $0x18] sm:$0xf]
  %v2920 = vld [vmem:[%s2912 + $0x1c] sm:$0xf]
  %v2929 = vunpack.c.l.b16 %v2913
  %v2930 = vunpack.c.l.b16 %v2914
  %v2931 = vunpack.c.l.b16 %v2915
  %v2932 = vunpack.c.l.b16 %v2916
  %v2933 = vunpack.c.l.b16 %v2917
  %v2934 = vunpack.c.l.b16 %v2918
  %v2935 = vunpack.c.l.b16 %v2919
  %v2936 = vunpack.c.l.b16 %v2920
  %v2937 = vpack.c.b16 %v2930, %v2929
  %v2938 = vpack.c.b16 %v2932, %v2931
  %v2939 = vpack.c.b16 %v2934, %v2933
  %v2940 = vpack.c.b16 %v2936, %v2935
  %v2946 = vsel %vm1685, %v1624, 0
  %v2949 = vsel %vm1685, %v1625, 0
  %v2952 = vsel %vm1685, %v1626, 0
  %v2955 = vsel %vm1685, %v1627, 0
  %2957 = vmatprep.subr.bf16.mxu0 0
  %2958 = vmatpush1.bf16.msra.mxu0 %v2937
  %2959 = vmatprep.subr.bf16.mxu0 0
  %2960 = vmatpush1.bf16.msra.mxu0 %v2938
  %2961 = vmatprep.subr.bf16.mxu0 0
  %2962 = vmatpush1.bf16.msra.mxu0 %v2939
  %2963 = vmatprep.subr.bf16.mxu0 0
  %2964 = vmatpush1.bf16.msra.mxu0 %v2940
  %2965 = vmatprep.subr.bf16.mxu0 0
  %2966 = vmatpush1.bf16.msra.mxu0 0
  %2967 = vmatprep.subr.bf16.mxu0 0
  %2968 = vmatpush1.bf16.msra.mxu0 0
  %2969 = vmatprep.subr.bf16.mxu0 0
  %2970 = vmatpush1.bf16.msra.mxu0 0
  %2971 = vmatprep.subr.bf16.mxu0 0
  %2972 = vmatpush1.bf16.msra.mxu0 0
  %2973 = vmatprep.subr.bf16.mxu0 0
  %2974 = vmatpush1.bf16.msra.mxu0 0
  %2975 = vmatprep.subr.bf16.mxu0 0
  %2976 = vmatpush1.bf16.msra.mxu0 0
  %2977 = vmatprep.subr.bf16.mxu0 0
  %2978 = vmatpush1.bf16.msra.mxu0 0
  %2979 = vmatprep.subr.bf16.mxu0 0
  %2980 = vmatpush1.bf16.msra.mxu0 0
  %2981 = vmatprep.subr.bf16.mxu0 0
  %2982 = vmatpush1.bf16.msra.mxu0 0
  %2983 = vmatprep.subr.bf16.mxu0 0
  %2984 = vmatpush1.bf16.msra.mxu0 0
  %2985 = vmatprep.subr.bf16.mxu0 0
  %2986 = vmatpush1.bf16.msra.mxu0 0
  %2987 = vmatprep.subr.bf16.mxu0 0
  %2988 = vmatpush1.bf16.msra.mxu0 0
  %2989 = vmatprep.mubr.bf16.mxu0 0
  %2990 = vmatmul.mubr.bf16.gmra.mrb[0].mxu0 %v2788
  %v2991 = vpop.f32.mrb[0].mxu0
  %v2992 = vadd.f32 0.0, %v2991
  %v2993 = vpop.f32.mrb[0].mxu0
  %v2994 = vpop.f32.mrb[0].mxu0
  %v2995 = vadd.f32 0.0, %v2994
  %v2996 = vpop.f32.mrb[0].mxu0
  %2997 = vmatprep.mubr.bf16.mxu0 0
  %2998 = vmatmul.mubr.bf16.gmra.mrb[0].mxu0 %v2791
  %v2999 = vpop.f32.mrb[0].mxu0
  %v3000 = vadd.f32 0.0, %v2999
  %v3001 = vpop.f32.mrb[0].mxu0
  %v3002 = vpop.f32.mrb[0].mxu0
  %v3003 = vadd.f32 0.0, %v3002
  %v3004 = vpop.f32.mrb[0].mxu0
  %3005 = vmatprep.mubr.bf16.mxu0 0
  %3006 = vmatmul.mubr.bf16.gmra.mrb[0].mxu0 %v2794
  %v3007 = vpop.f32.mrb[0].mxu0
  %v3008 = vadd.f32 0.0, %v3007
  %v3009 = vpop.f32.mrb[0].mxu0
  %v3010 = vpop.f32.mrb[0].mxu0
  %v3011 = vadd.f32 0.0, %v3010
  %v3012 = vpop.f32.mrb[0].mxu0
  %3013 = vmatprep.mubr.bf16.mxu0 0
  %3014 = vmatmul.mubr.bf16.gmra.mrb[0].mxu0 %v2797
  %v3015 = vpop.f32.mrb[0].mxu0
  %v3016 = vadd.f32 0.0, %v3015
  %v3017 = vpop.f32.mrb[0].mxu0
  %v3018 = vpop.f32.mrb[0].mxu0
  %v3019 = vadd.f32 0.0, %v3018
  %v3020 = vpop.f32.mrb[0].mxu0
  %3021 = vmatprep.mubr.bf16.mxu0 0
  %3022 = vmatmul.mubr.bf16.gmra.mrb[0].mxu0 %v2946
  %v3023 = vpop.f32.mrb[0].mxu0
  %v3024 = vadd.f32 0.0, %v3023
  %v3025 = vpop.f32.mrb[0].mxu0
  %v3026 = vpop.f32.mrb[0].mxu0
  %v3027 = vadd.f32 0.0, %v3026
  %v3028 = vpop.f32.mrb[0].mxu0
  %3029 = vmatprep.mubr.bf16.mxu0 0
  %3030 = vmatmul.mubr.bf16.gmra.mrb[0].mxu0 %v2949
  %v3031 = vpop.f32.mrb[0].mxu0
  %v3032 = vadd.f32 0.0, %v3031
  %v3033 = vpop.f32.mrb[0].mxu0
  %v3034 = vpop.f32.mrb[0].mxu0
  %v3035 = vadd.f32 0.0, %v3034
  %v3036 = vpop.f32.mrb[0].mxu0
  %3037 = vmatprep.mubr.bf16.mxu0 0
  %3038 = vmatmul.mubr.bf16.gmra.mrb[0].mxu0 %v2952
  %v3039 = vpop.f32.mrb[0].mxu0
  %v3040 = vadd.f32 0.0, %v3039
  %v3041 = vpop.f32.mrb[0].mxu0
  %v3042 = vpop.f32.mrb[0].mxu0
  %v3043 = vadd.f32 0.0, %v3042
  %v3044 = vpop.f32.mrb[0].mxu0
  %3045 = vmatprep.mubr.bf16.mxu0 0
  %3046 = vmatmul.mubr.bf16.gmra.mrb[0].mxu0 %v2955
  %v3047 = vpop.f32.mrb[0].mxu0
  %v3048 = vadd.f32 0.0, %v3047
  %v3049 = vpop.f32.mrb[0].mxu0
  %v3050 = vpop.f32.mrb[0].mxu0
  %v3051 = vadd.f32 0.0, %v3050
  %v3052 = vpop.f32.mrb[0].mxu0
  %3053 = vdwg.mxu0
  %v3054 = vadd.f32 %v2896, %v2992
  %v3055 = vadd.f32 %v2897, %v2995
  %v3056 = vadd.f32 %v2898, %v3000
  %v3057 = vadd.f32 %v2899, %v3003
  %v3058 = vadd.f32 %v2900, %v3008
  %v3059 = vadd.f32 %v2901, %v3011
  %v3060 = vadd.f32 %v2902, %v3016
  %v3061 = vadd.f32 %v2903, %v3019
  %v3062 = vadd.f32 %v2904, %v3024
  %v3063 = vadd.f32 %v2905, %v3027
  %v3064 = vadd.f32 %v2906, %v3032
  %v3065 = vadd.f32 %v2907, %v3035
  %v3066 = vadd.f32 %v2908, %v3040
  %v3067 = vadd.f32 %v2909, %v3043
  %v3068 = vadd.f32 %v2910, %v3048
  %v3069 = vadd.f32 %v2911, %v3051
  %v3070 = vlaneseq
  %v3071 = vshrl.u32 %v3070, 7
  %v3072 = vsub.s32 0, %v3071
  %v3073 = vrot.slane %v154, %v3072
  %v3074 = vadd.f32 %v3054, %v3073
  %v3075 = vadd.f32 %v3055, %v3073
  %v3076 = vadd.f32 %v3056, %v3073
  %v3077 = vadd.f32 %v3057, %v3073
  %v3078 = vadd.f32 %v3058, %v3073
  %v3079 = vadd.f32 %v3059, %v3073
  %v3080 = vadd.f32 %v3060, %v3073
  %v3081 = vadd.f32 %v3061, %v3073
  %v3082 = vadd.f32 %v3062, %v3073
  %v3083 = vadd.f32 %v3063, %v3073
  %v3084 = vadd.f32 %v3064, %v3073
  %v3085 = vadd.f32 %v3065, %v3073
  %v3086 = vadd.f32 %v3066, %v3073
  %v3087 = vadd.f32 %v3067, %v3073
  %v3088 = vadd.f32 %v3068, %v3073
  %v3089 = vadd.f32 %v3069, %v3073
  %vm3090 = vcmp.gt.f32.partialorder %v3074, 0.0
  %vm3091 = vcmp.gt.f32.partialorder %v3075, 0.0
  %vm3092 = vcmp.gt.f32.partialorder %v3076, 0.0
  %vm3093 = vcmp.gt.f32.partialorder %v3077, 0.0
  %vm3094 = vcmp.gt.f32.partialorder %v3078, 0.0
  %vm3095 = vcmp.gt.f32.partialorder %v3079, 0.0
  %vm3096 = vcmp.gt.f32.partialorder %v3080, 0.0
  %vm3097 = vcmp.gt.f32.partialorder %v3081, 0.0
  %vm3098 = vcmp.gt.f32.partialorder %v3082, 0.0
  %vm3099 = vcmp.gt.f32.partialorder %v3083, 0.0
  %vm3100 = vcmp.gt.f32.partialorder %v3084, 0.0
  %vm3101 = vcmp.gt.f32.partialorder %v3085, 0.0
  %vm3102 = vcmp.gt.f32.partialorder %v3086, 0.0
  %vm3103 = vcmp.gt.f32.partialorder %v3087, 0.0
  %vm3104 = vcmp.gt.f32.partialorder %v3088, 0.0
  %vm3105 = vcmp.gt.f32.partialorder %v3089, 0.0
  %v3106 = vmin.f32 %v3074, 0.0
  %v3107 = vmin.f32 %v3075, 0.0
  %v3108 = vmin.f32 %v3076, 0.0
  %v3109 = vmin.f32 %v3077, 0.0
  %v3110 = vmin.f32 %v3078, 0.0
  %v3111 = vmin.f32 %v3079, 0.0
  %v3112 = vmin.f32 %v3080, 0.0
  %v3113 = vmin.f32 %v3081, 0.0
  %v3114 = vmin.f32 %v3082, 0.0
  %v3115 = vmin.f32 %v3083, 0.0
  %v3116 = vmin.f32 %v3084, 0.0
  %v3117 = vmin.f32 %v3085, 0.0
  %v3118 = vmin.f32 %v3086, 0.0
  %v3119 = vmin.f32 %v3087, 0.0
  %v3120 = vmin.f32 %v3088, 0.0
  %v3121 = vmin.f32 %v3089, 0.0
  %v3122 = vmul.f32 %v3106, 1.442695
  %v3123 = vpow.pop %v3122
  %v3124 = vmul.f32 %v3107, 1.442695
  %v3125 = vpow.pop %v3124
  %v3126 = vmul.f32 %v3108, 1.442695
  %v3127 = vpow.pop %v3126
  %v3128 = vmul.f32 %v3109, 1.442695
  %v3129 = vpow.pop %v3128
  %v3130 = vmul.f32 %v3110, 1.442695
  %v3131 = vpow.pop %v3130
  %v3132 = vmul.f32 %v3111, 1.442695
  %v3133 = vpow.pop %v3132
  %v3134 = vmul.f32 %v3112, 1.442695
  %v3135 = vpow.pop %v3134
  %v3136 = vmul.f32 %v3113, 1.442695
  %v3137 = vpow.pop %v3136
  %v3138 = vmul.f32 %v3114, 1.442695
  %v3139 = vpow.pop %v3138
  %v3140 = vmul.f32 %v3115, 1.442695
  %v3141 = vpow.pop %v3140
  %v3142 = vmul.f32 %v3116, 1.442695
  %v3143 = vpow.pop %v3142
  %v3144 = vmul.f32 %v3117, 1.442695
  %v3145 = vpow.pop %v3144
  %v3146 = vmul.f32 %v3118, 1.442695
  %v3147 = vpow.pop %v3146
  %v3148 = vmul.f32 %v3119, 1.442695
  %v3149 = vpow.pop %v3148
  %v3150 = vmul.f32 %v3120, 1.442695
  %v3151 = vpow.pop %v3150
  %v3152 = vmul.f32 %v3121, 1.442695
  %v3153 = vpow.pop %v3152
  %v3154 = vsub.f32 %v3123, 1.0
  %v3155 = vsub.f32 %v3125, 1.0
  %v3156 = vsub.f32 %v3127, 1.0
  %v3157 = vsub.f32 %v3129, 1.0
  %v3158 = vsub.f32 %v3131, 1.0
  %v3159 = vsub.f32 %v3133, 1.0
  %v3160 = vsub.f32 %v3135, 1.0
  %v3161 = vsub.f32 %v3137, 1.0
  %v3162 = vsub.f32 %v3139, 1.0
  %v3163 = vsub.f32 %v3141, 1.0
  %v3164 = vsub.f32 %v3143, 1.0
  %v3165 = vsub.f32 %v3145, 1.0
  %v3166 = vsub.f32 %v3147, 1.0
  %v3167 = vsub.f32 %v3149, 1.0
  %v3168 = vsub.f32 %v3151, 1.0
  %v3169 = vsub.f32 %v3153, 1.0
  %v3170 = vsel %vm3090, %v3074, %v3154
  %v3171 = vsel %vm3091, %v3075, %v3155
  %v3172 = vsel %vm3092, %v3076, %v3156
  %v3173 = vsel %vm3093, %v3077, %v3157
  %v3174 = vsel %vm3094, %v3078, %v3158
  %v3175 = vsel %vm3095, %v3079, %v3159
  %v3176 = vsel %vm3096, %v3080, %v3160
  %v3177 = vsel %vm3097, %v3081, %v3161
  %v3178 = vsel %vm3098, %v3082, %v3162
  %v3179 = vsel %vm3099, %v3083, %v3163
  %v3180 = vsel %vm3100, %v3084, %v3164
  %v3181 = vsel %vm3101, %v3085, %v3165
  %v3182 = vsel %vm3102, %v3086, %v3166
  %v3183 = vsel %vm3103, %v3087, %v3167
  %v3184 = vsel %vm3104, %v3088, %v3168
  %v3185 = vsel %vm3105, %v3089, %v3169
  %v3186 = vadd.f32 %v1532, %v3170
  %v3187 = vadd.f32 %v1533, %v3171
  %v3188 = vadd.f32 %v1534, %v3172
  %v3189 = vadd.f32 %v1535, %v3173
  %v3190 = vadd.f32 %v1536, %v3174
  %v3191 = vadd.f32 %v1537, %v3175
  %v3192 = vadd.f32 %v1538, %v3176
  %v3193 = vadd.f32 %v1539, %v3177
  %v3194 = vadd.f32 %v1540, %v3178
  %v3195 = vadd.f32 %v1541, %v3179
  %v3196 = vadd.f32 %v1542, %v3180
  %v3197 = vadd.f32 %v1543, %v3181
  %v3198 = vadd.f32 %v1544, %v3182
  %v3199 = vadd.f32 %v1545, %v3183
  %v3200 = vadd.f32 %v1546, %v3184
  %v3201 = vadd.f32 %v1547, %v3185
  %3202 = vmatprep.subr.bf16.mxu0 0
  %3203 = vmatpush1.bf16.msra.mxu0 %v1677
  %3204 = vmatprep.subr.bf16.mxu0 0
  %3205 = vmatpush1.bf16.msra.mxu0 %v1678
  %3206 = vmatprep.subr.bf16.mxu0 0
  %3207 = vmatpush1.bf16.msra.mxu0 %v1679
  %3208 = vmatprep.subr.bf16.mxu0 0
  %3209 = vmatpush1.bf16.msra.mxu0 %v1680
  %3210 = vmatprep.subr.bf16.mxu0 0
  %3211 = vmatpush1.bf16.msra.mxu0 0
  %3212 = vmatprep.subr.bf16.mxu0 0
  %3213 = vmatpush1.bf16.msra.mxu0 0
  %3214 = vmatprep.subr.bf16.mxu0 0
  %3215 = vmatpush1.bf16.msra.mxu0 0
  %3216 = vmatprep.subr.bf16.mxu0 0
  %3217 = vmatpush1.bf16.msra.mxu0 0
  %3218 = vmatprep.subr.bf16.mxu0 0
  %3219 = vmatpush1.bf16.msra.mxu0 0
  %3220 = vmatprep.subr.bf16.mxu0 0
  %3221 = vmatpush1.bf16.msra.mxu0 0
  %3222 = vmatprep.subr.bf16.mxu0 0
  %3223 = vmatpush1.bf16.msra.mxu0 0
  %3224 = vmatprep.subr.bf16.mxu0 0
  %3225 = vmatpush1.bf16.msra.mxu0 0
  %3226 = vmatprep.subr.bf16.mxu0 0
  %3227 = vmatpush1.bf16.msra.mxu0 0
  %3228 = vmatprep.subr.bf16.mxu0 0
  %3229 = vmatpush1.bf16.msra.mxu0 0
  %3230 = vmatprep.subr.bf16.mxu0 0
  %3231 = vmatpush1.bf16.msra.mxu0 0
  %3232 = vmatprep.subr.bf16.mxu0 0
  %3233 = vmatpush1.bf16.msra.mxu0 0
  %3234 = vmatprep.mubr.bf16.mxu0 0
  %3235 = vmatmul.mubr.bf16.gmra.mrb[0].mxu0 %v2144
  %v3236 = vpop.f32.mrb[0].mxu0
  %v3237 = vadd.f32 0.0, %v3236
  %v3238 = vpop.f32.mrb[0].mxu0
  %v3239 = vpop.f32.mrb[0].mxu0
  %v3240 = vadd.f32 0.0, %v3239
  %v3241 = vpop.f32.mrb[0].mxu0
  %3242 = vmatprep.mubr.bf16.mxu0 0
  %3243 = vmatmul.mubr.bf16.gmra.mrb[0].mxu0 %v2147
  %v3244 = vpop.f32.mrb[0].mxu0
  %v3245 = vadd.f32 0.0, %v3244
  %v3246 = vpop.f32.mrb[0].mxu0
  %v3247 = vpop.f32.mrb[0].mxu0
  %v3248 = vadd.f32 0.0, %v3247
  %v3249 = vpop.f32.mrb[0].mxu0
  %3250 = vmatprep.mubr.bf16.mxu0 0
  %3251 = vmatmul.mubr.bf16.gmra.mrb[0].mxu0 %v2150
  %v3252 = vpop.f32.mrb[0].mxu0
  %v3253 = vadd.f32 0.0, %v3252
  %v3254 = vpop.f32.mrb[0].mxu0
  %v3255 = vpop.f32.mrb[0].mxu0
  %v3256 = vadd.f32 0.0, %v3255
  %v3257 = vpop.f32.mrb[0].mxu0
  %3258 = vmatprep.mubr.bf16.mxu0 0
  %3259 = vmatmul.mubr.bf16.gmra.mrb[0].mxu0 %v2153
  %v3260 = vpop.f32.mrb[0].mxu0
  %v3261 = vadd.f32 0.0, %v3260
  %v3262 = vpop.f32.mrb[0].mxu0
  %v3263 = vpop.f32.mrb[0].mxu0
  %v3264 = vadd.f32 0.0, %v3263
  %v3265 = vpop.f32.mrb[0].mxu0
  %3266 = vmatprep.mubr.bf16.mxu0 0
  %3267 = vmatmul.mubr.bf16.gmra.mrb[0].mxu0 %v2302
  %v3268 = vpop.f32.mrb[0].mxu0
  %v3269 = vadd.f32 0.0, %v3268
  %v3270 = vpop.f32.mrb[0].mxu0
  %v3271 = vpop.f32.mrb[0].mxu0
  %v3272 = vadd.f32 0.0, %v3271
  %v3273 = vpop.f32.mrb[0].mxu0
  %3274 = vmatprep.mubr.bf16.mxu0 0
  %3275 = vmatmul.mubr.bf16.gmra.mrb[0].mxu0 %v2305
  %v3276 = vpop.f32.mrb[0].mxu0
  %v3277 = vadd.f32 0.0, %v3276
  %v3278 = vpop.f32.mrb[0].mxu0
  %v3279 = vpop.f32.mrb[0].mxu0
  %v3280 = vadd.f32 0.0, %v3279
  %v3281 = vpop.f32.mrb[0].mxu0
  %3282 = vmatprep.mubr.bf16.mxu0 0
  %3283 = vmatmul.mubr.bf16.gmra.mrb[0].mxu0 %v2308
  %v3284 = vpop.f32.mrb[0].mxu0
  %v3285 = vadd.f32 0.0, %v3284
  %v3286 = vpop.f32.mrb[0].mxu0
  %v3287 = vpop.f32.mrb[0].mxu0
  %v3288 = vadd.f32 0.0, %v3287
  %v3289 = vpop.f32.mrb[0].mxu0
  %3290 = vmatprep.mubr.bf16.mxu0 0
  %3291 = vmatmul.mubr.bf16.gmra.mrb[0].mxu0 %v2311
  %v3292 = vpop.f32.mrb[0].mxu0
  %v3293 = vadd.f32 0.0, %v3292
  %v3294 = vpop.f32.mrb[0].mxu0
  %v3295 = vpop.f32.mrb[0].mxu0
  %v3296 = vadd.f32 0.0, %v3295
  %v3297 = vpop.f32.mrb[0].mxu0
  %3298 = vdwg.mxu0
  %3299 = vmatprep.subr.bf16.mxu0 0
  %3300 = vmatpush1.bf16.msra.mxu0 %v1823
  %3301 = vmatprep.subr.bf16.mxu0 0
  %3302 = vmatpush1.bf16.msra.mxu0 %v1824
  %3303 = vmatprep.subr.bf16.mxu0 0
  %3304 = vmatpush1.bf16.msra.mxu0 %v1825
  %3305 = vmatprep.subr.bf16.mxu0 0
  %3306 = vmatpush1.bf16.msra.mxu0 %v1826
  %3307 = vmatprep.subr.bf16.mxu0 0
  %3308 = vmatpush1.bf16.msra.mxu0 0
  %3309 = vmatprep.subr.bf16.mxu0 0
  %3310 = vmatpush1.bf16.msra.mxu0 0
  %3311 = vmatprep.subr.bf16.mxu0 0
  %3312 = vmatpush1.bf16.msra.mxu0 0
  %3313 = vmatprep.subr.bf16.mxu0 0
  %3314 = vmatpush1.bf16.msra.mxu0 0
  %3315 = vmatprep.subr.bf16.mxu0 0
  %3316 = vmatpush1.bf16.msra.mxu0 0
  %3317 = vmatprep.subr.bf16.mxu0 0
  %3318 = vmatpush1.bf16.msra.mxu0 0
  %3319 = vmatprep.subr.bf16.mxu0 0
  %3320 = vmatpush1.bf16.msra.mxu0 0
  %3321 = vmatprep.subr.bf16.mxu0 0
  %3322 = vmatpush1.bf16.msra.mxu0 0
  %3323 = vmatprep.subr.bf16.mxu0 0
  %3324 = vmatpush1.bf16.msra.mxu0 0
  %3325 = vmatprep.subr.bf16.mxu0 0
  %3326 = vmatpush1.bf16.msra.mxu0 0
  %3327 = vmatprep.subr.bf16.mxu0 0
  %3328 = vmatpush1.bf16.msra.mxu0 0
  %3329 = vmatprep.subr.bf16.mxu0 0
  %3330 = vmatpush1.bf16.msra.mxu0 0
  %3331 = vmatprep.mubr.bf16.mxu0 0
  %3332 = vmatmul.mubr.bf16.gmra.mrb[0].mxu0 %v2132
  %v3333 = vpop.f32.mrb[0].mxu0
  %v3334 = vadd.f32 %v3237, %v3333
  %v3335 = vpop.f32.mrb[0].mxu0
  %v3336 = vpop.f32.mrb[0].mxu0
  %v3337 = vadd.f32 %v3240, %v3336
  %v3338 = vpop.f32.mrb[0].mxu0
  %3339 = vmatprep.mubr.bf16.mxu0 0
  %3340 = vmatmul.mubr.bf16.gmra.mrb[0].mxu0 %v2135
  %v3341 = vpop.f32.mrb[0].mxu0
  %v3342 = vadd.f32 %v3245, %v3341
  %v3343 = vpop.f32.mrb[0].mxu0
  %v3344 = vpop.f32.mrb[0].mxu0
  %v3345 = vadd.f32 %v3248, %v3344
  %v3346 = vpop.f32.mrb[0].mxu0
  %3347 = vmatprep.mubr.bf16.mxu0 0
  %3348 = vmatmul.mubr.bf16.gmra.mrb[0].mxu0 %v2138
  %v3349 = vpop.f32.mrb[0].mxu0
  %v3350 = vadd.f32 %v3253, %v3349
  %v3351 = vpop.f32.mrb[0].mxu0
  %v3352 = vpop.f32.mrb[0].mxu0
  %v3353 = vadd.f32 %v3256, %v3352
  %v3354 = vpop.f32.mrb[0].mxu0
  %3355 = vmatprep.mubr.bf16.mxu0 0
  %3356 = vmatmul.mubr.bf16.gmra.mrb[0].mxu0 %v2141
  %v3357 = vpop.f32.mrb[0].mxu0
  %v3358 = vadd.f32 %v3261, %v3357
  %v3359 = vpop.f32.mrb[0].mxu0
  %v3360 = vpop.f32.mrb[0].mxu0
  %v3361 = vadd.f32 %v3264, %v3360
  %v3362 = vpop.f32.mrb[0].mxu0
  %3363 = vmatprep.mubr.bf16.mxu0 0
  %3364 = vmatmul.mubr.bf16.gmra.mrb[0].mxu0 %v2144
  %v3365 = vpop.f32.mrb[0].mxu0
  %v3366 = vadd.f32 %v3269, %v3365
  %v3367 = vpop.f32.mrb[0].mxu0
  %v3368 = vpop.f32.mrb[0].mxu0
  %v3369 = vadd.f32 %v3272, %v3368
  %v3370 = vpop.f32.mrb[0].mxu0
  %3371 = vmatprep.mubr.bf16.mxu0 0
  %3372 = vmatmul.mubr.bf16.gmra.mrb[0].mxu0 %v2147
  %v3373 = vpop.f32.mrb[0].mxu0
  %v3374 = vadd.f32 %v3277, %v3373
  %v3375 = vpop.f32.mrb[0].mxu0
  %v3376 = vpop.f32.mrb[0].mxu0
  %v3377 = vadd.f32 %v3280, %v3376
  %v3378 = vpop.f32.mrb[0].mxu0
  %3379 = vmatprep.mubr.bf16.mxu0 0
  %3380 = vmatmul.mubr.bf16.gmra.mrb[0].mxu0 %v2150
  %v3381 = vpop.f32.mrb[0].mxu0
  %v3382 = vadd.f32 %v3285, %v3381
  %v3383 = vpop.f32.mrb[0].mxu0
  %v3384 = vpop.f32.mrb[0].mxu0
  %v3385 = vadd.f32 %v3288, %v3384
  %v3386 = vpop.f32.mrb[0].mxu0
  %3387 = vmatprep.mubr.bf16.mxu0 0
  %3388 = vmatmul.mubr.bf16.gmra.mrb[0].mxu0 %v2153
  %v3389 = vpop.f32.mrb[0].mxu0
  %v3390 = vadd.f32 %v3293, %v3389
  %v3391 = vpop.f32.mrb[0].mxu0
  %v3392 = vpop.f32.mrb[0].mxu0
  %v3393 = vadd.f32 %v3296, %v3392
  %v3394 = vpop.f32.mrb[0].mxu0
  %3395 = vdwg.mxu0
  %3396 = vmatprep.subr.bf16.mxu0 0
  %3397 = vmatpush1.bf16.msra.mxu0 %v1965
  %3398 = vmatprep.subr.bf16.mxu0 0
  %3399 = vmatpush1.bf16.msra.mxu0 %v1966
  %3400 = vmatprep.subr.bf16.mxu0 0
  %3401 = vmatpush1.bf16.msra.mxu0 %v1967
  %3402 = vmatprep.subr.bf16.mxu0 0
  %3403 = vmatpush1.bf16.msra.mxu0 %v1968
  %3404 = vmatprep.subr.bf16.mxu0 0
  %3405 = vmatpush1.bf16.msra.mxu0 0
  %3406 = vmatprep.subr.bf16.mxu0 0
  %3407 = vmatpush1.bf16.msra.mxu0 0
  %3408 = vmatprep.subr.bf16.mxu0 0
  %3409 = vmatpush1.bf16.msra.mxu0 0
  %3410 = vmatprep.subr.bf16.mxu0 0
  %3411 = vmatpush1.bf16.msra.mxu0 0
  %3412 = vmatprep.subr.bf16.mxu0 0
  %3413 = vmatpush1.bf16.msra.mxu0 0
  %3414 = vmatprep.subr.bf16.mxu0 0
  %3415 = vmatpush1.bf16.msra.mxu0 0
  %3416 = vmatprep.subr.bf16.mxu0 0
  %3417 = vmatpush1.bf16.msra.mxu0 0
  %3418 = vmatprep.subr.bf16.mxu0 0
  %3419 = vmatpush1.bf16.msra.mxu0 0
  %3420 = vmatprep.subr.bf16.mxu0 0
  %3421 = vmatpush1.bf16.msra.mxu0 0
  %3422 = vmatprep.subr.bf16.mxu0 0
  %3423 = vmatpush1.bf16.msra.mxu0 0
  %3424 = vmatprep.subr.bf16.mxu0 0
  %3425 = vmatpush1.bf16.msra.mxu0 0
  %3426 = vmatprep.subr.bf16.mxu0 0
  %3427 = vmatpush1.bf16.msra.mxu0 0
  %3428 = vmatprep.mubr.bf16.mxu0 0
  %3429 = vmatmul.mubr.bf16.gmra.mrb[0].mxu0 %v2302
  %v3430 = vpop.f32.mrb[0].mxu0
  %v3431 = vadd.f32 0.0, %v3430
  %v3432 = vpop.f32.mrb[0].mxu0
  %v3433 = vpop.f32.mrb[0].mxu0
  %v3434 = vadd.f32 0.0, %v3433
  %v3435 = vpop.f32.mrb[0].mxu0
  %3436 = vmatprep.mubr.bf16.mxu0 0
  %3437 = vmatmul.mubr.bf16.gmra.mrb[0].mxu0 %v2305
  %v3438 = vpop.f32.mrb[0].mxu0
  %v3439 = vadd.f32 0.0, %v3438
  %v3440 = vpop.f32.mrb[0].mxu0
  %v3441 = vpop.f32.mrb[0].mxu0
  %v3442 = vadd.f32 0.0, %v3441
  %v3443 = vpop.f32.mrb[0].mxu0
  %3444 = vmatprep.mubr.bf16.mxu0 0
  %3445 = vmatmul.mubr.bf16.gmra.mrb[0].mxu0 %v2308
  %v3446 = vpop.f32.mrb[0].mxu0
  %v3447 = vadd.f32 0.0, %v3446
  %v3448 = vpop.f32.mrb[0].mxu0
  %v3449 = vpop.f32.mrb[0].mxu0
  %v3450 = vadd.f32 0.0, %v3449
  %v3451 = vpop.f32.mrb[0].mxu0
  %3452 = vmatprep.mubr.bf16.mxu0 0
  %3453 = vmatmul.mubr.bf16.gmra.mrb[0].mxu0 %v2311
  %v3454 = vpop.f32.mrb[0].mxu0
  %v3455 = vadd.f32 0.0, %v3454
  %v3456 = vpop.f32.mrb[0].mxu0
  %v3457 = vpop.f32.mrb[0].mxu0
  %v3458 = vadd.f32 0.0, %v3457
  %v3459 = vpop.f32.mrb[0].mxu0
  %3460 = vmatprep.mubr.bf16.mxu0 0
  %3461 = vmatmul.mubr.bf16.gmra.mrb[0].mxu0 %v2460
  %v3462 = vpop.f32.mrb[0].mxu0
  %v3463 = vadd.f32 0.0, %v3462
  %v3464 = vpop.f32.mrb[0].mxu0
  %v3465 = vpop.f32.mrb[0].mxu0
  %v3466 = vadd.f32 0.0, %v3465
  %v3467 = vpop.f32.mrb[0].mxu0
  %3468 = vmatprep.mubr.bf16.mxu0 0
  %3469 = vmatmul.mubr.bf16.gmra.mrb[0].mxu0 %v2463
  %v3470 = vpop.f32.mrb[0].mxu0
  %v3471 = vadd.f32 0.0, %v3470
  %v3472 = vpop.f32.mrb[0].mxu0
  %v3473 = vpop.f32.mrb[0].mxu0
  %v3474 = vadd.f32 0.0, %v3473
  %v3475 = vpop.f32.mrb[0].mxu0
  %3476 = vmatprep.mubr.bf16.mxu0 0
  %3477 = vmatmul.mubr.bf16.gmra.mrb[0].mxu0 %v2466
  %v3478 = vpop.f32.mrb[0].mxu0
  %v3479 = vadd.f32 0.0, %v3478
  %v3480 = vpop.f32.mrb[0].mxu0
  %v3481 = vpop.f32.mrb[0].mxu0
  %v3482 = vadd.f32 0.0, %v3481
  %v3483 = vpop.f32.mrb[0].mxu0
  %3484 = vmatprep.mubr.bf16.mxu0 0
  %3485 = vmatmul.mubr.bf16.gmra.mrb[0].mxu0 %v2469
  %v3486 = vpop.f32.mrb[0].mxu0
  %v3487 = vadd.f32 0.0, %v3486
  %v3488 = vpop.f32.mrb[0].mxu0
  %v3489 = vpop.f32.mrb[0].mxu0
  %v3490 = vadd.f32 0.0, %v3489
  %v3491 = vpop.f32.mrb[0].mxu0
  %3492 = vdwg.mxu0
  %v3493 = vadd.f32 %v3334, %v3431
  %v3494 = vadd.f32 %v3337, %v3434
  %v3495 = vadd.f32 %v3342, %v3439
  %v3496 = vadd.f32 %v3345, %v3442
  %v3497 = vadd.f32 %v3350, %v3447
  %v3498 = vadd.f32 %v3353, %v3450
  %v3499 = vadd.f32 %v3358, %v3455
  %v3500 = vadd.f32 %v3361, %v3458
  %v3501 = vadd.f32 %v3366, %v3463
  %v3502 = vadd.f32 %v3369, %v3466
  %v3503 = vadd.f32 %v3374, %v3471
  %v3504 = vadd.f32 %v3377, %v3474
  %v3505 = vadd.f32 %v3382, %v3479
  %v3506 = vadd.f32 %v3385, %v3482
  %v3507 = vadd.f32 %v3390, %v3487
  %v3508 = vadd.f32 %v3393, %v3490
  %3509 = vmatprep.subr.bf16.mxu0 0
  %3510 = vmatpush1.bf16.msra.mxu0 %v2123
  %3511 = vmatprep.subr.bf16.mxu0 0
  %3512 = vmatpush1.bf16.msra.mxu0 %v2124
  %3513 = vmatprep.subr.bf16.mxu0 0
  %3514 = vmatpush1.bf16.msra.mxu0 %v2125
  %3515 = vmatprep.subr.bf16.mxu0 0
  %3516 = vmatpush1.bf16.msra.mxu0 %v2126
  %3517 = vmatprep.subr.bf16.mxu0 0
  %3518 = vmatpush1.bf16.msra.mxu0 0
  %3519 = vmatprep.subr.bf16.mxu0 0
  %3520 = vmatpush1.bf16.msra.mxu0 0
  %3521 = vmatprep.subr.bf16.mxu0 0
  %3522 = vmatpush1.bf16.msra.mxu0 0
  %3523 = vmatprep.subr.bf16.mxu0 0
  %3524 = vmatpush1.bf16.msra.mxu0 0
  %3525 = vmatprep.subr.bf16.mxu0 0
  %3526 = vmatpush1.bf16.msra.mxu0 0
  %3527 = vmatprep.subr.bf16.mxu0 0
  %3528 = vmatpush1.bf16.msra.mxu0 0
  %3529 = vmatprep.subr.bf16.mxu0 0
  %3530 = vmatpush1.bf16.msra.mxu0 0
  %3531 = vmatprep.subr.bf16.mxu0 0
  %3532 = vmatpush1.bf16.msra.mxu0 0
  %3533 = vmatprep.subr.bf16.mxu0 0
  %3534 = vmatpush1.bf16.msra.mxu0 0
  %3535 = vmatprep.subr.bf16.mxu0 0
  %3536 = vmatpush1.bf16.msra.mxu0 0
  %3537 = vmatprep.subr.bf16.mxu0 0
  %3538 = vmatpush1.bf16.msra.mxu0 0
  %3539 = vmatprep.subr.bf16.mxu0 0
  %3540 = vmatpush1.bf16.msra.mxu0 0
  %3541 = vmatprep.mubr.bf16.mxu0 0
  %3542 = vmatmul.mubr.bf16.gmra.mrb[0].mxu0 %v2618
  %v3543 = vpop.f32.mrb[0].mxu0
  %v3544 = vadd.f32 0.0, %v3543
  %v3545 = vpop.f32.mrb[0].mxu0
  %v3546 = vpop.f32.mrb[0].mxu0
  %v3547 = vadd.f32 0.0, %v3546
  %v3548 = vpop.f32.mrb[0].mxu0
  %3549 = vmatprep.mubr.bf16.mxu0 0
  %3550 = vmatmul.mubr.bf16.gmra.mrb[0].mxu0 %v2621
  %v3551 = vpop.f32.mrb[0].mxu0
  %v3552 = vadd.f32 0.0, %v3551
  %v3553 = vpop.f32.mrb[0].mxu0
  %v3554 = vpop.f32.mrb[0].mxu0
  %v3555 = vadd.f32 0.0, %v3554
  %v3556 = vpop.f32.mrb[0].mxu0
  %3557 = vmatprep.mubr.bf16.mxu0 0
  %3558 = vmatmul.mubr.bf16.gmra.mrb[0].mxu0 %v2624
  %v3559 = vpop.f32.mrb[0].mxu0
  %v3560 = vadd.f32 0.0, %v3559
  %v3561 = vpop.f32.mrb[0].mxu0
  %v3562 = vpop.f32.mrb[0].mxu0
  %v3563 = vadd.f32 0.0, %v3562
  %v3564 = vpop.f32.mrb[0].mxu0
  %3565 = vmatprep.mubr.bf16.mxu0 0
  %3566 = vmatmul.mubr.bf16.gmra.mrb[0].mxu0 %v2627
  %v3567 = vpop.f32.mrb[0].mxu0
  %v3568 = vadd.f32 0.0, %v3567
  %v3569 = vpop.f32.mrb[0].mxu0
  %v3570 = vpop.f32.mrb[0].mxu0
  %v3571 = vadd.f32 0.0, %v3570
  %v3572 = vpop.f32.mrb[0].mxu0
  %3573 = vmatprep.mubr.bf16.mxu0 0
  %3574 = vmatmul.mubr.bf16.gmra.mrb[0].mxu0 %v2630
  %v3575 = vpop.f32.mrb[0].mxu0
  %v3576 = vadd.f32 0.0, %v3575
  %v3577 = vpop.f32.mrb[0].mxu0
  %v3578 = vpop.f32.mrb[0].mxu0
  %v3579 = vadd.f32 0.0, %v3578
  %v3580 = vpop.f32.mrb[0].mxu0
  %3581 = vmatprep.mubr.bf16.mxu0 0
  %3582 = vmatmul.mubr.bf16.gmra.mrb[0].mxu0 %v2633
  %v3583 = vpop.f32.mrb[0].mxu0
  %v3584 = vadd.f32 0.0, %v3583
  %v3585 = vpop.f32.mrb[0].mxu0
  %v3586 = vpop.f32.mrb[0].mxu0
  %v3587 = vadd.f32 0.0, %v3586
  %v3588 = vpop.f32.mrb[0].mxu0
  %3589 = vmatprep.mubr.bf16.mxu0 0
  %3590 = vmatmul.mubr.bf16.gmra.mrb[0].mxu0 %v2636
  %v3591 = vpop.f32.mrb[0].mxu0
  %v3592 = vadd.f32 0.0, %v3591
  %v3593 = vpop.f32.mrb[0].mxu0
  %v3594 = vpop.f32.mrb[0].mxu0
  %v3595 = vadd.f32 0.0, %v3594
  %v3596 = vpop.f32.mrb[0].mxu0
  %3597 = vmatprep.mubr.bf16.mxu0 0
  %3598 = vmatmul.mubr.bf16.gmra.mrb[0].mxu0 %v2639
  %v3599 = vpop.f32.mrb[0].mxu0
  %v3600 = vadd.f32 0.0, %v3599
  %v3601 = vpop.f32.mrb[0].mxu0
  %v3602 = vpop.f32.mrb[0].mxu0
  %v3603 = vadd.f32 0.0, %v3602
  %v3604 = vpop.f32.mrb[0].mxu0
  %3605 = vdwg.mxu0
  %v3606 = vadd.f32 %v3493, %v3544
  %v3607 = vadd.f32 %v3494, %v3547
  %v3608 = vadd.f32 %v3495, %v3552
  %v3609 = vadd.f32 %v3496, %v3555
  %v3610 = vadd.f32 %v3497, %v3560
  %v3611 = vadd.f32 %v3498, %v3563
  %v3612 = vadd.f32 %v3499, %v3568
  %v3613 = vadd.f32 %v3500, %v3571
  %v3614 = vadd.f32 %v3501, %v3576
  %v3615 = vadd.f32 %v3502, %v3579
  %v3616 = vadd.f32 %v3503, %v3584
  %v3617 = vadd.f32 %v3504, %v3587
  %v3618 = vadd.f32 %v3505, %v3592
  %v3619 = vadd.f32 %v3506, %v3595
  %v3620 = vadd.f32 %v3507, %v3600
  %v3621 = vadd.f32 %v3508, %v3603
  %3622 = vmatprep.subr.bf16.mxu0 0
  %3623 = vmatpush1.bf16.msra.mxu0 %v2293
  %3624 = vmatprep.subr.bf16.mxu0 0
  %3625 = vmatpush1.bf16.msra.mxu0 %v2294
  %3626 = vmatprep.subr.bf16.mxu0 0
  %3627 = vmatpush1.bf16.msra.mxu0 %v2295
  %3628 = vmatprep.subr.bf16.mxu0 0
  %3629 = vmatpush1.bf16.msra.mxu0 %v2296
  %3630 = vmatprep.subr.bf16.mxu0 0
  %3631 = vmatpush1.bf16.msra.mxu0 0
  %3632 = vmatprep.subr.bf16.mxu0 0
  %3633 = vmatpush1.bf16.msra.mxu0 0
  %3634 = vmatprep.subr.bf16.mxu0 0
  %3635 = vmatpush1.bf16.msra.mxu0 0
  %3636 = vmatprep.subr.bf16.mxu0 0
  %3637 = vmatpush1.bf16.msra.mxu0 0
  %3638 = vmatprep.subr.bf16.mxu0 0
  %3639 = vmatpush1.bf16.msra.mxu0 0
  %3640 = vmatprep.subr.bf16.mxu0 0
  %3641 = vmatpush1.bf16.msra.mxu0 0
  %3642 = vmatprep.subr.bf16.mxu0 0
  %3643 = vmatpush1.bf16.msra.mxu0 0
  %3644 = vmatprep.subr.bf16.mxu0 0
  %3645 = vmatpush1.bf16.msra.mxu0 0
  %3646 = vmatprep.subr.bf16.mxu0 0
  %3647 = vmatpush1.bf16.msra.mxu0 0
  %3648 = vmatprep.subr.bf16.mxu0 0
  %3649 = vmatpush1.bf16.msra.mxu0 0
  %3650 = vmatprep.subr.bf16.mxu0 0
  %3651 = vmatpush1.bf16.msra.mxu0 0
  %3652 = vmatprep.subr.bf16.mxu0 0
  %3653 = vmatpush1.bf16.msra.mxu0 0
  %3654 = vmatprep.mubr.bf16.mxu0 0
  %3655 = vmatmul.mubr.bf16.gmra.mrb[0].mxu0 %v2630
  %v3656 = vpop.f32.mrb[0].mxu0
  %v3657 = vadd.f32 0.0, %v3656
  %v3658 = vpop.f32.mrb[0].mxu0
  %v3659 = vpop.f32.mrb[0].mxu0
  %v3660 = vadd.f32 0.0, %v3659
  %v3661 = vpop.f32.mrb[0].mxu0
  %3662 = vmatprep.mubr.bf16.mxu0 0
  %3663 = vmatmul.mubr.bf16.gmra.mrb[0].mxu0 %v2633
  %v3664 = vpop.f32.mrb[0].mxu0
  %v3665 = vadd.f32 0.0, %v3664
  %v3666 = vpop.f32.mrb[0].mxu0
  %v3667 = vpop.f32.mrb[0].mxu0
  %v3668 = vadd.f32 0.0, %v3667
  %v3669 = vpop.f32.mrb[0].mxu0
  %3670 = vmatprep.mubr.bf16.mxu0 0
  %3671 = vmatmul.mubr.bf16.gmra.mrb[0].mxu0 %v2636
  %v3672 = vpop.f32.mrb[0].mxu0
  %v3673 = vadd.f32 0.0, %v3672
  %v3674 = vpop.f32.mrb[0].mxu0
  %v3675 = vpop.f32.mrb[0].mxu0
  %v3676 = vadd.f32 0.0, %v3675
  %v3677 = vpop.f32.mrb[0].mxu0
  %3678 = vmatprep.mubr.bf16.mxu0 0
  %3679 = vmatmul.mubr.bf16.gmra.mrb[0].mxu0 %v2639
  %v3680 = vpop.f32.mrb[0].mxu0
  %v3681 = vadd.f32 0.0, %v3680
  %v3682 = vpop.f32.mrb[0].mxu0
  %v3683 = vpop.f32.mrb[0].mxu0
  %v3684 = vadd.f32 0.0, %v3683
  %v3685 = vpop.f32.mrb[0].mxu0
  %3686 = vmatprep.mubr.bf16.mxu0 0
  %3687 = vmatmul.mubr.bf16.gmra.mrb[0].mxu0 %v2788
  %v3688 = vpop.f32.mrb[0].mxu0
  %v3689 = vadd.f32 0.0, %v3688
  %v3690 = vpop.f32.mrb[0].mxu0
  %v3691 = vpop.f32.mrb[0].mxu0
  %v3692 = vadd.f32 0.0, %v3691
  %v3693 = vpop.f32.mrb[0].mxu0
  %3694 = vmatprep.mubr.bf16.mxu0 0
  %3695 = vmatmul.mubr.bf16.gmra.mrb[0].mxu0 %v2791
  %v3696 = vpop.f32.mrb[0].mxu0
  %v3697 = vadd.f32 0.0, %v3696
  %v3698 = vpop.f32.mrb[0].mxu0
  %v3699 = vpop.f32.mrb[0].mxu0
  %v3700 = vadd.f32 0.0, %v3699
  %v3701 = vpop.f32.mrb[0].mxu0
  %3702 = vmatprep.mubr.bf16.mxu0 0
  %3703 = vmatmul.mubr.bf16.gmra.mrb[0].mxu0 %v2794
  %v3704 = vpop.f32.mrb[0].mxu0
  %v3705 = vadd.f32 0.0, %v3704
  %v3706 = vpop.f32.mrb[0].mxu0
  %v3707 = vpop.f32.mrb[0].mxu0
  %v3708 = vadd.f32 0.0, %v3707
  %v3709 = vpop.f32.mrb[0].mxu0
  %3710 = vmatprep.mubr.bf16.mxu0 0
  %3711 = vmatmul.mubr.bf16.gmra.mrb[0].mxu0 %v2797
  %v3712 = vpop.f32.mrb[0].mxu0
  %v3713 = vadd.f32 0.0, %v3712
  %v3714 = vpop.f32.mrb[0].mxu0
  %v3715 = vpop.f32.mrb[0].mxu0
  %v3716 = vadd.f32 0.0, %v3715
  %v3717 = vpop.f32.mrb[0].mxu0
  %3718 = vdwg.mxu0
  %v3719 = vadd.f32 %v3606, %v3657
  %v3720 = vadd.f32 %v3607, %v3660
  %v3721 = vadd.f32 %v3608, %v3665
  %v3722 = vadd.f32 %v3609, %v3668
  %v3723 = vadd.f32 %v3610, %v3673
  %v3724 = vadd.f32 %v3611, %v3676
  %v3725 = vadd.f32 %v3612, %v3681
  %v3726 = vadd.f32 %v3613, %v3684
  %v3727 = vadd.f32 %v3614, %v3689
  %v3728 = vadd.f32 %v3615, %v3692
  %v3729 = vadd.f32 %v3616, %v3697
  %v3730 = vadd.f32 %v3617, %v3700
  %v3731 = vadd.f32 %v3618, %v3705
  %v3732 = vadd.f32 %v3619, %v3708
  %v3733 = vadd.f32 %v3620, %v3713
  %v3734 = vadd.f32 %v3621, %v3716
  %3735 = vmatprep.subr.bf16.mxu0 0
  %3736 = vmatpush1.bf16.msra.mxu0 %v2451
  %3737 = vmatprep.subr.bf16.mxu0 0
  %3738 = vmatpush1.bf16.msra.mxu0 %v2452
  %3739 = vmatprep.subr.bf16.mxu0 0
  %3740 = vmatpush1.bf16.msra.mxu0 %v2453
  %3741 = vmatprep.subr.bf16.mxu0 0
  %3742 = vmatpush1.bf16.msra.mxu0 %v2454
  %3743 = vmatprep.subr.bf16.mxu0 0
  %3744 = vmatpush1.bf16.msra.mxu0 0
  %3745 = vmatprep.subr.bf16.mxu0 0
  %3746 = vmatpush1.bf16.msra.mxu0 0
  %3747 = vmatprep.subr.bf16.mxu0 0
  %3748 = vmatpush1.bf16.msra.mxu0 0
  %3749 = vmatprep.subr.bf16.mxu0 0
  %3750 = vmatpush1.bf16.msra.mxu0 0
  %3751 = vmatprep.subr.bf16.mxu0 0
  %3752 = vmatpush1.bf16.msra.mxu0 0
  %3753 = vmatprep.subr.bf16.mxu0 0
  %3754 = vmatpush1.bf16.msra.mxu0 0
  %3755 = vmatprep.subr.bf16.mxu0 0
  %3756 = vmatpush1.bf16.msra.mxu0 0
  %3757 = vmatprep.subr.bf16.mxu0 0
  %3758 = vmatpush1.bf16.msra.mxu0 0
  %3759 = vmatprep.subr.bf16.mxu0 0
  %3760 = vmatpush1.bf16.msra.mxu0 0
  %3761 = vmatprep.subr.bf16.mxu0 0
  %3762 = vmatpush1.bf16.msra.mxu0 0
  %3763 = vmatprep.subr.bf16.mxu0 0
  %3764 = vmatpush1.bf16.msra.mxu0 0
  %3765 = vmatprep.subr.bf16.mxu0 0
  %3766 = vmatpush1.bf16.msra.mxu0 0
  %3767 = vmatprep.mubr.bf16.mxu0 0
  %3768 = vmatmul.mubr.bf16.gmra.mrb[0].mxu0 %v2788
  %v3769 = vpop.f32.mrb[0].mxu0
  %v3770 = vadd.f32 0.0, %v3769
  %v3771 = vpop.f32.mrb[0].mxu0
  %v3772 = vpop.f32.mrb[0].mxu0
  %v3773 = vadd.f32 0.0, %v3772
  %v3774 = vpop.f32.mrb[0].mxu0
  %3775 = vmatprep.mubr.bf16.mxu0 0
  %3776 = vmatmul.mubr.bf16.gmra.mrb[0].mxu0 %v2791
  %v3777 = vpop.f32.mrb[0].mxu0
  %v3778 = vadd.f32 0.0, %v3777
  %v3779 = vpop.f32.mrb[0].mxu0
  %v3780 = vpop.f32.mrb[0].mxu0
  %v3781 = vadd.f32 0.0, %v3780
  %v3782 = vpop.f32.mrb[0].mxu0
  %3783 = vmatprep.mubr.bf16.mxu0 0
  %3784 = vmatmul.mubr.bf16.gmra.mrb[0].mxu0 %v2794
  %v3785 = vpop.f32.mrb[0].mxu0
  %v3786 = vadd.f32 0.0, %v3785
  %v3787 = vpop.f32.mrb[0].mxu0
  %v3788 = vpop.f32.mrb[0].mxu0
  %v3789 = vadd.f32 0.0, %v3788
  %v3790 = vpop.f32.mrb[0].mxu0
  %3791 = vmatprep.mubr.bf16.mxu0 0
  %3792 = vmatmul.mubr.bf16.gmra.mrb[0].mxu0 %v2797
  %v3793 = vpop.f32.mrb[0].mxu0
  %v3794 = vadd.f32 0.0, %v3793
  %v3795 = vpop.f32.mrb[0].mxu0
  %v3796 = vpop.f32.mrb[0].mxu0
  %v3797 = vadd.f32 0.0, %v3796
  %v3798 = vpop.f32.mrb[0].mxu0
  %3799 = vmatprep.mubr.bf16.mxu0 0
  %3800 = vmatmul.mubr.bf16.gmra.mrb[0].mxu0 %v2946
  %v3801 = vpop.f32.mrb[0].mxu0
  %v3802 = vadd.f32 0.0, %v3801
  %v3803 = vpop.f32.mrb[0].mxu0
  %v3804 = vpop.f32.mrb[0].mxu0
  %v3805 = vadd.f32 0.0, %v3804
  %v3806 = vpop.f32.mrb[0].mxu0
  %3807 = vmatprep.mubr.bf16.mxu0 0
  %3808 = vmatmul.mubr.bf16.gmra.mrb[0].mxu0 %v2949
  %v3809 = vpop.f32.mrb[0].mxu0
  %v3810 = vadd.f32 0.0, %v3809
  %v3811 = vpop.f32.mrb[0].mxu0
  %v3812 = vpop.f32.mrb[0].mxu0
  %v3813 = vadd.f32 0.0, %v3812
  %v3814 = vpop.f32.mrb[0].mxu0
  %3815 = vmatprep.mubr.bf16.mxu0 0
  %3816 = vmatmul.mubr.bf16.gmra.mrb[0].mxu0 %v2952
  %v3817 = vpop.f32.mrb[0].mxu0
  %v3818 = vadd.f32 0.0, %v3817
  %v3819 = vpop.f32.mrb[0].mxu0
  %v3820 = vpop.f32.mrb[0].mxu0
  %v3821 = vadd.f32 0.0, %v3820
  %v3822 = vpop.f32.mrb[0].mxu0
  %3823 = vmatprep.mubr.bf16.mxu0 0
  %3824 = vmatmul.mubr.bf16.gmra.mrb[0].mxu0 %v2955
  %v3825 = vpop.f32.mrb[0].mxu0
  %v3826 = vadd.f32 0.0, %v3825
  %v3827 = vpop.f32.mrb[0].mxu0
  %v3828 = vpop.f32.mrb[0].mxu0
  %v3829 = vadd.f32 0.0, %v3828
  %v3830 = vpop.f32.mrb[0].mxu0
  %3831 = vdwg.mxu0
  %v3832 = vadd.f32 %v3719, %v3770
  %v3833 = vadd.f32 %v3720, %v3773
  %v3834 = vadd.f32 %v3721, %v3778
  %v3835 = vadd.f32 %v3722, %v3781
  %v3836 = vadd.f32 %v3723, %v3786
  %v3837 = vadd.f32 %v3724, %v3789
  %v3838 = vadd.f32 %v3725, %v3794
  %v3839 = vadd.f32 %v3726, %v3797
  %v3840 = vadd.f32 %v3727, %v3802
  %v3841 = vadd.f32 %v3728, %v3805
  %v3842 = vadd.f32 %v3729, %v3810
  %v3843 = vadd.f32 %v3730, %v3813
  %v3844 = vadd.f32 %v3731, %v3818
  %v3845 = vadd.f32 %v3732, %v3821
  %v3846 = vadd.f32 %v3733, %v3826
  %v3847 = vadd.f32 %v3734, %v3829
  %v3849 = vsel %vm1685, %v1628, 0
  %v3852 = vsel %vm1685, %v1629, 0
  %v3855 = vsel %vm1685, %v1630, 0
  %v3858 = vsel %vm1685, %v1631, 0
  %v3861 = vsel %vm1685, %v1632, 0
  %v3864 = vsel %vm1685, %v1633, 0
  %v3867 = vsel %vm1685, %v1634, 0
  %v3870 = vsel %vm1685, %v1635, 0
  %3872 = vmatprep.subr.bf16.mxu0 0
  %3873 = vmatpush1.bf16.msra.mxu0 %v2609
  %3874 = vmatprep.subr.bf16.mxu0 0
  %3875 = vmatpush1.bf16.msra.mxu0 %v2610
  %3876 = vmatprep.subr.bf16.mxu0 0
  %3877 = vmatpush1.bf16.msra.mxu0 %v2611
  %3878 = vmatprep.subr.bf16.mxu0 0
  %3879 = vmatpush1.bf16.msra.mxu0 %v2612
  %3880 = vmatprep.subr.bf16.mxu0 0
  %3881 = vmatpush1.bf16.msra.mxu0 0
  %3882 = vmatprep.subr.bf16.mxu0 0
  %3883 = vmatpush1.bf16.msra.mxu0 0
  %3884 = vmatprep.subr.bf16.mxu0 0
  %3885 = vmatpush1.bf16.msra.mxu0 0
  %3886 = vmatprep.subr.bf16.mxu0 0
  %3887 = vmatpush1.bf16.msra.mxu0 0
  %3888 = vmatprep.subr.bf16.mxu0 0
  %3889 = vmatpush1.bf16.msra.mxu0 0
  %3890 = vmatprep.subr.bf16.mxu0 0
  %3891 = vmatpush1.bf16.msra.mxu0 0
  %3892 = vmatprep.subr.bf16.mxu0 0
  %3893 = vmatpush1.bf16.msra.mxu0 0
  %3894 = vmatprep.subr.bf16.mxu0 0
  %3895 = vmatpush1.bf16.msra.mxu0 0
  %3896 = vmatprep.subr.bf16.mxu0 0
  %3897 = vmatpush1.bf16.msra.mxu0 0
  %3898 = vmatprep.subr.bf16.mxu0 0
  %3899 = vmatpush1.bf16.msra.mxu0 0
  %3900 = vmatprep.subr.bf16.mxu0 0
  %3901 = vmatpush1.bf16.msra.mxu0 0
  %3902 = vmatprep.subr.bf16.mxu0 0
  %3903 = vmatpush1.bf16.msra.mxu0 0
  %3904 = vmatprep.mubr.bf16.mxu0 0
  %3905 = vmatmul.mubr.bf16.gmra.mrb[0].mxu0 %v3849
  %v3906 = vpop.f32.mrb[0].mxu0
  %v3907 = vadd.f32 0.0, %v3906
  %v3908 = vpop.f32.mrb[0].mxu0
  %v3909 = vpop.f32.mrb[0].mxu0
  %v3910 = vadd.f32 0.0, %v3909
  %v3911 = vpop.f32.mrb[0].mxu0
  %3912 = vmatprep.mubr.bf16.mxu0 0
  %3913 = vmatmul.mubr.bf16.gmra.mrb[0].mxu0 %v3852
  %v3914 = vpop.f32.mrb[0].mxu0
  %v3915 = vadd.f32 0.0, %v3914
  %v3916 = vpop.f32.mrb[0].mxu0
  %v3917 = vpop.f32.mrb[0].mxu0
  %v3918 = vadd.f32 0.0, %v3917
  %v3919 = vpop.f32.mrb[0].mxu0
  %3920 = vmatprep.mubr.bf16.mxu0 0
  %3921 = vmatmul.mubr.bf16.gmra.mrb[0].mxu0 %v3855
  %v3922 = vpop.f32.mrb[0].mxu0
  %v3923 = vadd.f32 0.0, %v3922
  %v3924 = vpop.f32.mrb[0].mxu0
  %v3925 = vpop.f32.mrb[0].mxu0
  %v3926 = vadd.f32 0.0, %v3925
  %v3927 = vpop.f32.mrb[0].mxu0
  %3928 = vmatprep.mubr.bf16.mxu0 0
  %3929 = vmatmul.mubr.bf16.gmra.mrb[0].mxu0 %v3858
  %v3930 = vpop.f32.mrb[0].mxu0
  %v3931 = vadd.f32 0.0, %v3930
  %v3932 = vpop.f32.mrb[0].mxu0
  %v3933 = vpop.f32.mrb[0].mxu0
  %v3934 = vadd.f32 0.0, %v3933
  %v3935 = vpop.f32.mrb[0].mxu0
  %3936 = vmatprep.mubr.bf16.mxu0 0
  %3937 = vmatmul.mubr.bf16.gmra.mrb[0].mxu0 %v3861
  %v3938 = vpop.f32.mrb[0].mxu0
  %v3939 = vadd.f32 0.0, %v3938
  %v3940 = vpop.f32.mrb[0].mxu0
  %v3941 = vpop.f32.mrb[0].mxu0
  %v3942 = vadd.f32 0.0, %v3941
  %v3943 = vpop.f32.mrb[0].mxu0
  %3944 = vmatprep.mubr.bf16.mxu0 0
  %3945 = vmatmul.mubr.bf16.gmra.mrb[0].mxu0 %v3864
  %v3946 = vpop.f32.mrb[0].mxu0
  %v3947 = vadd.f32 0.0, %v3946
  %v3948 = vpop.f32.mrb[0].mxu0
  %v3949 = vpop.f32.mrb[0].mxu0
  %v3950 = vadd.f32 0.0, %v3949
  %v3951 = vpop.f32.mrb[0].mxu0
  %3952 = vmatprep.mubr.bf16.mxu0 0
  %3953 = vmatmul.mubr.bf16.gmra.mrb[0].mxu0 %v3867
  %v3954 = vpop.f32.mrb[0].mxu0
  %v3955 = vadd.f32 0.0, %v3954
  %v3956 = vpop.f32.mrb[0].mxu0
  %v3957 = vpop.f32.mrb[0].mxu0
  %v3958 = vadd.f32 0.0, %v3957
  %v3959 = vpop.f32.mrb[0].mxu0
  %3960 = vmatprep.mubr.bf16.mxu0 0
  %3961 = vmatmul.mubr.bf16.gmra.mrb[0].mxu0 %v3870
  %v3962 = vpop.f32.mrb[0].mxu0
  %v3963 = vadd.f32 0.0, %v3962
  %v3964 = vpop.f32.mrb[0].mxu0
  %v3965 = vpop.f32.mrb[0].mxu0
  %v3966 = vadd.f32 0.0, %v3965
  %v3967 = vpop.f32.mrb[0].mxu0
  %3968 = vdwg.mxu0
  %v3969 = vadd.f32 %v3832, %v3907
  %v3970 = vadd.f32 %v3833, %v3910
  %v3971 = vadd.f32 %v3834, %v3915
  %v3972 = vadd.f32 %v3835, %v3918
  %v3973 = vadd.f32 %v3836, %v3923
  %v3974 = vadd.f32 %v3837, %v3926
  %v3975 = vadd.f32 %v3838, %v3931
  %v3976 = vadd.f32 %v3839, %v3934
  %v3977 = vadd.f32 %v3840, %v3939
  %v3978 = vadd.f32 %v3841, %v3942
  %v3979 = vadd.f32 %v3842, %v3947
  %v3980 = vadd.f32 %v3843, %v3950
  %v3981 = vadd.f32 %v3844, %v3955
  %v3982 = vadd.f32 %v3845, %v3958
  %v3983 = vadd.f32 %v3846, %v3963
  %v3984 = vadd.f32 %v3847, %v3966
  %v3986 = vsel %vm1685, %v1636, 0
  %v3989 = vsel %vm1685, %v1637, 0
  %v3992 = vsel %vm1685, %v1638, 0
  %v3995 = vsel %vm1685, %v1639, 0
  %3997 = vmatprep.subr.bf16.mxu0 0
  %3998 = vmatpush1.bf16.msra.mxu0 %v2779
  %3999 = vmatprep.subr.bf16.mxu0 0
  %4000 = vmatpush1.bf16.msra.mxu0 %v2780
  %4001 = vmatprep.subr.bf16.mxu0 0
  %4002 = vmatpush1.bf16.msra.mxu0 %v2781
  %4003 = vmatprep.subr.bf16.mxu0 0
  %4004 = vmatpush1.bf16.msra.mxu0 %v2782
  %4005 = vmatprep.subr.bf16.mxu0 0
  %4006 = vmatpush1.bf16.msra.mxu0 0
  %4007 = vmatprep.subr.bf16.mxu0 0
  %4008 = vmatpush1.bf16.msra.mxu0 0
  %4009 = vmatprep.subr.bf16.mxu0 0
  %4010 = vmatpush1.bf16.msra.mxu0 0
  %4011 = vmatprep.subr.bf16.mxu0 0
  %4012 = vmatpush1.bf16.msra.mxu0 0
  %4013 = vmatprep.subr.bf16.mxu0 0
  %4014 = vmatpush1.bf16.msra.mxu0 0
  %4015 = vmatprep.subr.bf16.mxu0 0
  %4016 = vmatpush1.bf16.msra.mxu0 0
  %4017 = vmatprep.subr.bf16.mxu0 0
  %4018 = vmatpush1.bf16.msra.mxu0 0
  %4019 = vmatprep.subr.bf16.mxu0 0
  %4020 = vmatpush1.bf16.msra.mxu0 0
  %4021 = vmatprep.subr.bf16.mxu0 0
  %4022 = vmatpush1.bf16.msra.mxu0 0
  %4023 = vmatprep.subr.bf16.mxu0 0
  %4024 = vmatpush1.bf16.msra.mxu0 0
  %4025 = vmatprep.subr.bf16.mxu0 0
  %4026 = vmatpush1.bf16.msra.mxu0 0
  %4027 = vmatprep.subr.bf16.mxu0 0
  %4028 = vmatpush1.bf16.msra.mxu0 0
  %4029 = vmatprep.mubr.bf16.mxu0 0
  %4030 = vmatmul.mubr.bf16.gmra.mrb[0].mxu0 %v3861
  %v4031 = vpop.f32.mrb[0].mxu0
  %v4032 = vadd.f32 0.0, %v4031
  %v4033 = vpop.f32.mrb[0].mxu0
  %v4034 = vpop.f32.mrb[0].mxu0
  %v4035 = vadd.f32 0.0, %v4034
  %v4036 = vpop.f32.mrb[0].mxu0
  %4037 = vmatprep.mubr.bf16.mxu0 0
  %4038 = vmatmul.mubr.bf16.gmra.mrb[0].mxu0 %v3864
  %v4039 = vpop.f32.mrb[0].mxu0
  %v4040 = vadd.f32 0.0, %v4039
  %v4041 = vpop.f32.mrb[0].mxu0
  %v4042 = vpop.f32.mrb[0].mxu0
  %v4043 = vadd.f32 0.0, %v4042
  %v4044 = vpop.f32.mrb[0].mxu0
  %4045 = vmatprep.mubr.bf16.mxu0 0
  %4046 = vmatmul.mubr.bf16.gmra.mrb[0].mxu0 %v3867
  %v4047 = vpop.f32.mrb[0].mxu0
  %v4048 = vadd.f32 0.0, %v4047
  %v4049 = vpop.f32.mrb[0].mxu0
  %v4050 = vpop.f32.mrb[0].mxu0
  %v4051 = vadd.f32 0.0, %v4050
  %v4052 = vpop.f32.mrb[0].mxu0
  %4053 = vmatprep.mubr.bf16.mxu0 0
  %4054 = vmatmul.mubr.bf16.gmra.mrb[0].mxu0 %v3870
  %v4055 = vpop.f32.mrb[0].mxu0
  %v4056 = vadd.f32 0.0, %v4055
  %v4057 = vpop.f32.mrb[0].mxu0
  %v4058 = vpop.f32.mrb[0].mxu0
  %v4059 = vadd.f32 0.0, %v4058
  %v4060 = vpop.f32.mrb[0].mxu0
  %4061 = vmatprep.mubr.bf16.mxu0 0
  %4062 = vmatmul.mubr.bf16.gmra.mrb[0].mxu0 %v3986
  %v4063 = vpop.f32.mrb[0].mxu0
  %v4064 = vadd.f32 0.0, %v4063
  %v4065 = vpop.f32.mrb[0].mxu0
  %v4066 = vpop.f32.mrb[0].mxu0
  %v4067 = vadd.f32 0.0, %v4066
  %v4068 = vpop.f32.mrb[0].mxu0
  %4069 = vmatprep.mubr.bf16.mxu0 0
  %4070 = vmatmul.mubr.bf16.gmra.mrb[0].mxu0 %v3989
  %v4071 = vpop.f32.mrb[0].mxu0
  %v4072 = vadd.f32 0.0, %v4071
  %v4073 = vpop.f32.mrb[0].mxu0
  %v4074 = vpop.f32.mrb[0].mxu0
  %v4075 = vadd.f32 0.0, %v4074
  %v4076 = vpop.f32.mrb[0].mxu0
  %4077 = vmatprep.mubr.bf16.mxu0 0
  %4078 = vmatmul.mubr.bf16.gmra.mrb[0].mxu0 %v3992
  %v4079 = vpop.f32.mrb[0].mxu0
  %v4080 = vadd.f32 0.0, %v4079
  %v4081 = vpop.f32.mrb[0].mxu0
  %v4082 = vpop.f32.mrb[0].mxu0
  %v4083 = vadd.f32 0.0, %v4082
  %v4084 = vpop.f32.mrb[0].mxu0
  %4085 = vmatprep.mubr.bf16.mxu0 0
  %4086 = vmatmul.mubr.bf16.gmra.mrb[0].mxu0 %v3995
  %v4087 = vpop.f32.mrb[0].mxu0
  %v4088 = vadd.f32 0.0, %v4087
  %v4089 = vpop.f32.mrb[0].mxu0
  %v4090 = vpop.f32.mrb[0].mxu0
  %v4091 = vadd.f32 0.0, %v4090
  %v4092 = vpop.f32.mrb[0].mxu0
  %4093 = vdwg.mxu0
  %v4094 = vadd.f32 %v3969, %v4032
  %v4095 = vadd.f32 %v3970, %v4035
  %v4096 = vadd.f32 %v3971, %v4040
  %v4097 = vadd.f32 %v3972, %v4043
  %v4098 = vadd.f32 %v3973, %v4048
  %v4099 = vadd.f32 %v3974, %v4051
  %v4100 = vadd.f32 %v3975, %v4056
  %v4101 = vadd.f32 %v3976, %v4059
  %v4102 = vadd.f32 %v3977, %v4064
  %v4103 = vadd.f32 %v3978, %v4067
  %v4104 = vadd.f32 %v3979, %v4072
  %v4105 = vadd.f32 %v3980, %v4075
  %v4106 = vadd.f32 %v3981, %v4080
  %v4107 = vadd.f32 %v3982, %v4083
  %v4108 = vadd.f32 %v3983, %v4088
  %v4109 = vadd.f32 %v3984, %v4091
  %v4111 = vsel %vm1685, %v1640, 0
  %v4114 = vsel %vm1685, %v1641, 0
  %v4117 = vsel %vm1685, %v1642, 0
  %v4120 = vsel %vm1685, %v1643, 0
  %4122 = vmatprep.subr.bf16.mxu0 0
  %4123 = vmatpush1.bf16.msra.mxu0 %v2937
  %4124 = vmatprep.subr.bf16.mxu0 0
  %4125 = vmatpush1.bf16.msra.mxu0 %v2938
  %4126 = vmatprep.subr.bf16.mxu0 0
  %4127 = vmatpush1.bf16.msra.mxu0 %v2939
  %4128 = vmatprep.subr.bf16.mxu0 0
  %4129 = vmatpush1.bf16.msra.mxu0 %v2940
  %4130 = vmatprep.subr.bf16.mxu0 0
  %4131 = vmatpush1.bf16.msra.mxu0 0
  %4132 = vmatprep.subr.bf16.mxu0 0
  %4133 = vmatpush1.bf16.msra.mxu0 0
  %4134 = vmatprep.subr.bf16.mxu0 0
  %4135 = vmatpush1.bf16.msra.mxu0 0
  %4136 = vmatprep.subr.bf16.mxu0 0
  %4137 = vmatpush1.bf16.msra.mxu0 0
  %4138 = vmatprep.subr.bf16.mxu0 0
  %4139 = vmatpush1.bf16.msra.mxu0 0
  %4140 = vmatprep.subr.bf16.mxu0 0
  %4141 = vmatpush1.bf16.msra.mxu0 0
  %4142 = vmatprep.subr.bf16.mxu0 0
  %4143 = vmatpush1.bf16.msra.mxu0 0
  %4144 = vmatprep.subr.bf16.mxu0 0
  %4145 = vmatpush1.bf16.msra.mxu0 0
  %4146 = vmatprep.subr.bf16.mxu0 0
  %4147 = vmatpush1.bf16.msra.mxu0 0
  %4148 = vmatprep.subr.bf16.mxu0 0
  %4149 = vmatpush1.bf16.msra.mxu0 0
  %4150 = vmatprep.subr.bf16.mxu0 0
  %4151 = vmatpush1.bf16.msra.mxu0 0
  %4152 = vmatprep.subr.bf16.mxu0 0
  %4153 = vmatpush1.bf16.msra.mxu0 0
  %4154 = vmatprep.mubr.bf16.mxu0 0
  %4155 = vmatmul.mubr.bf16.gmra.mrb[0].mxu0 %v3986
  %v4156 = vpop.f32.mrb[0].mxu0
  %v4157 = vadd.f32 0.0, %v4156
  %v4158 = vpop.f32.mrb[0].mxu0
  %v4159 = vpop.f32.mrb[0].mxu0
  %v4160 = vadd.f32 0.0, %v4159
  %v4161 = vpop.f32.mrb[0].mxu0
  %4162 = vmatprep.mubr.bf16.mxu0 0
  %4163 = vmatmul.mubr.bf16.gmra.mrb[0].mxu0 %v3989
  %v4164 = vpop.f32.mrb[0].mxu0
  %v4165 = vadd.f32 0.0, %v4164
  %v4166 = vpop.f32.mrb[0].mxu0
  %v4167 = vpop.f32.mrb[0].mxu0
  %v4168 = vadd.f32 0.0, %v4167
  %v4169 = vpop.f32.mrb[0].mxu0
  %4170 = vmatprep.mubr.bf16.mxu0 0
  %4171 = vmatmul.mubr.bf16.gmra.mrb[0].mxu0 %v3992
  %v4172 = vpop.f32.mrb[0].mxu0
  %v4173 = vadd.f32 0.0, %v4172
  %v4174 = vpop.f32.mrb[0].mxu0
  %v4175 = vpop.f32.mrb[0].mxu0
  %v4176 = vadd.f32 0.0, %v4175
  %v4177 = vpop.f32.mrb[0].mxu0
  %4178 = vmatprep.mubr.bf16.mxu0 0
  %4179 = vmatmul.mubr.bf16.gmra.mrb[0].mxu0 %v3995
  %v4180 = vpop.f32.mrb[0].mxu0
  %v4181 = vadd.f32 0.0, %v4180
  %v4182 = vpop.f32.mrb[0].mxu0
  %v4183 = vpop.f32.mrb[0].mxu0
  %v4184 = vadd.f32 0.0, %v4183
  %v4185 = vpop.f32.mrb[0].mxu0
  %4186 = vmatprep.mubr.bf16.mxu0 0
  %4187 = vmatmul.mubr.bf16.gmra.mrb[0].mxu0 %v4111
  %v4188 = vpop.f32.mrb[0].mxu0
  %v4189 = vadd.f32 0.0, %v4188
  %v4190 = vpop.f32.mrb[0].mxu0
  %v4191 = vpop.f32.mrb[0].mxu0
  %v4192 = vadd.f32 0.0, %v4191
  %v4193 = vpop.f32.mrb[0].mxu0
  %4194 = vmatprep.mubr.bf16.mxu0 0
  %4195 = vmatmul.mubr.bf16.gmra.mrb[0].mxu0 %v4114
  %v4196 = vpop.f32.mrb[0].mxu0
  %v4197 = vadd.f32 0.0, %v4196
  %v4198 = vpop.f32.mrb[0].mxu0
  %v4199 = vpop.f32.mrb[0].mxu0
  %v4200 = vadd.f32 0.0, %v4199
  %v4201 = vpop.f32.mrb[0].mxu0
  %4202 = vmatprep.mubr.bf16.mxu0 0
  %4203 = vmatmul.mubr.bf16.gmra.mrb[0].mxu0 %v4117
  %v4204 = vpop.f32.mrb[0].mxu0
  %v4205 = vadd.f32 0.0, %v4204
  %v4206 = vpop.f32.mrb[0].mxu0
  %v4207 = vpop.f32.mrb[0].mxu0
  %v4208 = vadd.f32 0.0, %v4207
  %v4209 = vpop.f32.mrb[0].mxu0
  %4210 = vmatprep.mubr.bf16.mxu0 0
  %4211 = vmatmul.mubr.bf16.gmra.mrb[0].mxu0 %v4120
  %v4212 = vpop.f32.mrb[0].mxu0
  %v4213 = vadd.f32 0.0, %v4212
  %v4214 = vpop.f32.mrb[0].mxu0
  %v4215 = vpop.f32.mrb[0].mxu0
  %v4216 = vadd.f32 0.0, %v4215
  %v4217 = vpop.f32.mrb[0].mxu0
  %4218 = vdwg.mxu0
  %v4219 = vadd.f32 %v4094, %v4157
  %v4220 = vadd.f32 %v4095, %v4160
  %v4221 = vadd.f32 %v4096, %v4165
  %v4222 = vadd.f32 %v4097, %v4168
  %v4223 = vadd.f32 %v4098, %v4173
  %v4224 = vadd.f32 %v4099, %v4176
  %v4225 = vadd.f32 %v4100, %v4181
  %v4226 = vadd.f32 %v4101, %v4184
  %v4227 = vadd.f32 %v4102, %v4189
  %v4228 = vadd.f32 %v4103, %v4192
  %v4229 = vadd.f32 %v4104, %v4197
  %v4230 = vadd.f32 %v4105, %v4200
  %v4231 = vadd.f32 %v4106, %v4205
  %v4232 = vadd.f32 %v4107, %v4208
  %v4233 = vadd.f32 %v4108, %v4213
  %v4234 = vadd.f32 %v4109, %v4216
  %v4235 = vadd.f32 %v4219, %v3073
  %v4236 = vadd.f32 %v4220, %v3073
  %v4237 = vadd.f32 %v4221, %v3073
  %v4238 = vadd.f32 %v4222, %v3073
  %v4239 = vadd.f32 %v4223, %v3073
  %v4240 = vadd.f32 %v4224, %v3073
  %v4241 = vadd.f32 %v4225, %v3073
  %v4242 = vadd.f32 %v4226, %v3073
  %v4243 = vadd.f32 %v4227, %v3073
  %v4244 = vadd.f32 %v4228, %v3073
  %v4245 = vadd.f32 %v4229, %v3073
  %v4246 = vadd.f32 %v4230, %v3073
  %v4247 = vadd.f32 %v4231, %v3073
  %v4248 = vadd.f32 %v4232, %v3073
  %v4249 = vadd.f32 %v4233, %v3073
  %v4250 = vadd.f32 %v4234, %v3073
  %vm4251 = vcmp.gt.f32.partialorder %v4235, 0.0
  %vm4252 = vcmp.gt.f32.partialorder %v4236, 0.0
  %vm4253 = vcmp.gt.f32.partialorder %v4237, 0.0
  %vm4254 = vcmp.gt.f32.partialorder %v4238, 0.0
  %vm4255 = vcmp.gt.f32.partialorder %v4239, 0.0
  %vm4256 = vcmp.gt.f32.partialorder %v4240, 0.0
  %vm4257 = vcmp.gt.f32.partialorder %v4241, 0.0
  %vm4258 = vcmp.gt.f32.partialorder %v4242, 0.0
  %vm4259 = vcmp.gt.f32.partialorder %v4243, 0.0
  %vm4260 = vcmp.gt.f32.partialorder %v4244, 0.0
  %vm4261 = vcmp.gt.f32.partialorder %v4245, 0.0
  %vm4262 = vcmp.gt.f32.partialorder %v4246, 0.0
  %vm4263 = vcmp.gt.f32.partialorder %v4247, 0.0
  %vm4264 = vcmp.gt.f32.partialorder %v4248, 0.0
  %vm4265 = vcmp.gt.f32.partialorder %v4249, 0.0
  %vm4266 = vcmp.gt.f32.partialorder %v4250, 0.0
  %v4267 = vmin.f32 %v4235, 0.0
  %v4268 = vmin.f32 %v4236, 0.0
  %v4269 = vmin.f32 %v4237, 0.0
  %v4270 = vmin.f32 %v4238, 0.0
  %v4271 = vmin.f32 %v4239, 0.0
  %v4272 = vmin.f32 %v4240, 0.0
  %v4273 = vmin.f32 %v4241, 0.0
  %v4274 = vmin.f32 %v4242, 0.0
  %v4275 = vmin.f32 %v4243, 0.0
  %v4276 = vmin.f32 %v4244, 0.0
  %v4277 = vmin.f32 %v4245, 0.0
  %v4278 = vmin.f32 %v4246, 0.0
  %v4279 = vmin.f32 %v4247, 0.0
  %v4280 = vmin.f32 %v4248, 0.0
  %v4281 = vmin.f32 %v4249, 0.0
  %v4282 = vmin.f32 %v4250, 0.0
  %v4283 = vmul.f32 %v4267, 1.442695
  %v4284 = vpow.pop %v4283
  %v4285 = vmul.f32 %v4268, 1.442695
  %v4286 = vpow.pop %v4285
  %v4287 = vmul.f32 %v4269, 1.442695
  %v4288 = vpow.pop %v4287
  %v4289 = vmul.f32 %v4270, 1.442695
  %v4290 = vpow.pop %v4289
  %v4291 = vmul.f32 %v4271, 1.442695
  %v4292 = vpow.pop %v4291
  %v4293 = vmul.f32 %v4272, 1.442695
  %v4294 = vpow.pop %v4293
  %v4295 = vmul.f32 %v4273, 1.442695
  %v4296 = vpow.pop %v4295
  %v4297 = vmul.f32 %v4274, 1.442695
  %v4298 = vpow.pop %v4297
  %v4299 = vmul.f32 %v4275, 1.442695
  %v4300 = vpow.pop %v4299
  %v4301 = vmul.f32 %v4276, 1.442695
  %v4302 = vpow.pop %v4301
  %v4303 = vmul.f32 %v4277, 1.442695
  %v4304 = vpow.pop %v4303
  %v4305 = vmul.f32 %v4278, 1.442695
  %v4306 = vpow.pop %v4305
  %v4307 = vmul.f32 %v4279, 1.442695
  %v4308 = vpow.pop %v4307
  %v4309 = vmul.f32 %v4280, 1.442695
  %v4310 = vpow.pop %v4309
  %v4311 = vmul.f32 %v4281, 1.442695
  %v4312 = vpow.pop %v4311
  %v4313 = vmul.f32 %v4282, 1.442695
  %v4314 = vpow.pop %v4313
  %v4315 = vsub.f32 %v4284, 1.0
  %v4316 = vsub.f32 %v4286, 1.0
  %v4317 = vsub.f32 %v4288, 1.0
  %v4318 = vsub.f32 %v4290, 1.0
  %v4319 = vsub.f32 %v4292, 1.0
  %v4320 = vsub.f32 %v4294, 1.0
  %v4321 = vsub.f32 %v4296, 1.0
  %v4322 = vsub.f32 %v4298, 1.0
  %v4323 = vsub.f32 %v4300, 1.0
  %v4324 = vsub.f32 %v4302, 1.0
  %v4325 = vsub.f32 %v4304, 1.0
  %v4326 = vsub.f32 %v4306, 1.0
  %v4327 = vsub.f32 %v4308, 1.0
  %v4328 = vsub.f32 %v4310, 1.0
  %v4329 = vsub.f32 %v4312, 1.0
  %v4330 = vsub.f32 %v4314, 1.0
  %v4331 = vsel %vm4251, %v4235, %v4315
  %v4332 = vsel %vm4252, %v4236, %v4316
  %v4333 = vsel %vm4253, %v4237, %v4317
  %v4334 = vsel %vm4254, %v4238, %v4318
  %v4335 = vsel %vm4255, %v4239, %v4319
  %v4336 = vsel %vm4256, %v4240, %v4320
  %v4337 = vsel %vm4257, %v4241, %v4321
  %v4338 = vsel %vm4258, %v4242, %v4322
  %v4339 = vsel %vm4259, %v4243, %v4323
  %v4340 = vsel %vm4260, %v4244, %v4324
  %v4341 = vsel %vm4261, %v4245, %v4325
  %v4342 = vsel %vm4262, %v4246, %v4326
  %v4343 = vsel %vm4263, %v4247, %v4327
  %v4344 = vsel %vm4264, %v4248, %v4328
  %v4345 = vsel %vm4265, %v4249, %v4329
  %v4346 = vsel %vm4266, %v4250, %v4330
  %v4347 = vadd.f32 %v1564, %v4331
  %v4348 = vadd.f32 %v1565, %v4332
  %v4349 = vadd.f32 %v1566, %v4333
  %v4350 = vadd.f32 %v1567, %v4334
  %v4351 = vadd.f32 %v1568, %v4335
  %v4352 = vadd.f32 %v1569, %v4336
  %v4353 = vadd.f32 %v1570, %v4337
  %v4354 = vadd.f32 %v1571, %v4338
  %v4355 = vadd.f32 %v1572, %v4339
  %v4356 = vadd.f32 %v1573, %v4340
  %v4357 = vadd.f32 %v1574, %v4341
  %v4358 = vadd.f32 %v1575, %v4342
  %v4359 = vadd.f32 %v1576, %v4343
  %v4360 = vadd.f32 %v1577, %v4344
  %v4361 = vadd.f32 %v1578, %v4345
  %v4362 = vadd.f32 %v1579, %v4346
  %v4363 = vpack.c.bf16 %v3187, %v3186
  %v4364 = vpack.c.bf16 %v3189, %v3188
  %v4365 = vpack.c.bf16 %v3191, %v3190
  %v4366 = vpack.c.bf16 %v3193, %v3192
  %v4367 = vpack.c.bf16 %v3195, %v3194
  %v4368 = vpack.c.bf16 %v3197, %v3196
  %v4369 = vpack.c.bf16 %v3199, %v3198
  %v4370 = vpack.c.bf16 %v3201, %v3200
  %v4371 = vpack.c.bf16 %v4348, %v4347
  %v4372 = vpack.c.bf16 %v4350, %v4349
  %v4373 = vpack.c.bf16 %v4352, %v4351
  %v4374 = vpack.c.bf16 %v4354, %v4353
  %v4375 = vpack.c.bf16 %v4356, %v4355
  %v4376 = vpack.c.bf16 %v4358, %v4357
  %v4377 = vpack.c.bf16 %v4360, %v4359
  %v4378 = vpack.c.bf16 %v4362, %v4361
  %s4379 = scalar_lea.vmem %s1, 288
  %v4380 = vld [vmem:[%s4379] sm:$0xf]
  %v4381 = vld [vmem:[%s4379 + $0x4] sm:$0xf]
  %v4382 = vld [vmem:[%s4379 + $0x8] sm:$0xf]
  %v4383 = vld [vmem:[%s4379 + $0xc] sm:$0xf]
  %v4384 = vld [vmem:[%s4379 + $0x10] sm:$0xf]
  %v4385 = vld [vmem:[%s4379 + $0x14] sm:$0xf]
  %v4386 = vld [vmem:[%s4379 + $0x18] sm:$0xf]
  %v4387 = vld [vmem:[%s4379 + $0x1c] sm:$0xf]
  %s4388 = scalar_lea.vmem %s1, 320
  %v4389 = vld [vmem:[%s4388] sm:$0xf]
  %v4390 = vld [vmem:[%s4388 + $0x4] sm:$0xf]
  %v4391 = vld [vmem:[%s4388 + $0x8] sm:$0xf]
  %v4392 = vld [vmem:[%s4388 + $0xc] sm:$0xf]
  %v4393 = vld [vmem:[%s4388 + $0x10] sm:$0xf]
  %v4394 = vld [vmem:[%s4388 + $0x14] sm:$0xf]
  %v4395 = vld [vmem:[%s4388 + $0x18] sm:$0xf]
  %v4396 = vld [vmem:[%s4388 + $0x1c] sm:$0xf]
  %v4405 = vunpack.c.l.b16 %v4389
  %v4406 = vunpack.c.l.b16 %v4390
  %v4407 = vunpack.c.l.b16 %v4391
  %v4408 = vunpack.c.l.b16 %v4392
  %v4409 = vunpack.c.l.b16 %v4393
  %v4410 = vunpack.c.l.b16 %v4394
  %v4411 = vunpack.c.l.b16 %v4395
  %v4412 = vunpack.c.l.b16 %v4396
  %v4413 = vpack.c.b16 %v4406, %v4405
  %v4414 = vpack.c.b16 %v4408, %v4407
  %v4415 = vpack.c.b16 %v4410, %v4409
  %v4416 = vpack.c.b16 %v4412, %v4411
  %v4422 = vsel %vm1685, %v4365, 0
  %v4425 = vsel %vm1685, %v4366, 0
  %v4428 = vsel %vm1685, %v4367, 0
  %v4431 = vsel %vm1685, %v4368, 0
  %4433 = vmatprep.subr.bf16.mxu0 0
  %4434 = vmatpush1.bf16.msra.mxu0 %v4413
  %4435 = vmatprep.subr.bf16.mxu0 0
  %4436 = vmatpush1.bf16.msra.mxu0 %v4414
  %4437 = vmatprep.subr.bf16.mxu0 0
  %4438 = vmatpush1.bf16.msra.mxu0 %v4415
  %4439 = vmatprep.subr.bf16.mxu0 0
  %4440 = vmatpush1.bf16.msra.mxu0 %v4416
  %4441 = vmatprep.subr.bf16.mxu0 0
  %4442 = vmatpush1.bf16.msra.mxu0 0
  %4443 = vmatprep.subr.bf16.mxu0 0
  %4444 = vmatpush1.bf16.msra.mxu0 0
  %4445 = vmatprep.subr.bf16.mxu0 0
  %4446 = vmatpush1.bf16.msra.mxu0 0
  %4447 = vmatprep.subr.bf16.mxu0 0
  %4448 = vmatpush1.bf16.msra.mxu0 0
  %4449 = vmatprep.subr.bf16.mxu0 0
  %4450 = vmatpush1.bf16.msra.mxu0 0
  %4451 = vmatprep.subr.bf16.mxu0 0
  %4452 = vmatpush1.bf16.msra.mxu0 0
  %4453 = vmatprep.subr.bf16.mxu0 0
  %4454 = vmatpush1.bf16.msra.mxu0 0
  %4455 = vmatprep.subr.bf16.mxu0 0
  %4456 = vmatpush1.bf16.msra.mxu0 0
  %4457 = vmatprep.subr.bf16.mxu0 0
  %4458 = vmatpush1.bf16.msra.mxu0 0
  %4459 = vmatprep.subr.bf16.mxu0 0
  %4460 = vmatpush1.bf16.msra.mxu0 0
  %4461 = vmatprep.subr.bf16.mxu0 0
  %4462 = vmatpush1.bf16.msra.mxu0 0
  %4463 = vmatprep.subr.bf16.mxu0 0
  %4464 = vmatpush1.bf16.msra.mxu0 0
  %4465 = vmatprep.mubr.bf16.mxu0 0
  %4466 = vmatmul.mubr.bf16.gmra.mrb[0].mxu0 %v4422
  %v4467 = vpop.f32.mrb[0].mxu0
  %v4468 = vadd.f32 0.0, %v4467
  %v4469 = vpop.f32.mrb[0].mxu0
  %v4470 = vpop.f32.mrb[0].mxu0
  %v4471 = vadd.f32 0.0, %v4470
  %v4472 = vpop.f32.mrb[0].mxu0
  %4473 = vmatprep.mubr.bf16.mxu0 0
  %4474 = vmatmul.mubr.bf16.gmra.mrb[0].mxu0 %v4425
  %v4475 = vpop.f32.mrb[0].mxu0
  %v4476 = vadd.f32 0.0, %v4475
  %v4477 = vpop.f32.mrb[0].mxu0
  %v4478 = vpop.f32.mrb[0].mxu0
  %v4479 = vadd.f32 0.0, %v4478
  %v4480 = vpop.f32.mrb[0].mxu0
  %4481 = vmatprep.mubr.bf16.mxu0 0
  %4482 = vmatmul.mubr.bf16.gmra.mrb[0].mxu0 %v4428
  %v4483 = vpop.f32.mrb[0].mxu0
  %v4484 = vadd.f32 0.0, %v4483
  %v4485 = vpop.f32.mrb[0].mxu0
  %v4486 = vpop.f32.mrb[0].mxu0
  %v4487 = vadd.f32 0.0, %v4486
  %v4488 = vpop.f32.mrb[0].mxu0
  %4489 = vmatprep.mubr.bf16.mxu0 0
  %4490 = vmatmul.mubr.bf16.gmra.mrb[0].mxu0 %v4431
  %v4491 = vpop.f32.mrb[0].mxu0
  %v4492 = vadd.f32 0.0, %v4491
  %v4493 = vpop.f32.mrb[0].mxu0
  %v4494 = vpop.f32.mrb[0].mxu0
  %v4495 = vadd.f32 0.0, %v4494
  %v4496 = vpop.f32.mrb[0].mxu0
  %4497 = vdwg.mxu0
  %v4506 = vunpack.c.l.b16 %v4380
  %v4507 = vunpack.c.l.b16 %v4381
  %v4508 = vunpack.c.l.b16 %v4382
  %v4509 = vunpack.c.l.b16 %v4383
  %v4510 = vunpack.c.l.b16 %v4384
  %v4511 = vunpack.c.l.b16 %v4385
  %v4512 = vunpack.c.l.b16 %v4386
  %v4513 = vunpack.c.l.b16 %v4387
  %v4514 = vpack.c.b16 %v4507, %v4506
  %v4515 = vpack.c.b16 %v4509, %v4508
  %v4516 = vpack.c.b16 %v4511, %v4510
  %v4517 = vpack.c.b16 %v4513, %v4512
  %v4523 = vsel %vm1685, %v4363, 0
  %v4526 = vsel %vm1685, %v4364, 0
  %4528 = vmatprep.subr.bf16.mxu0 0
  %4529 = vmatpush1.bf16.msra.mxu0 %v4514
  %4530 = vmatprep.subr.bf16.mxu0 0
  %4531 = vmatpush1.bf16.msra.mxu0 %v4515
  %4532 = vmatprep.subr.bf16.mxu0 0
  %4533 = vmatpush1.bf16.msra.mxu0 %v4516
  %4534 = vmatprep.subr.bf16.mxu0 0
  %4535 = vmatpush1.bf16.msra.mxu0 %v4517
  %4536 = vmatprep.subr.bf16.mxu0 0
  %4537 = vmatpush1.bf16.msra.mxu0 0
  %4538 = vmatprep.subr.bf16.mxu0 0
  %4539 = vmatpush1.bf16.msra.mxu0 0
  %4540 = vmatprep.subr.bf16.mxu0 0
  %4541 = vmatpush1.bf16.msra.mxu0 0
  %4542 = vmatprep.subr.bf16.mxu0 0
  %4543 = vmatpush1.bf16.msra.mxu0 0
  %4544 = vmatprep.subr.bf16.mxu0 0
  %4545 = vmatpush1.bf16.msra.mxu0 0
  %4546 = vmatprep.subr.bf16.mxu0 0
  %4547 = vmatpush1.bf16.msra.mxu0 0
  %4548 = vmatprep.subr.bf16.mxu0 0
  %4549 = vmatpush1.bf16.msra.mxu0 0
  %4550 = vmatprep.subr.bf16.mxu0 0
  %4551 = vmatpush1.bf16.msra.mxu0 0
  %4552 = vmatprep.subr.bf16.mxu0 0
  %4553 = vmatpush1.bf16.msra.mxu0 0
  %4554 = vmatprep.subr.bf16.mxu0 0
  %4555 = vmatpush1.bf16.msra.mxu0 0
  %4556 = vmatprep.subr.bf16.mxu0 0
  %4557 = vmatpush1.bf16.msra.mxu0 0
  %4558 = vmatprep.subr.bf16.mxu0 0
  %4559 = vmatpush1.bf16.msra.mxu0 0
  %4560 = vmatprep.mubr.bf16.mxu0 0
  %4561 = vmatmul.mubr.bf16.gmra.mrb[0].mxu0 %v4523
  %v4562 = vpop.f32.mrb[0].mxu0
  %v4563 = vadd.f32 %v4468, %v4562
  %v4564 = vpop.f32.mrb[0].mxu0
  %v4565 = vpop.f32.mrb[0].mxu0
  %v4566 = vadd.f32 %v4471, %v4565
  %v4567 = vpop.f32.mrb[0].mxu0
  %4568 = vmatprep.mubr.bf16.mxu0 0
  %4569 = vmatmul.mubr.bf16.gmra.mrb[0].mxu0 %v4526
  %v4570 = vpop.f32.mrb[0].mxu0
  %v4571 = vadd.f32 %v4476, %v4570
  %v4572 = vpop.f32.mrb[0].mxu0
  %v4573 = vpop.f32.mrb[0].mxu0
  %v4574 = vadd.f32 %v4479, %v4573
  %v4575 = vpop.f32.mrb[0].mxu0
  %4576 = vmatprep.mubr.bf16.mxu0 0
  %4577 = vmatmul.mubr.bf16.gmra.mrb[0].mxu0 %v4422
  %v4578 = vpop.f32.mrb[0].mxu0
  %v4579 = vadd.f32 %v4484, %v4578
  %v4580 = vpop.f32.mrb[0].mxu0
  %v4581 = vpop.f32.mrb[0].mxu0
  %v4582 = vadd.f32 %v4487, %v4581
  %v4583 = vpop.f32.mrb[0].mxu0
  %4584 = vmatprep.mubr.bf16.mxu0 0
  %4585 = vmatmul.mubr.bf16.gmra.mrb[0].mxu0 %v4425
  %v4586 = vpop.f32.mrb[0].mxu0
  %v4587 = vadd.f32 %v4492, %v4586
  %v4588 = vpop.f32.mrb[0].mxu0
  %v4589 = vpop.f32.mrb[0].mxu0
  %v4590 = vadd.f32 %v4495, %v4589
  %v4591 = vpop.f32.mrb[0].mxu0
  %4592 = vdwg.mxu0
  %s4593 = scalar_lea.vmem %s1, 352
  %v4594 = vld [vmem:[%s4593] sm:$0xf]
  %v4595 = vld [vmem:[%s4593 + $0x4] sm:$0xf]
  %v4596 = vld [vmem:[%s4593 + $0x8] sm:$0xf]
  %v4597 = vld [vmem:[%s4593 + $0xc] sm:$0xf]
  %v4598 = vld [vmem:[%s4593 + $0x10] sm:$0xf]
  %v4599 = vld [vmem:[%s4593 + $0x14] sm:$0xf]
  %v4600 = vld [vmem:[%s4593 + $0x18] sm:$0xf]
  %v4601 = vld [vmem:[%s4593 + $0x1c] sm:$0xf]
  %v4610 = vunpack.c.l.b16 %v4594
  %v4611 = vunpack.c.l.b16 %v4595
  %v4612 = vunpack.c.l.b16 %v4596
  %v4613 = vunpack.c.l.b16 %v4597
  %v4614 = vunpack.c.l.b16 %v4598
  %v4615 = vunpack.c.l.b16 %v4599
  %v4616 = vunpack.c.l.b16 %v4600
  %v4617 = vunpack.c.l.b16 %v4601
  %v4618 = vpack.c.b16 %v4611, %v4610
  %v4619 = vpack.c.b16 %v4613, %v4612
  %v4620 = vpack.c.b16 %v4615, %v4614
  %v4621 = vpack.c.b16 %v4617, %v4616
  %v4627 = vsel %vm1685, %v4369, 0
  %v4630 = vsel %vm1685, %v4370, 0
  %4632 = vmatprep.subr.bf16.mxu0 0
  %4633 = vmatpush1.bf16.msra.mxu0 %v4618
  %4634 = vmatprep.subr.bf16.mxu0 0
  %4635 = vmatpush1.bf16.msra.mxu0 %v4619
  %4636 = vmatprep.subr.bf16.mxu0 0
  %4637 = vmatpush1.bf16.msra.mxu0 %v4620
  %4638 = vmatprep.subr.bf16.mxu0 0
  %4639 = vmatpush1.bf16.msra.mxu0 %v4621
  %4640 = vmatprep.subr.bf16.mxu0 0
  %4641 = vmatpush1.bf16.msra.mxu0 0
  %4642 = vmatprep.subr.bf16.mxu0 0
  %4643 = vmatpush1.bf16.msra.mxu0 0
  %4644 = vmatprep.subr.bf16.mxu0 0
  %4645 = vmatpush1.bf16.msra.mxu0 0
  %4646 = vmatprep.subr.bf16.mxu0 0
  %4647 = vmatpush1.bf16.msra.mxu0 0
  %4648 = vmatprep.subr.bf16.mxu0 0
  %4649 = vmatpush1.bf16.msra.mxu0 0
  %4650 = vmatprep.subr.bf16.mxu0 0
  %4651 = vmatpush1.bf16.msra.mxu0 0
  %4652 = vmatprep.subr.bf16.mxu0 0
  %4653 = vmatpush1.bf16.msra.mxu0 0
  %4654 = vmatprep.subr.bf16.mxu0 0
  %4655 = vmatpush1.bf16.msra.mxu0 0
  %4656 = vmatprep.subr.bf16.mxu0 0
  %4657 = vmatpush1.bf16.msra.mxu0 0
  %4658 = vmatprep.subr.bf16.mxu0 0
  %4659 = vmatpush1.bf16.msra.mxu0 0
  %4660 = vmatprep.subr.bf16.mxu0 0
  %4661 = vmatpush1.bf16.msra.mxu0 0
  %4662 = vmatprep.subr.bf16.mxu0 0
  %4663 = vmatpush1.bf16.msra.mxu0 0
  %4664 = vmatprep.mubr.bf16.mxu0 0
  %4665 = vmatmul.mubr.bf16.gmra.mrb[0].mxu0 %v4428
  %v4666 = vpop.f32.mrb[0].mxu0
  %v4667 = vadd.f32 0.0, %v4666
  %v4668 = vpop.f32.mrb[0].mxu0
  %v4669 = vpop.f32.mrb[0].mxu0
  %v4670 = vadd.f32 0.0, %v4669
  %v4671 = vpop.f32.mrb[0].mxu0
  %4672 = vmatprep.mubr.bf16.mxu0 0
  %4673 = vmatmul.mubr.bf16.gmra.mrb[0].mxu0 %v4431
  %v4674 = vpop.f32.mrb[0].mxu0
  %v4675 = vadd.f32 0.0, %v4674
  %v4676 = vpop.f32.mrb[0].mxu0
  %v4677 = vpop.f32.mrb[0].mxu0
  %v4678 = vadd.f32 0.0, %v4677
  %v4679 = vpop.f32.mrb[0].mxu0
  %4680 = vmatprep.mubr.bf16.mxu0 0
  %4681 = vmatmul.mubr.bf16.gmra.mrb[0].mxu0 %v4627
  %v4682 = vpop.f32.mrb[0].mxu0
  %v4683 = vadd.f32 0.0, %v4682
  %v4684 = vpop.f32.mrb[0].mxu0
  %v4685 = vpop.f32.mrb[0].mxu0
  %v4686 = vadd.f32 0.0, %v4685
  %v4687 = vpop.f32.mrb[0].mxu0
  %4688 = vmatprep.mubr.bf16.mxu0 0
  %4689 = vmatmul.mubr.bf16.gmra.mrb[0].mxu0 %v4630
  %v4690 = vpop.f32.mrb[0].mxu0
  %v4691 = vadd.f32 0.0, %v4690
  %v4692 = vpop.f32.mrb[0].mxu0
  %v4693 = vpop.f32.mrb[0].mxu0
  %v4694 = vadd.f32 0.0, %v4693
  %v4695 = vpop.f32.mrb[0].mxu0
  %4696 = vdwg.mxu0
  %v4697 = vadd.f32 %v4563, %v4667
  %v4698 = vadd.f32 %v4566, %v4670
  %v4699 = vadd.f32 %v4571, %v4675
  %v4700 = vadd.f32 %v4574, %v4678
  %v4701 = vadd.f32 %v4579, %v4683
  %v4702 = vadd.f32 %v4582, %v4686
  %v4703 = vadd.f32 %v4587, %v4691
  %v4704 = vadd.f32 %v4590, %v4694
  %v4705 = vlaneseq
  %v4706 = vshrl.u32 %v4705, 7
  %v4707 = vsub.s32 1, %v4706
  %v4708 = vrot.slane %v154, %v4707
  %v4709 = vadd.f32 %v4697, %v4708
  %v4710 = vadd.f32 %v4698, %v4708
  %v4711 = vadd.f32 %v4699, %v4708
  %v4712 = vadd.f32 %v4700, %v4708
  %v4713 = vadd.f32 %v4701, %v4708
  %v4714 = vadd.f32 %v4702, %v4708
  %v4715 = vadd.f32 %v4703, %v4708
  %v4716 = vadd.f32 %v4704, %v4708
  %vm4717 = vcmp.gt.f32.partialorder %v4709, 0.0
  %vm4718 = vcmp.gt.f32.partialorder %v4710, 0.0
  %vm4719 = vcmp.gt.f32.partialorder %v4711, 0.0
  %vm4720 = vcmp.gt.f32.partialorder %v4712, 0.0
  %vm4721 = vcmp.gt.f32.partialorder %v4713, 0.0
  %vm4722 = vcmp.gt.f32.partialorder %v4714, 0.0
  %vm4723 = vcmp.gt.f32.partialorder %v4715, 0.0
  %vm4724 = vcmp.gt.f32.partialorder %v4716, 0.0
  %v4725 = vmin.f32 %v4709, 0.0
  %v4726 = vmin.f32 %v4710, 0.0
  %v4727 = vmin.f32 %v4711, 0.0
  %v4728 = vmin.f32 %v4712, 0.0
  %v4729 = vmin.f32 %v4713, 0.0
  %v4730 = vmin.f32 %v4714, 0.0
  %v4731 = vmin.f32 %v4715, 0.0
  %v4732 = vmin.f32 %v4716, 0.0
  %v4733 = vmul.f32 %v4725, 1.442695
  %v4734 = vpow.pop %v4733
  %v4735 = vmul.f32 %v4726, 1.442695
  %v4736 = vpow.pop %v4735
  %v4737 = vmul.f32 %v4727, 1.442695
  %v4738 = vpow.pop %v4737
  %v4739 = vmul.f32 %v4728, 1.442695
  %v4740 = vpow.pop %v4739
  %v4741 = vmul.f32 %v4729, 1.442695
  %v4742 = vpow.pop %v4741
  %v4743 = vmul.f32 %v4730, 1.442695
  %v4744 = vpow.pop %v4743
  %v4745 = vmul.f32 %v4731, 1.442695
  %v4746 = vpow.pop %v4745
  %v4747 = vmul.f32 %v4732, 1.442695
  %v4748 = vpow.pop %v4747
  %v4749 = vsub.f32 %v4734, 1.0
  %v4750 = vsub.f32 %v4736, 1.0
  %v4751 = vsub.f32 %v4738, 1.0
  %v4752 = vsub.f32 %v4740, 1.0
  %v4753 = vsub.f32 %v4742, 1.0
  %v4754 = vsub.f32 %v4744, 1.0
  %v4755 = vsub.f32 %v4746, 1.0
  %v4756 = vsub.f32 %v4748, 1.0
  %v4757 = vsel %vm4717, %v4709, %v4749
  %v4758 = vsel %vm4718, %v4710, %v4750
  %v4759 = vsel %vm4719, %v4711, %v4751
  %v4760 = vsel %vm4720, %v4712, %v4752
  %v4761 = vsel %vm4721, %v4713, %v4753
  %v4762 = vsel %vm4722, %v4714, %v4754
  %v4763 = vsel %vm4723, %v4715, %v4755
  %v4764 = vsel %vm4724, %v4716, %v4756
  %v4765 = vadd.f32 %v3194, %v4757
  %v4766 = vadd.f32 %v3195, %v4758
  %v4767 = vadd.f32 %v3196, %v4759
  %v4768 = vadd.f32 %v3197, %v4760
  %v4769 = vadd.f32 %v3198, %v4761
  %v4770 = vadd.f32 %v3199, %v4762
  %v4771 = vadd.f32 %v3200, %v4763
  %v4772 = vadd.f32 %v3201, %v4764
  %v4774 = vsel %vm1685, %v4373, 0
  %v4777 = vsel %vm1685, %v4374, 0
  %v4780 = vsel %vm1685, %v4375, 0
  %v4783 = vsel %vm1685, %v4376, 0
  %4785 = vmatprep.subr.bf16.mxu0 0
  %4786 = vmatpush1.bf16.msra.mxu0 %v4413
  %4787 = vmatprep.subr.bf16.mxu0 0
  %4788 = vmatpush1.bf16.msra.mxu0 %v4414
  %4789 = vmatprep.subr.bf16.mxu0 0
  %4790 = vmatpush1.bf16.msra.mxu0 %v4415
  %4791 = vmatprep.subr.bf16.mxu0 0
  %4792 = vmatpush1.bf16.msra.mxu0 %v4416
  %4793 = vmatprep.subr.bf16.mxu0 0
  %4794 = vmatpush1.bf16.msra.mxu0 0
  %4795 = vmatprep.subr.bf16.mxu0 0
  %4796 = vmatpush1.bf16.msra.mxu0 0
  %4797 = vmatprep.subr.bf16.mxu0 0
  %4798 = vmatpush1.bf16.msra.mxu0 0
  %4799 = vmatprep.subr.bf16.mxu0 0
  %4800 = vmatpush1.bf16.msra.mxu0 0
  %4801 = vmatprep.subr.bf16.mxu0 0
  %4802 = vmatpush1.bf16.msra.mxu0 0
  %4803 = vmatprep.subr.bf16.mxu0 0
  %4804 = vmatpush1.bf16.msra.mxu0 0
  %4805 = vmatprep.subr.bf16.mxu0 0
  %4806 = vmatpush1.bf16.msra.mxu0 0
  %4807 = vmatprep.subr.bf16.mxu0 0
  %4808 = vmatpush1.bf16.msra.mxu0 0
  %4809 = vmatprep.subr.bf16.mxu0 0
  %4810 = vmatpush1.bf16.msra.mxu0 0
  %4811 = vmatprep.subr.bf16.mxu0 0
  %4812 = vmatpush1.bf16.msra.mxu0 0
  %4813 = vmatprep.subr.bf16.mxu0 0
  %4814 = vmatpush1.bf16.msra.mxu0 0
  %4815 = vmatprep.subr.bf16.mxu0 0
  %4816 = vmatpush1.bf16.msra.mxu0 0
  %4817 = vmatprep.mubr.bf16.mxu0 0
  %4818 = vmatmul.mubr.bf16.gmra.mrb[0].mxu0 %v4774
  %v4819 = vpop.f32.mrb[0].mxu0
  %v4820 = vadd.f32 0.0, %v4819
  %v4821 = vpop.f32.mrb[0].mxu0
  %v4822 = vpop.f32.mrb[0].mxu0
  %v4823 = vadd.f32 0.0, %v4822
  %v4824 = vpop.f32.mrb[0].mxu0
  %4825 = vmatprep.mubr.bf16.mxu0 0
  %4826 = vmatmul.mubr.bf16.gmra.mrb[0].mxu0 %v4777
  %v4827 = vpop.f32.mrb[0].mxu0
  %v4828 = vadd.f32 0.0, %v4827
  %v4829 = vpop.f32.mrb[0].mxu0
  %v4830 = vpop.f32.mrb[0].mxu0
  %v4831 = vadd.f32 0.0, %v4830
  %v4832 = vpop.f32.mrb[0].mxu0
  %4833 = vmatprep.mubr.bf16.mxu0 0
  %4834 = vmatmul.mubr.bf16.gmra.mrb[0].mxu0 %v4780
  %v4835 = vpop.f32.mrb[0].mxu0
  %v4836 = vadd.f32 0.0, %v4835
  %v4837 = vpop.f32.mrb[0].mxu0
  %v4838 = vpop.f32.mrb[0].mxu0
  %v4839 = vadd.f32 0.0, %v4838
  %v4840 = vpop.f32.mrb[0].mxu0
  %4841 = vmatprep.mubr.bf16.mxu0 0
  %4842 = vmatmul.mubr.bf16.gmra.mrb[0].mxu0 %v4783
  %v4843 = vpop.f32.mrb[0].mxu0
  %v4844 = vadd.f32 0.0, %v4843
  %v4845 = vpop.f32.mrb[0].mxu0
  %v4846 = vpop.f32.mrb[0].mxu0
  %v4847 = vadd.f32 0.0, %v4846
  %v4848 = vpop.f32.mrb[0].mxu0
  %4849 = vdwg.mxu0
  %v4851 = vsel %vm1685, %v4371, 0
  %v4854 = vsel %vm1685, %v4372, 0
  %4856 = vmatprep.subr.bf16.mxu0 0
  %4857 = vmatpush1.bf16.msra.mxu0 %v4514
  %4858 = vmatprep.subr.bf16.mxu0 0
  %4859 = vmatpush1.bf16.msra.mxu0 %v4515
  %4860 = vmatprep.subr.bf16.mxu0 0
  %4861 = vmatpush1.bf16.msra.mxu0 %v4516
  %4862 = vmatprep.subr.bf16.mxu0 0
  %4863 = vmatpush1.bf16.msra.mxu0 %v4517
  %4864 = vmatprep.subr.bf16.mxu0 0
  %4865 = vmatpush1.bf16.msra.mxu0 0
  %4866 = vmatprep.subr.bf16.mxu0 0
  %4867 = vmatpush1.bf16.msra.mxu0 0
  %4868 = vmatprep.subr.bf16.mxu0 0
  %4869 = vmatpush1.bf16.msra.mxu0 0
  %4870 = vmatprep.subr.bf16.mxu0 0
  %4871 = vmatpush1.bf16.msra.mxu0 0
  %4872 = vmatprep.subr.bf16.mxu0 0
  %4873 = vmatpush1.bf16.msra.mxu0 0
  %4874 = vmatprep.subr.bf16.mxu0 0
  %4875 = vmatpush1.bf16.msra.mxu0 0
  %4876 = vmatprep.subr.bf16.mxu0 0
  %4877 = vmatpush1.bf16.msra.mxu0 0
  %4878 = vmatprep.subr.bf16.mxu0 0
  %4879 = vmatpush1.bf16.msra.mxu0 0
  %4880 = vmatprep.subr.bf16.mxu0 0
  %4881 = vmatpush1.bf16.msra.mxu0 0
  %4882 = vmatprep.subr.bf16.mxu0 0
  %4883 = vmatpush1.bf16.msra.mxu0 0
  %4884 = vmatprep.subr.bf16.mxu0 0
  %4885 = vmatpush1.bf16.msra.mxu0 0
  %4886 = vmatprep.subr.bf16.mxu0 0
  %4887 = vmatpush1.bf16.msra.mxu0 0
  %4888 = vmatprep.mubr.bf16.mxu0 0
  %4889 = vmatmul.mubr.bf16.gmra.mrb[0].mxu0 %v4851
  %v4890 = vpop.f32.mrb[0].mxu0
  %v4891 = vadd.f32 %v4820, %v4890
  %v4892 = vpop.f32.mrb[0].mxu0
  %v4893 = vpop.f32.mrb[0].mxu0
  %v4894 = vadd.f32 %v4823, %v4893
  %v4895 = vpop.f32.mrb[0].mxu0
  %4896 = vmatprep.mubr.bf16.mxu0 0
  %4897 = vmatmul.mubr.bf16.gmra.mrb[0].mxu0 %v4854
  %v4898 = vpop.f32.mrb[0].mxu0
  %v4899 = vadd.f32 %v4828, %v4898
  %v4900 = vpop.f32.mrb[0].mxu0
  %v4901 = vpop.f32.mrb[0].mxu0
  %v4902 = vadd.f32 %v4831, %v4901
  %v4903 = vpop.f32.mrb[0].mxu0
  %4904 = vmatprep.mubr.bf16.mxu0 0
  %4905 = vmatmul.mubr.bf16.gmra.mrb[0].mxu0 %v4774
  %v4906 = vpop.f32.mrb[0].mxu0
  %v4907 = vadd.f32 %v4836, %v4906
  %v4908 = vpop.f32.mrb[0].mxu0
  %v4909 = vpop.f32.mrb[0].mxu0
  %v4910 = vadd.f32 %v4839, %v4909
  %v4911 = vpop.f32.mrb[0].mxu0
  %4912 = vmatprep.mubr.bf16.mxu0 0
  %4913 = vmatmul.mubr.bf16.gmra.mrb[0].mxu0 %v4777
  %v4914 = vpop.f32.mrb[0].mxu0
  %v4915 = vadd.f32 %v4844, %v4914
  %v4916 = vpop.f32.mrb[0].mxu0
  %v4917 = vpop.f32.mrb[0].mxu0
  %v4918 = vadd.f32 %v4847, %v4917
  %v4919 = vpop.f32.mrb[0].mxu0
  %4920 = vdwg.mxu0
  %v4922 = vsel %vm1685, %v4377, 0
  %v4925 = vsel %vm1685, %v4378, 0
  %4927 = vmatprep.subr.bf16.mxu0 0
  %4928 = vmatpush1.bf16.msra.mxu0 %v4618
  %4929 = vmatprep.subr.bf16.mxu0 0
  %4930 = vmatpush1.bf16.msra.mxu0 %v4619
  %4931 = vmatprep.subr.bf16.mxu0 0
  %4932 = vmatpush1.bf16.msra.mxu0 %v4620
  %4933 = vmatprep.subr.bf16.mxu0 0
  %4934 = vmatpush1.bf16.msra.mxu0 %v4621
  %4935 = vmatprep.subr.bf16.mxu0 0
  %4936 = vmatpush1.bf16.msra.mxu0 0
  %4937 = vmatprep.subr.bf16.mxu0 0
  %4938 = vmatpush1.bf16.msra.mxu0 0
  %4939 = vmatprep.subr.bf16.mxu0 0
  %4940 = vmatpush1.bf16.msra.mxu0 0
  %4941 = vmatprep.subr.bf16.mxu0 0
  %4942 = vmatpush1.bf16.msra.mxu0 0
  %4943 = vmatprep.subr.bf16.mxu0 0
  %4944 = vmatpush1.bf16.msra.mxu0 0
  %4945 = vmatprep.subr.bf16.mxu0 0
  %4946 = vmatpush1.bf16.msra.mxu0 0
  %4947 = vmatprep.subr.bf16.mxu0 0
  %4948 = vmatpush1.bf16.msra.mxu0 0
  %4949 = vmatprep.subr.bf16.mxu0 0
  %4950 = vmatpush1.bf16.msra.mxu0 0
  %4951 = vmatprep.subr.bf16.mxu0 0
  %4952 = vmatpush1.bf16.msra.mxu0 0
  %4953 = vmatprep.subr.bf16.mxu0 0
  %4954 = vmatpush1.bf16.msra.mxu0 0
  %4955 = vmatprep.subr.bf16.mxu0 0
  %4956 = vmatpush1.bf16.msra.mxu0 0
  %4957 = vmatprep.subr.bf16.mxu0 0
  %4958 = vmatpush1.bf16.msra.mxu0 0
  %4959 = vmatprep.mubr.bf16.mxu0 0
  %4960 = vmatmul.mubr.bf16.gmra.mrb[0].mxu0 %v4780
  %v4961 = vpop.f32.mrb[0].mxu0
  %v4962 = vadd.f32 0.0, %v4961
  %v4963 = vpop.f32.mrb[0].mxu0
  %v4964 = vpop.f32.mrb[0].mxu0
  %v4965 = vadd.f32 0.0, %v4964
  %v4966 = vpop.f32.mrb[0].mxu0
  %4967 = vmatprep.mubr.bf16.mxu0 0
  %4968 = vmatmul.mubr.bf16.gmra.mrb[0].mxu0 %v4783
  %v4969 = vpop.f32.mrb[0].mxu0
  %v4970 = vadd.f32 0.0, %v4969
  %v4971 = vpop.f32.mrb[0].mxu0
  %v4972 = vpop.f32.mrb[0].mxu0
  %v4973 = vadd.f32 0.0, %v4972
  %v4974 = vpop.f32.mrb[0].mxu0
  %4975 = vmatprep.mubr.bf16.mxu0 0
  %4976 = vmatmul.mubr.bf16.gmra.mrb[0].mxu0 %v4922
  %v4977 = vpop.f32.mrb[0].mxu0
  %v4978 = vadd.f32 0.0, %v4977
  %v4979 = vpop.f32.mrb[0].mxu0
  %v4980 = vpop.f32.mrb[0].mxu0
  %v4981 = vadd.f32 0.0, %v4980
  %v4982 = vpop.f32.mrb[0].mxu0
  %4983 = vmatprep.mubr.bf16.mxu0 0
  %4984 = vmatmul.mubr.bf16.gmra.mrb[0].mxu0 %v4925
  %v4985 = vpop.f32.mrb[0].mxu0
  %v4986 = vadd.f32 0.0, %v4985
  %v4987 = vpop.f32.mrb[0].mxu0
  %v4988 = vpop.f32.mrb[0].mxu0
  %v4989 = vadd.f32 0.0, %v4988
  %v4990 = vpop.f32.mrb[0].mxu0
  %4991 = vdwg.mxu0
  %v4992 = vadd.f32 %v4891, %v4962
  %v4993 = vadd.f32 %v4894, %v4965
  %v4994 = vadd.f32 %v4899, %v4970
  %v4995 = vadd.f32 %v4902, %v4973
  %v4996 = vadd.f32 %v4907, %v4978
  %v4997 = vadd.f32 %v4910, %v4981
  %v4998 = vadd.f32 %v4915, %v4986
  %v4999 = vadd.f32 %v4918, %v4989
  %v5000 = vadd.f32 %v4992, %v4708
  %v5001 = vadd.f32 %v4993, %v4708
  %v5002 = vadd.f32 %v4994, %v4708
  %v5003 = vadd.f32 %v4995, %v4708
  %v5004 = vadd.f32 %v4996, %v4708
  %v5005 = vadd.f32 %v4997, %v4708
  %v5006 = vadd.f32 %v4998, %v4708
  %v5007 = vadd.f32 %v4999, %v4708
  %vm5008 = vcmp.gt.f32.partialorder %v5000, 0.0
  %vm5009 = vcmp.gt.f32.partialorder %v5001, 0.0
  %vm5010 = vcmp.gt.f32.partialorder %v5002, 0.0
  %vm5011 = vcmp.gt.f32.partialorder %v5003, 0.0
  %vm5012 = vcmp.gt.f32.partialorder %v5004, 0.0
  %vm5013 = vcmp.gt.f32.partialorder %v5005, 0.0
  %vm5014 = vcmp.gt.f32.partialorder %v5006, 0.0
  %vm5015 = vcmp.gt.f32.partialorder %v5007, 0.0
  %v5016 = vmin.f32 %v5000, 0.0
  %v5017 = vmin.f32 %v5001, 0.0
  %v5018 = vmin.f32 %v5002, 0.0
  %v5019 = vmin.f32 %v5003, 0.0
  %v5020 = vmin.f32 %v5004, 0.0
  %v5021 = vmin.f32 %v5005, 0.0
  %v5022 = vmin.f32 %v5006, 0.0
  %v5023 = vmin.f32 %v5007, 0.0
  %v5024 = vmul.f32 %v5016, 1.442695
  %v5025 = vpow.pop %v5024
  %v5026 = vmul.f32 %v5017, 1.442695
  %v5027 = vpow.pop %v5026
  %v5028 = vmul.f32 %v5018, 1.442695
  %v5029 = vpow.pop %v5028
  %v5030 = vmul.f32 %v5019, 1.442695
  %v5031 = vpow.pop %v5030
  %v5032 = vmul.f32 %v5020, 1.442695
  %v5033 = vpow.pop %v5032
  %v5034 = vmul.f32 %v5021, 1.442695
  %v5035 = vpow.pop %v5034
  %v5036 = vmul.f32 %v5022, 1.442695
  %v5037 = vpow.pop %v5036
  %v5038 = vmul.f32 %v5023, 1.442695
  %v5039 = vpow.pop %v5038
  %v5040 = vsub.f32 %v5025, 1.0
  %v5041 = vsub.f32 %v5027, 1.0
  %v5042 = vsub.f32 %v5029, 1.0
  %v5043 = vsub.f32 %v5031, 1.0
  %v5044 = vsub.f32 %v5033, 1.0
  %v5045 = vsub.f32 %v5035, 1.0
  %v5046 = vsub.f32 %v5037, 1.0
  %v5047 = vsub.f32 %v5039, 1.0
  %v5048 = vsel %vm5008, %v5000, %v5040
  %v5049 = vsel %vm5009, %v5001, %v5041
  %v5050 = vsel %vm5010, %v5002, %v5042
  %v5051 = vsel %vm5011, %v5003, %v5043
  %v5052 = vsel %vm5012, %v5004, %v5044
  %v5053 = vsel %vm5013, %v5005, %v5045
  %v5054 = vsel %vm5014, %v5006, %v5046
  %v5055 = vsel %vm5015, %v5007, %v5047
  %v5056 = vadd.f32 %v4355, %v5048
  %v5057 = vadd.f32 %v4356, %v5049
  %v5058 = vadd.f32 %v4357, %v5050
  %v5059 = vadd.f32 %v4358, %v5051
  %v5060 = vadd.f32 %v4359, %v5052
  %v5061 = vadd.f32 %v4360, %v5053
  %v5062 = vadd.f32 %v4361, %v5054
  %v5063 = vadd.f32 %v4362, %v5055
  %v5064 = vpack.c.bf16 %v4766, %v4765
  %v5065 = vpack.c.bf16 %v4768, %v4767
  %v5066 = vpack.c.bf16 %v4770, %v4769
  %v5067 = vpack.c.bf16 %v4772, %v4771
  %v5068 = vpack.c.bf16 %v5057, %v5056
  %v5069 = vpack.c.bf16 %v5059, %v5058
  %v5070 = vpack.c.bf16 %v5061, %v5060
  %v5071 = vpack.c.bf16 %v5063, %v5062
  %s5072 = scalar_lea.vmem %s1, 384
  %v5073 = vld [vmem:[%s5072] sm:$0xf]
  %v5074 = vld [vmem:[%s5072 + $0x4] sm:$0xf]
  %v5075 = vld [vmem:[%s5072 + $0x8] sm:$0xf]
  %v5076 = vld [vmem:[%s5072 + $0xc] sm:$0xf]
  %v5077 = vld [vmem:[%s5072 + $0x10] sm:$0xf]
  %v5078 = vld [vmem:[%s5072 + $0x14] sm:$0xf]
  %v5079 = vld [vmem:[%s5072 + $0x18] sm:$0xf]
  %v5080 = vld [vmem:[%s5072 + $0x1c] sm:$0xf]
  %s5081 = scalar_lea.vmem %s1, 416
  %v5082 = vld [vmem:[%s5081] sm:$0xf]
  %v5083 = vld [vmem:[%s5081 + $0x4] sm:$0xf]
  %v5084 = vld [vmem:[%s5081 + $0x8] sm:$0xf]
  %v5085 = vld [vmem:[%s5081 + $0xc] sm:$0xf]
  %v5086 = vld [vmem:[%s5081 + $0x10] sm:$0xf]
  %v5087 = vld [vmem:[%s5081 + $0x14] sm:$0xf]
  %v5088 = vld [vmem:[%s5081 + $0x18] sm:$0xf]
  %v5089 = vld [vmem:[%s5081 + $0x1c] sm:$0xf]
  %v5098 = vunpack.c.l.b16 %v5082
  %v5099 = vunpack.c.l.b16 %v5083
  %v5100 = vunpack.c.l.b16 %v5084
  %v5101 = vunpack.c.l.b16 %v5085
  %v5102 = vunpack.c.l.b16 %v5086
  %v5103 = vunpack.c.l.b16 %v5087
  %v5104 = vunpack.c.l.b16 %v5088
  %v5105 = vunpack.c.l.b16 %v5089
  %v5106 = vpack.c.b16 %v5099, %v5098
  %v5107 = vpack.c.b16 %v5101, %v5100
  %v5108 = vpack.c.b16 %v5103, %v5102
  %v5109 = vpack.c.b16 %v5105, %v5104
  %v5115 = vsel %vm1685, %v5066, 0
  %v5118 = vsel %vm1685, %v5067, 0
  %5120 = vmatprep.subr.bf16.mxu0 0
  %5121 = vmatpush1.bf16.msra.mxu0 %v5106
  %5122 = vmatprep.subr.bf16.mxu0 0
  %5123 = vmatpush1.bf16.msra.mxu0 %v5107
  %5124 = vmatprep.subr.bf16.mxu0 0
  %5125 = vmatpush1.bf16.msra.mxu0 %v5108
  %5126 = vmatprep.subr.bf16.mxu0 0
  %5127 = vmatpush1.bf16.msra.mxu0 %v5109
  %5128 = vmatprep.subr.bf16.mxu0 0
  %5129 = vmatpush1.bf16.msra.mxu0 0
  %5130 = vmatprep.subr.bf16.mxu0 0
  %5131 = vmatpush1.bf16.msra.mxu0 0
  %5132 = vmatprep.subr.bf16.mxu0 0
  %5133 = vmatpush1.bf16.msra.mxu0 0
  %5134 = vmatprep.subr.bf16.mxu0 0
  %5135 = vmatpush1.bf16.msra.mxu0 0
  %5136 = vmatprep.subr.bf16.mxu0 0
  %5137 = vmatpush1.bf16.msra.mxu0 0
  %5138 = vmatprep.subr.bf16.mxu0 0
  %5139 = vmatpush1.bf16.msra.mxu0 0
  %5140 = vmatprep.subr.bf16.mxu0 0
  %5141 = vmatpush1.bf16.msra.mxu0 0
  %5142 = vmatprep.subr.bf16.mxu0 0
  %5143 = vmatpush1.bf16.msra.mxu0 0
  %5144 = vmatprep.subr.bf16.mxu0 0
  %5145 = vmatpush1.bf16.msra.mxu0 0
  %5146 = vmatprep.subr.bf16.mxu0 0
  %5147 = vmatpush1.bf16.msra.mxu0 0
  %5148 = vmatprep.subr.bf16.mxu0 0
  %5149 = vmatpush1.bf16.msra.mxu0 0
  %5150 = vmatprep.subr.bf16.mxu0 0
  %5151 = vmatpush1.bf16.msra.mxu0 0
  %5152 = vmatprep.mubr.bf16.mxu0 0
  %5153 = vmatmul.mubr.bf16.gmra.mrb[0].mxu0 %v5115
  %v5154 = vpop.f32.mrb[0].mxu0
  %v5155 = vadd.f32 0.0, %v5154
  %v5156 = vpop.f32.mrb[0].mxu0
  %v5157 = vpop.f32.mrb[0].mxu0
  %v5158 = vadd.f32 0.0, %v5157
  %v5159 = vpop.f32.mrb[0].mxu0
  %5160 = vmatprep.mubr.bf16.mxu0 0
  %5161 = vmatmul.mubr.bf16.gmra.mrb[0].mxu0 %v5118
  %v5162 = vpop.f32.mrb[0].mxu0
  %v5163 = vadd.f32 0.0, %v5162
  %v5164 = vpop.f32.mrb[0].mxu0
  %v5165 = vpop.f32.mrb[0].mxu0
  %v5166 = vadd.f32 0.0, %v5165
  %v5167 = vpop.f32.mrb[0].mxu0
  %5168 = vdwg.mxu0
  %v5177 = vunpack.c.l.b16 %v5073
  %v5178 = vunpack.c.l.b16 %v5074
  %v5179 = vunpack.c.l.b16 %v5075
  %v5180 = vunpack.c.l.b16 %v5076
  %v5181 = vunpack.c.l.b16 %v5077
  %v5182 = vunpack.c.l.b16 %v5078
  %v5183 = vunpack.c.l.b16 %v5079
  %v5184 = vunpack.c.l.b16 %v5080
  %v5185 = vpack.c.b16 %v5178, %v5177
  %v5186 = vpack.c.b16 %v5180, %v5179
  %v5187 = vpack.c.b16 %v5182, %v5181
  %v5188 = vpack.c.b16 %v5184, %v5183
  %v5194 = vsel %vm1685, %v5064, 0
  %v5197 = vsel %vm1685, %v5065, 0
  %5199 = vmatprep.subr.bf16.mxu0 0
  %5200 = vmatpush1.bf16.msra.mxu0 %v5185
  %5201 = vmatprep.subr.bf16.mxu0 0
  %5202 = vmatpush1.bf16.msra.mxu0 %v5186
  %5203 = vmatprep.subr.bf16.mxu0 0
  %5204 = vmatpush1.bf16.msra.mxu0 %v5187
  %5205 = vmatprep.subr.bf16.mxu0 0
  %5206 = vmatpush1.bf16.msra.mxu0 %v5188
  %5207 = vmatprep.subr.bf16.mxu0 0
  %5208 = vmatpush1.bf16.msra.mxu0 0
  %5209 = vmatprep.subr.bf16.mxu0 0
  %5210 = vmatpush1.bf16.msra.mxu0 0
  %5211 = vmatprep.subr.bf16.mxu0 0
  %5212 = vmatpush1.bf16.msra.mxu0 0
  %5213 = vmatprep.subr.bf16.mxu0 0
  %5214 = vmatpush1.bf16.msra.mxu0 0
  %5215 = vmatprep.subr.bf16.mxu0 0
  %5216 = vmatpush1.bf16.msra.mxu0 0
  %5217 = vmatprep.subr.bf16.mxu0 0
  %5218 = vmatpush1.bf16.msra.mxu0 0
  %5219 = vmatprep.subr.bf16.mxu0 0
  %5220 = vmatpush1.bf16.msra.mxu0 0
  %5221 = vmatprep.subr.bf16.mxu0 0
  %5222 = vmatpush1.bf16.msra.mxu0 0
  %5223 = vmatprep.subr.bf16.mxu0 0
  %5224 = vmatpush1.bf16.msra.mxu0 0
  %5225 = vmatprep.subr.bf16.mxu0 0
  %5226 = vmatpush1.bf16.msra.mxu0 0
  %5227 = vmatprep.subr.bf16.mxu0 0
  %5228 = vmatpush1.bf16.msra.mxu0 0
  %5229 = vmatprep.subr.bf16.mxu0 0
  %5230 = vmatpush1.bf16.msra.mxu0 0
  %5231 = vmatprep.mubr.bf16.mxu0 0
  %5232 = vmatmul.mubr.bf16.gmra.mrb[0].mxu0 %v5194
  %v5233 = vpop.f32.mrb[0].mxu0
  %v5234 = vadd.f32 %v5155, %v5233
  %v5235 = vpop.f32.mrb[0].mxu0
  %v5236 = vpop.f32.mrb[0].mxu0
  %v5237 = vadd.f32 %v5158, %v5236
  %v5238 = vpop.f32.mrb[0].mxu0
  %5239 = vmatprep.mubr.bf16.mxu0 0
  %5240 = vmatmul.mubr.bf16.gmra.mrb[0].mxu0 %v5197
  %v5241 = vpop.f32.mrb[0].mxu0
  %v5242 = vadd.f32 %v5163, %v5241
  %v5243 = vpop.f32.mrb[0].mxu0
  %v5244 = vpop.f32.mrb[0].mxu0
  %v5245 = vadd.f32 %v5166, %v5244
  %v5246 = vpop.f32.mrb[0].mxu0
  %5247 = vdwg.mxu0
  %s5248 = scalar_lea.vmem %s1, 448
  %v5249 = vld [vmem:[%s5248] sm:$0xf]
  %v5250 = vld [vmem:[%s5248 + $0x4] sm:$0xf]
  %v5251 = vld [vmem:[%s5248 + $0x8] sm:$0xf]
  %v5252 = vld [vmem:[%s5248 + $0xc] sm:$0xf]
  %v5253 = vld [vmem:[%s5248 + $0x10] sm:$0xf]
  %v5254 = vld [vmem:[%s5248 + $0x14] sm:$0xf]
  %v5255 = vld [vmem:[%s5248 + $0x18] sm:$0xf]
  %v5256 = vld [vmem:[%s5248 + $0x1c] sm:$0xf]
  %v5265 = vunpack.c.l.b16 %v5249
  %v5266 = vunpack.c.l.b16 %v5250
  %v5267 = vunpack.c.l.b16 %v5251
  %v5268 = vunpack.c.l.b16 %v5252
  %v5269 = vunpack.c.l.b16 %v5253
  %v5270 = vunpack.c.l.b16 %v5254
  %v5271 = vunpack.c.l.b16 %v5255
  %v5272 = vunpack.c.l.b16 %v5256
  %v5273 = vpack.c.b16 %v5266, %v5265
  %v5274 = vpack.c.b16 %v5268, %v5267
  %v5275 = vpack.c.b16 %v5270, %v5269
  %v5276 = vpack.c.b16 %v5272, %v5271
  %v5282 = vsel %vm1685, %v5068, 0
  %v5285 = vsel %vm1685, %v5069, 0
  %5287 = vmatprep.subr.bf16.mxu0 0
  %5288 = vmatpush1.bf16.msra.mxu0 %v5273
  %5289 = vmatprep.subr.bf16.mxu0 0
  %5290 = vmatpush1.bf16.msra.mxu0 %v5274
  %5291 = vmatprep.subr.bf16.mxu0 0
  %5292 = vmatpush1.bf16.msra.mxu0 %v5275
  %5293 = vmatprep.subr.bf16.mxu0 0
  %5294 = vmatpush1.bf16.msra.mxu0 %v5276
  %5295 = vmatprep.subr.bf16.mxu0 0
  %5296 = vmatpush1.bf16.msra.mxu0 0
  %5297 = vmatprep.subr.bf16.mxu0 0
  %5298 = vmatpush1.bf16.msra.mxu0 0
  %5299 = vmatprep.subr.bf16.mxu0 0
  %5300 = vmatpush1.bf16.msra.mxu0 0
  %5301 = vmatprep.subr.bf16.mxu0 0
  %5302 = vmatpush1.bf16.msra.mxu0 0
  %5303 = vmatprep.subr.bf16.mxu0 0
  %5304 = vmatpush1.bf16.msra.mxu0 0
  %5305 = vmatprep.subr.bf16.mxu0 0
  %5306 = vmatpush1.bf16.msra.mxu0 0
  %5307 = vmatprep.subr.bf16.mxu0 0
  %5308 = vmatpush1.bf16.msra.mxu0 0
  %5309 = vmatprep.subr.bf16.mxu0 0
  %5310 = vmatpush1.bf16.msra.mxu0 0
  %5311 = vmatprep.subr.bf16.mxu0 0
  %5312 = vmatpush1.bf16.msra.mxu0 0
  %5313 = vmatprep.subr.bf16.mxu0 0
  %5314 = vmatpush1.bf16.msra.mxu0 0
  %5315 = vmatprep.subr.bf16.mxu0 0
  %5316 = vmatpush1.bf16.msra.mxu0 0
  %5317 = vmatprep.subr.bf16.mxu0 0
  %5318 = vmatpush1.bf16.msra.mxu0 0
  %5319 = vmatprep.mubr.bf16.mxu0 0
  %5320 = vmatmul.mubr.bf16.gmra.mrb[0].mxu0 %v5282
  %v5321 = vpop.f32.mrb[0].mxu0
  %v5322 = vadd.f32 0.0, %v5321
  %v5323 = vpop.f32.mrb[0].mxu0
  %v5324 = vpop.f32.mrb[0].mxu0
  %v5325 = vadd.f32 0.0, %v5324
  %v5326 = vpop.f32.mrb[0].mxu0
  %5327 = vmatprep.mubr.bf16.mxu0 0
  %5328 = vmatmul.mubr.bf16.gmra.mrb[0].mxu0 %v5285
  %v5329 = vpop.f32.mrb[0].mxu0
  %v5330 = vadd.f32 0.0, %v5329
  %v5331 = vpop.f32.mrb[0].mxu0
  %v5332 = vpop.f32.mrb[0].mxu0
  %v5333 = vadd.f32 0.0, %v5332
  %v5334 = vpop.f32.mrb[0].mxu0
  %5335 = vdwg.mxu0
  %v5336 = vadd.f32 %v5234, %v5322
  %v5337 = vadd.f32 %v5237, %v5325
  %v5338 = vadd.f32 %v5242, %v5330
  %v5339 = vadd.f32 %v5245, %v5333
  %s5340 = scalar_lea.vmem %s1, 480
  %v5341 = vld [vmem:[%s5340] sm:$0xf]
  %v5342 = vld [vmem:[%s5340 + $0x4] sm:$0xf]
  %v5343 = vld [vmem:[%s5340 + $0x8] sm:$0xf]
  %v5344 = vld [vmem:[%s5340 + $0xc] sm:$0xf]
  %v5345 = vld [vmem:[%s5340 + $0x10] sm:$0xf]
  %v5346 = vld [vmem:[%s5340 + $0x14] sm:$0xf]
  %v5347 = vld [vmem:[%s5340 + $0x18] sm:$0xf]
  %v5348 = vld [vmem:[%s5340 + $0x1c] sm:$0xf]
  %v5357 = vunpack.c.l.b16 %v5341
  %v5358 = vunpack.c.l.b16 %v5342
  %v5359 = vunpack.c.l.b16 %v5343
  %v5360 = vunpack.c.l.b16 %v5344
  %v5361 = vunpack.c.l.b16 %v5345
  %v5362 = vunpack.c.l.b16 %v5346
  %v5363 = vunpack.c.l.b16 %v5347
  %v5364 = vunpack.c.l.b16 %v5348
  %v5365 = vpack.c.b16 %v5358, %v5357
  %v5366 = vpack.c.b16 %v5360, %v5359
  %v5367 = vpack.c.b16 %v5362, %v5361
  %v5368 = vpack.c.b16 %v5364, %v5363
  %v5374 = vsel %vm1685, %v5070, 0
  %v5377 = vsel %vm1685, %v5071, 0
  %5379 = vmatprep.subr.bf16.mxu0 0
  %5380 = vmatpush1.bf16.msra.mxu0 %v5365
  %5381 = vmatprep.subr.bf16.mxu0 0
  %5382 = vmatpush1.bf16.msra.mxu0 %v5366
  %5383 = vmatprep.subr.bf16.mxu0 0
  %5384 = vmatpush1.bf16.msra.mxu0 %v5367
  %5385 = vmatprep.subr.bf16.mxu0 0
  %5386 = vmatpush1.bf16.msra.mxu0 %v5368
  %5387 = vmatprep.subr.bf16.mxu0 0
  %5388 = vmatpush1.bf16.msra.mxu0 0
  %5389 = vmatprep.subr.bf16.mxu0 0
  %5390 = vmatpush1.bf16.msra.mxu0 0
  %5391 = vmatprep.subr.bf16.mxu0 0
  %5392 = vmatpush1.bf16.msra.mxu0 0
  %5393 = vmatprep.subr.bf16.mxu0 0
  %5394 = vmatpush1.bf16.msra.mxu0 0
  %5395 = vmatprep.subr.bf16.mxu0 0
  %5396 = vmatpush1.bf16.msra.mxu0 0
  %5397 = vmatprep.subr.bf16.mxu0 0
  %5398 = vmatpush1.bf16.msra.mxu0 0
  %5399 = vmatprep.subr.bf16.mxu0 0
  %5400 = vmatpush1.bf16.msra.mxu0 0
  %5401 = vmatprep.subr.bf16.mxu0 0
  %5402 = vmatpush1.bf16.msra.mxu0 0
  %5403 = vmatprep.subr.bf16.mxu0 0
  %5404 = vmatpush1.bf16.msra.mxu0 0
  %5405 = vmatprep.subr.bf16.mxu0 0
  %5406 = vmatpush1.bf16.msra.mxu0 0
  %5407 = vmatprep.subr.bf16.mxu0 0
  %5408 = vmatpush1.bf16.msra.mxu0 0
  %5409 = vmatprep.subr.bf16.mxu0 0
  %5410 = vmatpush1.bf16.msra.mxu0 0
  %5411 = vmatprep.mubr.bf16.mxu0 0
  %5412 = vmatmul.mubr.bf16.gmra.mrb[0].mxu0 %v5374
  %v5413 = vpop.f32.mrb[0].mxu0
  %v5414 = vadd.f32 0.0, %v5413
  %v5415 = vpop.f32.mrb[0].mxu0
  %v5416 = vpop.f32.mrb[0].mxu0
  %v5417 = vadd.f32 0.0, %v5416
  %v5418 = vpop.f32.mrb[0].mxu0
  %5419 = vmatprep.mubr.bf16.mxu0 0
  %5420 = vmatmul.mubr.bf16.gmra.mrb[0].mxu0 %v5377
  %v5421 = vpop.f32.mrb[0].mxu0
  %v5422 = vadd.f32 0.0, %v5421
  %v5423 = vpop.f32.mrb[0].mxu0
  %v5424 = vpop.f32.mrb[0].mxu0
  %v5425 = vadd.f32 0.0, %v5424
  %v5426 = vpop.f32.mrb[0].mxu0
  %5427 = vdwg.mxu0
  %v5428 = vadd.f32 %v5336, %v5414
  %v5429 = vadd.f32 %v5337, %v5417
  %v5430 = vadd.f32 %v5338, %v5422
  %v5431 = vadd.f32 %v5339, %v5425
  %v5432 = vlaneseq
  %v5433 = vshrl.u32 %v5432, 7
  %v5434 = vsub.s32 2, %v5433
  %v5435 = vrot.slane %v154, %v5434
  %v5436 = vadd.f32 %v5428, %v5435
  %v5437 = vadd.f32 %v5429, %v5435
  %v5438 = vadd.f32 %v5430, %v5435
  %v5439 = vadd.f32 %v5431, %v5435
  %vm5440 = vcmp.gt.f32.partialorder %v5436, 0.0
  %vm5441 = vcmp.gt.f32.partialorder %v5437, 0.0
  %vm5442 = vcmp.gt.f32.partialorder %v5438, 0.0
  %vm5443 = vcmp.gt.f32.partialorder %v5439, 0.0
  %v5444 = vmin.f32 %v5436, 0.0
  %v5445 = vmin.f32 %v5437, 0.0
  %v5446 = vmin.f32 %v5438, 0.0
  %v5447 = vmin.f32 %v5439, 0.0
  %v5448 = vmul.f32 %v5444, 1.442695
  %v5449 = vpow.pop %v5448
  %v5450 = vmul.f32 %v5445, 1.442695
  %v5451 = vpow.pop %v5450
  %v5452 = vmul.f32 %v5446, 1.442695
  %v5453 = vpow.pop %v5452
  %v5454 = vmul.f32 %v5447, 1.442695
  %v5455 = vpow.pop %v5454
  %v5456 = vsub.f32 %v5449, 1.0
  %v5457 = vsub.f32 %v5451, 1.0
  %v5458 = vsub.f32 %v5453, 1.0
  %v5459 = vsub.f32 %v5455, 1.0
  %v5460 = vsel %vm5440, %v5436, %v5456
  %v5461 = vsel %vm5441, %v5437, %v5457
  %v5462 = vsel %vm5442, %v5438, %v5458
  %v5463 = vsel %vm5443, %v5439, %v5459
  %v5464 = vadd.f32 %v5060, %v5460
  %v5465 = vadd.f32 %v5061, %v5461
  %v5466 = vadd.f32 %v5062, %v5462
  %v5467 = vadd.f32 %v5063, %v5463
  %v5468 = vmax.f32 %v1452, %v1484
  %v5469 = vmax.f32 %v1453, %v1485
  %v5470 = vmax.f32 %v1454, %v1486
  %v5471 = vmax.f32 %v1455, %v1487
  %v5472 = vmax.f32 %v1456, %v1488
  %v5473 = vmax.f32 %v1457, %v1489
  %v5474 = vmax.f32 %v1458, %v1490
  %v5475 = vmax.f32 %v1459, %v1491
  %v5476 = vmax.f32 %v1460, %v1492
  %v5477 = vmax.f32 %v1461, %v1493
  %v5478 = vmax.f32 %v1462, %v1494
  %v5479 = vmax.f32 %v1463, %v1495
  %v5480 = vmax.f32 %v1464, %v1496
  %v5481 = vmax.f32 %v1465, %v1497
  %v5482 = vmax.f32 %v1466, %v1498
  %v5483 = vmax.f32 %v1467, %v1499
  %v5484 = vmax.f32 %v1468, %v1500
  %v5485 = vmax.f32 %v1469, %v1501
  %v5486 = vmax.f32 %v1470, %v1502
  %v5487 = vmax.f32 %v1471, %v1503
  %v5488 = vmax.f32 %v1472, %v1504
  %v5489 = vmax.f32 %v1473, %v1505
  %v5490 = vmax.f32 %v1474, %v1506
  %v5491 = vmax.f32 %v1475, %v1507
  %v5492 = vmax.f32 %v1476, %v1508
  %v5493 = vmax.f32 %v1477, %v1509
  %v5494 = vmax.f32 %v1478, %v1510
  %v5495 = vmax.f32 %v1479, %v1511
  %v5496 = vmax.f32 %v1480, %v1512
  %v5497 = vmax.f32 %v1481, %v1513
  %v5498 = vmax.f32 %v1482, %v1514
  %v5499 = vmax.f32 %v1483, %v1515
  %v5500 = vmin.f32 %v1452, %v1484
  %v5501 = vmin.f32 %v1453, %v1485
  %v5502 = vmin.f32 %v1454, %v1486
  %v5503 = vmin.f32 %v1455, %v1487
  %v5504 = vmin.f32 %v1456, %v1488
  %v5505 = vmin.f32 %v1457, %v1489
  %v5506 = vmin.f32 %v1458, %v1490
  %v5507 = vmin.f32 %v1459, %v1491
  %v5508 = vmin.f32 %v1460, %v1492
  %v5509 = vmin.f32 %v1461, %v1493
  %v5510 = vmin.f32 %v1462, %v1494
  %v5511 = vmin.f32 %v1463, %v1495
  %v5512 = vmin.f32 %v1464, %v1496
  %v5513 = vmin.f32 %v1465, %v1497
  %v5514 = vmin.f32 %v1466, %v1498
  %v5515 = vmin.f32 %v1467, %v1499
  %v5516 = vmin.f32 %v1468, %v1500
  %v5517 = vmin.f32 %v1469, %v1501
  %v5518 = vmin.f32 %v1470, %v1502
  %v5519 = vmin.f32 %v1471, %v1503
  %v5520 = vmin.f32 %v1472, %v1504
  %v5521 = vmin.f32 %v1473, %v1505
  %v5522 = vmin.f32 %v1474, %v1506
  %v5523 = vmin.f32 %v1475, %v1507
  %v5524 = vmin.f32 %v1476, %v1508
  %v5525 = vmin.f32 %v1477, %v1509
  %v5526 = vmin.f32 %v1478, %v1510
  %v5527 = vmin.f32 %v1479, %v1511
  %v5528 = vmin.f32 %v1480, %v1512
  %v5529 = vmin.f32 %v1481, %v1513
  %v5530 = vmin.f32 %v1482, %v1514
  %v5531 = vmin.f32 %v1483, %v1515
  %v5532 = vmax.f32 %v5468, %v5472
  %v5533 = vmax.f32 %v5469, %v5473
  %v5534 = vmax.f32 %v5470, %v5474
  %v5535 = vmax.f32 %v5471, %v5475
  %v5536 = vmin.f32 %v5500, %v5504
  %v5537 = vmin.f32 %v5501, %v5505
  %v5538 = vmin.f32 %v5502, %v5506
  %v5539 = vmin.f32 %v5503, %v5507
  %v5540 = vmax.f32 %v5476, %v5480
  %v5541 = vmax.f32 %v5477, %v5481
  %v5542 = vmax.f32 %v5478, %v5482
  %v5543 = vmax.f32 %v5479, %v5483
  %v5544 = vmin.f32 %v5508, %v5512
  %v5545 = vmin.f32 %v5509, %v5513
  %v5546 = vmin.f32 %v5510, %v5514
  %v5547 = vmin.f32 %v5511, %v5515
  %v5548 = vmax.f32 %v5484, %v5488
  %v5549 = vmax.f32 %v5485, %v5489
  %v5550 = vmax.f32 %v5486, %v5490
  %v5551 = vmax.f32 %v5487, %v5491
  %v5552 = vmin.f32 %v5516, %v5520
  %v5553 = vmin.f32 %v5517, %v5521
  %v5554 = vmin.f32 %v5518, %v5522
  %v5555 = vmin.f32 %v5519, %v5523
  %v5556 = vmax.f32 %v5492, %v5496
  %v5557 = vmax.f32 %v5493, %v5497
  %v5558 = vmax.f32 %v5494, %v5498
  %v5559 = vmax.f32 %v5495, %v5499
  %v5560 = vmin.f32 %v5524, %v5528
  %v5561 = vmin.f32 %v5525, %v5529
  %v5562 = vmin.f32 %v5526, %v5530
  %v5563 = vmin.f32 %v5527, %v5531
  %v5564 = vpack.c.bf16 %v5533, %v5532
  %v5565 = vpack.c.bf16 %v5535, %v5534
  %v5566 = vpack.c.bf16 %v5541, %v5540
  %v5567 = vpack.c.bf16 %v5543, %v5542
  %v5568 = vpack.c.bf16 %v5549, %v5548
  %v5569 = vpack.c.bf16 %v5551, %v5550
  %v5570 = vpack.c.bf16 %v5557, %v5556
  %v5571 = vpack.c.bf16 %v5559, %v5558
  %s5572 = scalar_lea.vmem %s1, 512
  %v5573 = vld [vmem:[%s5572] sm:$0xf]
  %v5574 = vld [vmem:[%s5572 + $0x4] sm:$0xf]
  %v5575 = vld [vmem:[%s5572 + $0x8] sm:$0xf]
  %v5576 = vld [vmem:[%s5572 + $0xc] sm:$0xf]
  %v5577 = vld [vmem:[%s5572 + $0x10] sm:$0xf]
  %v5578 = vld [vmem:[%s5572 + $0x14] sm:$0xf]
  %v5579 = vld [vmem:[%s5572 + $0x18] sm:$0xf]
  %v5580 = vld [vmem:[%s5572 + $0x1c] sm:$0xf]
  %v5581 = vpack.c.bf16 %v5537, %v5536
  %v5582 = vpack.c.bf16 %v5539, %v5538
  %v5583 = vpack.c.bf16 %v5545, %v5544
  %v5584 = vpack.c.bf16 %v5547, %v5546
  %v5585 = vpack.c.bf16 %v5553, %v5552
  %v5586 = vpack.c.bf16 %v5555, %v5554
  %v5587 = vpack.c.bf16 %v5561, %v5560
  %v5588 = vpack.c.bf16 %v5563, %v5562
  %s5589 = scalar_lea.vmem %s1, 544
  %v5590 = vld [vmem:[%s5589] sm:$0xf]
  %v5591 = vld [vmem:[%s5589 + $0x4] sm:$0xf]
  %v5592 = vld [vmem:[%s5589 + $0x8] sm:$0xf]
  %v5593 = vld [vmem:[%s5589 + $0xc] sm:$0xf]
  %v5594 = vld [vmem:[%s5589 + $0x10] sm:$0xf]
  %v5595 = vld [vmem:[%s5589 + $0x14] sm:$0xf]
  %v5596 = vld [vmem:[%s5589 + $0x18] sm:$0xf]
  %v5597 = vld [vmem:[%s5589 + $0x1c] sm:$0xf]
  %v5606 = vunpack.c.l.b16 %v5590
  %v5607 = vunpack.c.l.b16 %v5591
  %v5608 = vunpack.c.l.b16 %v5592
  %v5609 = vunpack.c.l.b16 %v5593
  %v5610 = vunpack.c.l.b16 %v5594
  %v5611 = vunpack.c.l.b16 %v5595
  %v5612 = vunpack.c.l.b16 %v5596
  %v5613 = vunpack.c.l.b16 %v5597
  %v5614 = vpack.c.b16 %v5607, %v5606
  %v5615 = vpack.c.b16 %v5609, %v5608
  %v5616 = vpack.c.b16 %v5611, %v5610
  %v5617 = vpack.c.b16 %v5613, %v5612
  %v5623 = vsel %vm1685, %v5581, 0
  %v5626 = vsel %vm1685, %v5582, 0
  %v5629 = vsel %vm1685, %v5583, 0
  %v5632 = vsel %vm1685, %v5584, 0
  %v5635 = vsel %vm1685, %v5585, 0
  %v5638 = vsel %vm1685, %v5586, 0
  %v5641 = vsel %vm1685, %v5587, 0
  %v5644 = vsel %vm1685, %v5588, 0
  %5646 = vmatprep.subr.bf16.mxu0 0
  %5647 = vmatpush1.bf16.msra.mxu0 %v5614
  %5648 = vmatprep.subr.bf16.mxu0 0
  %5649 = vmatpush1.bf16.msra.mxu0 %v5615
  %5650 = vmatprep.subr.bf16.mxu0 0
  %5651 = vmatpush1.bf16.msra.mxu0 %v5616
  %5652 = vmatprep.subr.bf16.mxu0 0
  %5653 = vmatpush1.bf16.msra.mxu0 %v5617
  %5654 = vmatprep.subr.bf16.mxu0 0
  %5655 = vmatpush1.bf16.msra.mxu0 0
  %5656 = vmatprep.subr.bf16.mxu0 0
  %5657 = vmatpush1.bf16.msra.mxu0 0
  %5658 = vmatprep.subr.bf16.mxu0 0
  %5659 = vmatpush1.bf16.msra.mxu0 0
  %5660 = vmatprep.subr.bf16.mxu0 0
  %5661 = vmatpush1.bf16.msra.mxu0 0
  %5662 = vmatprep.subr.bf16.mxu0 0
  %5663 = vmatpush1.bf16.msra.mxu0 0
  %5664 = vmatprep.subr.bf16.mxu0 0
  %5665 = vmatpush1.bf16.msra.mxu0 0
  %5666 = vmatprep.subr.bf16.mxu0 0
  %5667 = vmatpush1.bf16.msra.mxu0 0
  %5668 = vmatprep.subr.bf16.mxu0 0
  %5669 = vmatpush1.bf16.msra.mxu0 0
  %5670 = vmatprep.subr.bf16.mxu0 0
  %5671 = vmatpush1.bf16.msra.mxu0 0
  %5672 = vmatprep.subr.bf16.mxu0 0
  %5673 = vmatpush1.bf16.msra.mxu0 0
  %5674 = vmatprep.subr.bf16.mxu0 0
  %5675 = vmatpush1.bf16.msra.mxu0 0
  %5676 = vmatprep.subr.bf16.mxu0 0
  %5677 = vmatpush1.bf16.msra.mxu0 0
  %5678 = vmatprep.mubr.bf16.mxu0 0
  %5679 = vmatmul.mubr.bf16.gmra.mrb[0].mxu0 %v5623
  %v5680 = vpop.f32.mrb[0].mxu0
  %v5681 = vadd.f32 0.0, %v5680
  %v5682 = vpop.f32.mrb[0].mxu0
  %v5683 = vpop.f32.mrb[0].mxu0
  %v5684 = vadd.f32 0.0, %v5683
  %v5685 = vpop.f32.mrb[0].mxu0
  %5686 = vmatprep.mubr.bf16.mxu0 0
  %5687 = vmatmul.mubr.bf16.gmra.mrb[0].mxu0 %v5626
  %v5688 = vpop.f32.mrb[0].mxu0
  %v5689 = vadd.f32 0.0, %v5688
  %v5690 = vpop.f32.mrb[0].mxu0
  %v5691 = vpop.f32.mrb[0].mxu0
  %v5692 = vadd.f32 0.0, %v5691
  %v5693 = vpop.f32.mrb[0].mxu0
  %5694 = vmatprep.mubr.bf16.mxu0 0
  %5695 = vmatmul.mubr.bf16.gmra.mrb[0].mxu0 %v5629
  %v5696 = vpop.f32.mrb[0].mxu0
  %v5697 = vadd.f32 0.0, %v5696
  %v5698 = vpop.f32.mrb[0].mxu0
  %v5699 = vpop.f32.mrb[0].mxu0
  %v5700 = vadd.f32 0.0, %v5699
  %v5701 = vpop.f32.mrb[0].mxu0
  %5702 = vmatprep.mubr.bf16.mxu0 0
  %5703 = vmatmul.mubr.bf16.gmra.mrb[0].mxu0 %v5632
  %v5704 = vpop.f32.mrb[0].mxu0
  %v5705 = vadd.f32 0.0, %v5704
  %v5706 = vpop.f32.mrb[0].mxu0
  %v5707 = vpop.f32.mrb[0].mxu0
  %v5708 = vadd.f32 0.0, %v5707
  %v5709 = vpop.f32.mrb[0].mxu0
  %5710 = vmatprep.mubr.bf16.mxu0 0
  %5711 = vmatmul.mubr.bf16.gmra.mrb[0].mxu0 %v5635
  %v5712 = vpop.f32.mrb[0].mxu0
  %v5713 = vadd.f32 0.0, %v5712
  %v5714 = vpop.f32.mrb[0].mxu0
  %v5715 = vpop.f32.mrb[0].mxu0
  %v5716 = vadd.f32 0.0, %v5715
  %v5717 = vpop.f32.mrb[0].mxu0
  %5718 = vmatprep.mubr.bf16.mxu0 0
  %5719 = vmatmul.mubr.bf16.gmra.mrb[0].mxu0 %v5638
  %v5720 = vpop.f32.mrb[0].mxu0
  %v5721 = vadd.f32 0.0, %v5720
  %v5722 = vpop.f32.mrb[0].mxu0
  %v5723 = vpop.f32.mrb[0].mxu0
  %v5724 = vadd.f32 0.0, %v5723
  %v5725 = vpop.f32.mrb[0].mxu0
  %5726 = vmatprep.mubr.bf16.mxu0 0
  %5727 = vmatmul.mubr.bf16.gmra.mrb[0].mxu0 %v5641
  %v5728 = vpop.f32.mrb[0].mxu0
  %v5729 = vadd.f32 0.0, %v5728
  %v5730 = vpop.f32.mrb[0].mxu0
  %v5731 = vpop.f32.mrb[0].mxu0
  %v5732 = vadd.f32 0.0, %v5731
  %v5733 = vpop.f32.mrb[0].mxu0
  %5734 = vmatprep.mubr.bf16.mxu0 0
  %5735 = vmatmul.mubr.bf16.gmra.mrb[0].mxu0 %v5644
  %v5736 = vpop.f32.mrb[0].mxu0
  %v5737 = vadd.f32 0.0, %v5736
  %v5738 = vpop.f32.mrb[0].mxu0
  %v5739 = vpop.f32.mrb[0].mxu0
  %v5740 = vadd.f32 0.0, %v5739
  %v5741 = vpop.f32.mrb[0].mxu0
  %5742 = vdwg.mxu0
  %v5751 = vunpack.c.l.b16 %v5573
  %v5752 = vunpack.c.l.b16 %v5574
  %v5753 = vunpack.c.l.b16 %v5575
  %v5754 = vunpack.c.l.b16 %v5576
  %v5755 = vunpack.c.l.b16 %v5577
  %v5756 = vunpack.c.l.b16 %v5578
  %v5757 = vunpack.c.l.b16 %v5579
  %v5758 = vunpack.c.l.b16 %v5580
  %v5759 = vpack.c.b16 %v5752, %v5751
  %v5760 = vpack.c.b16 %v5754, %v5753
  %v5761 = vpack.c.b16 %v5756, %v5755
  %v5762 = vpack.c.b16 %v5758, %v5757
  %v5768 = vsel %vm1685, %v5564, 0
  %v5771 = vsel %vm1685, %v5565, 0
  %v5774 = vsel %vm1685, %v5566, 0
  %v5777 = vsel %vm1685, %v5567, 0
  %v5780 = vsel %vm1685, %v5568, 0
  %v5783 = vsel %vm1685, %v5569, 0
  %v5786 = vsel %vm1685, %v5570, 0
  %v5789 = vsel %vm1685, %v5571, 0
  %5791 = vmatprep.subr.bf16.mxu0 0
  %5792 = vmatpush1.bf16.msra.mxu0 %v5759
  %5793 = vmatprep.subr.bf16.mxu0 0
  %5794 = vmatpush1.bf16.msra.mxu0 %v5760
  %5795 = vmatprep.subr.bf16.mxu0 0
  %5796 = vmatpush1.bf16.msra.mxu0 %v5761
  %5797 = vmatprep.subr.bf16.mxu0 0
  %5798 = vmatpush1.bf16.msra.mxu0 %v5762
  %5799 = vmatprep.subr.bf16.mxu0 0
  %5800 = vmatpush1.bf16.msra.mxu0 0
  %5801 = vmatprep.subr.bf16.mxu0 0
  %5802 = vmatpush1.bf16.msra.mxu0 0
  %5803 = vmatprep.subr.bf16.mxu0 0
  %5804 = vmatpush1.bf16.msra.mxu0 0
  %5805 = vmatprep.subr.bf16.mxu0 0
  %5806 = vmatpush1.bf16.msra.mxu0 0
  %5807 = vmatprep.subr.bf16.mxu0 0
  %5808 = vmatpush1.bf16.msra.mxu0 0
  %5809 = vmatprep.subr.bf16.mxu0 0
  %5810 = vmatpush1.bf16.msra.mxu0 0
  %5811 = vmatprep.subr.bf16.mxu0 0
  %5812 = vmatpush1.bf16.msra.mxu0 0
  %5813 = vmatprep.subr.bf16.mxu0 0
  %5814 = vmatpush1.bf16.msra.mxu0 0
  %5815 = vmatprep.subr.bf16.mxu0 0
  %5816 = vmatpush1.bf16.msra.mxu0 0
  %5817 = vmatprep.subr.bf16.mxu0 0
  %5818 = vmatpush1.bf16.msra.mxu0 0
  %5819 = vmatprep.subr.bf16.mxu0 0
  %5820 = vmatpush1.bf16.msra.mxu0 0
  %5821 = vmatprep.subr.bf16.mxu0 0
  %5822 = vmatpush1.bf16.msra.mxu0 0
  %5823 = vmatprep.mubr.bf16.mxu0 0
  %5824 = vmatmul.mubr.bf16.gmra.mrb[0].mxu0 %v5768
  %v5825 = vpop.f32.mrb[0].mxu0
  %v5826 = vadd.f32 %v5681, %v5825
  %v5827 = vpop.f32.mrb[0].mxu0
  %v5828 = vpop.f32.mrb[0].mxu0
  %v5829 = vadd.f32 %v5684, %v5828
  %v5830 = vpop.f32.mrb[0].mxu0
  %5831 = vmatprep.mubr.bf16.mxu0 0
  %5832 = vmatmul.mubr.bf16.gmra.mrb[0].mxu0 %v5771
  %v5833 = vpop.f32.mrb[0].mxu0
  %v5834 = vadd.f32 %v5689, %v5833
  %v5835 = vpop.f32.mrb[0].mxu0
  %v5836 = vpop.f32.mrb[0].mxu0
  %v5837 = vadd.f32 %v5692, %v5836
  %v5838 = vpop.f32.mrb[0].mxu0
  %5839 = vmatprep.mubr.bf16.mxu0 0
  %5840 = vmatmul.mubr.bf16.gmra.mrb[0].mxu0 %v5774
  %v5841 = vpop.f32.mrb[0].mxu0
  %v5842 = vadd.f32 %v5697, %v5841
  %v5843 = vpop.f32.mrb[0].mxu0
  %v5844 = vpop.f32.mrb[0].mxu0
  %v5845 = vadd.f32 %v5700, %v5844
  %v5846 = vpop.f32.mrb[0].mxu0
  %5847 = vmatprep.mubr.bf16.mxu0 0
  %5848 = vmatmul.mubr.bf16.gmra.mrb[0].mxu0 %v5777
  %v5849 = vpop.f32.mrb[0].mxu0
  %v5850 = vadd.f32 %v5705, %v5849
  %v5851 = vpop.f32.mrb[0].mxu0
  %v5852 = vpop.f32.mrb[0].mxu0
  %v5853 = vadd.f32 %v5708, %v5852
  %v5854 = vpop.f32.mrb[0].mxu0
  %5855 = vmatprep.mubr.bf16.mxu0 0
  %5856 = vmatmul.mubr.bf16.gmra.mrb[0].mxu0 %v5780
  %v5857 = vpop.f32.mrb[0].mxu0
  %v5858 = vadd.f32 %v5713, %v5857
  %v5859 = vpop.f32.mrb[0].mxu0
  %v5860 = vpop.f32.mrb[0].mxu0
  %v5861 = vadd.f32 %v5716, %v5860
  %v5862 = vpop.f32.mrb[0].mxu0
  %5863 = vmatprep.mubr.bf16.mxu0 0
  %5864 = vmatmul.mubr.bf16.gmra.mrb[0].mxu0 %v5783
  %v5865 = vpop.f32.mrb[0].mxu0
  %v5866 = vadd.f32 %v5721, %v5865
  %v5867 = vpop.f32.mrb[0].mxu0
  %v5868 = vpop.f32.mrb[0].mxu0
  %v5869 = vadd.f32 %v5724, %v5868
  %v5870 = vpop.f32.mrb[0].mxu0
  %5871 = vmatprep.mubr.bf16.mxu0 0
  %5872 = vmatmul.mubr.bf16.gmra.mrb[0].mxu0 %v5786
  %v5873 = vpop.f32.mrb[0].mxu0
  %v5874 = vadd.f32 %v5729, %v5873
  %v5875 = vpop.f32.mrb[0].mxu0
  %v5876 = vpop.f32.mrb[0].mxu0
  %v5877 = vadd.f32 %v5732, %v5876
  %v5878 = vpop.f32.mrb[0].mxu0
  %5879 = vmatprep.mubr.bf16.mxu0 0
  %5880 = vmatmul.mubr.bf16.gmra.mrb[0].mxu0 %v5789
  %v5881 = vpop.f32.mrb[0].mxu0
  %v5882 = vadd.f32 %v5737, %v5881
  %v5883 = vpop.f32.mrb[0].mxu0
  %v5884 = vpop.f32.mrb[0].mxu0
  %v5885 = vadd.f32 %v5740, %v5884
  %v5886 = vpop.f32.mrb[0].mxu0
  %5887 = vdwg.mxu0
  %v5888 = vlaneseq
  %v5889 = vshrl.u32 %v5888, 7
  %v5890 = vsub.s32 3, %v5889
  %v5891 = vrot.slane %v154, %v5890
  %v5892 = vadd.f32 %v5826, %v5891
  %v5893 = vadd.f32 %v5829, %v5891
  %v5894 = vadd.f32 %v5834, %v5891
  %v5895 = vadd.f32 %v5837, %v5891
  %v5896 = vadd.f32 %v5842, %v5891
  %v5897 = vadd.f32 %v5845, %v5891
  %v5898 = vadd.f32 %v5850, %v5891
  %v5899 = vadd.f32 %v5853, %v5891
  %v5900 = vadd.f32 %v5858, %v5891
  %v5901 = vadd.f32 %v5861, %v5891
  %v5902 = vadd.f32 %v5866, %v5891
  %v5903 = vadd.f32 %v5869, %v5891
  %v5904 = vadd.f32 %v5874, %v5891
  %v5905 = vadd.f32 %v5877, %v5891
  %v5906 = vadd.f32 %v5882, %v5891
  %v5907 = vadd.f32 %v5885, %v5891
  %vm5908 = vcmp.gt.f32.partialorder %v5892, 0.0
  %vm5909 = vcmp.gt.f32.partialorder %v5893, 0.0
  %vm5910 = vcmp.gt.f32.partialorder %v5894, 0.0
  %vm5911 = vcmp.gt.f32.partialorder %v5895, 0.0
  %vm5912 = vcmp.gt.f32.partialorder %v5896, 0.0
  %vm5913 = vcmp.gt.f32.partialorder %v5897, 0.0
  %vm5914 = vcmp.gt.f32.partialorder %v5898, 0.0
  %vm5915 = vcmp.gt.f32.partialorder %v5899, 0.0
  %vm5916 = vcmp.gt.f32.partialorder %v5900, 0.0
  %vm5917 = vcmp.gt.f32.partialorder %v5901, 0.0
  %vm5918 = vcmp.gt.f32.partialorder %v5902, 0.0
  %vm5919 = vcmp.gt.f32.partialorder %v5903, 0.0
  %vm5920 = vcmp.gt.f32.partialorder %v5904, 0.0
  %vm5921 = vcmp.gt.f32.partialorder %v5905, 0.0
  %vm5922 = vcmp.gt.f32.partialorder %v5906, 0.0
  %vm5923 = vcmp.gt.f32.partialorder %v5907, 0.0
  %v5924 = vmin.f32 %v5892, 0.0
  %v5925 = vmin.f32 %v5893, 0.0
  %v5926 = vmin.f32 %v5894, 0.0
  %v5927 = vmin.f32 %v5895, 0.0
  %v5928 = vmin.f32 %v5896, 0.0
  %v5929 = vmin.f32 %v5897, 0.0
  %v5930 = vmin.f32 %v5898, 0.0
  %v5931 = vmin.f32 %v5899, 0.0
  %v5932 = vmin.f32 %v5900, 0.0
  %v5933 = vmin.f32 %v5901, 0.0
  %v5934 = vmin.f32 %v5902, 0.0
  %v5935 = vmin.f32 %v5903, 0.0
  %v5936 = vmin.f32 %v5904, 0.0
  %v5937 = vmin.f32 %v5905, 0.0
  %v5938 = vmin.f32 %v5906, 0.0
  %v5939 = vmin.f32 %v5907, 0.0
  %v5940 = vmul.f32 %v5924, 1.442695
  %v5941 = vpow.pop %v5940
  %v5942 = vmul.f32 %v5925, 1.442695
  %v5943 = vpow.pop %v5942
  %v5944 = vmul.f32 %v5926, 1.442695
  %v5945 = vpow.pop %v5944
  %v5946 = vmul.f32 %v5927, 1.442695
  %v5947 = vpow.pop %v5946
  %v5948 = vmul.f32 %v5928, 1.442695
  %v5949 = vpow.pop %v5948
  %v5950 = vmul.f32 %v5929, 1.442695
  %v5951 = vpow.pop %v5950
  %v5952 = vmul.f32 %v5930, 1.442695
  %v5953 = vpow.pop %v5952
  %v5954 = vmul.f32 %v5931, 1.442695
  %v5955 = vpow.pop %v5954
  %v5956 = vmul.f32 %v5932, 1.442695
  %v5957 = vpow.pop %v5956
  %v5958 = vmul.f32 %v5933, 1.442695
  %v5959 = vpow.pop %v5958
  %v5960 = vmul.f32 %v5934, 1.442695
  %v5961 = vpow.pop %v5960
  %v5962 = vmul.f32 %v5935, 1.442695
  %v5963 = vpow.pop %v5962
  %v5964 = vmul.f32 %v5936, 1.442695
  %v5965 = vpow.pop %v5964
  %v5966 = vmul.f32 %v5937, 1.442695
  %v5967 = vpow.pop %v5966
  %v5968 = vmul.f32 %v5938, 1.442695
  %v5969 = vpow.pop %v5968
  %v5970 = vmul.f32 %v5939, 1.442695
  %v5971 = vpow.pop %v5970
  %v5972 = vsub.f32 %v5941, 1.0
  %v5973 = vsub.f32 %v5943, 1.0
  %v5974 = vsub.f32 %v5945, 1.0
  %v5975 = vsub.f32 %v5947, 1.0
  %v5976 = vsub.f32 %v5949, 1.0
  %v5977 = vsub.f32 %v5951, 1.0
  %v5978 = vsub.f32 %v5953, 1.0
  %v5979 = vsub.f32 %v5955, 1.0
  %v5980 = vsub.f32 %v5957, 1.0
  %v5981 = vsub.f32 %v5959, 1.0
  %v5982 = vsub.f32 %v5961, 1.0
  %v5983 = vsub.f32 %v5963, 1.0
  %v5984 = vsub.f32 %v5965, 1.0
  %v5985 = vsub.f32 %v5967, 1.0
  %v5986 = vsub.f32 %v5969, 1.0
  %v5987 = vsub.f32 %v5971, 1.0
  %v5988 = vsel %vm5908, %v5892, %v5972
  %v5989 = vsel %vm5909, %v5893, %v5973
  %v5990 = vsel %vm5910, %v5894, %v5974
  %v5991 = vsel %vm5911, %v5895, %v5975
  %v5992 = vsel %vm5912, %v5896, %v5976
  %v5993 = vsel %vm5913, %v5897, %v5977
  %v5994 = vsel %vm5914, %v5898, %v5978
  %v5995 = vsel %vm5915, %v5899, %v5979
  %v5996 = vsel %vm5916, %v5900, %v5980
  %v5997 = vsel %vm5917, %v5901, %v5981
  %v5998 = vsel %vm5918, %v5902, %v5982
  %v5999 = vsel %vm5919, %v5903, %v5983
  %v6000 = vsel %vm5920, %v5904, %v5984
  %v6001 = vsel %vm5921, %v5905, %v5985
  %v6002 = vsel %vm5922, %v5906, %v5986
  %v6003 = vsel %vm5923, %v5907, %v5987
  %v6004 = vadd.f32 %v1532, %v5988
  %v6005 = vadd.f32 %v1533, %v5989
  %v6006 = vadd.f32 %v1534, %v5990
  %v6007 = vadd.f32 %v1535, %v5991
  %v6008 = vadd.f32 %v1536, %v5992
  %v6009 = vadd.f32 %v1537, %v5993
  %v6010 = vadd.f32 %v1538, %v5994
  %v6011 = vadd.f32 %v1539, %v5995
  %v6012 = vadd.f32 %v1540, %v5996
  %v6013 = vadd.f32 %v1541, %v5997
  %v6014 = vadd.f32 %v1542, %v5998
  %v6015 = vadd.f32 %v1543, %v5999
  %v6016 = vadd.f32 %v1544, %v6000
  %v6017 = vadd.f32 %v1545, %v6001
  %v6018 = vadd.f32 %v1546, %v6002
  %v6019 = vadd.f32 %v1547, %v6003
  %v6020 = vmax.f32 %v1516, %v1548
  %v6021 = vmax.f32 %v1517, %v1549
  %v6022 = vmax.f32 %v1518, %v1550
  %v6023 = vmax.f32 %v1519, %v1551
  %v6024 = vmax.f32 %v1520, %v1552
  %v6025 = vmax.f32 %v1521, %v1553
  %v6026 = vmax.f32 %v1522, %v1554
  %v6027 = vmax.f32 %v1523, %v1555
  %v6028 = vmax.f32 %v1524, %v1556
  %v6029 = vmax.f32 %v1525, %v1557
  %v6030 = vmax.f32 %v1526, %v1558
  %v6031 = vmax.f32 %v1527, %v1559
  %v6032 = vmax.f32 %v1528, %v1560
  %v6033 = vmax.f32 %v1529, %v1561
  %v6034 = vmax.f32 %v1530, %v1562
  %v6035 = vmax.f32 %v1531, %v1563
  %v6036 = vmax.f32 %v1532, %v1564
  %v6037 = vmax.f32 %v1533, %v1565
  %v6038 = vmax.f32 %v1534, %v1566
  %v6039 = vmax.f32 %v1535, %v1567
  %v6040 = vmax.f32 %v1536, %v1568
  %v6041 = vmax.f32 %v1537, %v1569
  %v6042 = vmax.f32 %v1538, %v1570
  %v6043 = vmax.f32 %v1539, %v1571
  %v6044 = vmax.f32 %v1540, %v1572
  %v6045 = vmax.f32 %v1541, %v1573
  %v6046 = vmax.f32 %v1542, %v1574
  %v6047 = vmax.f32 %v1543, %v1575
  %v6048 = vmax.f32 %v1544, %v1576
  %v6049 = vmax.f32 %v1545, %v1577
  %v6050 = vmax.f32 %v1546, %v1578
  %v6051 = vmax.f32 %v1547, %v1579
  %v6052 = vmin.f32 %v1516, %v1548
  %v6053 = vmin.f32 %v1517, %v1549
  %v6054 = vmin.f32 %v1518, %v1550
  %v6055 = vmin.f32 %v1519, %v1551
  %v6056 = vmin.f32 %v1520, %v1552
  %v6057 = vmin.f32 %v1521, %v1553
  %v6058 = vmin.f32 %v1522, %v1554
  %v6059 = vmin.f32 %v1523, %v1555
  %v6060 = vmin.f32 %v1524, %v1556
  %v6061 = vmin.f32 %v1525, %v1557
  %v6062 = vmin.f32 %v1526, %v1558
  %v6063 = vmin.f32 %v1527, %v1559
  %v6064 = vmin.f32 %v1528, %v1560
  %v6065 = vmin.f32 %v1529, %v1561
  %v6066 = vmin.f32 %v1530, %v1562
  %v6067 = vmin.f32 %v1531, %v1563
  %v6068 = vmin.f32 %v1532, %v1564
  %v6069 = vmin.f32 %v1533, %v1565
  %v6070 = vmin.f32 %v1534, %v1566
  %v6071 = vmin.f32 %v1535, %v1567
  %v6072 = vmin.f32 %v1536, %v1568
  %v6073 = vmin.f32 %v1537, %v1569
  %v6074 = vmin.f32 %v1538, %v1570
  %v6075 = vmin.f32 %v1539, %v1571
  %v6076 = vmin.f32 %v1540, %v1572
  %v6077 = vmin.f32 %v1541, %v1573
  %v6078 = vmin.f32 %v1542, %v1574
  %v6079 = vmin.f32 %v1543, %v1575
  %v6080 = vmin.f32 %v1544, %v1576
  %v6081 = vmin.f32 %v1545, %v1577
  %v6082 = vmin.f32 %v1546, %v1578
  %v6083 = vmin.f32 %v1547, %v1579
  %v6084 = vmax.f32 %v6020, %v6024
  %v6085 = vmax.f32 %v6021, %v6025
  %v6086 = vmax.f32 %v6022, %v6026
  %v6087 = vmax.f32 %v6023, %v6027
  %v6088 = vmin.f32 %v6052, %v6056
  %v6089 = vmin.f32 %v6053, %v6057
  %v6090 = vmin.f32 %v6054, %v6058
  %v6091 = vmin.f32 %v6055, %v6059
  %v6092 = vmax.f32 %v6028, %v6032
  %v6093 = vmax.f32 %v6029, %v6033
  %v6094 = vmax.f32 %v6030, %v6034
  %v6095 = vmax.f32 %v6031, %v6035
  %v6096 = vmin.f32 %v6060, %v6064
  %v6097 = vmin.f32 %v6061, %v6065
  %v6098 = vmin.f32 %v6062, %v6066
  %v6099 = vmin.f32 %v6063, %v6067
  %v6100 = vmax.f32 %v6036, %v6040
  %v6101 = vmax.f32 %v6037, %v6041
  %v6102 = vmax.f32 %v6038, %v6042
  %v6103 = vmax.f32 %v6039, %v6043
  %v6104 = vmin.f32 %v6068, %v6072
  %v6105 = vmin.f32 %v6069, %v6073
  %v6106 = vmin.f32 %v6070, %v6074
  %v6107 = vmin.f32 %v6071, %v6075
  %v6108 = vmax.f32 %v6044, %v6048
  %v6109 = vmax.f32 %v6045, %v6049
  %v6110 = vmax.f32 %v6046, %v6050
  %v6111 = vmax.f32 %v6047, %v6051
  %v6112 = vmin.f32 %v6076, %v6080
  %v6113 = vmin.f32 %v6077, %v6081
  %v6114 = vmin.f32 %v6078, %v6082
  %v6115 = vmin.f32 %v6079, %v6083
  %v6116 = vpack.c.bf16 %v6085, %v6084
  %v6117 = vpack.c.bf16 %v6087, %v6086
  %v6118 = vpack.c.bf16 %v6093, %v6092
  %v6119 = vpack.c.bf16 %v6095, %v6094
  %v6120 = vpack.c.bf16 %v6101, %v6100
  %v6121 = vpack.c.bf16 %v6103, %v6102
  %v6122 = vpack.c.bf16 %v6109, %v6108
  %v6123 = vpack.c.bf16 %v6111, %v6110
  %v6124 = vpack.c.bf16 %v6089, %v6088
  %v6125 = vpack.c.bf16 %v6091, %v6090
  %v6126 = vpack.c.bf16 %v6097, %v6096
  %v6127 = vpack.c.bf16 %v6099, %v6098
  %v6128 = vpack.c.bf16 %v6105, %v6104
  %v6129 = vpack.c.bf16 %v6107, %v6106
  %v6130 = vpack.c.bf16 %v6113, %v6112
  %v6131 = vpack.c.bf16 %v6115, %v6114
  %v6133 = vsel %vm1685, %v6124, 0
  %v6136 = vsel %vm1685, %v6125, 0
  %v6139 = vsel %vm1685, %v6126, 0
  %v6142 = vsel %vm1685, %v6127, 0
  %v6145 = vsel %vm1685, %v6128, 0
  %v6148 = vsel %vm1685, %v6129, 0
  %v6151 = vsel %vm1685, %v6130, 0
  %v6154 = vsel %vm1685, %v6131, 0
  %6156 = vmatprep.subr.bf16.mxu0 0
  %6157 = vmatpush1.bf16.msra.mxu0 %v5614
  %6158 = vmatprep.subr.bf16.mxu0 0
  %6159 = vmatpush1.bf16.msra.mxu0 %v5615
  %6160 = vmatprep.subr.bf16.mxu0 0
  %6161 = vmatpush1.bf16.msra.mxu0 %v5616
  %6162 = vmatprep.subr.bf16.mxu0 0
  %6163 = vmatpush1.bf16.msra.mxu0 %v5617
  %6164 = vmatprep.subr.bf16.mxu0 0
  %6165 = vmatpush1.bf16.msra.mxu0 0
  %6166 = vmatprep.subr.bf16.mxu0 0
  %6167 = vmatpush1.bf16.msra.mxu0 0
  %6168 = vmatprep.subr.bf16.mxu0 0
  %6169 = vmatpush1.bf16.msra.mxu0 0
  %6170 = vmatprep.subr.bf16.mxu0 0
  %6171 = vmatpush1.bf16.msra.mxu0 0
  %6172 = vmatprep.subr.bf16.mxu0 0
  %6173 = vmatpush1.bf16.msra.mxu0 0
  %6174 = vmatprep.subr.bf16.mxu0 0
  %6175 = vmatpush1.bf16.msra.mxu0 0
  %6176 = vmatprep.subr.bf16.mxu0 0
  %6177 = vmatpush1.bf16.msra.mxu0 0
  %6178 = vmatprep.subr.bf16.mxu0 0
  %6179 = vmatpush1.bf16.msra.mxu0 0
  %6180 = vmatprep.subr.bf16.mxu0 0
  %6181 = vmatpush1.bf16.msra.mxu0 0
  %6182 = vmatprep.subr.bf16.mxu0 0
  %6183 = vmatpush1.bf16.msra.mxu0 0
  %6184 = vmatprep.subr.bf16.mxu0 0
  %6185 = vmatpush1.bf16.msra.mxu0 0
  %6186 = vmatprep.subr.bf16.mxu0 0
  %6187 = vmatpush1.bf16.msra.mxu0 0
  %6188 = vmatprep.mubr.bf16.mxu0 0
  %6189 = vmatmul.mubr.bf16.gmra.mrb[0].mxu0 %v6133
  %v6190 = vpop.f32.mrb[0].mxu0
  %v6191 = vadd.f32 0.0, %v6190
  %v6192 = vpop.f32.mrb[0].mxu0
  %v6193 = vpop.f32.mrb[0].mxu0
  %v6194 = vadd.f32 0.0, %v6193
  %v6195 = vpop.f32.mrb[0].mxu0
  %6196 = vmatprep.mubr.bf16.mxu0 0
  %6197 = vmatmul.mubr.bf16.gmra.mrb[0].mxu0 %v6136
  %v6198 = vpop.f32.mrb[0].mxu0
  %v6199 = vadd.f32 0.0, %v6198
  %v6200 = vpop.f32.mrb[0].mxu0
  %v6201 = vpop.f32.mrb[0].mxu0
  %v6202 = vadd.f32 0.0, %v6201
  %v6203 = vpop.f32.mrb[0].mxu0
  %6204 = vmatprep.mubr.bf16.mxu0 0
  %6205 = vmatmul.mubr.bf16.gmra.mrb[0].mxu0 %v6139
  %v6206 = vpop.f32.mrb[0].mxu0
  %v6207 = vadd.f32 0.0, %v6206
  %v6208 = vpop.f32.mrb[0].mxu0
  %v6209 = vpop.f32.mrb[0].mxu0
  %v6210 = vadd.f32 0.0, %v6209
  %v6211 = vpop.f32.mrb[0].mxu0
  %6212 = vmatprep.mubr.bf16.mxu0 0
  %6213 = vmatmul.mubr.bf16.gmra.mrb[0].mxu0 %v6142
  %v6214 = vpop.f32.mrb[0].mxu0
  %v6215 = vadd.f32 0.0, %v6214
  %v6216 = vpop.f32.mrb[0].mxu0
  %v6217 = vpop.f32.mrb[0].mxu0
  %v6218 = vadd.f32 0.0, %v6217
  %v6219 = vpop.f32.mrb[0].mxu0
  %6220 = vmatprep.mubr.bf16.mxu0 0
  %6221 = vmatmul.mubr.bf16.gmra.mrb[0].mxu0 %v6145
  %v6222 = vpop.f32.mrb[0].mxu0
  %v6223 = vadd.f32 0.0, %v6222
  %v6224 = vpop.f32.mrb[0].mxu0
  %v6225 = vpop.f32.mrb[0].mxu0
  %v6226 = vadd.f32 0.0, %v6225
  %v6227 = vpop.f32.mrb[0].mxu0
  %6228 = vmatprep.mubr.bf16.mxu0 0
  %6229 = vmatmul.mubr.bf16.gmra.mrb[0].mxu0 %v6148
  %v6230 = vpop.f32.mrb[0].mxu0
  %v6231 = vadd.f32 0.0, %v6230
  %v6232 = vpop.f32.mrb[0].mxu0
  %v6233 = vpop.f32.mrb[0].mxu0
  %v6234 = vadd.f32 0.0, %v6233
  %v6235 = vpop.f32.mrb[0].mxu0
  %6236 = vmatprep.mubr.bf16.mxu0 0
  %6237 = vmatmul.mubr.bf16.gmra.mrb[0].mxu0 %v6151
  %v6238 = vpop.f32.mrb[0].mxu0
  %v6239 = vadd.f32 0.0, %v6238
  %v6240 = vpop.f32.mrb[0].mxu0
  %v6241 = vpop.f32.mrb[0].mxu0
  %v6242 = vadd.f32 0.0, %v6241
  %v6243 = vpop.f32.mrb[0].mxu0
  %6244 = vmatprep.mubr.bf16.mxu0 0
  %6245 = vmatmul.mubr.bf16.gmra.mrb[0].mxu0 %v6154
  %v6246 = vpop.f32.mrb[0].mxu0
  %v6247 = vadd.f32 0.0, %v6246
  %v6248 = vpop.f32.mrb[0].mxu0
  %v6249 = vpop.f32.mrb[0].mxu0
  %v6250 = vadd.f32 0.0, %v6249
  %v6251 = vpop.f32.mrb[0].mxu0
  %6252 = vdwg.mxu0
  %v6254 = vsel %vm1685, %v6116, 0
  %v6257 = vsel %vm1685, %v6117, 0
  %v6260 = vsel %vm1685, %v6118, 0
  %v6263 = vsel %vm1685, %v6119, 0
  %v6266 = vsel %vm1685, %v6120, 0
  %v6269 = vsel %vm1685, %v6121, 0
  %v6272 = vsel %vm1685, %v6122, 0
  %v6275 = vsel %vm1685, %v6123, 0
  %6277 = vmatprep.subr.bf16.mxu0 0
  %6278 = vmatpush1.bf16.msra.mxu0 %v5759
  %6279 = vmatprep.subr.bf16.mxu0 0
  %6280 = vmatpush1.bf16.msra.mxu0 %v5760
  %6281 = vmatprep.subr.bf16.mxu0 0
  %6282 = vmatpush1.bf16.msra.mxu0 %v5761
  %6283 = vmatprep.subr.bf16.mxu0 0
  %6284 = vmatpush1.bf16.msra.mxu0 %v5762
  %6285 = vmatprep.subr.bf16.mxu0 0
  %6286 = vmatpush1.bf16.msra.mxu0 0
  %6287 = vmatprep.subr.bf16.mxu0 0
  %6288 = vmatpush1.bf16.msra.mxu0 0
  %6289 = vmatprep.subr.bf16.mxu0 0
  %6290 = vmatpush1.bf16.msra.mxu0 0
  %6291 = vmatprep.subr.bf16.mxu0 0
  %6292 = vmatpush1.bf16.msra.mxu0 0
  %6293 = vmatprep.subr.bf16.mxu0 0
  %6294 = vmatpush1.bf16.msra.mxu0 0
  %6295 = vmatprep.subr.bf16.mxu0 0
  %6296 = vmatpush1.bf16.msra.mxu0 0
  %6297 = vmatprep.subr.bf16.mxu0 0
  %6298 = vmatpush1.bf16.msra.mxu0 0
  %6299 = vmatprep.subr.bf16.mxu0 0
  %6300 = vmatpush1.bf16.msra.mxu0 0
  %6301 = vmatprep.subr.bf16.mxu0 0
  %6302 = vmatpush1.bf16.msra.mxu0 0
  %6303 = vmatprep.subr.bf16.mxu0 0
  %6304 = vmatpush1.bf16.msra.mxu0 0
  %6305 = vmatprep.subr.bf16.mxu0 0
  %6306 = vmatpush1.bf16.msra.mxu0 0
  %6307 = vmatprep.subr.bf16.mxu0 0
  %6308 = vmatpush1.bf16.msra.mxu0 0
  %6309 = vmatprep.mubr.bf16.mxu0 0
  %6310 = vmatmul.mubr.bf16.gmra.mrb[0].mxu0 %v6254
  %v6311 = vpop.f32.mrb[0].mxu0
  %v6312 = vadd.f32 %v6191, %v6311
  %v6313 = vpop.f32.mrb[0].mxu0
  %v6314 = vpop.f32.mrb[0].mxu0
  %v6315 = vadd.f32 %v6194, %v6314
  %v6316 = vpop.f32.mrb[0].mxu0
  %6317 = vmatprep.mubr.bf16.mxu0 0
  %6318 = vmatmul.mubr.bf16.gmra.mrb[0].mxu0 %v6257
  %v6319 = vpop.f32.mrb[0].mxu0
  %v6320 = vadd.f32 %v6199, %v6319
  %v6321 = vpop.f32.mrb[0].mxu0
  %v6322 = vpop.f32.mrb[0].mxu0
  %v6323 = vadd.f32 %v6202, %v6322
  %v6324 = vpop.f32.mrb[0].mxu0
  %6325 = vmatprep.mubr.bf16.mxu0 0
  %6326 = vmatmul.mubr.bf16.gmra.mrb[0].mxu0 %v6260
  %v6327 = vpop.f32.mrb[0].mxu0
  %v6328 = vadd.f32 %v6207, %v6327
  %v6329 = vpop.f32.mrb[0].mxu0
  %v6330 = vpop.f32.mrb[0].mxu0
  %v6331 = vadd.f32 %v6210, %v6330
  %v6332 = vpop.f32.mrb[0].mxu0
  %6333 = vmatprep.mubr.bf16.mxu0 0
  %6334 = vmatmul.mubr.bf16.gmra.mrb[0].mxu0 %v6263
  %v6335 = vpop.f32.mrb[0].mxu0
  %v6336 = vadd.f32 %v6215, %v6335
  %v6337 = vpop.f32.mrb[0].mxu0
  %v6338 = vpop.f32.mrb[0].mxu0
  %v6339 = vadd.f32 %v6218, %v6338
  %v6340 = vpop.f32.mrb[0].mxu0
  %6341 = vmatprep.mubr.bf16.mxu0 0
  %6342 = vmatmul.mubr.bf16.gmra.mrb[0].mxu0 %v6266
  %v6343 = vpop.f32.mrb[0].mxu0
  %v6344 = vadd.f32 %v6223, %v6343
  %v6345 = vpop.f32.mrb[0].mxu0
  %v6346 = vpop.f32.mrb[0].mxu0
  %v6347 = vadd.f32 %v6226, %v6346
  %v6348 = vpop.f32.mrb[0].mxu0
  %6349 = vmatprep.mubr.bf16.mxu0 0
  %6350 = vmatmul.mubr.bf16.gmra.mrb[0].mxu0 %v6269
  %v6351 = vpop.f32.mrb[0].mxu0
  %v6352 = vadd.f32 %v6231, %v6351
  %v6353 = vpop.f32.mrb[0].mxu0
  %v6354 = vpop.f32.mrb[0].mxu0
  %v6355 = vadd.f32 %v6234, %v6354
  %v6356 = vpop.f32.mrb[0].mxu0
  %6357 = vmatprep.mubr.bf16.mxu0 0
  %6358 = vmatmul.mubr.bf16.gmra.mrb[0].mxu0 %v6272
  %v6359 = vpop.f32.mrb[0].mxu0
  %v6360 = vadd.f32 %v6239, %v6359
  %v6361 = vpop.f32.mrb[0].mxu0
  %v6362 = vpop.f32.mrb[0].mxu0
  %v6363 = vadd.f32 %v6242, %v6362
  %v6364 = vpop.f32.mrb[0].mxu0
  %6365 = vmatprep.mubr.bf16.mxu0 0
  %6366 = vmatmul.mubr.bf16.gmra.mrb[0].mxu0 %v6275
  %v6367 = vpop.f32.mrb[0].mxu0
  %v6368 = vadd.f32 %v6247, %v6367
  %v6369 = vpop.f32.mrb[0].mxu0
  %v6370 = vpop.f32.mrb[0].mxu0
  %v6371 = vadd.f32 %v6250, %v6370
  %v6372 = vpop.f32.mrb[0].mxu0
  %6373 = vdwg.mxu0
  %v6374 = vadd.f32 %v6312, %v5891
  %v6375 = vadd.f32 %v6315, %v5891
  %v6376 = vadd.f32 %v6320, %v5891
  %v6377 = vadd.f32 %v6323, %v5891
  %v6378 = vadd.f32 %v6328, %v5891
  %v6379 = vadd.f32 %v6331, %v5891
  %v6380 = vadd.f32 %v6336, %v5891
  %v6381 = vadd.f32 %v6339, %v5891
  %v6382 = vadd.f32 %v6344, %v5891
  %v6383 = vadd.f32 %v6347, %v5891
  %v6384 = vadd.f32 %v6352, %v5891
  %v6385 = vadd.f32 %v6355, %v5891
  %v6386 = vadd.f32 %v6360, %v5891
  %v6387 = vadd.f32 %v6363, %v5891
  %v6388 = vadd.f32 %v6368, %v5891
  %v6389 = vadd.f32 %v6371, %v5891
  %vm6390 = vcmp.gt.f32.partialorder %v6374, 0.0
  %vm6391 = vcmp.gt.f32.partialorder %v6375, 0.0
  %vm6392 = vcmp.gt.f32.partialorder %v6376, 0.0
  %vm6393 = vcmp.gt.f32.partialorder %v6377, 0.0
  %vm6394 = vcmp.gt.f32.partialorder %v6378, 0.0
  %vm6395 = vcmp.gt.f32.partialorder %v6379, 0.0
  %vm6396 = vcmp.gt.f32.partialorder %v6380, 0.0
  %vm6397 = vcmp.gt.f32.partialorder %v6381, 0.0
  %vm6398 = vcmp.gt.f32.partialorder %v6382, 0.0
  %vm6399 = vcmp.gt.f32.partialorder %v6383, 0.0
  %vm6400 = vcmp.gt.f32.partialorder %v6384, 0.0
  %vm6401 = vcmp.gt.f32.partialorder %v6385, 0.0
  %vm6402 = vcmp.gt.f32.partialorder %v6386, 0.0
  %vm6403 = vcmp.gt.f32.partialorder %v6387, 0.0
  %vm6404 = vcmp.gt.f32.partialorder %v6388, 0.0
  %vm6405 = vcmp.gt.f32.partialorder %v6389, 0.0
  %v6406 = vmin.f32 %v6374, 0.0
  %v6407 = vmin.f32 %v6375, 0.0
  %v6408 = vmin.f32 %v6376, 0.0
  %v6409 = vmin.f32 %v6377, 0.0
  %v6410 = vmin.f32 %v6378, 0.0
  %v6411 = vmin.f32 %v6379, 0.0
  %v6412 = vmin.f32 %v6380, 0.0
  %v6413 = vmin.f32 %v6381, 0.0
  %v6414 = vmin.f32 %v6382, 0.0
  %v6415 = vmin.f32 %v6383, 0.0
  %v6416 = vmin.f32 %v6384, 0.0
  %v6417 = vmin.f32 %v6385, 0.0
  %v6418 = vmin.f32 %v6386, 0.0
  %v6419 = vmin.f32 %v6387, 0.0
  %v6420 = vmin.f32 %v6388, 0.0
  %v6421 = vmin.f32 %v6389, 0.0
  %v6422 = vmul.f32 %v6406, 1.442695
  %v6423 = vpow.pop %v6422
  %v6424 = vmul.f32 %v6407, 1.442695
  %v6425 = vpow.pop %v6424
  %v6426 = vmul.f32 %v6408, 1.442695
  %v6427 = vpow.pop %v6426
  %v6428 = vmul.f32 %v6409, 1.442695
  %v6429 = vpow.pop %v6428
  %v6430 = vmul.f32 %v6410, 1.442695
  %v6431 = vpow.pop %v6430
  %v6432 = vmul.f32 %v6411, 1.442695
  %v6433 = vpow.pop %v6432
  %v6434 = vmul.f32 %v6412, 1.442695
  %v6435 = vpow.pop %v6434
  %v6436 = vmul.f32 %v6413, 1.442695
  %v6437 = vpow.pop %v6436
  %v6438 = vmul.f32 %v6414, 1.442695
  %v6439 = vpow.pop %v6438
  %v6440 = vmul.f32 %v6415, 1.442695
  %v6441 = vpow.pop %v6440
  %v6442 = vmul.f32 %v6416, 1.442695
  %v6443 = vpow.pop %v6442
  %v6444 = vmul.f32 %v6417, 1.442695
  %v6445 = vpow.pop %v6444
  %v6446 = vmul.f32 %v6418, 1.442695
  %v6447 = vpow.pop %v6446
  %v6448 = vmul.f32 %v6419, 1.442695
  %v6449 = vpow.pop %v6448
  %v6450 = vmul.f32 %v6420, 1.442695
  %v6451 = vpow.pop %v6450
  %v6452 = vmul.f32 %v6421, 1.442695
  %v6453 = vpow.pop %v6452
  %v6454 = vsub.f32 %v6423, 1.0
  %v6455 = vsub.f32 %v6425, 1.0
  %v6456 = vsub.f32 %v6427, 1.0
  %v6457 = vsub.f32 %v6429, 1.0
  %v6458 = vsub.f32 %v6431, 1.0
  %v6459 = vsub.f32 %v6433, 1.0
  %v6460 = vsub.f32 %v6435, 1.0
  %v6461 = vsub.f32 %v6437, 1.0
  %v6462 = vsub.f32 %v6439, 1.0
  %v6463 = vsub.f32 %v6441, 1.0
  %v6464 = vsub.f32 %v6443, 1.0
  %v6465 = vsub.f32 %v6445, 1.0
  %v6466 = vsub.f32 %v6447, 1.0
  %v6467 = vsub.f32 %v6449, 1.0
  %v6468 = vsub.f32 %v6451, 1.0
  %v6469 = vsub.f32 %v6453, 1.0
  %v6470 = vsel %vm6390, %v6374, %v6454
  %v6471 = vsel %vm6391, %v6375, %v6455
  %v6472 = vsel %vm6392, %v6376, %v6456
  %v6473 = vsel %vm6393, %v6377, %v6457
  %v6474 = vsel %vm6394, %v6378, %v6458
  %v6475 = vsel %vm6395, %v6379, %v6459
  %v6476 = vsel %vm6396, %v6380, %v6460
  %v6477 = vsel %vm6397, %v6381, %v6461
  %v6478 = vsel %vm6398, %v6382, %v6462
  %v6479 = vsel %vm6399, %v6383, %v6463
  %v6480 = vsel %vm6400, %v6384, %v6464
  %v6481 = vsel %vm6401, %v6385, %v6465
  %v6482 = vsel %vm6402, %v6386, %v6466
  %v6483 = vsel %vm6403, %v6387, %v6467
  %v6484 = vsel %vm6404, %v6388, %v6468
  %v6485 = vsel %vm6405, %v6389, %v6469
  %v6486 = vadd.f32 %v1564, %v6470
  %v6487 = vadd.f32 %v1565, %v6471
  %v6488 = vadd.f32 %v1566, %v6472
  %v6489 = vadd.f32 %v1567, %v6473
  %v6490 = vadd.f32 %v1568, %v6474
  %v6491 = vadd.f32 %v1569, %v6475
  %v6492 = vadd.f32 %v1570, %v6476
  %v6493 = vadd.f32 %v1571, %v6477
  %v6494 = vadd.f32 %v1572, %v6478
  %v6495 = vadd.f32 %v1573, %v6479
  %v6496 = vadd.f32 %v1574, %v6480
  %v6497 = vadd.f32 %v1575, %v6481
  %v6498 = vadd.f32 %v1576, %v6482
  %v6499 = vadd.f32 %v1577, %v6483
  %v6500 = vadd.f32 %v1578, %v6484
  %v6501 = vadd.f32 %v1579, %v6485
  %v6502 = vmax.f32 %v6004, %v6486
  %v6503 = vmax.f32 %v6005, %v6487
  %v6504 = vmax.f32 %v6006, %v6488
  %v6505 = vmax.f32 %v6007, %v6489
  %v6506 = vmax.f32 %v6008, %v6490
  %v6507 = vmax.f32 %v6009, %v6491
  %v6508 = vmax.f32 %v6010, %v6492
  %v6509 = vmax.f32 %v6011, %v6493
  %v6510 = vmax.f32 %v6012, %v6494
  %v6511 = vmax.f32 %v6013, %v6495
  %v6512 = vmax.f32 %v6014, %v6496
  %v6513 = vmax.f32 %v6015, %v6497
  %v6514 = vmax.f32 %v6016, %v6498
  %v6515 = vmax.f32 %v6017, %v6499
  %v6516 = vmax.f32 %v6018, %v6500
  %v6517 = vmax.f32 %v6019, %v6501
  %v6518 = vmin.f32 %v6004, %v6486
  %v6519 = vmin.f32 %v6005, %v6487
  %v6520 = vmin.f32 %v6006, %v6488
  %v6521 = vmin.f32 %v6007, %v6489
  %v6522 = vmin.f32 %v6008, %v6490
  %v6523 = vmin.f32 %v6009, %v6491
  %v6524 = vmin.f32 %v6010, %v6492
  %v6525 = vmin.f32 %v6011, %v6493
  %v6526 = vmin.f32 %v6012, %v6494
  %v6527 = vmin.f32 %v6013, %v6495
  %v6528 = vmin.f32 %v6014, %v6496
  %v6529 = vmin.f32 %v6015, %v6497
  %v6530 = vmin.f32 %v6016, %v6498
  %v6531 = vmin.f32 %v6017, %v6499
  %v6532 = vmin.f32 %v6018, %v6500
  %v6533 = vmin.f32 %v6019, %v6501
  %v6534 = vmax.f32 %v6502, %v6506
  %v6535 = vmax.f32 %v6503, %v6507
  %v6536 = vmax.f32 %v6504, %v6508
  %v6537 = vmax.f32 %v6505, %v6509
  %v6538 = vmin.f32 %v6518, %v6522
  %v6539 = vmin.f32 %v6519, %v6523
  %v6540 = vmin.f32 %v6520, %v6524
  %v6541 = vmin.f32 %v6521, %v6525
  %v6542 = vmax.f32 %v6534, %v6510
  %v6543 = vmax.f32 %v6535, %v6511
  %v6544 = vmax.f32 %v6536, %v6512
  %v6545 = vmax.f32 %v6537, %v6513
  %v6546 = vmin.f32 %v6538, %v6526
  %v6547 = vmin.f32 %v6539, %v6527
  %v6548 = vmin.f32 %v6540, %v6528
  %v6549 = vmin.f32 %v6541, %v6529
  %v6550 = vmax.f32 %v6542, %v6514
  %v6551 = vmax.f32 %v6543, %v6515
  %v6552 = vmax.f32 %v6544, %v6516
  %v6553 = vmax.f32 %v6545, %v6517
  %v6554 = vmin.f32 %v6546, %v6530
  %v6555 = vmin.f32 %v6547, %v6531
  %v6556 = vmin.f32 %v6548, %v6532
  %v6557 = vmin.f32 %v6549, %v6533
  %v6558 = vpack.c.bf16 %v6551, %v6550
  %v6559 = vpack.c.bf16 %v6553, %v6552
  %s6560 = scalar_lea.vmem %s1, 576
  %v6561 = vld [vmem:[%s6560] sm:$0xf]
  %v6562 = vld [vmem:[%s6560 + $0x4] sm:$0xf]
  %v6563 = vld [vmem:[%s6560 + $0x8] sm:$0xf]
  %v6564 = vld [vmem:[%s6560 + $0xc] sm:$0xf]
  %v6565 = vld [vmem:[%s6560 + $0x10] sm:$0xf]
  %v6566 = vld [vmem:[%s6560 + $0x14] sm:$0xf]
  %v6567 = vld [vmem:[%s6560 + $0x18] sm:$0xf]
  %v6568 = vld [vmem:[%s6560 + $0x1c] sm:$0xf]
  %v6569 = vpack.c.bf16 %v6555, %v6554
  %v6570 = vpack.c.bf16 %v6557, %v6556
  %s6571 = scalar_lea.vmem %s1, 608
  %v6572 = vld [vmem:[%s6571] sm:$0xf]
  %v6573 = vld [vmem:[%s6571 + $0x4] sm:$0xf]
  %v6574 = vld [vmem:[%s6571 + $0x8] sm:$0xf]
  %v6575 = vld [vmem:[%s6571 + $0xc] sm:$0xf]
  %v6576 = vld [vmem:[%s6571 + $0x10] sm:$0xf]
  %v6577 = vld [vmem:[%s6571 + $0x14] sm:$0xf]
  %v6578 = vld [vmem:[%s6571 + $0x18] sm:$0xf]
  %v6579 = vld [vmem:[%s6571 + $0x1c] sm:$0xf]
  %v6588 = vunpack.c.l.b16 %v6572
  %v6589 = vunpack.c.l.b16 %v6573
  %v6590 = vunpack.c.l.b16 %v6574
  %v6591 = vunpack.c.l.b16 %v6575
  %v6592 = vunpack.c.l.b16 %v6576
  %v6593 = vunpack.c.l.b16 %v6577
  %v6594 = vunpack.c.l.b16 %v6578
  %v6595 = vunpack.c.l.b16 %v6579
  %v6596 = vpack.c.b16 %v6589, %v6588
  %v6597 = vpack.c.b16 %v6591, %v6590
  %v6598 = vpack.c.b16 %v6593, %v6592
  %v6599 = vpack.c.b16 %v6595, %v6594
  %v6605 = vsel %vm1685, %v6569, 0
  %v6608 = vsel %vm1685, %v6570, 0
  %6610 = vmatprep.subr.bf16.mxu0 0
  %6611 = vmatpush1.bf16.msra.mxu0 %v6596
  %6612 = vmatprep.subr.bf16.mxu0 0
  %6613 = vmatpush1.bf16.msra.mxu0 %v6597
  %6614 = vmatprep.subr.bf16.mxu0 0
  %6615 = vmatpush1.bf16.msra.mxu0 %v6598
  %6616 = vmatprep.subr.bf16.mxu0 0
  %6617 = vmatpush1.bf16.msra.mxu0 %v6599
  %6618 = vmatprep.subr.bf16.mxu0 0
  %6619 = vmatpush1.bf16.msra.mxu0 0
  %6620 = vmatprep.subr.bf16.mxu0 0
  %6621 = vmatpush1.bf16.msra.mxu0 0
  %6622 = vmatprep.subr.bf16.mxu0 0
  %6623 = vmatpush1.bf16.msra.mxu0 0
  %6624 = vmatprep.subr.bf16.mxu0 0
  %6625 = vmatpush1.bf16.msra.mxu0 0
  %6626 = vmatprep.subr.bf16.mxu0 0
  %6627 = vmatpush1.bf16.msra.mxu0 0
  %6628 = vmatprep.subr.bf16.mxu0 0
  %6629 = vmatpush1.bf16.msra.mxu0 0
  %6630 = vmatprep.subr.bf16.mxu0 0
  %6631 = vmatpush1.bf16.msra.mxu0 0
  %6632 = vmatprep.subr.bf16.mxu0 0
  %6633 = vmatpush1.bf16.msra.mxu0 0
  %6634 = vmatprep.subr.bf16.mxu0 0
  %6635 = vmatpush1.bf16.msra.mxu0 0
  %6636 = vmatprep.subr.bf16.mxu0 0
  %6637 = vmatpush1.bf16.msra.mxu0 0
  %6638 = vmatprep.subr.bf16.mxu0 0
  %6639 = vmatpush1.bf16.msra.mxu0 0
  %6640 = vmatprep.subr.bf16.mxu0 0
  %6641 = vmatpush1.bf16.msra.mxu0 0
  %6642 = vmatprep.mubr.bf16.mxu0 0
  %6643 = vmatmul.mubr.bf16.gmra.mrb[0].mxu0 %v6605
  %v6644 = vpop.f32.mrb[0].mxu0
  %v6645 = vadd.f32 0.0, %v6644
  %v6646 = vpop.f32.mrb[0].mxu0
  %v6647 = vpop.f32.mrb[0].mxu0
  %v6648 = vadd.f32 0.0, %v6647
  %v6649 = vpop.f32.mrb[0].mxu0
  %6650 = vmatprep.mubr.bf16.mxu0 0
  %6651 = vmatmul.mubr.bf16.gmra.mrb[0].mxu0 %v6608
  %v6652 = vpop.f32.mrb[0].mxu0
  %v6653 = vadd.f32 0.0, %v6652
  %v6654 = vpop.f32.mrb[0].mxu0
  %v6655 = vpop.f32.mrb[0].mxu0
  %v6656 = vadd.f32 0.0, %v6655
  %v6657 = vpop.f32.mrb[0].mxu0
  %6658 = vdwg.mxu0
  %v6667 = vunpack.c.l.b16 %v6561
  %v6668 = vunpack.c.l.b16 %v6562
  %v6669 = vunpack.c.l.b16 %v6563
  %v6670 = vunpack.c.l.b16 %v6564
  %v6671 = vunpack.c.l.b16 %v6565
  %v6672 = vunpack.c.l.b16 %v6566
  %v6673 = vunpack.c.l.b16 %v6567
  %v6674 = vunpack.c.l.b16 %v6568
  %v6675 = vpack.c.b16 %v6668, %v6667
  %v6676 = vpack.c.b16 %v6670, %v6669
  %v6677 = vpack.c.b16 %v6672, %v6671
  %v6678 = vpack.c.b16 %v6674, %v6673
  %v6684 = vsel %vm1685, %v6558, 0
  %v6687 = vsel %vm1685, %v6559, 0
  %6689 = vmatprep.subr.bf16.mxu0 0
  %6690 = vmatpush1.bf16.msra.mxu0 %v6675
  %6691 = vmatprep.subr.bf16.mxu0 0
  %6692 = vmatpush1.bf16.msra.mxu0 %v6676
  %6693 = vmatprep.subr.bf16.mxu0 0
  %6694 = vmatpush1.bf16.msra.mxu0 %v6677
  %6695 = vmatprep.subr.bf16.mxu0 0
  %6696 = vmatpush1.bf16.msra.mxu0 %v6678
  %6697 = vmatprep.subr.bf16.mxu0 0
  %6698 = vmatpush1.bf16.msra.mxu0 0
  %6699 = vmatprep.subr.bf16.mxu0 0
  %6700 = vmatpush1.bf16.msra.mxu0 0
  %6701 = vmatprep.subr.bf16.mxu0 0
  %6702 = vmatpush1.bf16.msra.mxu0 0
  %6703 = vmatprep.subr.bf16.mxu0 0
  %6704 = vmatpush1.bf16.msra.mxu0 0
  %6705 = vmatprep.subr.bf16.mxu0 0
  %6706 = vmatpush1.bf16.msra.mxu0 0
  %6707 = vmatprep.subr.bf16.mxu0 0
  %6708 = vmatpush1.bf16.msra.mxu0 0
  %6709 = vmatprep.subr.bf16.mxu0 0
  %6710 = vmatpush1.bf16.msra.mxu0 0
  %6711 = vmatprep.subr.bf16.mxu0 0
  %6712 = vmatpush1.bf16.msra.mxu0 0
  %6713 = vmatprep.subr.bf16.mxu0 0
  %6714 = vmatpush1.bf16.msra.mxu0 0
  %6715 = vmatprep.subr.bf16.mxu0 0
  %6716 = vmatpush1.bf16.msra.mxu0 0
  %6717 = vmatprep.subr.bf16.mxu0 0
  %6718 = vmatpush1.bf16.msra.mxu0 0
  %6719 = vmatprep.subr.bf16.mxu0 0
  %6720 = vmatpush1.bf16.msra.mxu0 0
  %6721 = vmatprep.mubr.bf16.mxu0 0
  %6722 = vmatmul.mubr.bf16.gmra.mrb[0].mxu0 %v6684
  %v6723 = vpop.f32.mrb[0].mxu0
  %v6724 = vadd.f32 %v6645, %v6723
  %v6725 = vpop.f32.mrb[0].mxu0
  %v6726 = vpop.f32.mrb[0].mxu0
  %v6727 = vadd.f32 %v6648, %v6726
  %v6728 = vpop.f32.mrb[0].mxu0
  %6729 = vmatprep.mubr.bf16.mxu0 0
  %6730 = vmatmul.mubr.bf16.gmra.mrb[0].mxu0 %v6687
  %v6731 = vpop.f32.mrb[0].mxu0
  %v6732 = vadd.f32 %v6653, %v6731
  %v6733 = vpop.f32.mrb[0].mxu0
  %v6734 = vpop.f32.mrb[0].mxu0
  %v6735 = vadd.f32 %v6656, %v6734
  %v6736 = vpop.f32.mrb[0].mxu0
  %6737 = vdwg.mxu0
  %v6738 = vlaneseq
  %v6739 = vshrl.u32 %v6738, 7
  %v6740 = vsub.s32 4, %v6739
  %v6741 = vrot.slane %v154, %v6740
  %v6742 = vadd.f32 %v6724, %v6741
  %v6743 = vadd.f32 %v6727, %v6741
  %v6744 = vadd.f32 %v6732, %v6741
  %v6745 = vadd.f32 %v6735, %v6741
  %vm6746 = vcmp.gt.f32.partialorder %v6742, 0.0
  %vm6747 = vcmp.gt.f32.partialorder %v6743, 0.0
  %vm6748 = vcmp.gt.f32.partialorder %v6744, 0.0
  %vm6749 = vcmp.gt.f32.partialorder %v6745, 0.0
  %v6750 = vmin.f32 %v6742, 0.0
  %v6751 = vmin.f32 %v6743, 0.0
  %v6752 = vmin.f32 %v6744, 0.0
  %v6753 = vmin.f32 %v6745, 0.0
  %v6754 = vmul.f32 %v6750, 1.442695
  %v6755 = vpow.pop %v6754
  %v6756 = vmul.f32 %v6751, 1.442695
  %v6757 = vpow.pop %v6756
  %v6758 = vmul.f32 %v6752, 1.442695
  %v6759 = vpow.pop %v6758
  %v6760 = vmul.f32 %v6753, 1.442695
  %v6761 = vpow.pop %v6760
  %v6762 = vsub.f32 %v6755, 1.0
  %v6763 = vsub.f32 %v6757, 1.0
  %v6764 = vsub.f32 %v6759, 1.0
  %v6765 = vsub.f32 %v6761, 1.0
  %v6766 = vsel %vm6746, %v6742, %v6762
  %v6767 = vsel %vm6747, %v6743, %v6763
  %v6768 = vsel %vm6748, %v6744, %v6764
  %v6769 = vsel %vm6749, %v6745, %v6765
  %v6770 = vadd.f32 %v6498, %v6766
  %v6771 = vadd.f32 %v6499, %v6767
  %v6772 = vadd.f32 %v6500, %v6768
  %v6773 = vadd.f32 %v6501, %v6769
  %s6774 = scalar_lea.vmem %s1, 640
  %v6775 = vld [vmem:[%s6774] sm:$0xf]
  %v6776 = vld [vmem:[%s6774 + $0x4] sm:$0xf]
  %v6777 = vld [vmem:[%s6774 + $0x8] sm:$0xf]
  %v6778 = vld [vmem:[%s6774 + $0xc] sm:$0xf]
  %v6779 = vld [vmem:[%s6774 + $0x10] sm:$0xf]
  %v6780 = vld [vmem:[%s6774 + $0x14] sm:$0xf]
  %v6781 = vld [vmem:[%s6774 + $0x18] sm:$0xf]
  %v6782 = vld [vmem:[%s6774 + $0x1c] sm:$0xf]
  %s6783 = scalar_lea.vmem %s1, 672
  %v6784 = vld [vmem:[%s6783] sm:$0xf]
  %v6785 = vld [vmem:[%s6783 + $0x4] sm:$0xf]
  %v6786 = vld [vmem:[%s6783 + $0x8] sm:$0xf]
  %v6787 = vld [vmem:[%s6783 + $0xc] sm:$0xf]
  %v6788 = vld [vmem:[%s6783 + $0x10] sm:$0xf]
  %v6789 = vld [vmem:[%s6783 + $0x14] sm:$0xf]
  %v6790 = vld [vmem:[%s6783 + $0x18] sm:$0xf]
  %v6791 = vld [vmem:[%s6783 + $0x1c] sm:$0xf]
  %v6800 = vunpack.c.l.b16 %v6784
  %v6801 = vunpack.c.l.b16 %v6785
  %v6802 = vunpack.c.l.b16 %v6786
  %v6803 = vunpack.c.l.b16 %v6787
  %v6804 = vunpack.c.l.b16 %v6788
  %v6805 = vunpack.c.l.b16 %v6789
  %v6806 = vunpack.c.l.b16 %v6790
  %v6807 = vunpack.c.l.b16 %v6791
  %v6808 = vpack.c.b16 %v6801, %v6800
  %v6809 = vpack.c.b16 %v6803, %v6802
  %v6810 = vpack.c.b16 %v6805, %v6804
  %v6811 = vpack.c.b16 %v6807, %v6806
  %6816 = vmatprep.subr.bf16.mxu0 0
  %6817 = vmatpush1.bf16.msra.mxu0 %v6808
  %6818 = vmatprep.subr.bf16.mxu0 0
  %6819 = vmatpush1.bf16.msra.mxu0 %v6809
  %6820 = vmatprep.subr.bf16.mxu0 0
  %6821 = vmatpush1.bf16.msra.mxu0 %v6810
  %6822 = vmatprep.subr.bf16.mxu0 0
  %6823 = vmatpush1.bf16.msra.mxu0 %v6811
  %6824 = vmatprep.subr.bf16.mxu0 0
  %6825 = vmatpush1.bf16.msra.mxu0 0
  %6826 = vmatprep.subr.bf16.mxu0 0
  %6827 = vmatpush1.bf16.msra.mxu0 0
  %6828 = vmatprep.subr.bf16.mxu0 0
  %6829 = vmatpush1.bf16.msra.mxu0 0
  %6830 = vmatprep.subr.bf16.mxu0 0
  %6831 = vmatpush1.bf16.msra.mxu0 0
  %6832 = vmatprep.subr.bf16.mxu0 0
  %6833 = vmatpush1.bf16.msra.mxu0 0
  %6834 = vmatprep.subr.bf16.mxu0 0
  %6835 = vmatpush1.bf16.msra.mxu0 0
  %6836 = vmatprep.subr.bf16.mxu0 0
  %6837 = vmatpush1.bf16.msra.mxu0 0
  %6838 = vmatprep.subr.bf16.mxu0 0
  %6839 = vmatpush1.bf16.msra.mxu0 0
  %6840 = vmatprep.subr.bf16.mxu0 0
  %6841 = vmatpush1.bf16.msra.mxu0 0
  %6842 = vmatprep.subr.bf16.mxu0 0
  %6843 = vmatpush1.bf16.msra.mxu0 0
  %6844 = vmatprep.subr.bf16.mxu0 0
  %6845 = vmatpush1.bf16.msra.mxu0 0
  %6846 = vmatprep.subr.bf16.mxu0 0
  %6847 = vmatpush1.bf16.msra.mxu0 0
  %6848 = vmatprep.mubr.bf16.mxu0 0
  %6849 = vmatmul.mubr.bf16.gmra.mrb[0].mxu0 %v2132
  %v6850 = vpop.f32.mrb[0].mxu0
  %v6851 = vadd.f32 0.0, %v6850
  %v6852 = vpop.f32.mrb[0].mxu0
  %v6853 = vpop.f32.mrb[0].mxu0
  %v6854 = vadd.f32 0.0, %v6853
  %v6855 = vpop.f32.mrb[0].mxu0
  %6856 = vmatprep.mubr.bf16.mxu0 0
  %6857 = vmatmul.mubr.bf16.gmra.mrb[0].mxu0 %v2135
  %v6858 = vpop.f32.mrb[0].mxu0
  %v6859 = vadd.f32 0.0, %v6858
  %v6860 = vpop.f32.mrb[0].mxu0
  %v6861 = vpop.f32.mrb[0].mxu0
  %v6862 = vadd.f32 0.0, %v6861
  %v6863 = vpop.f32.mrb[0].mxu0
  %6864 = vmatprep.mubr.bf16.mxu0 0
  %6865 = vmatmul.mubr.bf16.gmra.mrb[0].mxu0 %v2138
  %v6866 = vpop.f32.mrb[0].mxu0
  %v6867 = vadd.f32 0.0, %v6866
  %v6868 = vpop.f32.mrb[0].mxu0
  %v6869 = vpop.f32.mrb[0].mxu0
  %v6870 = vadd.f32 0.0, %v6869
  %v6871 = vpop.f32.mrb[0].mxu0
  %6872 = vmatprep.mubr.bf16.mxu0 0
  %6873 = vmatmul.mubr.bf16.gmra.mrb[0].mxu0 %v2141
  %v6874 = vpop.f32.mrb[0].mxu0
  %v6875 = vadd.f32 0.0, %v6874
  %v6876 = vpop.f32.mrb[0].mxu0
  %v6877 = vpop.f32.mrb[0].mxu0
  %v6878 = vadd.f32 0.0, %v6877
  %v6879 = vpop.f32.mrb[0].mxu0
  %6880 = vmatprep.mubr.bf16.mxu0 0
  %6881 = vmatmul.mubr.bf16.gmra.mrb[0].mxu0 %v2144
  %v6882 = vpop.f32.mrb[0].mxu0
  %v6883 = vadd.f32 0.0, %v6882
  %v6884 = vpop.f32.mrb[0].mxu0
  %v6885 = vpop.f32.mrb[0].mxu0
  %v6886 = vadd.f32 0.0, %v6885
  %v6887 = vpop.f32.mrb[0].mxu0
  %6888 = vmatprep.mubr.bf16.mxu0 0
  %6889 = vmatmul.mubr.bf16.gmra.mrb[0].mxu0 %v2147
  %v6890 = vpop.f32.mrb[0].mxu0
  %v6891 = vadd.f32 0.0, %v6890
  %v6892 = vpop.f32.mrb[0].mxu0
  %v6893 = vpop.f32.mrb[0].mxu0
  %v6894 = vadd.f32 0.0, %v6893
  %v6895 = vpop.f32.mrb[0].mxu0
  %6896 = vmatprep.mubr.bf16.mxu0 0
  %6897 = vmatmul.mubr.bf16.gmra.mrb[0].mxu0 %v2150
  %v6898 = vpop.f32.mrb[0].mxu0
  %v6899 = vadd.f32 0.0, %v6898
  %v6900 = vpop.f32.mrb[0].mxu0
  %v6901 = vpop.f32.mrb[0].mxu0
  %v6902 = vadd.f32 0.0, %v6901
  %v6903 = vpop.f32.mrb[0].mxu0
  %6904 = vmatprep.mubr.bf16.mxu0 0
  %6905 = vmatmul.mubr.bf16.gmra.mrb[0].mxu0 %v2153
  %v6906 = vpop.f32.mrb[0].mxu0
  %v6907 = vadd.f32 0.0, %v6906
  %v6908 = vpop.f32.mrb[0].mxu0
  %v6909 = vpop.f32.mrb[0].mxu0
  %v6910 = vadd.f32 0.0, %v6909
  %v6911 = vpop.f32.mrb[0].mxu0
  %6912 = vmatprep.mubr.bf16.mxu0 0
  %6913 = vmatmul.mubr.bf16.gmra.mrb[0].mxu0 %v2302
  %v6914 = vpop.f32.mrb[0].mxu0
  %v6915 = vadd.f32 0.0, %v6914
  %v6916 = vpop.f32.mrb[0].mxu0
  %v6917 = vpop.f32.mrb[0].mxu0
  %v6918 = vadd.f32 0.0, %v6917
  %v6919 = vpop.f32.mrb[0].mxu0
  %6920 = vmatprep.mubr.bf16.mxu0 0
  %6921 = vmatmul.mubr.bf16.gmra.mrb[0].mxu0 %v2305
  %v6922 = vpop.f32.mrb[0].mxu0
  %v6923 = vadd.f32 0.0, %v6922
  %v6924 = vpop.f32.mrb[0].mxu0
  %v6925 = vpop.f32.mrb[0].mxu0
  %v6926 = vadd.f32 0.0, %v6925
  %v6927 = vpop.f32.mrb[0].mxu0
  %6928 = vmatprep.mubr.bf16.mxu0 0
  %6929 = vmatmul.mubr.bf16.gmra.mrb[0].mxu0 %v2308
  %v6930 = vpop.f32.mrb[0].mxu0
  %v6931 = vadd.f32 0.0, %v6930
  %v6932 = vpop.f32.mrb[0].mxu0
  %v6933 = vpop.f32.mrb[0].mxu0
  %v6934 = vadd.f32 0.0, %v6933
  %v6935 = vpop.f32.mrb[0].mxu0
  %6936 = vmatprep.mubr.bf16.mxu0 0
  %6937 = vmatmul.mubr.bf16.gmra.mrb[0].mxu0 %v2311
  %v6938 = vpop.f32.mrb[0].mxu0
  %v6939 = vadd.f32 0.0, %v6938
  %v6940 = vpop.f32.mrb[0].mxu0
  %v6941 = vpop.f32.mrb[0].mxu0
  %v6942 = vadd.f32 0.0, %v6941
  %v6943 = vpop.f32.mrb[0].mxu0
  %6944 = vmatprep.mubr.bf16.mxu0 0
  %6945 = vmatmul.mubr.bf16.gmra.mrb[0].mxu0 %v2460
  %v6946 = vpop.f32.mrb[0].mxu0
  %v6947 = vadd.f32 0.0, %v6946
  %v6948 = vpop.f32.mrb[0].mxu0
  %v6949 = vpop.f32.mrb[0].mxu0
  %v6950 = vadd.f32 0.0, %v6949
  %v6951 = vpop.f32.mrb[0].mxu0
  %6952 = vmatprep.mubr.bf16.mxu0 0
  %6953 = vmatmul.mubr.bf16.gmra.mrb[0].mxu0 %v2463
  %v6954 = vpop.f32.mrb[0].mxu0
  %v6955 = vadd.f32 0.0, %v6954
  %v6956 = vpop.f32.mrb[0].mxu0
  %v6957 = vpop.f32.mrb[0].mxu0
  %v6958 = vadd.f32 0.0, %v6957
  %v6959 = vpop.f32.mrb[0].mxu0
  %6960 = vmatprep.mubr.bf16.mxu0 0
  %6961 = vmatmul.mubr.bf16.gmra.mrb[0].mxu0 %v2466
  %v6962 = vpop.f32.mrb[0].mxu0
  %v6963 = vadd.f32 0.0, %v6962
  %v6964 = vpop.f32.mrb[0].mxu0
  %v6965 = vpop.f32.mrb[0].mxu0
  %v6966 = vadd.f32 0.0, %v6965
  %v6967 = vpop.f32.mrb[0].mxu0
  %6968 = vmatprep.mubr.bf16.mxu0 0
  %6969 = vmatmul.mubr.bf16.gmra.mrb[0].mxu0 %v2469
  %v6970 = vpop.f32.mrb[0].mxu0
  %v6971 = vadd.f32 0.0, %v6970
  %v6972 = vpop.f32.mrb[0].mxu0
  %v6973 = vpop.f32.mrb[0].mxu0
  %v6974 = vadd.f32 0.0, %v6973
  %v6975 = vpop.f32.mrb[0].mxu0
  %6976 = vdwg.mxu0
  %v6985 = vunpack.c.l.b16 %v6775
  %v6986 = vunpack.c.l.b16 %v6776
  %v6987 = vunpack.c.l.b16 %v6777
  %v6988 = vunpack.c.l.b16 %v6778
  %v6989 = vunpack.c.l.b16 %v6779
  %v6990 = vunpack.c.l.b16 %v6780
  %v6991 = vunpack.c.l.b16 %v6781
  %v6992 = vunpack.c.l.b16 %v6782
  %v6993 = vpack.c.b16 %v6986, %v6985
  %v6994 = vpack.c.b16 %v6988, %v6987
  %v6995 = vpack.c.b16 %v6990, %v6989
  %v6996 = vpack.c.b16 %v6992, %v6991
  %7001 = vmatprep.subr.bf16.mxu0 0
  %7002 = vmatpush1.bf16.msra.mxu0 %v6993
  %7003 = vmatprep.subr.bf16.mxu0 0
  %7004 = vmatpush1.bf16.msra.mxu0 %v6994
  %7005 = vmatprep.subr.bf16.mxu0 0
  %7006 = vmatpush1.bf16.msra.mxu0 %v6995
  %7007 = vmatprep.subr.bf16.mxu0 0
  %7008 = vmatpush1.bf16.msra.mxu0 %v6996
  %7009 = vmatprep.subr.bf16.mxu0 0
  %7010 = vmatpush1.bf16.msra.mxu0 0
  %7011 = vmatprep.subr.bf16.mxu0 0
  %7012 = vmatpush1.bf16.msra.mxu0 0
  %7013 = vmatprep.subr.bf16.mxu0 0
  %7014 = vmatpush1.bf16.msra.mxu0 0
  %7015 = vmatprep.subr.bf16.mxu0 0
  %7016 = vmatpush1.bf16.msra.mxu0 0
  %7017 = vmatprep.subr.bf16.mxu0 0
  %7018 = vmatpush1.bf16.msra.mxu0 0
  %7019 = vmatprep.subr.bf16.mxu0 0
  %7020 = vmatpush1.bf16.msra.mxu0 0
  %7021 = vmatprep.subr.bf16.mxu0 0
  %7022 = vmatpush1.bf16.msra.mxu0 0
  %7023 = vmatprep.subr.bf16.mxu0 0
  %7024 = vmatpush1.bf16.msra.mxu0 0
  %7025 = vmatprep.subr.bf16.mxu0 0
  %7026 = vmatpush1.bf16.msra.mxu0 0
  %7027 = vmatprep.subr.bf16.mxu0 0
  %7028 = vmatpush1.bf16.msra.mxu0 0
  %7029 = vmatprep.subr.bf16.mxu0 0
  %7030 = vmatpush1.bf16.msra.mxu0 0
  %7031 = vmatprep.subr.bf16.mxu0 0
  %7032 = vmatpush1.bf16.msra.mxu0 0
  %7033 = vmatprep.mubr.bf16.mxu0 0
  %7034 = vmatmul.mubr.bf16.gmra.mrb[0].mxu0 %v1832
  %v7035 = vpop.f32.mrb[0].mxu0
  %v7036 = vadd.f32 %v6851, %v7035
  %v7037 = vpop.f32.mrb[0].mxu0
  %v7038 = vpop.f32.mrb[0].mxu0
  %v7039 = vadd.f32 %v6854, %v7038
  %v7040 = vpop.f32.mrb[0].mxu0
  %7041 = vmatprep.mubr.bf16.mxu0 0
  %7042 = vmatmul.mubr.bf16.gmra.mrb[0].mxu0 %v1835
  %v7043 = vpop.f32.mrb[0].mxu0
  %v7044 = vadd.f32 %v6859, %v7043
  %v7045 = vpop.f32.mrb[0].mxu0
  %v7046 = vpop.f32.mrb[0].mxu0
  %v7047 = vadd.f32 %v6862, %v7046
  %v7048 = vpop.f32.mrb[0].mxu0
  %7049 = vmatprep.mubr.bf16.mxu0 0
  %7050 = vmatmul.mubr.bf16.gmra.mrb[0].mxu0 %v1838
  %v7051 = vpop.f32.mrb[0].mxu0
  %v7052 = vadd.f32 %v6867, %v7051
  %v7053 = vpop.f32.mrb[0].mxu0
  %v7054 = vpop.f32.mrb[0].mxu0
  %v7055 = vadd.f32 %v6870, %v7054
  %v7056 = vpop.f32.mrb[0].mxu0
  %7057 = vmatprep.mubr.bf16.mxu0 0
  %7058 = vmatmul.mubr.bf16.gmra.mrb[0].mxu0 %v1841
  %v7059 = vpop.f32.mrb[0].mxu0
  %v7060 = vadd.f32 %v6875, %v7059
  %v7061 = vpop.f32.mrb[0].mxu0
  %v7062 = vpop.f32.mrb[0].mxu0
  %v7063 = vadd.f32 %v6878, %v7062
  %v7064 = vpop.f32.mrb[0].mxu0
  %7065 = vmatprep.mubr.bf16.mxu0 0
  %7066 = vmatmul.mubr.bf16.gmra.mrb[0].mxu0 %v1687
  %v7067 = vpop.f32.mrb[0].mxu0
  %v7068 = vadd.f32 %v6883, %v7067
  %v7069 = vpop.f32.mrb[0].mxu0
  %v7070 = vpop.f32.mrb[0].mxu0
  %v7071 = vadd.f32 %v6886, %v7070
  %v7072 = vpop.f32.mrb[0].mxu0
  %7073 = vmatprep.mubr.bf16.mxu0 0
  %7074 = vmatmul.mubr.bf16.gmra.mrb[0].mxu0 %v1690
  %v7075 = vpop.f32.mrb[0].mxu0
  %v7076 = vadd.f32 %v6891, %v7075
  %v7077 = vpop.f32.mrb[0].mxu0
  %v7078 = vpop.f32.mrb[0].mxu0
  %v7079 = vadd.f32 %v6894, %v7078
  %v7080 = vpop.f32.mrb[0].mxu0
  %7081 = vmatprep.mubr.bf16.mxu0 0
  %7082 = vmatmul.mubr.bf16.gmra.mrb[0].mxu0 %v1693
  %v7083 = vpop.f32.mrb[0].mxu0
  %v7084 = vadd.f32 %v6899, %v7083
  %v7085 = vpop.f32.mrb[0].mxu0
  %v7086 = vpop.f32.mrb[0].mxu0
  %v7087 = vadd.f32 %v6902, %v7086
  %v7088 = vpop.f32.mrb[0].mxu0
  %7089 = vmatprep.mubr.bf16.mxu0 0
  %7090 = vmatmul.mubr.bf16.gmra.mrb[0].mxu0 %v1696
  %v7091 = vpop.f32.mrb[0].mxu0
  %v7092 = vadd.f32 %v6907, %v7091
  %v7093 = vpop.f32.mrb[0].mxu0
  %v7094 = vpop.f32.mrb[0].mxu0
  %v7095 = vadd.f32 %v6910, %v7094
  %v7096 = vpop.f32.mrb[0].mxu0
  %7097 = vmatprep.mubr.bf16.mxu0 0
  %7098 = vmatmul.mubr.bf16.gmra.mrb[0].mxu0 %v1699
  %v7099 = vpop.f32.mrb[0].mxu0
  %v7100 = vadd.f32 %v6915, %v7099
  %v7101 = vpop.f32.mrb[0].mxu0
  %v7102 = vpop.f32.mrb[0].mxu0
  %v7103 = vadd.f32 %v6918, %v7102
  %v7104 = vpop.f32.mrb[0].mxu0
  %7105 = vmatprep.mubr.bf16.mxu0 0
  %7106 = vmatmul.mubr.bf16.gmra.mrb[0].mxu0 %v1702
  %v7107 = vpop.f32.mrb[0].mxu0
  %v7108 = vadd.f32 %v6923, %v7107
  %v7109 = vpop.f32.mrb[0].mxu0
  %v7110 = vpop.f32.mrb[0].mxu0
  %v7111 = vadd.f32 %v6926, %v7110
  %v7112 = vpop.f32.mrb[0].mxu0
  %7113 = vmatprep.mubr.bf16.mxu0 0
  %7114 = vmatmul.mubr.bf16.gmra.mrb[0].mxu0 %v1705
  %v7115 = vpop.f32.mrb[0].mxu0
  %v7116 = vadd.f32 %v6931, %v7115
  %v7117 = vpop.f32.mrb[0].mxu0
  %v7118 = vpop.f32.mrb[0].mxu0
  %v7119 = vadd.f32 %v6934, %v7118
  %v7120 = vpop.f32.mrb[0].mxu0
  %7121 = vmatprep.mubr.bf16.mxu0 0
  %7122 = vmatmul.mubr.bf16.gmra.mrb[0].mxu0 %v1708
  %v7123 = vpop.f32.mrb[0].mxu0
  %v7124 = vadd.f32 %v6939, %v7123
  %v7125 = vpop.f32.mrb[0].mxu0
  %v7126 = vpop.f32.mrb[0].mxu0
  %v7127 = vadd.f32 %v6942, %v7126
  %v7128 = vpop.f32.mrb[0].mxu0
  %7129 = vmatprep.mubr.bf16.mxu0 0
  %7130 = vmatmul.mubr.bf16.gmra.mrb[0].mxu0 %v1974
  %v7131 = vpop.f32.mrb[0].mxu0
  %v7132 = vadd.f32 %v6947, %v7131
  %v7133 = vpop.f32.mrb[0].mxu0
  %v7134 = vpop.f32.mrb[0].mxu0
  %v7135 = vadd.f32 %v6950, %v7134
  %v7136 = vpop.f32.mrb[0].mxu0
  %7137 = vmatprep.mubr.bf16.mxu0 0
  %7138 = vmatmul.mubr.bf16.gmra.mrb[0].mxu0 %v1977
  %v7139 = vpop.f32.mrb[0].mxu0
  %v7140 = vadd.f32 %v6955, %v7139
  %v7141 = vpop.f32.mrb[0].mxu0
  %v7142 = vpop.f32.mrb[0].mxu0
  %v7143 = vadd.f32 %v6958, %v7142
  %v7144 = vpop.f32.mrb[0].mxu0
  %7145 = vmatprep.mubr.bf16.mxu0 0
  %7146 = vmatmul.mubr.bf16.gmra.mrb[0].mxu0 %v1980
  %v7147 = vpop.f32.mrb[0].mxu0
  %v7148 = vadd.f32 %v6963, %v7147
  %v7149 = vpop.f32.mrb[0].mxu0
  %v7150 = vpop.f32.mrb[0].mxu0
  %v7151 = vadd.f32 %v6966, %v7150
  %v7152 = vpop.f32.mrb[0].mxu0
  %7153 = vmatprep.mubr.bf16.mxu0 0
  %7154 = vmatmul.mubr.bf16.gmra.mrb[0].mxu0 %v1983
  %v7155 = vpop.f32.mrb[0].mxu0
  %v7156 = vadd.f32 %v6971, %v7155
  %v7157 = vpop.f32.mrb[0].mxu0
  %v7158 = vpop.f32.mrb[0].mxu0
  %v7159 = vadd.f32 %v6974, %v7158
  %v7160 = vpop.f32.mrb[0].mxu0
  %7161 = vdwg.mxu0
  %s7162 = scalar_lea.vmem %s1, 704
  %v7163 = vld [vmem:[%s7162] sm:$0xf]
  %v7164 = vld [vmem:[%s7162 + $0x4] sm:$0xf]
  %v7165 = vld [vmem:[%s7162 + $0x8] sm:$0xf]
  %v7166 = vld [vmem:[%s7162 + $0xc] sm:$0xf]
  %v7167 = vld [vmem:[%s7162 + $0x10] sm:$0xf]
  %v7168 = vld [vmem:[%s7162 + $0x14] sm:$0xf]
  %v7169 = vld [vmem:[%s7162 + $0x18] sm:$0xf]
  %v7170 = vld [vmem:[%s7162 + $0x1c] sm:$0xf]
  %v7179 = vunpack.c.l.b16 %v7163
  %v7180 = vunpack.c.l.b16 %v7164
  %v7181 = vunpack.c.l.b16 %v7165
  %v7182 = vunpack.c.l.b16 %v7166
  %v7183 = vunpack.c.l.b16 %v7167
  %v7184 = vunpack.c.l.b16 %v7168
  %v7185 = vunpack.c.l.b16 %v7169
  %v7186 = vunpack.c.l.b16 %v7170
  %v7187 = vpack.c.b16 %v7180, %v7179
  %v7188 = vpack.c.b16 %v7182, %v7181
  %v7189 = vpack.c.b16 %v7184, %v7183
  %v7190 = vpack.c.b16 %v7186, %v7185
  %7195 = vmatprep.subr.bf16.mxu0 0
  %7196 = vmatpush1.bf16.msra.mxu0 %v7187
  %7197 = vmatprep.subr.bf16.mxu0 0
  %7198 = vmatpush1.bf16.msra.mxu0 %v7188
  %7199 = vmatprep.subr.bf16.mxu0 0
  %7200 = vmatpush1.bf16.msra.mxu0 %v7189
  %7201 = vmatprep.subr.bf16.mxu0 0
  %7202 = vmatpush1.bf16.msra.mxu0 %v7190
  %7203 = vmatprep.subr.bf16.mxu0 0
  %7204 = vmatpush1.bf16.msra.mxu0 0
  %7205 = vmatprep.subr.bf16.mxu0 0
  %7206 = vmatpush1.bf16.msra.mxu0 0
  %7207 = vmatprep.subr.bf16.mxu0 0
  %7208 = vmatpush1.bf16.msra.mxu0 0
  %7209 = vmatprep.subr.bf16.mxu0 0
  %7210 = vmatpush1.bf16.msra.mxu0 0
  %7211 = vmatprep.subr.bf16.mxu0 0
  %7212 = vmatpush1.bf16.msra.mxu0 0
  %7213 = vmatprep.subr.bf16.mxu0 0
  %7214 = vmatpush1.bf16.msra.mxu0 0
  %7215 = vmatprep.subr.bf16.mxu0 0
  %7216 = vmatpush1.bf16.msra.mxu0 0
  %7217 = vmatprep.subr.bf16.mxu0 0
  %7218 = vmatpush1.bf16.msra.mxu0 0
  %7219 = vmatprep.subr.bf16.mxu0 0
  %7220 = vmatpush1.bf16.msra.mxu0 0
  %7221 = vmatprep.subr.bf16.mxu0 0
  %7222 = vmatpush1.bf16.msra.mxu0 0
  %7223 = vmatprep.subr.bf16.mxu0 0
  %7224 = vmatpush1.bf16.msra.mxu0 0
  %7225 = vmatprep.subr.bf16.mxu0 0
  %7226 = vmatpush1.bf16.msra.mxu0 0
  %7227 = vmatprep.mubr.bf16.mxu0 0
  %7228 = vmatmul.mubr.bf16.gmra.mrb[0].mxu0 %v2618
  %v7229 = vpop.f32.mrb[0].mxu0
  %v7230 = vadd.f32 0.0, %v7229
  %v7231 = vpop.f32.mrb[0].mxu0
  %v7232 = vpop.f32.mrb[0].mxu0
  %v7233 = vadd.f32 0.0, %v7232
  %v7234 = vpop.f32.mrb[0].mxu0
  %7235 = vmatprep.mubr.bf16.mxu0 0
  %7236 = vmatmul.mubr.bf16.gmra.mrb[0].mxu0 %v2621
  %v7237 = vpop.f32.mrb[0].mxu0
  %v7238 = vadd.f32 0.0, %v7237
  %v7239 = vpop.f32.mrb[0].mxu0
  %v7240 = vpop.f32.mrb[0].mxu0
  %v7241 = vadd.f32 0.0, %v7240
  %v7242 = vpop.f32.mrb[0].mxu0
  %7243 = vmatprep.mubr.bf16.mxu0 0
  %7244 = vmatmul.mubr.bf16.gmra.mrb[0].mxu0 %v2624
  %v7245 = vpop.f32.mrb[0].mxu0
  %v7246 = vadd.f32 0.0, %v7245
  %v7247 = vpop.f32.mrb[0].mxu0
  %v7248 = vpop.f32.mrb[0].mxu0
  %v7249 = vadd.f32 0.0, %v7248
  %v7250 = vpop.f32.mrb[0].mxu0
  %7251 = vmatprep.mubr.bf16.mxu0 0
  %7252 = vmatmul.mubr.bf16.gmra.mrb[0].mxu0 %v2627
  %v7253 = vpop.f32.mrb[0].mxu0
  %v7254 = vadd.f32 0.0, %v7253
  %v7255 = vpop.f32.mrb[0].mxu0
  %v7256 = vpop.f32.mrb[0].mxu0
  %v7257 = vadd.f32 0.0, %v7256
  %v7258 = vpop.f32.mrb[0].mxu0
  %7259 = vmatprep.mubr.bf16.mxu0 0
  %7260 = vmatmul.mubr.bf16.gmra.mrb[0].mxu0 %v2630
  %v7261 = vpop.f32.mrb[0].mxu0
  %v7262 = vadd.f32 0.0, %v7261
  %v7263 = vpop.f32.mrb[0].mxu0
  %v7264 = vpop.f32.mrb[0].mxu0
  %v7265 = vadd.f32 0.0, %v7264
  %v7266 = vpop.f32.mrb[0].mxu0
  %7267 = vmatprep.mubr.bf16.mxu0 0
  %7268 = vmatmul.mubr.bf16.gmra.mrb[0].mxu0 %v2633
  %v7269 = vpop.f32.mrb[0].mxu0
  %v7270 = vadd.f32 0.0, %v7269
  %v7271 = vpop.f32.mrb[0].mxu0
  %v7272 = vpop.f32.mrb[0].mxu0
  %v7273 = vadd.f32 0.0, %v7272
  %v7274 = vpop.f32.mrb[0].mxu0
  %7275 = vmatprep.mubr.bf16.mxu0 0
  %7276 = vmatmul.mubr.bf16.gmra.mrb[0].mxu0 %v2636
  %v7277 = vpop.f32.mrb[0].mxu0
  %v7278 = vadd.f32 0.0, %v7277
  %v7279 = vpop.f32.mrb[0].mxu0
  %v7280 = vpop.f32.mrb[0].mxu0
  %v7281 = vadd.f32 0.0, %v7280
  %v7282 = vpop.f32.mrb[0].mxu0
  %7283 = vmatprep.mubr.bf16.mxu0 0
  %7284 = vmatmul.mubr.bf16.gmra.mrb[0].mxu0 %v2639
  %v7285 = vpop.f32.mrb[0].mxu0
  %v7286 = vadd.f32 0.0, %v7285
  %v7287 = vpop.f32.mrb[0].mxu0
  %v7288 = vpop.f32.mrb[0].mxu0
  %v7289 = vadd.f32 0.0, %v7288
  %v7290 = vpop.f32.mrb[0].mxu0
  %7291 = vmatprep.mubr.bf16.mxu0 0
  %7292 = vmatmul.mubr.bf16.gmra.mrb[0].mxu0 %v2788
  %v7293 = vpop.f32.mrb[0].mxu0
  %v7294 = vadd.f32 0.0, %v7293
  %v7295 = vpop.f32.mrb[0].mxu0
  %v7296 = vpop.f32.mrb[0].mxu0
  %v7297 = vadd.f32 0.0, %v7296
  %v7298 = vpop.f32.mrb[0].mxu0
  %7299 = vmatprep.mubr.bf16.mxu0 0
  %7300 = vmatmul.mubr.bf16.gmra.mrb[0].mxu0 %v2791
  %v7301 = vpop.f32.mrb[0].mxu0
  %v7302 = vadd.f32 0.0, %v7301
  %v7303 = vpop.f32.mrb[0].mxu0
  %v7304 = vpop.f32.mrb[0].mxu0
  %v7305 = vadd.f32 0.0, %v7304
  %v7306 = vpop.f32.mrb[0].mxu0
  %7307 = vmatprep.mubr.bf16.mxu0 0
  %7308 = vmatmul.mubr.bf16.gmra.mrb[0].mxu0 %v2794
  %v7309 = vpop.f32.mrb[0].mxu0
  %v7310 = vadd.f32 0.0, %v7309
  %v7311 = vpop.f32.mrb[0].mxu0
  %v7312 = vpop.f32.mrb[0].mxu0
  %v7313 = vadd.f32 0.0, %v7312
  %v7314 = vpop.f32.mrb[0].mxu0
  %7315 = vmatprep.mubr.bf16.mxu0 0
  %7316 = vmatmul.mubr.bf16.gmra.mrb[0].mxu0 %v2797
  %v7317 = vpop.f32.mrb[0].mxu0
  %v7318 = vadd.f32 0.0, %v7317
  %v7319 = vpop.f32.mrb[0].mxu0
  %v7320 = vpop.f32.mrb[0].mxu0
  %v7321 = vadd.f32 0.0, %v7320
  %v7322 = vpop.f32.mrb[0].mxu0
  %7323 = vmatprep.mubr.bf16.mxu0 0
  %7324 = vmatmul.mubr.bf16.gmra.mrb[0].mxu0 %v2946
  %v7325 = vpop.f32.mrb[0].mxu0
  %v7326 = vadd.f32 0.0, %v7325
  %v7327 = vpop.f32.mrb[0].mxu0
  %v7328 = vpop.f32.mrb[0].mxu0
  %v7329 = vadd.f32 0.0, %v7328
  %v7330 = vpop.f32.mrb[0].mxu0
  %7331 = vmatprep.mubr.bf16.mxu0 0
  %7332 = vmatmul.mubr.bf16.gmra.mrb[0].mxu0 %v2949
  %v7333 = vpop.f32.mrb[0].mxu0
  %v7334 = vadd.f32 0.0, %v7333
  %v7335 = vpop.f32.mrb[0].mxu0
  %v7336 = vpop.f32.mrb[0].mxu0
  %v7337 = vadd.f32 0.0, %v7336
  %v7338 = vpop.f32.mrb[0].mxu0
  %7339 = vmatprep.mubr.bf16.mxu0 0
  %7340 = vmatmul.mubr.bf16.gmra.mrb[0].mxu0 %v2952
  %v7341 = vpop.f32.mrb[0].mxu0
  %v7342 = vadd.f32 0.0, %v7341
  %v7343 = vpop.f32.mrb[0].mxu0
  %v7344 = vpop.f32.mrb[0].mxu0
  %v7345 = vadd.f32 0.0, %v7344
  %v7346 = vpop.f32.mrb[0].mxu0
  %7347 = vmatprep.mubr.bf16.mxu0 0
  %7348 = vmatmul.mubr.bf16.gmra.mrb[0].mxu0 %v2955
  %v7349 = vpop.f32.mrb[0].mxu0
  %v7350 = vadd.f32 0.0, %v7349
  %v7351 = vpop.f32.mrb[0].mxu0
  %v7352 = vpop.f32.mrb[0].mxu0
  %v7353 = vadd.f32 0.0, %v7352
  %v7354 = vpop.f32.mrb[0].mxu0
  %7355 = vdwg.mxu0
  %v7356 = vadd.f32 %v7036, %v7230
  %v7357 = vadd.f32 %v7039, %v7233
  %v7358 = vadd.f32 %v7044, %v7238
  %v7359 = vadd.f32 %v7047, %v7241
  %v7360 = vadd.f32 %v7052, %v7246
  %v7361 = vadd.f32 %v7055, %v7249
  %v7362 = vadd.f32 %v7060, %v7254
  %v7363 = vadd.f32 %v7063, %v7257
  %v7364 = vadd.f32 %v7068, %v7262
  %v7365 = vadd.f32 %v7071, %v7265
  %v7366 = vadd.f32 %v7076, %v7270
  %v7367 = vadd.f32 %v7079, %v7273
  %v7368 = vadd.f32 %v7084, %v7278
  %v7369 = vadd.f32 %v7087, %v7281
  %v7370 = vadd.f32 %v7092, %v7286
  %v7371 = vadd.f32 %v7095, %v7289
  %v7372 = vadd.f32 %v7100, %v7294
  %v7373 = vadd.f32 %v7103, %v7297
  %v7374 = vadd.f32 %v7108, %v7302
  %v7375 = vadd.f32 %v7111, %v7305
  %v7376 = vadd.f32 %v7116, %v7310
  %v7377 = vadd.f32 %v7119, %v7313
  %v7378 = vadd.f32 %v7124, %v7318
  %v7379 = vadd.f32 %v7127, %v7321
  %v7380 = vadd.f32 %v7132, %v7326
  %v7381 = vadd.f32 %v7135, %v7329
  %v7382 = vadd.f32 %v7140, %v7334
  %v7383 = vadd.f32 %v7143, %v7337
  %v7384 = vadd.f32 %v7148, %v7342
  %v7385 = vadd.f32 %v7151, %v7345
  %v7386 = vadd.f32 %v7156, %v7350
  %v7387 = vadd.f32 %v7159, %v7353
  %s7388 = scalar_lea.vmem %s1, 736
  %v7389 = vld [vmem:[%s7388] sm:$0xf]
  %v7390 = vld [vmem:[%s7388 + $0x4] sm:$0xf]
  %v7391 = vld [vmem:[%s7388 + $0x8] sm:$0xf]
  %v7392 = vld [vmem:[%s7388 + $0xc] sm:$0xf]
  %v7393 = vld [vmem:[%s7388 + $0x10] sm:$0xf]
  %v7394 = vld [vmem:[%s7388 + $0x14] sm:$0xf]
  %v7395 = vld [vmem:[%s7388 + $0x18] sm:$0xf]
  %v7396 = vld [vmem:[%s7388 + $0x1c] sm:$0xf]
  %v7405 = vunpack.c.l.b16 %v7389
  %v7406 = vunpack.c.l.b16 %v7390
  %v7407 = vunpack.c.l.b16 %v7391
  %v7408 = vunpack.c.l.b16 %v7392
  %v7409 = vunpack.c.l.b16 %v7393
  %v7410 = vunpack.c.l.b16 %v7394
  %v7411 = vunpack.c.l.b16 %v7395
  %v7412 = vunpack.c.l.b16 %v7396
  %v7413 = vpack.c.b16 %v7406, %v7405
  %v7414 = vpack.c.b16 %v7408, %v7407
  %v7415 = vpack.c.b16 %v7410, %v7409
  %v7416 = vpack.c.b16 %v7412, %v7411
  %7421 = vmatprep.subr.bf16.mxu0 0
  %7422 = vmatpush1.bf16.msra.mxu0 %v7413
  %7423 = vmatprep.subr.bf16.mxu0 0
  %7424 = vmatpush1.bf16.msra.mxu0 %v7414
  %7425 = vmatprep.subr.bf16.mxu0 0
  %7426 = vmatpush1.bf16.msra.mxu0 %v7415
  %7427 = vmatprep.subr.bf16.mxu0 0
  %7428 = vmatpush1.bf16.msra.mxu0 %v7416
  %7429 = vmatprep.subr.bf16.mxu0 0
  %7430 = vmatpush1.bf16.msra.mxu0 0
  %7431 = vmatprep.subr.bf16.mxu0 0
  %7432 = vmatpush1.bf16.msra.mxu0 0
  %7433 = vmatprep.subr.bf16.mxu0 0
  %7434 = vmatpush1.bf16.msra.mxu0 0
  %7435 = vmatprep.subr.bf16.mxu0 0
  %7436 = vmatpush1.bf16.msra.mxu0 0
  %7437 = vmatprep.subr.bf16.mxu0 0
  %7438 = vmatpush1.bf16.msra.mxu0 0
  %7439 = vmatprep.subr.bf16.mxu0 0
  %7440 = vmatpush1.bf16.msra.mxu0 0
  %7441 = vmatprep.subr.bf16.mxu0 0
  %7442 = vmatpush1.bf16.msra.mxu0 0
  %7443 = vmatprep.subr.bf16.mxu0 0
  %7444 = vmatpush1.bf16.msra.mxu0 0
  %7445 = vmatprep.subr.bf16.mxu0 0
  %7446 = vmatpush1.bf16.msra.mxu0 0
  %7447 = vmatprep.subr.bf16.mxu0 0
  %7448 = vmatpush1.bf16.msra.mxu0 0
  %7449 = vmatprep.subr.bf16.mxu0 0
  %7450 = vmatpush1.bf16.msra.mxu0 0
  %7451 = vmatprep.subr.bf16.mxu0 0
  %7452 = vmatpush1.bf16.msra.mxu0 0
  %7453 = vmatprep.mubr.bf16.mxu0 0
  %7454 = vmatmul.mubr.bf16.gmra.mrb[0].mxu0 %v3849
  %v7455 = vpop.f32.mrb[0].mxu0
  %v7456 = vadd.f32 0.0, %v7455
  %v7457 = vpop.f32.mrb[0].mxu0
  %v7458 = vpop.f32.mrb[0].mxu0
  %v7459 = vadd.f32 0.0, %v7458
  %v7460 = vpop.f32.mrb[0].mxu0
  %7461 = vmatprep.mubr.bf16.mxu0 0
  %7462 = vmatmul.mubr.bf16.gmra.mrb[0].mxu0 %v3852
  %v7463 = vpop.f32.mrb[0].mxu0
  %v7464 = vadd.f32 0.0, %v7463
  %v7465 = vpop.f32.mrb[0].mxu0
  %v7466 = vpop.f32.mrb[0].mxu0
  %v7467 = vadd.f32 0.0, %v7466
  %v7468 = vpop.f32.mrb[0].mxu0
  %7469 = vmatprep.mubr.bf16.mxu0 0
  %7470 = vmatmul.mubr.bf16.gmra.mrb[0].mxu0 %v3855
  %v7471 = vpop.f32.mrb[0].mxu0
  %v7472 = vadd.f32 0.0, %v7471
  %v7473 = vpop.f32.mrb[0].mxu0
  %v7474 = vpop.f32.mrb[0].mxu0
  %v7475 = vadd.f32 0.0, %v7474
  %v7476 = vpop.f32.mrb[0].mxu0
  %7477 = vmatprep.mubr.bf16.mxu0 0
  %7478 = vmatmul.mubr.bf16.gmra.mrb[0].mxu0 %v3858
  %v7479 = vpop.f32.mrb[0].mxu0
  %v7480 = vadd.f32 0.0, %v7479
  %v7481 = vpop.f32.mrb[0].mxu0
  %v7482 = vpop.f32.mrb[0].mxu0
  %v7483 = vadd.f32 0.0, %v7482
  %v7484 = vpop.f32.mrb[0].mxu0
  %7485 = vmatprep.mubr.bf16.mxu0 0
  %7486 = vmatmul.mubr.bf16.gmra.mrb[0].mxu0 %v3861
  %v7487 = vpop.f32.mrb[0].mxu0
  %v7488 = vadd.f32 0.0, %v7487
  %v7489 = vpop.f32.mrb[0].mxu0
  %v7490 = vpop.f32.mrb[0].mxu0
  %v7491 = vadd.f32 0.0, %v7490
  %v7492 = vpop.f32.mrb[0].mxu0
  %7493 = vmatprep.mubr.bf16.mxu0 0
  %7494 = vmatmul.mubr.bf16.gmra.mrb[0].mxu0 %v3864
  %v7495 = vpop.f32.mrb[0].mxu0
  %v7496 = vadd.f32 0.0, %v7495
  %v7497 = vpop.f32.mrb[0].mxu0
  %v7498 = vpop.f32.mrb[0].mxu0
  %v7499 = vadd.f32 0.0, %v7498
  %v7500 = vpop.f32.mrb[0].mxu0
  %7501 = vmatprep.mubr.bf16.mxu0 0
  %7502 = vmatmul.mubr.bf16.gmra.mrb[0].mxu0 %v3867
  %v7503 = vpop.f32.mrb[0].mxu0
  %v7504 = vadd.f32 0.0, %v7503
  %v7505 = vpop.f32.mrb[0].mxu0
  %v7506 = vpop.f32.mrb[0].mxu0
  %v7507 = vadd.f32 0.0, %v7506
  %v7508 = vpop.f32.mrb[0].mxu0
  %7509 = vmatprep.mubr.bf16.mxu0 0
  %7510 = vmatmul.mubr.bf16.gmra.mrb[0].mxu0 %v3870
  %v7511 = vpop.f32.mrb[0].mxu0
  %v7512 = vadd.f32 0.0, %v7511
  %v7513 = vpop.f32.mrb[0].mxu0
  %v7514 = vpop.f32.mrb[0].mxu0
  %v7515 = vadd.f32 0.0, %v7514
  %v7516 = vpop.f32.mrb[0].mxu0
  %7517 = vmatprep.mubr.bf16.mxu0 0
  %7518 = vmatmul.mubr.bf16.gmra.mrb[0].mxu0 %v3986
  %v7519 = vpop.f32.mrb[0].mxu0
  %v7520 = vadd.f32 0.0, %v7519
  %v7521 = vpop.f32.mrb[0].mxu0
  %v7522 = vpop.f32.mrb[0].mxu0
  %v7523 = vadd.f32 0.0, %v7522
  %v7524 = vpop.f32.mrb[0].mxu0
  %7525 = vmatprep.mubr.bf16.mxu0 0
  %7526 = vmatmul.mubr.bf16.gmra.mrb[0].mxu0 %v3989
  %v7527 = vpop.f32.mrb[0].mxu0
  %v7528 = vadd.f32 0.0, %v7527
  %v7529 = vpop.f32.mrb[0].mxu0
  %v7530 = vpop.f32.mrb[0].mxu0
  %v7531 = vadd.f32 0.0, %v7530
  %v7532 = vpop.f32.mrb[0].mxu0
  %7533 = vmatprep.mubr.bf16.mxu0 0
  %7534 = vmatmul.mubr.bf16.gmra.mrb[0].mxu0 %v3992
  %v7535 = vpop.f32.mrb[0].mxu0
  %v7536 = vadd.f32 0.0, %v7535
  %v7537 = vpop.f32.mrb[0].mxu0
  %v7538 = vpop.f32.mrb[0].mxu0
  %v7539 = vadd.f32 0.0, %v7538
  %v7540 = vpop.f32.mrb[0].mxu0
  %7541 = vmatprep.mubr.bf16.mxu0 0
  %7542 = vmatmul.mubr.bf16.gmra.mrb[0].mxu0 %v3995
  %v7543 = vpop.f32.mrb[0].mxu0
  %v7544 = vadd.f32 0.0, %v7543
  %v7545 = vpop.f32.mrb[0].mxu0
  %v7546 = vpop.f32.mrb[0].mxu0
  %v7547 = vadd.f32 0.0, %v7546
  %v7548 = vpop.f32.mrb[0].mxu0
  %7549 = vmatprep.mubr.bf16.mxu0 0
  %7550 = vmatmul.mubr.bf16.gmra.mrb[0].mxu0 %v4111
  %v7551 = vpop.f32.mrb[0].mxu0
  %v7552 = vadd.f32 0.0, %v7551
  %v7553 = vpop.f32.mrb[0].mxu0
  %v7554 = vpop.f32.mrb[0].mxu0
  %v7555 = vadd.f32 0.0, %v7554
  %v7556 = vpop.f32.mrb[0].mxu0
  %7557 = vmatprep.mubr.bf16.mxu0 0
  %7558 = vmatmul.mubr.bf16.gmra.mrb[0].mxu0 %v4114
  %v7559 = vpop.f32.mrb[0].mxu0
  %v7560 = vadd.f32 0.0, %v7559
  %v7561 = vpop.f32.mrb[0].mxu0
  %v7562 = vpop.f32.mrb[0].mxu0
  %v7563 = vadd.f32 0.0, %v7562
  %v7564 = vpop.f32.mrb[0].mxu0
  %7565 = vmatprep.mubr.bf16.mxu0 0
  %7566 = vmatmul.mubr.bf16.gmra.mrb[0].mxu0 %v4117
  %v7567 = vpop.f32.mrb[0].mxu0
  %v7568 = vadd.f32 0.0, %v7567
  %v7569 = vpop.f32.mrb[0].mxu0
  %v7570 = vpop.f32.mrb[0].mxu0
  %v7571 = vadd.f32 0.0, %v7570
  %v7572 = vpop.f32.mrb[0].mxu0
  %7573 = vmatprep.mubr.bf16.mxu0 0
  %7574 = vmatmul.mubr.bf16.gmra.mrb[0].mxu0 %v4120
  %v7575 = vpop.f32.mrb[0].mxu0
  %v7576 = vadd.f32 0.0, %v7575
  %v7577 = vpop.f32.mrb[0].mxu0
  %v7578 = vpop.f32.mrb[0].mxu0
  %v7579 = vadd.f32 0.0, %v7578
  %v7580 = vpop.f32.mrb[0].mxu0
  %7581 = vdwg.mxu0
  %v7582 = vadd.f32 %v7356, %v7456
  %v7583 = vadd.f32 %v7357, %v7459
  %v7584 = vadd.f32 %v7358, %v7464
  %v7585 = vadd.f32 %v7359, %v7467
  %v7586 = vadd.f32 %v7360, %v7472
  %v7587 = vadd.f32 %v7361, %v7475
  %v7588 = vadd.f32 %v7362, %v7480
  %v7589 = vadd.f32 %v7363, %v7483
  %v7590 = vadd.f32 %v7364, %v7488
  %v7591 = vadd.f32 %v7365, %v7491
  %v7592 = vadd.f32 %v7366, %v7496
  %v7593 = vadd.f32 %v7367, %v7499
  %v7594 = vadd.f32 %v7368, %v7504
  %v7595 = vadd.f32 %v7369, %v7507
  %v7596 = vadd.f32 %v7370, %v7512
  %v7597 = vadd.f32 %v7371, %v7515
  %v7598 = vadd.f32 %v7372, %v7520
  %v7599 = vadd.f32 %v7373, %v7523
  %v7600 = vadd.f32 %v7374, %v7528
  %v7601 = vadd.f32 %v7375, %v7531
  %v7602 = vadd.f32 %v7376, %v7536
  %v7603 = vadd.f32 %v7377, %v7539
  %v7604 = vadd.f32 %v7378, %v7544
  %v7605 = vadd.f32 %v7379, %v7547
  %v7606 = vadd.f32 %v7380, %v7552
  %v7607 = vadd.f32 %v7381, %v7555
  %v7608 = vadd.f32 %v7382, %v7560
  %v7609 = vadd.f32 %v7383, %v7563
  %v7610 = vadd.f32 %v7384, %v7568
  %v7611 = vadd.f32 %v7385, %v7571
  %v7612 = vadd.f32 %v7386, %v7576
  %v7613 = vadd.f32 %v7387, %v7579
  %v7614 = vlaneseq
  %v7615 = vshrl.u32 %v7614, 7
  %v7616 = vsub.s32 5, %v7615
  %v7617 = vrot.slane %v154, %v7616
  %v7618 = vadd.f32 %v7582, %v7617
  %v7619 = vadd.f32 %v7583, %v7617
  %v7620 = vadd.f32 %v7584, %v7617
  %v7621 = vadd.f32 %v7585, %v7617
  %v7622 = vadd.f32 %v7586, %v7617
  %v7623 = vadd.f32 %v7587, %v7617
  %v7624 = vadd.f32 %v7588, %v7617
  %v7625 = vadd.f32 %v7589, %v7617
  %v7626 = vadd.f32 %v7590, %v7617
  %v7627 = vadd.f32 %v7591, %v7617
  %v7628 = vadd.f32 %v7592, %v7617
  %v7629 = vadd.f32 %v7593, %v7617
  %v7630 = vadd.f32 %v7594, %v7617
  %v7631 = vadd.f32 %v7595, %v7617
  %v7632 = vadd.f32 %v7596, %v7617
  %v7633 = vadd.f32 %v7597, %v7617
  %v7634 = vadd.f32 %v7598, %v7617
  %v7635 = vadd.f32 %v7599, %v7617
  %v7636 = vadd.f32 %v7600, %v7617
  %v7637 = vadd.f32 %v7601, %v7617
  %v7638 = vadd.f32 %v7602, %v7617
  %v7639 = vadd.f32 %v7603, %v7617
  %v7640 = vadd.f32 %v7604, %v7617
  %v7641 = vadd.f32 %v7605, %v7617
  %v7642 = vadd.f32 %v7606, %v7617
  %v7643 = vadd.f32 %v7607, %v7617
  %v7644 = vadd.f32 %v7608, %v7617
  %v7645 = vadd.f32 %v7609, %v7617
  %v7646 = vadd.f32 %v7610, %v7617
  %v7647 = vadd.f32 %v7611, %v7617
  %v7648 = vadd.f32 %v7612, %v7617
  %v7649 = vadd.f32 %v7613, %v7617
  %vm7650 = vcmp.gt.f32.partialorder %v7618, 0.0
  %vm7651 = vcmp.gt.f32.partialorder %v7619, 0.0
  %vm7652 = vcmp.gt.f32.partialorder %v7620, 0.0
  %vm7653 = vcmp.gt.f32.partialorder %v7621, 0.0
  %vm7654 = vcmp.gt.f32.partialorder %v7622, 0.0
  %vm7655 = vcmp.gt.f32.partialorder %v7623, 0.0
  %vm7656 = vcmp.gt.f32.partialorder %v7624, 0.0
  %vm7657 = vcmp.gt.f32.partialorder %v7625, 0.0
  %vm7658 = vcmp.gt.f32.partialorder %v7626, 0.0
  %vm7659 = vcmp.gt.f32.partialorder %v7627, 0.0
  %vm7660 = vcmp.gt.f32.partialorder %v7628, 0.0
  %vm7661 = vcmp.gt.f32.partialorder %v7629, 0.0
  %vm7662 = vcmp.gt.f32.partialorder %v7630, 0.0
  %vm7663 = vcmp.gt.f32.partialorder %v7631, 0.0
  %vm7664 = vcmp.gt.f32.partialorder %v7632, 0.0
  %vm7665 = vcmp.gt.f32.partialorder %v7633, 0.0
  %vm7666 = vcmp.gt.f32.partialorder %v7634, 0.0
  %vm7667 = vcmp.gt.f32.partialorder %v7635, 0.0
  %vm7668 = vcmp.gt.f32.partialorder %v7636, 0.0
  %vm7669 = vcmp.gt.f32.partialorder %v7637, 0.0
  %vm7670 = vcmp.gt.f32.partialorder %v7638, 0.0
  %vm7671 = vcmp.gt.f32.partialorder %v7639, 0.0
  %vm7672 = vcmp.gt.f32.partialorder %v7640, 0.0
  %vm7673 = vcmp.gt.f32.partialorder %v7641, 0.0
  %vm7674 = vcmp.gt.f32.partialorder %v7642, 0.0
  %vm7675 = vcmp.gt.f32.partialorder %v7643, 0.0
  %vm7676 = vcmp.gt.f32.partialorder %v7644, 0.0
  %vm7677 = vcmp.gt.f32.partialorder %v7645, 0.0
  %vm7678 = vcmp.gt.f32.partialorder %v7646, 0.0
  %vm7679 = vcmp.gt.f32.partialorder %v7647, 0.0
  %vm7680 = vcmp.gt.f32.partialorder %v7648, 0.0
  %vm7681 = vcmp.gt.f32.partialorder %v7649, 0.0
  %v7682 = vmin.f32 %v7618, 0.0
  %v7683 = vmin.f32 %v7619, 0.0
  %v7684 = vmin.f32 %v7620, 0.0
  %v7685 = vmin.f32 %v7621, 0.0
  %v7686 = vmin.f32 %v7622, 0.0
  %v7687 = vmin.f32 %v7623, 0.0
  %v7688 = vmin.f32 %v7624, 0.0
  %v7689 = vmin.f32 %v7625, 0.0
  %v7690 = vmin.f32 %v7626, 0.0
  %v7691 = vmin.f32 %v7627, 0.0
  %v7692 = vmin.f32 %v7628, 0.0
  %v7693 = vmin.f32 %v7629, 0.0
  %v7694 = vmin.f32 %v7630, 0.0
  %v7695 = vmin.f32 %v7631, 0.0
  %v7696 = vmin.f32 %v7632, 0.0
  %v7697 = vmin.f32 %v7633, 0.0
  %v7698 = vmin.f32 %v7634, 0.0
  %v7699 = vmin.f32 %v7635, 0.0
  %v7700 = vmin.f32 %v7636, 0.0
  %v7701 = vmin.f32 %v7637, 0.0
  %v7702 = vmin.f32 %v7638, 0.0
  %v7703 = vmin.f32 %v7639, 0.0
  %v7704 = vmin.f32 %v7640, 0.0
  %v7705 = vmin.f32 %v7641, 0.0
  %v7706 = vmin.f32 %v7642, 0.0
  %v7707 = vmin.f32 %v7643, 0.0
  %v7708 = vmin.f32 %v7644, 0.0
  %v7709 = vmin.f32 %v7645, 0.0
  %v7710 = vmin.f32 %v7646, 0.0
  %v7711 = vmin.f32 %v7647, 0.0
  %v7712 = vmin.f32 %v7648, 0.0
  %v7713 = vmin.f32 %v7649, 0.0
  %v7714 = vmul.f32 %v7682, 1.442695
  %v7715 = vpow.pop %v7714
  %v7716 = vmul.f32 %v7683, 1.442695
  %v7717 = vpow.pop %v7716
  %v7718 = vmul.f32 %v7684, 1.442695
  %v7719 = vpow.pop %v7718
  %v7720 = vmul.f32 %v7685, 1.442695
  %v7721 = vpow.pop %v7720
  %v7722 = vmul.f32 %v7686, 1.442695
  %v7723 = vpow.pop %v7722
  %v7724 = vmul.f32 %v7687, 1.442695
  %v7725 = vpow.pop %v7724
  %v7726 = vmul.f32 %v7688, 1.442695
  %v7727 = vpow.pop %v7726
  %v7728 = vmul.f32 %v7689, 1.442695
  %v7729 = vpow.pop %v7728
  %v7730 = vmul.f32 %v7690, 1.442695
  %v7731 = vpow.pop %v7730
  %v7732 = vmul.f32 %v7691, 1.442695
  %v7733 = vpow.pop %v7732
  %v7734 = vmul.f32 %v7692, 1.442695
  %v7735 = vpow.pop %v7734
  %v7736 = vmul.f32 %v7693, 1.442695
  %v7737 = vpow.pop %v7736
  %v7738 = vmul.f32 %v7694, 1.442695
  %v7739 = vpow.pop %v7738
  %v7740 = vmul.f32 %v7695, 1.442695
  %v7741 = vpow.pop %v7740
  %v7742 = vmul.f32 %v7696, 1.442695
  %v7743 = vpow.pop %v7742
  %v7744 = vmul.f32 %v7697, 1.442695
  %v7745 = vpow.pop %v7744
  %v7746 = vmul.f32 %v7698, 1.442695
  %v7747 = vpow.pop %v7746
  %v7748 = vmul.f32 %v7699, 1.442695
  %v7749 = vpow.pop %v7748
  %v7750 = vmul.f32 %v7700, 1.442695
  %v7751 = vpow.pop %v7750
  %v7752 = vmul.f32 %v7701, 1.442695
  %v7753 = vpow.pop %v7752
  %v7754 = vmul.f32 %v7702, 1.442695
  %v7755 = vpow.pop %v7754
  %v7756 = vmul.f32 %v7703, 1.442695
  %v7757 = vpow.pop %v7756
  %v7758 = vmul.f32 %v7704, 1.442695
  %v7759 = vpow.pop %v7758
  %v7760 = vmul.f32 %v7705, 1.442695
  %v7761 = vpow.pop %v7760
  %v7762 = vmul.f32 %v7706, 1.442695
  %v7763 = vpow.pop %v7762
  %v7764 = vmul.f32 %v7707, 1.442695
  %v7765 = vpow.pop %v7764
  %v7766 = vmul.f32 %v7708, 1.442695
  %v7767 = vpow.pop %v7766
  %v7768 = vmul.f32 %v7709, 1.442695
  %v7769 = vpow.pop %v7768
  %v7770 = vmul.f32 %v7710, 1.442695
  %v7771 = vpow.pop %v7770
  %v7772 = vmul.f32 %v7711, 1.442695
  %v7773 = vpow.pop %v7772
  %v7774 = vmul.f32 %v7712, 1.442695
  %v7775 = vpow.pop %v7774
  %v7776 = vmul.f32 %v7713, 1.442695
  %v7777 = vpow.pop %v7776
  %v7778 = vsub.f32 %v7715, 1.0
  %v7779 = vsub.f32 %v7717, 1.0
  %v7780 = vsub.f32 %v7719, 1.0
  %v7781 = vsub.f32 %v7721, 1.0
  %v7782 = vsub.f32 %v7723, 1.0
  %v7783 = vsub.f32 %v7725, 1.0
  %v7784 = vsub.f32 %v7727, 1.0
  %v7785 = vsub.f32 %v7729, 1.0
  %v7786 = vsub.f32 %v7731, 1.0
  %v7787 = vsub.f32 %v7733, 1.0
  %v7788 = vsub.f32 %v7735, 1.0
  %v7789 = vsub.f32 %v7737, 1.0
  %v7790 = vsub.f32 %v7739, 1.0
  %v7791 = vsub.f32 %v7741, 1.0
  %v7792 = vsub.f32 %v7743, 1.0
  %v7793 = vsub.f32 %v7745, 1.0
  %v7794 = vsub.f32 %v7747, 1.0
  %v7795 = vsub.f32 %v7749, 1.0
  %v7796 = vsub.f32 %v7751, 1.0
  %v7797 = vsub.f32 %v7753, 1.0
  %v7798 = vsub.f32 %v7755, 1.0
  %v7799 = vsub.f32 %v7757, 1.0
  %v7800 = vsub.f32 %v7759, 1.0
  %v7801 = vsub.f32 %v7761, 1.0
  %v7802 = vsub.f32 %v7763, 1.0
  %v7803 = vsub.f32 %v7765, 1.0
  %v7804 = vsub.f32 %v7767, 1.0
  %v7805 = vsub.f32 %v7769, 1.0
  %v7806 = vsub.f32 %v7771, 1.0
  %v7807 = vsub.f32 %v7773, 1.0
  %v7808 = vsub.f32 %v7775, 1.0
  %v7809 = vsub.f32 %v7777, 1.0
  %v7810 = vsel %vm7650, %v7618, %v7778
  %v7811 = vsel %vm7651, %v7619, %v7779
  %v7812 = vsel %vm7652, %v7620, %v7780
  %v7813 = vsel %vm7653, %v7621, %v7781
  %v7814 = vsel %vm7654, %v7622, %v7782
  %v7815 = vsel %vm7655, %v7623, %v7783
  %v7816 = vsel %vm7656, %v7624, %v7784
  %v7817 = vsel %vm7657, %v7625, %v7785
  %v7818 = vsel %vm7658, %v7626, %v7786
  %v7819 = vsel %vm7659, %v7627, %v7787
  %v7820 = vsel %vm7660, %v7628, %v7788
  %v7821 = vsel %vm7661, %v7629, %v7789
  %v7822 = vsel %vm7662, %v7630, %v7790
  %v7823 = vsel %vm7663, %v7631, %v7791
  %v7824 = vsel %vm7664, %v7632, %v7792
  %v7825 = vsel %vm7665, %v7633, %v7793
  %v7826 = vsel %vm7666, %v7634, %v7794
  %v7827 = vsel %vm7667, %v7635, %v7795
  %v7828 = vsel %vm7668, %v7636, %v7796
  %v7829 = vsel %vm7669, %v7637, %v7797
  %v7830 = vsel %vm7670, %v7638, %v7798
  %v7831 = vsel %vm7671, %v7639, %v7799
  %v7832 = vsel %vm7672, %v7640, %v7800
  %v7833 = vsel %vm7673, %v7641, %v7801
  %v7834 = vsel %vm7674, %v7642, %v7802
  %v7835 = vsel %vm7675, %v7643, %v7803
  %v7836 = vsel %vm7676, %v7644, %v7804
  %v7837 = vsel %vm7677, %v7645, %v7805
  %v7838 = vsel %vm7678, %v7646, %v7806
  %v7839 = vsel %vm7679, %v7647, %v7807
  %v7840 = vsel %vm7680, %v7648, %v7808
  %v7841 = vsel %vm7681, %v7649, %v7809
  %v7842 = vadd.f32 %v1548, %v7810
  %v7843 = vadd.f32 %v1549, %v7811
  %v7844 = vadd.f32 %v1550, %v7812
  %v7845 = vadd.f32 %v1551, %v7813
  %v7846 = vadd.f32 %v1552, %v7814
  %v7847 = vadd.f32 %v1553, %v7815
  %v7848 = vadd.f32 %v1554, %v7816
  %v7849 = vadd.f32 %v1555, %v7817
  %v7850 = vadd.f32 %v1556, %v7818
  %v7851 = vadd.f32 %v1557, %v7819
  %v7852 = vadd.f32 %v1558, %v7820
  %v7853 = vadd.f32 %v1559, %v7821
  %v7854 = vadd.f32 %v1560, %v7822
  %v7855 = vadd.f32 %v1561, %v7823
  %v7856 = vadd.f32 %v1562, %v7824
  %v7857 = vadd.f32 %v1563, %v7825
  %v7858 = vadd.f32 %v1564, %v7826
  %v7859 = vadd.f32 %v1565, %v7827
  %v7860 = vadd.f32 %v1566, %v7828
  %v7861 = vadd.f32 %v1567, %v7829
  %v7862 = vadd.f32 %v1568, %v7830
  %v7863 = vadd.f32 %v1569, %v7831
  %v7864 = vadd.f32 %v1570, %v7832
  %v7865 = vadd.f32 %v1571, %v7833
  %v7866 = vadd.f32 %v1572, %v7834
  %v7867 = vadd.f32 %v1573, %v7835
  %v7868 = vadd.f32 %v1574, %v7836
  %v7869 = vadd.f32 %v1575, %v7837
  %v7870 = vadd.f32 %v1576, %v7838
  %v7871 = vadd.f32 %v1577, %v7839
  %v7872 = vadd.f32 %v1578, %v7840
  %v7873 = vadd.f32 %v1579, %v7841
  %v7874 = vpack.c.bf16 %v7843, %v7842
  %v7875 = vpack.c.bf16 %v7845, %v7844
  %v7876 = vpack.c.bf16 %v7847, %v7846
  %v7877 = vpack.c.bf16 %v7849, %v7848
  %v7878 = vpack.c.bf16 %v7851, %v7850
  %v7879 = vpack.c.bf16 %v7853, %v7852
  %v7880 = vpack.c.bf16 %v7855, %v7854
  %v7881 = vpack.c.bf16 %v7857, %v7856
  %v7882 = vpack.c.bf16 %v7859, %v7858
  %v7883 = vpack.c.bf16 %v7861, %v7860
  %v7884 = vpack.c.bf16 %v7863, %v7862
  %v7885 = vpack.c.bf16 %v7865, %v7864
  %v7886 = vpack.c.bf16 %v7867, %v7866
  %v7887 = vpack.c.bf16 %v7869, %v7868
  %v7888 = vpack.c.bf16 %v7871, %v7870
  %v7889 = vpack.c.bf16 %v7873, %v7872
  %s7890 = scalar_lea.vmem %s1, 768
  %v7891 = vld [vmem:[%s7890] sm:$0xf]
  %v7892 = vld [vmem:[%s7890 + $0x4] sm:$0xf]
  %v7893 = vld [vmem:[%s7890 + $0x8] sm:$0xf]
  %v7894 = vld [vmem:[%s7890 + $0xc] sm:$0xf]
  %v7895 = vld [vmem:[%s7890 + $0x10] sm:$0xf]
  %v7896 = vld [vmem:[%s7890 + $0x14] sm:$0xf]
  %v7897 = vld [vmem:[%s7890 + $0x18] sm:$0xf]
  %v7898 = vld [vmem:[%s7890 + $0x1c] sm:$0xf]
  %s7899 = scalar_lea.vmem %s1, 800
  %v7900 = vld [vmem:[%s7899] sm:$0xf]
  %v7901 = vld [vmem:[%s7899 + $0x4] sm:$0xf]
  %v7902 = vld [vmem:[%s7899 + $0x8] sm:$0xf]
  %v7903 = vld [vmem:[%s7899 + $0xc] sm:$0xf]
  %v7904 = vld [vmem:[%s7899 + $0x10] sm:$0xf]
  %v7905 = vld [vmem:[%s7899 + $0x14] sm:$0xf]
  %v7906 = vld [vmem:[%s7899 + $0x18] sm:$0xf]
  %v7907 = vld [vmem:[%s7899 + $0x1c] sm:$0xf]
  %v7916 = vunpack.c.l.b16 %v7900
  %v7917 = vunpack.c.l.b16 %v7901
  %v7918 = vunpack.c.l.b16 %v7902
  %v7919 = vunpack.c.l.b16 %v7903
  %v7920 = vunpack.c.l.b16 %v7904
  %v7921 = vunpack.c.l.b16 %v7905
  %v7922 = vunpack.c.l.b16 %v7906
  %v7923 = vunpack.c.l.b16 %v7907
  %v7924 = vpack.c.b16 %v7917, %v7916
  %v7925 = vpack.c.b16 %v7919, %v7918
  %v7926 = vpack.c.b16 %v7921, %v7920
  %v7927 = vpack.c.b16 %v7923, %v7922
  %v7933 = vsel %vm1685, %v7876, 0
  %v7936 = vsel %vm1685, %v7877, 0
  %7938 = vmatprep.subr.bf16.mxu0 0
  %7939 = vmatpush1.bf16.msra.mxu0 %v7924
  %7940 = vmatprep.subr.bf16.mxu0 0
  %7941 = vmatpush1.bf16.msra.mxu0 %v7925
  %7942 = vmatprep.subr.bf16.mxu0 0
  %7943 = vmatpush1.bf16.msra.mxu0 %v7926
  %7944 = vmatprep.subr.bf16.mxu0 0
  %7945 = vmatpush1.bf16.msra.mxu0 %v7927
  %7946 = vmatprep.subr.bf16.mxu0 0
  %7947 = vmatpush1.bf16.msra.mxu0 0
  %7948 = vmatprep.subr.bf16.mxu0 0
  %7949 = vmatpush1.bf16.msra.mxu0 0
  %7950 = vmatprep.subr.bf16.mxu0 0
  %7951 = vmatpush1.bf16.msra.mxu0 0
  %7952 = vmatprep.subr.bf16.mxu0 0
  %7953 = vmatpush1.bf16.msra.mxu0 0
  %7954 = vmatprep.subr.bf16.mxu0 0
  %7955 = vmatpush1.bf16.msra.mxu0 0
  %7956 = vmatprep.subr.bf16.mxu0 0
  %7957 = vmatpush1.bf16.msra.mxu0 0
  %7958 = vmatprep.subr.bf16.mxu0 0
  %7959 = vmatpush1.bf16.msra.mxu0 0
  %7960 = vmatprep.subr.bf16.mxu0 0
  %7961 = vmatpush1.bf16.msra.mxu0 0
  %7962 = vmatprep.subr.bf16.mxu0 0
  %7963 = vmatpush1.bf16.msra.mxu0 0
  %7964 = vmatprep.subr.bf16.mxu0 0
  %7965 = vmatpush1.bf16.msra.mxu0 0
  %7966 = vmatprep.subr.bf16.mxu0 0
  %7967 = vmatpush1.bf16.msra.mxu0 0
  %7968 = vmatprep.subr.bf16.mxu0 0
  %7969 = vmatpush1.bf16.msra.mxu0 0
  %7970 = vmatprep.mubr.bf16.mxu0 0
  %7971 = vmatmul.mubr.bf16.gmra.mrb[0].mxu0 %v7933
  %v7972 = vpop.f32.mrb[0].mxu0
  %v7973 = vadd.f32 0.0, %v7972
  %v7974 = vpop.f32.mrb[0].mxu0
  %v7975 = vpop.f32.mrb[0].mxu0
  %v7976 = vadd.f32 0.0, %v7975
  %v7977 = vpop.f32.mrb[0].mxu0
  %7978 = vmatprep.mubr.bf16.mxu0 0
  %7979 = vmatmul.mubr.bf16.gmra.mrb[0].mxu0 %v7936
  %v7980 = vpop.f32.mrb[0].mxu0
  %v7981 = vadd.f32 0.0, %v7980
  %v7982 = vpop.f32.mrb[0].mxu0
  %v7983 = vpop.f32.mrb[0].mxu0
  %v7984 = vadd.f32 0.0, %v7983
  %v7985 = vpop.f32.mrb[0].mxu0
  %7986 = vdwg.mxu0
  %v7995 = vunpack.c.l.b16 %v7891
  %v7996 = vunpack.c.l.b16 %v7892
  %v7997 = vunpack.c.l.b16 %v7893
  %v7998 = vunpack.c.l.b16 %v7894
  %v7999 = vunpack.c.l.b16 %v7895
  %v8000 = vunpack.c.l.b16 %v7896
  %v8001 = vunpack.c.l.b16 %v7897
  %v8002 = vunpack.c.l.b16 %v7898
  %v8003 = vpack.c.b16 %v7996, %v7995
  %v8004 = vpack.c.b16 %v7998, %v7997
  %v8005 = vpack.c.b16 %v8000, %v7999
  %v8006 = vpack.c.b16 %v8002, %v8001
  %v8012 = vsel %vm1685, %v7874, 0
  %v8015 = vsel %vm1685, %v7875, 0
  %8017 = vmatprep.subr.bf16.mxu0 0
  %8018 = vmatpush1.bf16.msra.mxu0 %v8003
  %8019 = vmatprep.subr.bf16.mxu0 0
  %8020 = vmatpush1.bf16.msra.mxu0 %v8004
  %8021 = vmatprep.subr.bf16.mxu0 0
  %8022 = vmatpush1.bf16.msra.mxu0 %v8005
  %8023 = vmatprep.subr.bf16.mxu0 0
  %8024 = vmatpush1.bf16.msra.mxu0 %v8006
  %8025 = vmatprep.subr.bf16.mxu0 0
  %8026 = vmatpush1.bf16.msra.mxu0 0
  %8027 = vmatprep.subr.bf16.mxu0 0
  %8028 = vmatpush1.bf16.msra.mxu0 0
  %8029 = vmatprep.subr.bf16.mxu0 0
  %8030 = vmatpush1.bf16.msra.mxu0 0
  %8031 = vmatprep.subr.bf16.mxu0 0
  %8032 = vmatpush1.bf16.msra.mxu0 0
  %8033 = vmatprep.subr.bf16.mxu0 0
  %8034 = vmatpush1.bf16.msra.mxu0 0
  %8035 = vmatprep.subr.bf16.mxu0 0
  %8036 = vmatpush1.bf16.msra.mxu0 0
  %8037 = vmatprep.subr.bf16.mxu0 0
  %8038 = vmatpush1.bf16.msra.mxu0 0
  %8039 = vmatprep.subr.bf16.mxu0 0
  %8040 = vmatpush1.bf16.msra.mxu0 0
  %8041 = vmatprep.subr.bf16.mxu0 0
  %8042 = vmatpush1.bf16.msra.mxu0 0
  %8043 = vmatprep.subr.bf16.mxu0 0
  %8044 = vmatpush1.bf16.msra.mxu0 0
  %8045 = vmatprep.subr.bf16.mxu0 0
  %8046 = vmatpush1.bf16.msra.mxu0 0
  %8047 = vmatprep.subr.bf16.mxu0 0
  %8048 = vmatpush1.bf16.msra.mxu0 0
  %8049 = vmatprep.mubr.bf16.mxu0 0
  %8050 = vmatmul.mubr.bf16.gmra.mrb[0].mxu0 %v8012
  %v8051 = vpop.f32.mrb[0].mxu0
  %v8052 = vadd.f32 %v7973, %v8051
  %v8053 = vpop.f32.mrb[0].mxu0
  %v8054 = vpop.f32.mrb[0].mxu0
  %v8055 = vadd.f32 %v7976, %v8054
  %v8056 = vpop.f32.mrb[0].mxu0
  %8057 = vmatprep.mubr.bf16.mxu0 0
  %8058 = vmatmul.mubr.bf16.gmra.mrb[0].mxu0 %v8015
  %v8059 = vpop.f32.mrb[0].mxu0
  %v8060 = vadd.f32 %v7981, %v8059
  %v8061 = vpop.f32.mrb[0].mxu0
  %v8062 = vpop.f32.mrb[0].mxu0
  %v8063 = vadd.f32 %v7984, %v8062
  %v8064 = vpop.f32.mrb[0].mxu0
  %8065 = vdwg.mxu0
  %s8066 = scalar_lea.vmem %s1, 832
  %v8067 = vld [vmem:[%s8066] sm:$0xf]
  %v8068 = vld [vmem:[%s8066 + $0x4] sm:$0xf]
  %v8069 = vld [vmem:[%s8066 + $0x8] sm:$0xf]
  %v8070 = vld [vmem:[%s8066 + $0xc] sm:$0xf]
  %v8071 = vld [vmem:[%s8066 + $0x10] sm:$0xf]
  %v8072 = vld [vmem:[%s8066 + $0x14] sm:$0xf]
  %v8073 = vld [vmem:[%s8066 + $0x18] sm:$0xf]
  %v8074 = vld [vmem:[%s8066 + $0x1c] sm:$0xf]
  %v8083 = vunpack.c.l.b16 %v8067
  %v8084 = vunpack.c.l.b16 %v8068
  %v8085 = vunpack.c.l.b16 %v8069
  %v8086 = vunpack.c.l.b16 %v8070
  %v8087 = vunpack.c.l.b16 %v8071
  %v8088 = vunpack.c.l.b16 %v8072
  %v8089 = vunpack.c.l.b16 %v8073
  %v8090 = vunpack.c.l.b16 %v8074
  %v8091 = vpack.c.b16 %v8084, %v8083
  %v8092 = vpack.c.b16 %v8086, %v8085
  %v8093 = vpack.c.b16 %v8088, %v8087
  %v8094 = vpack.c.b16 %v8090, %v8089
  %v8100 = vsel %vm1685, %v7878, 0
  %v8103 = vsel %vm1685, %v7879, 0
  %8105 = vmatprep.subr.bf16.mxu0 0
  %8106 = vmatpush1.bf16.msra.mxu0 %v8091
  %8107 = vmatprep.subr.bf16.mxu0 0
  %8108 = vmatpush1.bf16.msra.mxu0 %v8092
  %8109 = vmatprep.subr.bf16.mxu0 0
  %8110 = vmatpush1.bf16.msra.mxu0 %v8093
  %8111 = vmatprep.subr.bf16.mxu0 0
  %8112 = vmatpush1.bf16.msra.mxu0 %v8094
  %8113 = vmatprep.subr.bf16.mxu0 0
  %8114 = vmatpush1.bf16.msra.mxu0 0
  %8115 = vmatprep.subr.bf16.mxu0 0
  %8116 = vmatpush1.bf16.msra.mxu0 0
  %8117 = vmatprep.subr.bf16.mxu0 0
  %8118 = vmatpush1.bf16.msra.mxu0 0
  %8119 = vmatprep.subr.bf16.mxu0 0
  %8120 = vmatpush1.bf16.msra.mxu0 0
  %8121 = vmatprep.subr.bf16.mxu0 0
  %8122 = vmatpush1.bf16.msra.mxu0 0
  %8123 = vmatprep.subr.bf16.mxu0 0
  %8124 = vmatpush1.bf16.msra.mxu0 0
  %8125 = vmatprep.subr.bf16.mxu0 0
  %8126 = vmatpush1.bf16.msra.mxu0 0
  %8127 = vmatprep.subr.bf16.mxu0 0
  %8128 = vmatpush1.bf16.msra.mxu0 0
  %8129 = vmatprep.subr.bf16.mxu0 0
  %8130 = vmatpush1.bf16.msra.mxu0 0
  %8131 = vmatprep.subr.bf16.mxu0 0
  %8132 = vmatpush1.bf16.msra.mxu0 0
  %8133 = vmatprep.subr.bf16.mxu0 0
  %8134 = vmatpush1.bf16.msra.mxu0 0
  %8135 = vmatprep.subr.bf16.mxu0 0
  %8136 = vmatpush1.bf16.msra.mxu0 0
  %8137 = vmatprep.mubr.bf16.mxu0 0
  %8138 = vmatmul.mubr.bf16.gmra.mrb[0].mxu0 %v8100
  %v8139 = vpop.f32.mrb[0].mxu0
  %v8140 = vadd.f32 0.0, %v8139
  %v8141 = vpop.f32.mrb[0].mxu0
  %v8142 = vpop.f32.mrb[0].mxu0
  %v8143 = vadd.f32 0.0, %v8142
  %v8144 = vpop.f32.mrb[0].mxu0
  %8145 = vmatprep.mubr.bf16.mxu0 0
  %8146 = vmatmul.mubr.bf16.gmra.mrb[0].mxu0 %v8103
  %v8147 = vpop.f32.mrb[0].mxu0
  %v8148 = vadd.f32 0.0, %v8147
  %v8149 = vpop.f32.mrb[0].mxu0
  %v8150 = vpop.f32.mrb[0].mxu0
  %v8151 = vadd.f32 0.0, %v8150
  %v8152 = vpop.f32.mrb[0].mxu0
  %8153 = vdwg.mxu0
  %v8154 = vadd.f32 %v8052, %v8140
  %v8155 = vadd.f32 %v8055, %v8143
  %v8156 = vadd.f32 %v8060, %v8148
  %v8157 = vadd.f32 %v8063, %v8151
  %s8158 = scalar_lea.vmem %s1, 864
  %v8159 = vld [vmem:[%s8158] sm:$0xf]
  %v8160 = vld [vmem:[%s8158 + $0x4] sm:$0xf]
  %v8161 = vld [vmem:[%s8158 + $0x8] sm:$0xf]
  %v8162 = vld [vmem:[%s8158 + $0xc] sm:$0xf]
  %v8163 = vld [vmem:[%s8158 + $0x10] sm:$0xf]
  %v8164 = vld [vmem:[%s8158 + $0x14] sm:$0xf]
  %v8165 = vld [vmem:[%s8158 + $0x18] sm:$0xf]
  %v8166 = vld [vmem:[%s8158 + $0x1c] sm:$0xf]
  %v8175 = vunpack.c.l.b16 %v8159
  %v8176 = vunpack.c.l.b16 %v8160
  %v8177 = vunpack.c.l.b16 %v8161
  %v8178 = vunpack.c.l.b16 %v8162
  %v8179 = vunpack.c.l.b16 %v8163
  %v8180 = vunpack.c.l.b16 %v8164
  %v8181 = vunpack.c.l.b16 %v8165
  %v8182 = vunpack.c.l.b16 %v8166
  %v8183 = vpack.c.b16 %v8176, %v8175
  %v8184 = vpack.c.b16 %v8178, %v8177
  %v8185 = vpack.c.b16 %v8180, %v8179
  %v8186 = vpack.c.b16 %v8182, %v8181
  %v8192 = vsel %vm1685, %v7880, 0
  %v8195 = vsel %vm1685, %v7881, 0
  %8197 = vmatprep.subr.bf16.mxu0 0
  %8198 = vmatpush1.bf16.msra.mxu0 %v8183
  %8199 = vmatprep.subr.bf16.mxu0 0
  %8200 = vmatpush1.bf16.msra.mxu0 %v8184
  %8201 = vmatprep.subr.bf16.mxu0 0
  %8202 = vmatpush1.bf16.msra.mxu0 %v8185
  %8203 = vmatprep.subr.bf16.mxu0 0
  %8204 = vmatpush1.bf16.msra.mxu0 %v8186
  %8205 = vmatprep.subr.bf16.mxu0 0
  %8206 = vmatpush1.bf16.msra.mxu0 0
  %8207 = vmatprep.subr.bf16.mxu0 0
  %8208 = vmatpush1.bf16.msra.mxu0 0
  %8209 = vmatprep.subr.bf16.mxu0 0
  %8210 = vmatpush1.bf16.msra.mxu0 0
  %8211 = vmatprep.subr.bf16.mxu0 0
  %8212 = vmatpush1.bf16.msra.mxu0 0
  %8213 = vmatprep.subr.bf16.mxu0 0
  %8214 = vmatpush1.bf16.msra.mxu0 0
  %8215 = vmatprep.subr.bf16.mxu0 0
  %8216 = vmatpush1.bf16.msra.mxu0 0
  %8217 = vmatprep.subr.bf16.mxu0 0
  %8218 = vmatpush1.bf16.msra.mxu0 0
  %8219 = vmatprep.subr.bf16.mxu0 0
  %8220 = vmatpush1.bf16.msra.mxu0 0
  %8221 = vmatprep.subr.bf16.mxu0 0
  %8222 = vmatpush1.bf16.msra.mxu0 0
  %8223 = vmatprep.subr.bf16.mxu0 0
  %8224 = vmatpush1.bf16.msra.mxu0 0
  %8225 = vmatprep.subr.bf16.mxu0 0
  %8226 = vmatpush1.bf16.msra.mxu0 0
  %8227 = vmatprep.subr.bf16.mxu0 0
  %8228 = vmatpush1.bf16.msra.mxu0 0
  %8229 = vmatprep.mubr.bf16.mxu0 0
  %8230 = vmatmul.mubr.bf16.gmra.mrb[0].mxu0 %v8192
  %v8231 = vpop.f32.mrb[0].mxu0
  %v8232 = vadd.f32 0.0, %v8231
  %v8233 = vpop.f32.mrb[0].mxu0
  %v8234 = vpop.f32.mrb[0].mxu0
  %v8235 = vadd.f32 0.0, %v8234
  %v8236 = vpop.f32.mrb[0].mxu0
  %8237 = vmatprep.mubr.bf16.mxu0 0
  %8238 = vmatmul.mubr.bf16.gmra.mrb[0].mxu0 %v8195
  %v8239 = vpop.f32.mrb[0].mxu0
  %v8240 = vadd.f32 0.0, %v8239
  %v8241 = vpop.f32.mrb[0].mxu0
  %v8242 = vpop.f32.mrb[0].mxu0
  %v8243 = vadd.f32 0.0, %v8242
  %v8244 = vpop.f32.mrb[0].mxu0
  %8245 = vdwg.mxu0
  %v8246 = vadd.f32 %v8154, %v8232
  %v8247 = vadd.f32 %v8155, %v8235
  %v8248 = vadd.f32 %v8156, %v8240
  %v8249 = vadd.f32 %v8157, %v8243
  %s8250 = scalar_lea.vmem %s1, 896
  %v8251 = vld [vmem:[%s8250] sm:$0xf]
  %v8252 = vld [vmem:[%s8250 + $0x4] sm:$0xf]
  %v8253 = vld [vmem:[%s8250 + $0x8] sm:$0xf]
  %v8254 = vld [vmem:[%s8250 + $0xc] sm:$0xf]
  %v8255 = vld [vmem:[%s8250 + $0x10] sm:$0xf]
  %v8256 = vld [vmem:[%s8250 + $0x14] sm:$0xf]
  %v8257 = vld [vmem:[%s8250 + $0x18] sm:$0xf]
  %v8258 = vld [vmem:[%s8250 + $0x1c] sm:$0xf]
  %v8267 = vunpack.c.l.b16 %v8251
  %v8268 = vunpack.c.l.b16 %v8252
  %v8269 = vunpack.c.l.b16 %v8253
  %v8270 = vunpack.c.l.b16 %v8254
  %v8271 = vunpack.c.l.b16 %v8255
  %v8272 = vunpack.c.l.b16 %v8256
  %v8273 = vunpack.c.l.b16 %v8257
  %v8274 = vunpack.c.l.b16 %v8258
  %v8275 = vpack.c.b16 %v8268, %v8267
  %v8276 = vpack.c.b16 %v8270, %v8269
  %v8277 = vpack.c.b16 %v8272, %v8271
  %v8278 = vpack.c.b16 %v8274, %v8273
  %v8284 = vsel %vm1685, %v7882, 0
  %v8287 = vsel %vm1685, %v7883, 0
  %8289 = vmatprep.subr.bf16.mxu0 0
  %8290 = vmatpush1.bf16.msra.mxu0 %v8275
  %8291 = vmatprep.subr.bf16.mxu0 0
  %8292 = vmatpush1.bf16.msra.mxu0 %v8276
  %8293 = vmatprep.subr.bf16.mxu0 0
  %8294 = vmatpush1.bf16.msra.mxu0 %v8277
  %8295 = vmatprep.subr.bf16.mxu0 0
  %8296 = vmatpush1.bf16.msra.mxu0 %v8278
  %8297 = vmatprep.subr.bf16.mxu0 0
  %8298 = vmatpush1.bf16.msra.mxu0 0
  %8299 = vmatprep.subr.bf16.mxu0 0
  %8300 = vmatpush1.bf16.msra.mxu0 0
  %8301 = vmatprep.subr.bf16.mxu0 0
  %8302 = vmatpush1.bf16.msra.mxu0 0
  %8303 = vmatprep.subr.bf16.mxu0 0
  %8304 = vmatpush1.bf16.msra.mxu0 0
  %8305 = vmatprep.subr.bf16.mxu0 0
  %8306 = vmatpush1.bf16.msra.mxu0 0
  %8307 = vmatprep.subr.bf16.mxu0 0
  %8308 = vmatpush1.bf16.msra.mxu0 0
  %8309 = vmatprep.subr.bf16.mxu0 0
  %8310 = vmatpush1.bf16.msra.mxu0 0
  %8311 = vmatprep.subr.bf16.mxu0 0
  %8312 = vmatpush1.bf16.msra.mxu0 0
  %8313 = vmatprep.subr.bf16.mxu0 0
  %8314 = vmatpush1.bf16.msra.mxu0 0
  %8315 = vmatprep.subr.bf16.mxu0 0
  %8316 = vmatpush1.bf16.msra.mxu0 0
  %8317 = vmatprep.subr.bf16.mxu0 0
  %8318 = vmatpush1.bf16.msra.mxu0 0
  %8319 = vmatprep.subr.bf16.mxu0 0
  %8320 = vmatpush1.bf16.msra.mxu0 0
  %8321 = vmatprep.mubr.bf16.mxu0 0
  %8322 = vmatmul.mubr.bf16.gmra.mrb[0].mxu0 %v8284
  %v8323 = vpop.f32.mrb[0].mxu0
  %v8324 = vadd.f32 0.0, %v8323
  %v8325 = vpop.f32.mrb[0].mxu0
  %v8326 = vpop.f32.mrb[0].mxu0
  %v8327 = vadd.f32 0.0, %v8326
  %v8328 = vpop.f32.mrb[0].mxu0
  %8329 = vmatprep.mubr.bf16.mxu0 0
  %8330 = vmatmul.mubr.bf16.gmra.mrb[0].mxu0 %v8287
  %v8331 = vpop.f32.mrb[0].mxu0
  %v8332 = vadd.f32 0.0, %v8331
  %v8333 = vpop.f32.mrb[0].mxu0
  %v8334 = vpop.f32.mrb[0].mxu0
  %v8335 = vadd.f32 0.0, %v8334
  %v8336 = vpop.f32.mrb[0].mxu0
  %8337 = vdwg.mxu0
  %v8338 = vadd.f32 %v8246, %v8324
  %v8339 = vadd.f32 %v8247, %v8327
  %v8340 = vadd.f32 %v8248, %v8332
  %v8341 = vadd.f32 %v8249, %v8335
  %s8342 = scalar_lea.vmem %s1, 928
  %v8343 = vld [vmem:[%s8342] sm:$0xf]
  %v8344 = vld [vmem:[%s8342 + $0x4] sm:$0xf]
  %v8345 = vld [vmem:[%s8342 + $0x8] sm:$0xf]
  %v8346 = vld [vmem:[%s8342 + $0xc] sm:$0xf]
  %v8347 = vld [vmem:[%s8342 + $0x10] sm:$0xf]
  %v8348 = vld [vmem:[%s8342 + $0x14] sm:$0xf]
  %v8349 = vld [vmem:[%s8342 + $0x18] sm:$0xf]
  %v8350 = vld [vmem:[%s8342 + $0x1c] sm:$0xf]
  %v8359 = vunpack.c.l.b16 %v8343
  %v8360 = vunpack.c.l.b16 %v8344
  %v8361 = vunpack.c.l.b16 %v8345
  %v8362 = vunpack.c.l.b16 %v8346
  %v8363 = vunpack.c.l.b16 %v8347
  %v8364 = vunpack.c.l.b16 %v8348
  %v8365 = vunpack.c.l.b16 %v8349
  %v8366 = vunpack.c.l.b16 %v8350
  %v8367 = vpack.c.b16 %v8360, %v8359
  %v8368 = vpack.c.b16 %v8362, %v8361
  %v8369 = vpack.c.b16 %v8364, %v8363
  %v8370 = vpack.c.b16 %v8366, %v8365
  %v8376 = vsel %vm1685, %v7884, 0
  %v8379 = vsel %vm1685, %v7885, 0
  %8381 = vmatprep.subr.bf16.mxu0 0
  %8382 = vmatpush1.bf16.msra.mxu0 %v8367
  %8383 = vmatprep.subr.bf16.mxu0 0
  %8384 = vmatpush1.bf16.msra.mxu0 %v8368
  %8385 = vmatprep.subr.bf16.mxu0 0
  %8386 = vmatpush1.bf16.msra.mxu0 %v8369
  %8387 = vmatprep.subr.bf16.mxu0 0
  %8388 = vmatpush1.bf16.msra.mxu0 %v8370
  %8389 = vmatprep.subr.bf16.mxu0 0
  %8390 = vmatpush1.bf16.msra.mxu0 0
  %8391 = vmatprep.subr.bf16.mxu0 0
  %8392 = vmatpush1.bf16.msra.mxu0 0
  %8393 = vmatprep.subr.bf16.mxu0 0
  %8394 = vmatpush1.bf16.msra.mxu0 0
  %8395 = vmatprep.subr.bf16.mxu0 0
  %8396 = vmatpush1.bf16.msra.mxu0 0
  %8397 = vmatprep.subr.bf16.mxu0 0
  %8398 = vmatpush1.bf16.msra.mxu0 0
  %8399 = vmatprep.subr.bf16.mxu0 0
  %8400 = vmatpush1.bf16.msra.mxu0 0
  %8401 = vmatprep.subr.bf16.mxu0 0
  %8402 = vmatpush1.bf16.msra.mxu0 0
  %8403 = vmatprep.subr.bf16.mxu0 0
  %8404 = vmatpush1.bf16.msra.mxu0 0
  %8405 = vmatprep.subr.bf16.mxu0 0
  %8406 = vmatpush1.bf16.msra.mxu0 0
  %8407 = vmatprep.subr.bf16.mxu0 0
  %8408 = vmatpush1.bf16.msra.mxu0 0
  %8409 = vmatprep.subr.bf16.mxu0 0
  %8410 = vmatpush1.bf16.msra.mxu0 0
  %8411 = vmatprep.subr.bf16.mxu0 0
  %8412 = vmatpush1.bf16.msra.mxu0 0
  %8413 = vmatprep.mubr.bf16.mxu0 0
  %8414 = vmatmul.mubr.bf16.gmra.mrb[0].mxu0 %v8376
  %v8415 = vpop.f32.mrb[0].mxu0
  %v8416 = vadd.f32 0.0, %v8415
  %v8417 = vpop.f32.mrb[0].mxu0
  %v8418 = vpop.f32.mrb[0].mxu0
  %v8419 = vadd.f32 0.0, %v8418
  %v8420 = vpop.f32.mrb[0].mxu0
  %8421 = vmatprep.mubr.bf16.mxu0 0
  %8422 = vmatmul.mubr.bf16.gmra.mrb[0].mxu0 %v8379
  %v8423 = vpop.f32.mrb[0].mxu0
  %v8424 = vadd.f32 0.0, %v8423
  %v8425 = vpop.f32.mrb[0].mxu0
  %v8426 = vpop.f32.mrb[0].mxu0
  %v8427 = vadd.f32 0.0, %v8426
  %v8428 = vpop.f32.mrb[0].mxu0
  %8429 = vdwg.mxu0
  %v8430 = vadd.f32 %v8338, %v8416
  %v8431 = vadd.f32 %v8339, %v8419
  %v8432 = vadd.f32 %v8340, %v8424
  %v8433 = vadd.f32 %v8341, %v8427
  %s8434 = scalar_lea.vmem %s1, 960
  %v8435 = vld [vmem:[%s8434] sm:$0xf]
  %v8436 = vld [vmem:[%s8434 + $0x4] sm:$0xf]
  %v8437 = vld [vmem:[%s8434 + $0x8] sm:$0xf]
  %v8438 = vld [vmem:[%s8434 + $0xc] sm:$0xf]
  %v8439 = vld [vmem:[%s8434 + $0x10] sm:$0xf]
  %v8440 = vld [vmem:[%s8434 + $0x14] sm:$0xf]
  %v8441 = vld [vmem:[%s8434 + $0x18] sm:$0xf]
  %v8442 = vld [vmem:[%s8434 + $0x1c] sm:$0xf]
  %v8451 = vunpack.c.l.b16 %v8435
  %v8452 = vunpack.c.l.b16 %v8436
  %v8453 = vunpack.c.l.b16 %v8437
  %v8454 = vunpack.c.l.b16 %v8438
  %v8455 = vunpack.c.l.b16 %v8439
  %v8456 = vunpack.c.l.b16 %v8440
  %v8457 = vunpack.c.l.b16 %v8441
  %v8458 = vunpack.c.l.b16 %v8442
  %v8459 = vpack.c.b16 %v8452, %v8451
  %v8460 = vpack.c.b16 %v8454, %v8453
  %v8461 = vpack.c.b16 %v8456, %v8455
  %v8462 = vpack.c.b16 %v8458, %v8457
  %v8468 = vsel %vm1685, %v7886, 0
  %v8471 = vsel %vm1685, %v7887, 0
  %8473 = vmatprep.subr.bf16.mxu0 0
  %8474 = vmatpush1.bf16.msra.mxu0 %v8459
  %8475 = vmatprep.subr.bf16.mxu0 0
  %8476 = vmatpush1.bf16.msra.mxu0 %v8460
  %8477 = vmatprep.subr.bf16.mxu0 0
  %8478 = vmatpush1.bf16.msra.mxu0 %v8461
  %8479 = vmatprep.subr.bf16.mxu0 0
  %8480 = vmatpush1.bf16.msra.mxu0 %v8462
  %8481 = vmatprep.subr.bf16.mxu0 0
  %8482 = vmatpush1.bf16.msra.mxu0 0
  %8483 = vmatprep.subr.bf16.mxu0 0
  %8484 = vmatpush1.bf16.msra.mxu0 0
  %8485 = vmatprep.subr.bf16.mxu0 0
  %8486 = vmatpush1.bf16.msra.mxu0 0
  %8487 = vmatprep.subr.bf16.mxu0 0
  %8488 = vmatpush1.bf16.msra.mxu0 0
  %8489 = vmatprep.subr.bf16.mxu0 0
  %8490 = vmatpush1.bf16.msra.mxu0 0
  %8491 = vmatprep.subr.bf16.mxu0 0
  %8492 = vmatpush1.bf16.msra.mxu0 0
  %8493 = vmatprep.subr.bf16.mxu0 0
  %8494 = vmatpush1.bf16.msra.mxu0 0
  %8495 = vmatprep.subr.bf16.mxu0 0
  %8496 = vmatpush1.bf16.msra.mxu0 0
  %8497 = vmatprep.subr.bf16.mxu0 0
  %8498 = vmatpush1.bf16.msra.mxu0 0
  %8499 = vmatprep.subr.bf16.mxu0 0
  %8500 = vmatpush1.bf16.msra.mxu0 0
  %8501 = vmatprep.subr.bf16.mxu0 0
  %8502 = vmatpush1.bf16.msra.mxu0 0
  %8503 = vmatprep.subr.bf16.mxu0 0
  %8504 = vmatpush1.bf16.msra.mxu0 0
  %8505 = vmatprep.mubr.bf16.mxu0 0
  %8506 = vmatmul.mubr.bf16.gmra.mrb[0].mxu0 %v8468
  %v8507 = vpop.f32.mrb[0].mxu0
  %v8508 = vadd.f32 0.0, %v8507
  %v8509 = vpop.f32.mrb[0].mxu0
  %v8510 = vpop.f32.mrb[0].mxu0
  %v8511 = vadd.f32 0.0, %v8510
  %v8512 = vpop.f32.mrb[0].mxu0
  %8513 = vmatprep.mubr.bf16.mxu0 0
  %8514 = vmatmul.mubr.bf16.gmra.mrb[0].mxu0 %v8471
  %v8515 = vpop.f32.mrb[0].mxu0
  %v8516 = vadd.f32 0.0, %v8515
  %v8517 = vpop.f32.mrb[0].mxu0
  %v8518 = vpop.f32.mrb[0].mxu0
  %v8519 = vadd.f32 0.0, %v8518
  %v8520 = vpop.f32.mrb[0].mxu0
  %8521 = vdwg.mxu0
  %v8522 = vadd.f32 %v8430, %v8508
  %v8523 = vadd.f32 %v8431, %v8511
  %v8524 = vadd.f32 %v8432, %v8516
  %v8525 = vadd.f32 %v8433, %v8519
  %s8526 = scalar_lea.vmem %s1, 992
  %v8527 = vld [vmem:[%s8526] sm:$0xf]
  %v8528 = vld [vmem:[%s8526 + $0x4] sm:$0xf]
  %v8529 = vld [vmem:[%s8526 + $0x8] sm:$0xf]
  %v8530 = vld [vmem:[%s8526 + $0xc] sm:$0xf]
  %v8531 = vld [vmem:[%s8526 + $0x10] sm:$0xf]
  %v8532 = vld [vmem:[%s8526 + $0x14] sm:$0xf]
  %v8533 = vld [vmem:[%s8526 + $0x18] sm:$0xf]
  %v8534 = vld [vmem:[%s8526 + $0x1c] sm:$0xf]
  %v8543 = vunpack.c.l.b16 %v8527
  %v8544 = vunpack.c.l.b16 %v8528
  %v8545 = vunpack.c.l.b16 %v8529
  %v8546 = vunpack.c.l.b16 %v8530
  %v8547 = vunpack.c.l.b16 %v8531
  %v8548 = vunpack.c.l.b16 %v8532
  %v8549 = vunpack.c.l.b16 %v8533
  %v8550 = vunpack.c.l.b16 %v8534
  %v8551 = vpack.c.b16 %v8544, %v8543
  %v8552 = vpack.c.b16 %v8546, %v8545
  %v8553 = vpack.c.b16 %v8548, %v8547
  %v8554 = vpack.c.b16 %v8550, %v8549
  %v8560 = vsel %vm1685, %v7888, 0
  %v8563 = vsel %vm1685, %v7889, 0
  %8565 = vmatprep.subr.bf16.mxu0 0
  %8566 = vmatpush1.bf16.msra.mxu0 %v8551
  %8567 = vmatprep.subr.bf16.mxu0 0
  %8568 = vmatpush1.bf16.msra.mxu0 %v8552
  %8569 = vmatprep.subr.bf16.mxu0 0
  %8570 = vmatpush1.bf16.msra.mxu0 %v8553
  %8571 = vmatprep.subr.bf16.mxu0 0
  %8572 = vmatpush1.bf16.msra.mxu0 %v8554
  %8573 = vmatprep.subr.bf16.mxu0 0
  %8574 = vmatpush1.bf16.msra.mxu0 0
  %8575 = vmatprep.subr.bf16.mxu0 0
  %8576 = vmatpush1.bf16.msra.mxu0 0
  %8577 = vmatprep.subr.bf16.mxu0 0
  %8578 = vmatpush1.bf16.msra.mxu0 0
  %8579 = vmatprep.subr.bf16.mxu0 0
  %8580 = vmatpush1.bf16.msra.mxu0 0
  %8581 = vmatprep.subr.bf16.mxu0 0
  %8582 = vmatpush1.bf16.msra.mxu0 0
  %8583 = vmatprep.subr.bf16.mxu0 0
  %8584 = vmatpush1.bf16.msra.mxu0 0
  %8585 = vmatprep.subr.bf16.mxu0 0
  %8586 = vmatpush1.bf16.msra.mxu0 0
  %8587 = vmatprep.subr.bf16.mxu0 0
  %8588 = vmatpush1.bf16.msra.mxu0 0
  %8589 = vmatprep.subr.bf16.mxu0 0
  %8590 = vmatpush1.bf16.msra.mxu0 0
  %8591 = vmatprep.subr.bf16.mxu0 0
  %8592 = vmatpush1.bf16.msra.mxu0 0
  %8593 = vmatprep.subr.bf16.mxu0 0
  %8594 = vmatpush1.bf16.msra.mxu0 0
  %8595 = vmatprep.subr.bf16.mxu0 0
  %8596 = vmatpush1.bf16.msra.mxu0 0
  %8597 = vmatprep.mubr.bf16.mxu0 0
  %8598 = vmatmul.mubr.bf16.gmra.mrb[0].mxu0 %v8560
  %v8599 = vpop.f32.mrb[0].mxu0
  %v8600 = vadd.f32 0.0, %v8599
  %v8601 = vpop.f32.mrb[0].mxu0
  %v8602 = vpop.f32.mrb[0].mxu0
  %v8603 = vadd.f32 0.0, %v8602
  %v8604 = vpop.f32.mrb[0].mxu0
  %8605 = vmatprep.mubr.bf16.mxu0 0
  %8606 = vmatmul.mubr.bf16.gmra.mrb[0].mxu0 %v8563
  %v8607 = vpop.f32.mrb[0].mxu0
  %v8608 = vadd.f32 0.0, %v8607
  %v8609 = vpop.f32.mrb[0].mxu0
  %v8610 = vpop.f32.mrb[0].mxu0
  %v8611 = vadd.f32 0.0, %v8610
  %v8612 = vpop.f32.mrb[0].mxu0
  %8613 = vdwg.mxu0
  %v8614 = vadd.f32 %v8522, %v8600
  %v8615 = vadd.f32 %v8523, %v8603
  %v8616 = vadd.f32 %v8524, %v8608
  %v8617 = vadd.f32 %v8525, %v8611
  %v8618 = vlaneseq
  %v8619 = vshrl.u32 %v8618, 7
  %v8620 = vsub.s32 6, %v8619
  %v8621 = vrot.slane %v154, %v8620
  %v8622 = vadd.f32 %v8614, %v8621
  %v8623 = vadd.f32 %v8615, %v8621
  %v8624 = vadd.f32 %v8616, %v8621
  %v8625 = vadd.f32 %v8617, %v8621
  %vm8626 = vcmp.gt.f32.partialorder %v8622, 0.0
  %vm8627 = vcmp.gt.f32.partialorder %v8623, 0.0
  %vm8628 = vcmp.gt.f32.partialorder %v8624, 0.0
  %vm8629 = vcmp.gt.f32.partialorder %v8625, 0.0
  %v8630 = vmin.f32 %v8622, 0.0
  %v8631 = vmin.f32 %v8623, 0.0
  %v8632 = vmin.f32 %v8624, 0.0
  %v8633 = vmin.f32 %v8625, 0.0
  %v8634 = vmul.f32 %v8630, 1.442695
  %v8635 = vpow.pop %v8634
  %v8636 = vmul.f32 %v8631, 1.442695
  %v8637 = vpow.pop %v8636
  %v8638 = vmul.f32 %v8632, 1.442695
  %v8639 = vpow.pop %v8638
  %v8640 = vmul.f32 %v8633, 1.442695
  %v8641 = vpow.pop %v8640
  %v8642 = vsub.f32 %v8635, 1.0
  %v8643 = vsub.f32 %v8637, 1.0
  %v8644 = vsub.f32 %v8639, 1.0
  %v8645 = vsub.f32 %v8641, 1.0
  %v8646 = vsel %vm8626, %v8622, %v8642
  %v8647 = vsel %vm8627, %v8623, %v8643
  %v8648 = vsel %vm8628, %v8624, %v8644
  %v8649 = vsel %vm8629, %v8625, %v8645
  %v8650 = vadd.f32 %v7870, %v8646
  %v8651 = vadd.f32 %v7871, %v8647
  %v8652 = vadd.f32 %v7872, %v8648
  %v8653 = vadd.f32 %v7873, %v8649
  %v8654 = vpack.c.bf16 %v6771, %v6770
  %v8655 = vpack.c.bf16 %v6773, %v6772
  %s8656 = scalar_lea.vmem %s1, 1024
  %v8657 = vld [vmem:[%s8656] sm:$0xf]
  %v8658 = vld [vmem:[%s8656 + $0x4] sm:$0xf]
  %v8659 = vld [vmem:[%s8656 + $0x8] sm:$0xf]
  %v8660 = vld [vmem:[%s8656 + $0xc] sm:$0xf]
  %v8661 = vld [vmem:[%s8656 + $0x10] sm:$0xf]
  %v8662 = vld [vmem:[%s8656 + $0x14] sm:$0xf]
  %v8663 = vld [vmem:[%s8656 + $0x18] sm:$0xf]
  %v8664 = vld [vmem:[%s8656 + $0x1c] sm:$0xf]
  %v8665 = vpack.c.bf16 %v5465, %v5464
  %v8666 = vpack.c.bf16 %v5467, %v5466
  %s8667 = scalar_lea.vmem %s1, 1056
  %v8668 = vld [vmem:[%s8667] sm:$0xf]
  %v8669 = vld [vmem:[%s8667 + $0x4] sm:$0xf]
  %v8670 = vld [vmem:[%s8667 + $0x8] sm:$0xf]
  %v8671 = vld [vmem:[%s8667 + $0xc] sm:$0xf]
  %v8672 = vld [vmem:[%s8667 + $0x10] sm:$0xf]
  %v8673 = vld [vmem:[%s8667 + $0x14] sm:$0xf]
  %v8674 = vld [vmem:[%s8667 + $0x18] sm:$0xf]
  %v8675 = vld [vmem:[%s8667 + $0x1c] sm:$0xf]
  %v8684 = vunpack.c.l.b16 %v8668
  %v8685 = vunpack.c.l.b16 %v8669
  %v8686 = vunpack.c.l.b16 %v8670
  %v8687 = vunpack.c.l.b16 %v8671
  %v8688 = vunpack.c.l.b16 %v8672
  %v8689 = vunpack.c.l.b16 %v8673
  %v8690 = vunpack.c.l.b16 %v8674
  %v8691 = vunpack.c.l.b16 %v8675
  %v8692 = vpack.c.b16 %v8685, %v8684
  %v8693 = vpack.c.b16 %v8687, %v8686
  %v8694 = vpack.c.b16 %v8689, %v8688
  %v8695 = vpack.c.b16 %v8691, %v8690
  %v8701 = vsel %vm1685, %v8665, 0
  %v8704 = vsel %vm1685, %v8666, 0
  %8706 = vmatprep.subr.bf16.mxu0 0
  %8707 = vmatpush1.bf16.msra.mxu0 %v8692
  %8708 = vmatprep.subr.bf16.mxu0 0
  %8709 = vmatpush1.bf16.msra.mxu0 %v8693
  %8710 = vmatprep.subr.bf16.mxu0 0
  %8711 = vmatpush1.bf16.msra.mxu0 %v8694
  %8712 = vmatprep.subr.bf16.mxu0 0
  %8713 = vmatpush1.bf16.msra.mxu0 %v8695
  %8714 = vmatprep.subr.bf16.mxu0 0
  %8715 = vmatpush1.bf16.msra.mxu0 0
  %8716 = vmatprep.subr.bf16.mxu0 0
  %8717 = vmatpush1.bf16.msra.mxu0 0
  %8718 = vmatprep.subr.bf16.mxu0 0
  %8719 = vmatpush1.bf16.msra.mxu0 0
  %8720 = vmatprep.subr.bf16.mxu0 0
  %8721 = vmatpush1.bf16.msra.mxu0 0
  %8722 = vmatprep.subr.bf16.mxu0 0
  %8723 = vmatpush1.bf16.msra.mxu0 0
  %8724 = vmatprep.subr.bf16.mxu0 0
  %8725 = vmatpush1.bf16.msra.mxu0 0
  %8726 = vmatprep.subr.bf16.mxu0 0
  %8727 = vmatpush1.bf16.msra.mxu0 0
  %8728 = vmatprep.subr.bf16.mxu0 0
  %8729 = vmatpush1.bf16.msra.mxu0 0
  %8730 = vmatprep.subr.bf16.mxu0 0
  %8731 = vmatpush1.bf16.msra.mxu0 0
  %8732 = vmatprep.subr.bf16.mxu0 0
  %8733 = vmatpush1.bf16.msra.mxu0 0
  %8734 = vmatprep.subr.bf16.mxu0 0
  %8735 = vmatpush1.bf16.msra.mxu0 0
  %8736 = vmatprep.subr.bf16.mxu0 0
  %8737 = vmatpush1.bf16.msra.mxu0 0
  %8738 = vmatprep.mubr.bf16.mxu0 0
  %8739 = vmatmul.mubr.bf16.gmra.mrb[0].mxu0 %v8701
  %v8740 = vpop.f32.mrb[0].mxu0
  %v8741 = vadd.f32 0.0, %v8740
  %v8742 = vpop.f32.mrb[0].mxu0
  %v8743 = vpop.f32.mrb[0].mxu0
  %v8744 = vadd.f32 0.0, %v8743
  %v8745 = vpop.f32.mrb[0].mxu0
  %8746 = vmatprep.mubr.bf16.mxu0 0
  %8747 = vmatmul.mubr.bf16.gmra.mrb[0].mxu0 %v8704
  %v8748 = vpop.f32.mrb[0].mxu0
  %v8749 = vadd.f32 0.0, %v8748
  %v8750 = vpop.f32.mrb[0].mxu0
  %v8751 = vpop.f32.mrb[0].mxu0
  %v8752 = vadd.f32 0.0, %v8751
  %v8753 = vpop.f32.mrb[0].mxu0
  %8754 = vdwg.mxu0
  %v8763 = vunpack.c.l.b16 %v8657
  %v8764 = vunpack.c.l.b16 %v8658
  %v8765 = vunpack.c.l.b16 %v8659
  %v8766 = vunpack.c.l.b16 %v8660
  %v8767 = vunpack.c.l.b16 %v8661
  %v8768 = vunpack.c.l.b16 %v8662
  %v8769 = vunpack.c.l.b16 %v8663
  %v8770 = vunpack.c.l.b16 %v8664
  %v8771 = vpack.c.b16 %v8764, %v8763
  %v8772 = vpack.c.b16 %v8766, %v8765
  %v8773 = vpack.c.b16 %v8768, %v8767
  %v8774 = vpack.c.b16 %v8770, %v8769
  %v8780 = vsel %vm1685, %v8654, 0
  %v8783 = vsel %vm1685, %v8655, 0
  %8785 = vmatprep.subr.bf16.mxu0 0
  %8786 = vmatpush1.bf16.msra.mxu0 %v8771
  %8787 = vmatprep.subr.bf16.mxu0 0
  %8788 = vmatpush1.bf16.msra.mxu0 %v8772
  %8789 = vmatprep.subr.bf16.mxu0 0
  %8790 = vmatpush1.bf16.msra.mxu0 %v8773
  %8791 = vmatprep.subr.bf16.mxu0 0
  %8792 = vmatpush1.bf16.msra.mxu0 %v8774
  %8793 = vmatprep.subr.bf16.mxu0 0
  %8794 = vmatpush1.bf16.msra.mxu0 0
  %8795 = vmatprep.subr.bf16.mxu0 0
  %8796 = vmatpush1.bf16.msra.mxu0 0
  %8797 = vmatprep.subr.bf16.mxu0 0
  %8798 = vmatpush1.bf16.msra.mxu0 0
  %8799 = vmatprep.subr.bf16.mxu0 0
  %8800 = vmatpush1.bf16.msra.mxu0 0
  %8801 = vmatprep.subr.bf16.mxu0 0
  %8802 = vmatpush1.bf16.msra.mxu0 0
  %8803 = vmatprep.subr.bf16.mxu0 0
  %8804 = vmatpush1.bf16.msra.mxu0 0
  %8805 = vmatprep.subr.bf16.mxu0 0
  %8806 = vmatpush1.bf16.msra.mxu0 0
  %8807 = vmatprep.subr.bf16.mxu0 0
  %8808 = vmatpush1.bf16.msra.mxu0 0
  %8809 = vmatprep.subr.bf16.mxu0 0
  %8810 = vmatpush1.bf16.msra.mxu0 0
  %8811 = vmatprep.subr.bf16.mxu0 0
  %8812 = vmatpush1.bf16.msra.mxu0 0
  %8813 = vmatprep.subr.bf16.mxu0 0
  %8814 = vmatpush1.bf16.msra.mxu0 0
  %8815 = vmatprep.subr.bf16.mxu0 0
  %8816 = vmatpush1.bf16.msra.mxu0 0
  %8817 = vmatprep.mubr.bf16.mxu0 0
  %8818 = vmatmul.mubr.bf16.gmra.mrb[0].mxu0 %v8780
  %v8819 = vpop.f32.mrb[0].mxu0
  %v8820 = vadd.f32 %v8741, %v8819
  %v8821 = vpop.f32.mrb[0].mxu0
  %v8822 = vpop.f32.mrb[0].mxu0
  %v8823 = vadd.f32 %v8744, %v8822
  %v8824 = vpop.f32.mrb[0].mxu0
  %8825 = vmatprep.mubr.bf16.mxu0 0
  %8826 = vmatmul.mubr.bf16.gmra.mrb[0].mxu0 %v8783
  %v8827 = vpop.f32.mrb[0].mxu0
  %v8828 = vadd.f32 %v8749, %v8827
  %v8829 = vpop.f32.mrb[0].mxu0
  %v8830 = vpop.f32.mrb[0].mxu0
  %v8831 = vadd.f32 %v8752, %v8830
  %v8832 = vpop.f32.mrb[0].mxu0
  %8833 = vdwg.mxu0
  %v8834 = vpack.c.bf16 %v8651, %v8650
  %v8835 = vpack.c.bf16 %v8653, %v8652
  %s8836 = scalar_lea.vmem %s1, 1088
  %v8837 = vld [vmem:[%s8836] sm:$0xf]
  %v8838 = vld [vmem:[%s8836 + $0x4] sm:$0xf]
  %v8839 = vld [vmem:[%s8836 + $0x8] sm:$0xf]
  %v8840 = vld [vmem:[%s8836 + $0xc] sm:$0xf]
  %v8841 = vld [vmem:[%s8836 + $0x10] sm:$0xf]
  %v8842 = vld [vmem:[%s8836 + $0x14] sm:$0xf]
  %v8843 = vld [vmem:[%s8836 + $0x18] sm:$0xf]
  %v8844 = vld [vmem:[%s8836 + $0x1c] sm:$0xf]
  %v8853 = vunpack.c.l.b16 %v8837
  %v8854 = vunpack.c.l.b16 %v8838
  %v8855 = vunpack.c.l.b16 %v8839
  %v8856 = vunpack.c.l.b16 %v8840
  %v8857 = vunpack.c.l.b16 %v8841
  %v8858 = vunpack.c.l.b16 %v8842
  %v8859 = vunpack.c.l.b16 %v8843
  %v8860 = vunpack.c.l.b16 %v8844
  %v8861 = vpack.c.b16 %v8854, %v8853
  %v8862 = vpack.c.b16 %v8856, %v8855
  %v8863 = vpack.c.b16 %v8858, %v8857
  %v8864 = vpack.c.b16 %v8860, %v8859
  %v8870 = vsel %vm1685, %v8834, 0
  %v8873 = vsel %vm1685, %v8835, 0
  %8875 = vmatprep.subr.bf16.mxu0 0
  %8876 = vmatpush1.bf16.msra.mxu0 %v8861
  %8877 = vmatprep.subr.bf16.mxu0 0
  %8878 = vmatpush1.bf16.msra.mxu0 %v8862
  %8879 = vmatprep.subr.bf16.mxu0 0
  %8880 = vmatpush1.bf16.msra.mxu0 %v8863
  %8881 = vmatprep.subr.bf16.mxu0 0
  %8882 = vmatpush1.bf16.msra.mxu0 %v8864
  %8883 = vmatprep.subr.bf16.mxu0 0
  %8884 = vmatpush1.bf16.msra.mxu0 0
  %8885 = vmatprep.subr.bf16.mxu0 0
  %8886 = vmatpush1.bf16.msra.mxu0 0
  %8887 = vmatprep.subr.bf16.mxu0 0
  %8888 = vmatpush1.bf16.msra.mxu0 0
  %8889 = vmatprep.subr.bf16.mxu0 0
  %8890 = vmatpush1.bf16.msra.mxu0 0
  %8891 = vmatprep.subr.bf16.mxu0 0
  %8892 = vmatpush1.bf16.msra.mxu0 0
  %8893 = vmatprep.subr.bf16.mxu0 0
  %8894 = vmatpush1.bf16.msra.mxu0 0
  %8895 = vmatprep.subr.bf16.mxu0 0
  %8896 = vmatpush1.bf16.msra.mxu0 0
  %8897 = vmatprep.subr.bf16.mxu0 0
  %8898 = vmatpush1.bf16.msra.mxu0 0
  %8899 = vmatprep.subr.bf16.mxu0 0
  %8900 = vmatpush1.bf16.msra.mxu0 0
  %8901 = vmatprep.subr.bf16.mxu0 0
  %8902 = vmatpush1.bf16.msra.mxu0 0
  %8903 = vmatprep.subr.bf16.mxu0 0
  %8904 = vmatpush1.bf16.msra.mxu0 0
  %8905 = vmatprep.subr.bf16.mxu0 0
  %8906 = vmatpush1.bf16.msra.mxu0 0
  %8907 = vmatprep.mubr.bf16.mxu0 0
  %8908 = vmatmul.mubr.bf16.gmra.mrb[0].mxu0 %v8870
  %v8909 = vpop.f32.mrb[0].mxu0
  %v8910 = vadd.f32 0.0, %v8909
  %v8911 = vpop.f32.mrb[0].mxu0
  %v8912 = vpop.f32.mrb[0].mxu0
  %v8913 = vadd.f32 0.0, %v8912
  %v8914 = vpop.f32.mrb[0].mxu0
  %8915 = vmatprep.mubr.bf16.mxu0 0
  %8916 = vmatmul.mubr.bf16.gmra.mrb[0].mxu0 %v8873
  %v8917 = vpop.f32.mrb[0].mxu0
  %v8918 = vadd.f32 0.0, %v8917
  %v8919 = vpop.f32.mrb[0].mxu0
  %v8920 = vpop.f32.mrb[0].mxu0
  %v8921 = vadd.f32 0.0, %v8920
  %v8922 = vpop.f32.mrb[0].mxu0
  %8923 = vdwg.mxu0
  %v8924 = vadd.f32 %v8820, %v8910
  %v8925 = vadd.f32 %v8823, %v8913
  %v8926 = vadd.f32 %v8828, %v8918
  %v8927 = vadd.f32 %v8831, %v8921
  %v8928 = vlaneseq
  %v8929 = vshrl.u32 %v8928, 7
  %v8930 = vsub.s32 7, %v8929
  %v8931 = vrot.slane %v154, %v8930
  %v8932 = vadd.f32 %v8924, %v8931
  %v8933 = vadd.f32 %v8925, %v8931
  %v8934 = vadd.f32 %v8926, %v8931
  %v8935 = vadd.f32 %v8927, %v8931
  %vm8936 = vcmp.gt.f32.partialorder %v8932, 0.0
  %vm8937 = vcmp.gt.f32.partialorder %v8933, 0.0
  %vm8938 = vcmp.gt.f32.partialorder %v8934, 0.0
  %vm8939 = vcmp.gt.f32.partialorder %v8935, 0.0
  %v8940 = vmin.f32 %v8932, 0.0
  %v8941 = vmin.f32 %v8933, 0.0
  %v8942 = vmin.f32 %v8934, 0.0
  %v8943 = vmin.f32 %v8935, 0.0
  %v8944 = vmul.f32 %v8940, 1.442695
  %v8945 = vpow.pop %v8944
  %v8946 = vmul.f32 %v8941, 1.442695
  %v8947 = vpow.pop %v8946
  %v8948 = vmul.f32 %v8942, 1.442695
  %v8949 = vpow.pop %v8948
  %v8950 = vmul.f32 %v8943, 1.442695
  %v8951 = vpow.pop %v8950
  %v8952 = vsub.f32 %v8945, 1.0
  %v8953 = vsub.f32 %v8947, 1.0
  %v8954 = vsub.f32 %v8949, 1.0
  %v8955 = vsub.f32 %v8951, 1.0
  %v8956 = vsel %vm8936, %v8932, %v8952
  %v8957 = vsel %vm8937, %v8933, %v8953
  %v8958 = vsel %vm8938, %v8934, %v8954
  %v8959 = vsel %vm8939, %v8935, %v8955
  %v8960 = vpack.c.bf16 %v8957, %v8956
  %v8961 = vpack.c.bf16 %v8959, %v8958
  %v8962 = vlaneseq
  %v8963 = vshrl.u32 %v8962, 7
  %v8964 = vsub.s32 0, %v8963
  %v8965 = vrot.slane %v155, %v8964
  %v8974 = vunpack.c.l.b16 %v146
  %v8975 = vunpack.c.l.b16 %v147
  %v8976 = vunpack.c.l.b16 %v148
  %v8977 = vunpack.c.l.b16 %v149
  %v8978 = vunpack.c.l.b16 %v150
  %v8979 = vunpack.c.l.b16 %v151
  %v8980 = vunpack.c.l.b16 %v152
  %v8981 = vunpack.c.l.b16 %v153
  %v8982 = vpack.c.b16 %v8975, %v8974
  %v8983 = vpack.c.b16 %v8977, %v8976
  %v8984 = vpack.c.b16 %v8979, %v8978
  %v8985 = vpack.c.b16 %v8981, %v8980
  %v8991 = vsel %vm1685, %v8960, 0
  %v8994 = vsel %vm1685, %v8961, 0
  %8996 = vmatprep.subr.bf16.mxu0 0
  %8997 = vmatpush1.bf16.msra.mxu0 %v8982
  %8998 = vmatprep.subr.bf16.mxu0 0
  %8999 = vmatpush1.bf16.msra.mxu0 %v8983
  %9000 = vmatprep.subr.bf16.mxu0 0
  %9001 = vmatpush1.bf16.msra.mxu0 %v8984
  %9002 = vmatprep.subr.bf16.mxu0 0
  %9003 = vmatpush1.bf16.msra.mxu0 %v8985
  %9004 = vmatprep.subr.bf16.mxu0 0
  %9005 = vmatpush1.bf16.msra.mxu0 0
  %9006 = vmatprep.subr.bf16.mxu0 0
  %9007 = vmatpush1.bf16.msra.mxu0 0
  %9008 = vmatprep.subr.bf16.mxu0 0
  %9009 = vmatpush1.bf16.msra.mxu0 0
  %9010 = vmatprep.subr.bf16.mxu0 0
  %9011 = vmatpush1.bf16.msra.mxu0 0
  %9012 = vmatprep.subr.bf16.mxu0 0
  %9013 = vmatpush1.bf16.msra.mxu0 0
  %9014 = vmatprep.subr.bf16.mxu0 0
  %9015 = vmatpush1.bf16.msra.mxu0 0
  %9016 = vmatprep.subr.bf16.mxu0 0
  %9017 = vmatpush1.bf16.msra.mxu0 0
  %9018 = vmatprep.subr.bf16.mxu0 0
  %9019 = vmatpush1.bf16.msra.mxu0 0
  %9020 = vmatprep.subr.bf16.mxu0 0
  %9021 = vmatpush1.bf16.msra.mxu0 0
  %9022 = vmatprep.subr.bf16.mxu0 0
  %9023 = vmatpush1.bf16.msra.mxu0 0
  %9024 = vmatprep.subr.bf16.mxu0 0
  %9025 = vmatpush1.bf16.msra.mxu0 0
  %9026 = vmatprep.subr.bf16.mxu0 0
  %9027 = vmatpush1.bf16.msra.mxu0 0
  %9028 = vmatprep.mubr.bf16.mxu0 0
  %9029 = vmatmul.mubr.bf16.gmra.mrb[0].mxu0 %v8991
  %v9030 = vpop.f32.mrb[0].mxu0
  %v9031 = vadd.f32 %v8965, %v9030
  %v9032 = vpop.f32.mrb[0].mxu0
  %v9033 = vpop.f32.mrb[0].mxu0
  %v9034 = vadd.f32 %v8965, %v9033
  %v9035 = vpop.f32.mrb[0].mxu0
  %9036 = vmatprep.mubr.bf16.mxu0 0
  %9037 = vmatmul.mubr.bf16.gmra.mrb[0].mxu0 %v8994
  %v9038 = vpop.f32.mrb[0].mxu0
  %v9039 = vadd.f32 %v8965, %v9038
  %v9040 = vpop.f32.mrb[0].mxu0
  %v9041 = vpop.f32.mrb[0].mxu0
  %v9042 = vadd.f32 %v8965, %v9041
  %v9043 = vpop.f32.mrb[0].mxu0
  %9044 = vdwg.mxu0
  %9045 = vst [vmem:[%s4] sm:$0xff] %v9031
  %9046 = vst [vmem:[%s4 + $0x8] sm:$0xff] %v9034
  %9047 = vst [vmem:[%s4 + $0x10] sm:$0xff] %v9039
  %9048 = vst [vmem:[%s4 + $0x18] sm:$0xff] %v9042
  // Predicated region
  $region18: #{forward.1} parent=0 // pred_check
    _
  $region19: #{forward.1} parent=0 // pred_check_branch
    %9050 = sbr.rel (0) target = $region21
  $region20: #{forward.1} parent=0 // pred_region
    _
  $region21: #{forward.1} parent=0 // pred_fallthru
    _
  // Predicated region
  $region22: #{forward.1} parent=0 // pred_check
    _
  $region23: #{forward.1} parent=0 // pred_check_branch
    %9052 = sbr.rel (0) target = $region25
  $region24: #{forward.1} parent=0 // pred_region
    _
  $region25: #{forward.1} parent=0 // pred_fallthru
    _

</llo_original>
